<compile_context>
chip_gen: v7x
topology: tpu7x:2x2x1
jax: 0.10.0
libtpu: 0.0.40
codegen_flags: <defaults>
</compile_context>

<pallas_src>
import numpy as np

import jax
import jax.numpy as jnp
from jax import lax
from jax.experimental import pallas as pl
from jax.experimental.pallas import tpu as pltpu


# ----------------------------------------------------------------------------
# Fused Pallas kernel: whole CVAE forward in one call
# ----------------------------------------------------------------------------
def _cvae_fused_kernel(
        x_ref, eps_ref,
        r1, h1, b1,
        r2, h2, b2,
        r3, h3, b3,
        sel_e, wfc, bfc,
        wm, bm, wv, bv,
        wdec, bdec, pdec,
        rd1, hd1, bd1,
        rd2, hd2, bd2,
        rd3, hd3, bd3,
        out_ref, mean_ref, logvar_ref):
    f32 = jnp.float32
    bf16 = jnp.bfloat16

    def relu(v):
        return jnp.maximum(v, 0.0)

    def conv_layer(act, r_ref, h_ref, bias_ref, kh):
        """out = bias + sum_ki (R_ki @ act) @ H_ki  (striped (B*H, W*C) layout)."""
        act_b = act.astype(bf16)
        acc = None
        for ki in range(kh):
            t = jnp.dot(r_ref[ki], act_b, preferred_element_type=f32)      # row gather/scatter
            t = jnp.dot(t.astype(bf16), h_ref[ki], preferred_element_type=f32)  # band weight
            acc = t if acc is None else acc + t
        return acc + bias_ref[...]

    # ------------------------- Convolute encoder -------------------------
    x = x_ref[...]                                           # (B*30, 30) f32
    a1 = relu(conv_layer(x,  r1, h1, b1, 8))                 # (B*7,  7*32)
    a2 = relu(conv_layer(a1, r2, h2, b2, 3))                 # (B*3,  3*64)
    a3 = relu(conv_layer(a2, r3, h3, b3, 3))                 # (B*3,  3*128)

    # encoder FC: flatten (NCHW order) folded into per-row weight blocks
    a3_b = a3.astype(bf16)
    conv_out = None
    for y in range(3):
        rowy = jnp.dot(sel_e[y], a3_b, preferred_element_type=f32)        # (B, 384)
        part = jnp.dot(rowy.astype(bf16), wfc[y], preferred_element_type=f32)
        conv_out = part if conv_out is None else conv_out + part
    conv_out = conv_out + bfc[...]                           # (B, n_middle)

    # ---------------- latent heads + reparameterize ----------------
    # NOTE: kept as two tiny dots (instead of one concat + lane slice) for
    # guaranteed lowering; cost is negligible.
    co_b = conv_out.astype(bf16)
    mean = jnp.dot(co_b, wm[...], preferred_element_type=f32) + bm[...]
    logvar = jnp.dot(co_b, wv[...], preferred_element_type=f32) + bv[...]
    z = eps_ref[...] * jnp.exp(0.5 * logvar) + mean          # eps*std + mu
    mean_ref[...] = mean
    logvar_ref[...] = logvar

    # ------------------------- DeConvolute decoder -------------------------
    z_b = z.astype(bf16)
    d0 = None
    for y in range(3):
        blk = relu(jnp.dot(z_b, wdec[y], preferred_element_type=f32) + bdec[y])  # (B, 384)
        scat = jnp.dot(pdec[y], blk.astype(bf16), preferred_element_type=f32)    # (B*3, 384)
        d0 = scat if d0 is None else d0 + scat

    dd1 = relu(conv_layer(d0,  rd1, hd1, bd1, 3))            # (B*3, 3*64)
    dd2 = relu(conv_layer(dd1, rd2, hd2, bd2, 3))            # (B*7, 7*32)
    dd3 = conv_layer(dd2, rd3, hd3, bd3, 8)                  # (B*30, 30)  lane-dense
    out_ref[...] = 1.0 / (1.0 + jnp.exp(-dd3))               # sigmoid


_PACK_ORDER = ("r1", "h1", "b1", "r2", "h2", "b2", "r3", "h3", "b3",
               "sel_e", "wfc", "bfc", "wm", "bm", "wv", "bv",
               "wdec", "bdec", "pdec",
               "rd1", "hd1", "bd1", "rd2", "hd2", "bd2", "rd3", "hd3", "bd3")


def _full_spec(shape):
    nd = len(shape)
    return pl.BlockSpec(shape, lambda *_, _nd=nd: (0,) * _nd)


def cvae_forward(state, packed, eps):
    B, n_hidden = eps.shape
    x = state.reshape(B * 30, 30).astype(jnp.float32)        # striped (B*H, W*Cin)
    operands = (x, eps.astype(jnp.float32)) + tuple(packed[k] for k in _PACK_ORDER)
    out_shape = (
        jax.ShapeDtypeStruct((B * 30, 30), jnp.float32),
        jax.ShapeDtypeStruct((B, n_hidden), jnp.float32),
        jax.ShapeDtypeStruct((B, n_hidden), jnp.float32),
    )
    out, mean, logvar = pl.pallas_call(
        _cvae_fused_kernel,
        out_shape=out_shape,
        in_specs=[_full_spec(o.shape) for o in operands],
        out_specs=tuple(_full_spec(s.shape) for s in out_shape),
        compiler_params=pltpu.CompilerParams(vmem_limit_bytes=32 * 1024 * 1024),
    )(*operands)
    return out.reshape(B, 30, 30), mean, logvar


# ----------------------------------------------------------------------------
# One-time weight packing (PyTorch layouts -> striped GEMM-ready bf16 matrices)
# ----------------------------------------------------------------------------
def _conv_out(n, k, s, p):
    return (n + 2 * p - k) // s + 1


def _deconv_out(n, k, s, p):
    return (n - 1) * s - 2 * p + k


def _pack_conv(w, stride, pad, Hi, Wi, B):
    """w: (Cout, Cin, kh, kw) PyTorch Conv2d weight."""
    Cout, Cin, kh, kw = w.shape
    Ho = _conv_out(Hi, kh, stride, pad)
    Wo = _conv_out(Wi, kw, stride, pad)
    R = np.zeros((kh, B * Ho, B * Hi), np.float32)
    H = np.zeros((kh, Wi * Cin, Wo * Cout), np.float32)
    for ki in range(kh):
        for b in range(B):
            for oy in range(Ho):
                iy = stride * oy + ki - pad
                if 0 <= iy < Hi:
                    R[ki, b * Ho + oy, b * Hi + iy] = 1.0
        for ox in range(Wo):
            for kj in range(kw):
                ix = stride * ox + kj - pad
                if 0 <= ix < Wi:
                    H[ki, ix * Cin:(ix + 1) * Cin, ox * Cout:(ox + 1) * Cout] = w[:, :, ki, kj].T
    return R, H, Ho, Wo


def _pack_deconv(w, stride, pad, Hi, Wi, B):
    """w: (Cin, Cout, kh, kw) PyTorch ConvTranspose2d weight."""
    Cin, Cout, kh, kw = w.shape
    Ho = _deconv_out(Hi, kh, stride, pad)
    Wo = _deconv_out(Wi, kw, stride, pad)
    R = np.zeros((kh, B * Ho, B * Hi), np.float32)
    H = np.zeros((kh, Wi * Cin, Wo * Cout), np.float32)
    for ki in range(kh):
        for b in range(B):
            for iy in range(Hi):
                y = stride * iy + ki - pad
                if 0 <= y < Ho:
                    R[ki, b * Ho + y, b * Hi + iy] = 1.0
        for ix in range(Wi):
            for kj in range(kw):
                x = stride * ix + kj - pad
                if 0 <= x < Wo:
                    H[ki, ix * Cin:(ix + 1) * Cin, x * Cout:(x + 1) * Cout] = w[:, :, ki, kj]
    return R, H, Ho, Wo


def pack_params(params, B, n_middle, n_hidden):
    f32 = np.float32
    p = {k: np.asarray(v, f32) for k, v in params.items()}
    packed = {}

    def put(name, arr, dtype=jnp.bfloat16):
        packed[name] = jnp.asarray(arr, dtype)

    # encoder convs
    r, h, _, wo = _pack_conv(p["c1_w"], 4, 1, 30, 30, B)
    put("r1", r); put("h1", h); put("b1", np.tile(p["c1_b"], wo)[None], jnp.float32)
    r, h, _, wo = _pack_conv(p["c2_w"], 2, 0, 7, 7, B)
    put("r2", r); put("h2", h); put("b2", np.tile(p["c2_b"], wo)[None], jnp.float32)
    r, h, _, wo = _pack_conv(p["c3_w"], 1, 1, 3, 3, B)
    put("r3", r); put("h3", h); put("b3", np.tile(p["c3_b"], wo)[None], jnp.float32)

    # encoder FC (PyTorch flatten index = ci*9 + y*3 + x), split per output row y
    C3 = 128
    wfc = p["enc_fc_w"].reshape(n_middle, C3, 3, 3).transpose(2, 3, 1, 0).reshape(3, 3 * C3, n_middle)
    put("wfc", wfc); put("bfc", p["enc_fc_b"][None], jnp.float32)
    sel = np.zeros((3, B, B * 3), f32)
    for y in range(3):
        for b in range(B):
            sel[y, b, b * 3 + y] = 1.0
    put("sel_e", sel)

    # latent heads
    put("wm", p["mean_w"].T); put("bm", p["mean_b"][None], jnp.float32)
    put("wv", p["std_w"].T);  put("bv", p["std_b"][None], jnp.float32)

    # decoder FC (output written directly in striped layout, split per row y)
    wd = p["dec_fc_w"].reshape(C3, 3, 3, n_hidden).transpose(1, 3, 2, 0).reshape(3, n_hidden, 3 * C3)
    put("wdec", wd)
    bd = p["dec_fc_b"].reshape(C3, 3, 3).transpose(1, 2, 0).reshape(3, 1, 3 * C3)
    put("bdec", bd, jnp.float32)
    pd = np.zeros((3, B * 3, B), f32)
    for y in range(3):
        for b in range(B):
            pd[y, b * 3 + y, b] = 1.0
    put("pdec", pd)

    # decoder transposed convs (no zero-dilation: scatter R + band H)
    r, h, _, wo = _pack_deconv(p["d1_w"], 1, 1, 3, 3, B)
    put("rd1", r); put("hd1", h); put("bd1", np.tile(p["d1_b"], wo)[None], jnp.float32)
    r, h, _, wo = _pack_deconv(p["d2_w"], 2, 0, 3, 3, B)
    put("rd2", r); put("hd2", h); put("bd2", np.tile(p["d2_b"], wo)[None], jnp.float32)
    r, h, _, wo = _pack_deconv(p["d3_w"], 4, 1, 7, 7, B)
    put("rd3", r); put("hd3", h); put("bd3", np.tile(p["d3_b"], wo)[None], jnp.float32)
    return packed


# ----------------------------------------------------------------------------
# Parameter init (deterministic, PyTorch layouts, fan-in uniform)
# ----------------------------------------------------------------------------
def init_params(key, n_middle, n_hidden):
    ks = jax.random.split(key, 20)

    def u(k, shape, fan_in):
        bound = 1.0 / np.sqrt(fan_in)
        return jax.random.uniform(k, shape, jnp.float32, -bound, bound)

    p = {}
    p["c1_w"] = u(ks[0], (32, 1, 8, 8), 64);     p["c1_b"] = u(ks[1], (32,), 64)
    p["c2_w"] = u(ks[2], (64, 32, 3, 3), 288);   p["c2_b"] = u(ks[3], (64,), 288)
    p["c3_w"] = u(ks[4], (128, 64, 3, 3), 576);  p["c3_b"] = u(ks[5], (128,), 576)
    p["enc_fc_w"] = u(ks[6], (n_middle, 1152), 1152)
    p["enc_fc_b"] = u(ks[7], (n_middle,), 1152)
    p["mean_w"] = u(ks[8], (n_hidden, n_middle), n_middle)
    p["mean_b"] = u(ks[9], (n_hidden,), n_middle)
    p["std_w"] = u(ks[10], (n_hidden, n_middle), n_middle)
    p["std_b"] = u(ks[11], (n_hidden,), n_middle)
    # NOTE: CVAE.decodeFc (Linear(n_hidden, n_middle)) is never used in forward().
    p["dec_fc_w"] = u(ks[12], (1152, n_hidden), n_hidden)
    p["dec_fc_b"] = u(ks[13], (1152,), n_hidden)
    p["d1_w"] = u(ks[14], (128, 64, 3, 3), 576); p["d1_b"] = u(ks[15], (64,), 576)
    p["d2_w"] = u(ks[16], (64, 32, 3, 3), 288);  p["d2_b"] = u(ks[17], (32,), 288)
    p["d3_w"] = u(ks[18], (32, 1, 8, 8), 64);    p["d3_b"] = u(ks[19], (1,), 64)
    return p


# ----------------------------------------------------------------------------
# Pure-XLA reference (for numerical validation of the fused kernel)
# ----------------------------------------------------------------------------
def _ref_conv(x, w, b, s, p):
    y = lax.conv_general_dilated(x, w, (s, s), [(p, p), (p, p)],
                                 dimension_numbers=("NCHW", "OIHW", "NCHW"))
    return y + b[None, :, None, None]


def _ref_deconv(x, w, b, s, p):
    k = w.shape[2]
    wf = jnp.flip(w, (2, 3)).transpose(1, 0, 2, 3)
    y = lax.conv_general_dilated(x, wf, (1, 1), [(k - 1 - p, k - 1 - p)] * 2,
                                 lhs_dilation=(s, s),
                                 dimension_numbers=("NCHW", "OIHW", "NCHW"))
    return y + b[None, :, None, None]


def cvae_reference(params, state, eps):
    B = state.shape[0]
    x = state.reshape(B, 1, 30, 30).astype(jnp.float32)
    h = jax.nn.relu(_ref_conv(x, params["c1_w"], params["c1_b"], 4, 1))
    h = jax.nn.relu(_ref_conv(h, params["c2_w"], params["c2_b"], 2, 0))
    h = jax.nn.relu(_ref_conv(h, params["c3_w"], params["c3_b"], 1, 1))
    flat = h.reshape(B, -1)
    conv_out = flat @ params["enc_fc_w"].T + params["enc_fc_b"]
    mean = conv_out @ params["mean_w"].T + params["mean_b"]
    logvar = conv_out @ params["std_w"].T + params["std_b"]
    z = eps * jnp.exp(0.5 * logvar) + mean
    d = jax.nn.relu(z @ params["dec_fc_w"].T + params["dec_fc_b"])
    d = d.reshape(B, 128, 3, 3)
    d = jax.nn.relu(_ref_deconv(d, params["d1_w"], params["d1_b"], 1, 1))
    d = jax.nn.relu(_ref_deconv(d, params["d2_w"], params["d2_b"], 2, 0))
    d = _ref_deconv(d, params["d3_w"], params["d3_b"], 4, 1)
    return jax.nn.sigmoid(d.reshape(B, 30, 30)), mean, logvar


# ----------------------------------------------------------------------------
if __name__ == "__main__":
    n_middle, n_hidden = 32, 8
    B = 2

    key = jax.random.PRNGKey(0)
    k_in, k_eps, k_par = jax.random.split(key, 3)

    state = jax.random.uniform(k_in, (B, 1, 30, 30), jnp.float32)
    # TODO(synk): torch.randn_like draws eps inside the module; here eps is a
    # deterministic jax.random.normal passed in explicitly.
    eps = jax.random.normal(k_eps, (B, n_hidden), jnp.float32)

    params = init_params(k_par, n_middle, n_hidden)
    packed = pack_params(params, B, n_middle, n_hidden)

    fwd = jax.jit(cvae_forward)
    deconvolved, mean, logvar = fwd(state, packed, eps)
    jax.block_until_ready((deconvolved, mean, logvar))

    assert deconvolved.shape == (B, 30, 30)
    assert mean.shape == (B, n_hidden) and logvar.shape == (B, n_hidden)
    assert bool(jnp.all(jnp.isfinite(deconvolved)))
    assert bool(jnp.all((deconvolved >= 0.0) & (deconvolved <= 1.0)))

    # validate the fused bf16 kernel against the f32 XLA reference
    ref_out, ref_mean, ref_logvar = jax.jit(cvae_reference)(params, state, eps)
    jax.block_until_ready((ref_out, ref_mean, ref_logvar))
    tol = 5e-2  # bf16 operand rounding inside the fused kernel
    assert float(jnp.max(jnp.abs(deconvolved - ref_out))) < tol
    assert float(jnp.max(jnp.abs(mean - ref_mean))) < tol
    assert float(jnp.max(jnp.abs(logvar - ref_logvar))) < tol

    print("KERNEL_OK")
</pallas_src>

<mosaic_0001>
module attributes {stable_mosaic.version = 11 : i64} {
  func.func @_cvae_fused_kernel(%arg0: memref<60x30xf32, #tpu.memory_space<vmem>>, %arg1: memref<2x8xf32, #tpu.memory_space<vmem>>, %arg2: memref<8x14x60xbf16, #tpu.memory_space<vmem>>, %arg3: memref<8x30x224xbf16, #tpu.memory_space<vmem>>, %arg4: memref<1x224xf32, #tpu.memory_space<vmem>>, %arg5: memref<3x6x14xbf16, #tpu.memory_space<vmem>>, %arg6: memref<3x224x192xbf16, #tpu.memory_space<vmem>>, %arg7: memref<1x192xf32, #tpu.memory_space<vmem>>, %arg8: memref<3x6x6xbf16, #tpu.memory_space<vmem>>, %arg9: memref<3x192x384xbf16, #tpu.memory_space<vmem>>, %arg10: memref<1x384xf32, #tpu.memory_space<vmem>>, %arg11: memref<3x2x6xbf16, #tpu.memory_space<vmem>>, %arg12: memref<3x384x32xbf16, #tpu.memory_space<vmem>>, %arg13: memref<1x32xf32, #tpu.memory_space<vmem>>, %arg14: memref<32x8xbf16, #tpu.memory_space<vmem>>, %arg15: memref<1x8xf32, #tpu.memory_space<vmem>>, %arg16: memref<32x8xbf16, #tpu.memory_space<vmem>>, %arg17: memref<1x8xf32, #tpu.memory_space<vmem>>, %arg18: memref<3x8x384xbf16, #tpu.memory_space<vmem>>, %arg19: memref<3x1x384xf32, #tpu.memory_space<vmem>>, %arg20: memref<3x6x2xbf16, #tpu.memory_space<vmem>>, %arg21: memref<3x6x6xbf16, #tpu.memory_space<vmem>>, %arg22: memref<3x384x192xbf16, #tpu.memory_space<vmem>>, %arg23: memref<1x192xf32, #tpu.memory_space<vmem>>, %arg24: memref<3x14x6xbf16, #tpu.memory_space<vmem>>, %arg25: memref<3x192x224xbf16, #tpu.memory_space<vmem>>, %arg26: memref<1x224xf32, #tpu.memory_space<vmem>>, %arg27: memref<8x60x14xbf16, #tpu.memory_space<vmem>>, %arg28: memref<8x224x30xbf16, #tpu.memory_space<vmem>>, %arg29: memref<1x30xf32, #tpu.memory_space<vmem>>, %arg30: memref<60x30xf32, #tpu.memory_space<vmem>>, %arg31: memref<2x8xf32, #tpu.memory_space<vmem>>, %arg32: memref<2x8xf32, #tpu.memory_space<vmem>>) attributes {dimension_semantics = [], scalar_prefetch = 0 : i64, scratch_operands = 0 : i64, tpu.core_type = #tpu.core_type<tc>} {
    %c0 = arith.constant 0 : index
    %c0_0 = arith.constant 0 : index
    %0 = vector.load %arg0[%c0, %c0_0] : memref<60x30xf32, #tpu.memory_space<vmem>>, vector<60x30xf32>
    %1 = arith.truncf %0 : vector<60x30xf32> to vector<60x30xbf16>
    %c0_1 = arith.constant 0 : index
    %c0_2 = arith.constant 0 : index
    %c0_3 = arith.constant 0 : index
    %2 = vector.load %arg2[%c0_1, %c0_2, %c0_3] : memref<8x14x60xbf16, #tpu.memory_space<vmem>>, vector<1x14x60xbf16>
    %3 = vector.shape_cast %2 : vector<1x14x60xbf16> to vector<14x60xbf16>
    %cst = arith.constant dense<0.000000e+00> : vector<14x30xf32>
    %4 = tpu.matmul %3, %1, %cst {dimension_numbers = #tpu.dot_dimension_numbers<[1], [0], [0], [1], [0, 0, 1, 1], [], []>} : vector<14x60xbf16>, vector<60x30xbf16>, vector<14x30xf32> -> vector<14x30xf32>
    %5 = arith.truncf %4 : vector<14x30xf32> to vector<14x30xbf16>
    %c0_4 = arith.constant 0 : index
    %c0_5 = arith.constant 0 : index
    %c0_6 = arith.constant 0 : index
    %6 = vector.load %arg3[%c0_4, %c0_5, %c0_6] : memref<8x30x224xbf16, #tpu.memory_space<vmem>>, vector<1x30x224xbf16>
    %7 = vector.shape_cast %6 : vector<1x30x224xbf16> to vector<30x224xbf16>
    %cst_7 = arith.constant dense<0.000000e+00> : vector<14x224xf32>
    %8 = tpu.matmul %5, %7, %cst_7 {dimension_numbers = #tpu.dot_dimension_numbers<[1], [0], [0], [1], [0, 0, 1, 1], [], []>} : vector<14x30xbf16>, vector<30x224xbf16>, vector<14x224xf32> -> vector<14x224xf32>
    %c1 = arith.constant 1 : index
    %c0_8 = arith.constant 0 : index
    %c0_9 = arith.constant 0 : index
    %9 = vector.load %arg2[%c1, %c0_8, %c0_9] : memref<8x14x60xbf16, #tpu.memory_space<vmem>>, vector<1x14x60xbf16>
    %10 = vector.shape_cast %9 : vector<1x14x60xbf16> to vector<14x60xbf16>
    %cst_10 = arith.constant dense<0.000000e+00> : vector<14x30xf32>
    %11 = tpu.matmul %10, %1, %cst_10 {dimension_numbers = #tpu.dot_dimension_numbers<[1], [0], [0], [1], [0, 0, 1, 1], [], []>} : vector<14x60xbf16>, vector<60x30xbf16>, vector<14x30xf32> -> vector<14x30xf32>
    %12 = arith.truncf %11 : vector<14x30xf32> to vector<14x30xbf16>
    %c1_11 = arith.constant 1 : index
    %c0_12 = arith.constant 0 : index
    %c0_13 = arith.constant 0 : index
    %13 = vector.load %arg3[%c1_11, %c0_12, %c0_13] : memref<8x30x224xbf16, #tpu.memory_space<vmem>>, vector<1x30x224xbf16>
    %14 = vector.shape_cast %13 : vector<1x30x224xbf16> to vector<30x224xbf16>
    %cst_14 = arith.constant dense<0.000000e+00> : vector<14x224xf32>
    %15 = tpu.matmul %12, %14, %cst_14 {dimension_numbers = #tpu.dot_dimension_numbers<[1], [0], [0], [1], [0, 0, 1, 1], [], []>} : vector<14x30xbf16>, vector<30x224xbf16>, vector<14x224xf32> -> vector<14x224xf32>
    %16 = arith.addf %8, %15 : vector<14x224xf32>
    %c2 = arith.constant 2 : index
    %c0_15 = arith.constant 0 : index
    %c0_16 = arith.constant 0 : index
    %17 = vector.load %arg2[%c2, %c0_15, %c0_16] : memref<8x14x60xbf16, #tpu.memory_space<vmem>>, vector<1x14x60xbf16>
    %18 = vector.shape_cast %17 : vector<1x14x60xbf16> to vector<14x60xbf16>
    %cst_17 = arith.constant dense<0.000000e+00> : vector<14x30xf32>
    %19 = tpu.matmul %18, %1, %cst_17 {dimension_numbers = #tpu.dot_dimension_numbers<[1], [0], [0], [1], [0, 0, 1, 1], [], []>} : vector<14x60xbf16>, vector<60x30xbf16>, vector<14x30xf32> -> vector<14x30xf32>
    %20 = arith.truncf %19 : vector<14x30xf32> to vector<14x30xbf16>
    %c2_18 = arith.constant 2 : index
    %c0_19 = arith.constant 0 : index
    %c0_20 = arith.constant 0 : index
    %21 = vector.load %arg3[%c2_18, %c0_19, %c0_20] : memref<8x30x224xbf16, #tpu.memory_space<vmem>>, vector<1x30x224xbf16>
    %22 = vector.shape_cast %21 : vector<1x30x224xbf16> to vector<30x224xbf16>
    %cst_21 = arith.constant dense<0.000000e+00> : vector<14x224xf32>
    %23 = tpu.matmul %20, %22, %cst_21 {dimension_numbers = #tpu.dot_dimension_numbers<[1], [0], [0], [1], [0, 0, 1, 1], [], []>} : vector<14x30xbf16>, vector<30x224xbf16>, vector<14x224xf32> -> vector<14x224xf32>
    %24 = arith.addf %16, %23 : vector<14x224xf32>
    %c3 = arith.constant 3 : index
    %c0_22 = arith.constant 0 : index
    %c0_23 = arith.constant 0 : index
    %25 = vector.load %arg2[%c3, %c0_22, %c0_23] : memref<8x14x60xbf16, #tpu.memory_space<vmem>>, vector<1x14x60xbf16>
    %26 = vector.shape_cast %25 : vector<1x14x60xbf16> to vector<14x60xbf16>
    %cst_24 = arith.constant dense<0.000000e+00> : vector<14x30xf32>
    %27 = tpu.matmul %26, %1, %cst_24 {dimension_numbers = #tpu.dot_dimension_numbers<[1], [0], [0], [1], [0, 0, 1, 1], [], []>} : vector<14x60xbf16>, vector<60x30xbf16>, vector<14x30xf32> -> vector<14x30xf32>
    %28 = arith.truncf %27 : vector<14x30xf32> to vector<14x30xbf16>
    %c3_25 = arith.constant 3 : index
    %c0_26 = arith.constant 0 : index
    %c0_27 = arith.constant 0 : index
    %29 = vector.load %arg3[%c3_25, %c0_26, %c0_27] : memref<8x30x224xbf16, #tpu.memory_space<vmem>>, vector<1x30x224xbf16>
    %30 = vector.shape_cast %29 : vector<1x30x224xbf16> to vector<30x224xbf16>
    %cst_28 = arith.constant dense<0.000000e+00> : vector<14x224xf32>
    %31 = tpu.matmul %28, %30, %cst_28 {dimension_numbers = #tpu.dot_dimension_numbers<[1], [0], [0], [1], [0, 0, 1, 1], [], []>} : vector<14x30xbf16>, vector<30x224xbf16>, vector<14x224xf32> -> vector<14x224xf32>
    %32 = arith.addf %24, %31 : vector<14x224xf32>
    %c4 = arith.constant 4 : index
    %c0_29 = arith.constant 0 : index
    %c0_30 = arith.constant 0 : index
    %33 = vector.load %arg2[%c4, %c0_29, %c0_30] : memref<8x14x60xbf16, #tpu.memory_space<vmem>>, vector<1x14x60xbf16>
    %34 = vector.shape_cast %33 : vector<1x14x60xbf16> to vector<14x60xbf16>
    %cst_31 = arith.constant dense<0.000000e+00> : vector<14x30xf32>
    %35 = tpu.matmul %34, %1, %cst_31 {dimension_numbers = #tpu.dot_dimension_numbers<[1], [0], [0], [1], [0, 0, 1, 1], [], []>} : vector<14x60xbf16>, vector<60x30xbf16>, vector<14x30xf32> -> vector<14x30xf32>
    %36 = arith.truncf %35 : vector<14x30xf32> to vector<14x30xbf16>
    %c4_32 = arith.constant 4 : index
    %c0_33 = arith.constant 0 : index
    %c0_34 = arith.constant 0 : index
    %37 = vector.load %arg3[%c4_32, %c0_33, %c0_34] : memref<8x30x224xbf16, #tpu.memory_space<vmem>>, vector<1x30x224xbf16>
    %38 = vector.shape_cast %37 : vector<1x30x224xbf16> to vector<30x224xbf16>
    %cst_35 = arith.constant dense<0.000000e+00> : vector<14x224xf32>
    %39 = tpu.matmul %36, %38, %cst_35 {dimension_numbers = #tpu.dot_dimension_numbers<[1], [0], [0], [1], [0, 0, 1, 1], [], []>} : vector<14x30xbf16>, vector<30x224xbf16>, vector<14x224xf32> -> vector<14x224xf32>
    %40 = arith.addf %32, %39 : vector<14x224xf32>
    %c5 = arith.constant 5 : index
    %c0_36 = arith.constant 0 : index
    %c0_37 = arith.constant 0 : index
    %41 = vector.load %arg2[%c5, %c0_36, %c0_37] : memref<8x14x60xbf16, #tpu.memory_space<vmem>>, vector<1x14x60xbf16>
    %42 = vector.shape_cast %41 : vector<1x14x60xbf16> to vector<14x60xbf16>
    %cst_38 = arith.constant dense<0.000000e+00> : vector<14x30xf32>
    %43 = tpu.matmul %42, %1, %cst_38 {dimension_numbers = #tpu.dot_dimension_numbers<[1], [0], [0], [1], [0, 0, 1, 1], [], []>} : vector<14x60xbf16>, vector<60x30xbf16>, vector<14x30xf32> -> vector<14x30xf32>
    %44 = arith.truncf %43 : vector<14x30xf32> to vector<14x30xbf16>
    %c5_39 = arith.constant 5 : index
    %c0_40 = arith.constant 0 : index
    %c0_41 = arith.constant 0 : index
    %45 = vector.load %arg3[%c5_39, %c0_40, %c0_41] : memref<8x30x224xbf16, #tpu.memory_space<vmem>>, vector<1x30x224xbf16>
    %46 = vector.shape_cast %45 : vector<1x30x224xbf16> to vector<30x224xbf16>
    %cst_42 = arith.constant dense<0.000000e+00> : vector<14x224xf32>
    %47 = tpu.matmul %44, %46, %cst_42 {dimension_numbers = #tpu.dot_dimension_numbers<[1], [0], [0], [1], [0, 0, 1, 1], [], []>} : vector<14x30xbf16>, vector<30x224xbf16>, vector<14x224xf32> -> vector<14x224xf32>
    %48 = arith.addf %40, %47 : vector<14x224xf32>
    %c6 = arith.constant 6 : index
    %c0_43 = arith.constant 0 : index
    %c0_44 = arith.constant 0 : index
    %49 = vector.load %arg2[%c6, %c0_43, %c0_44] : memref<8x14x60xbf16, #tpu.memory_space<vmem>>, vector<1x14x60xbf16>
    %50 = vector.shape_cast %49 : vector<1x14x60xbf16> to vector<14x60xbf16>
    %cst_45 = arith.constant dense<0.000000e+00> : vector<14x30xf32>
    %51 = tpu.matmul %50, %1, %cst_45 {dimension_numbers = #tpu.dot_dimension_numbers<[1], [0], [0], [1], [0, 0, 1, 1], [], []>} : vector<14x60xbf16>, vector<60x30xbf16>, vector<14x30xf32> -> vector<14x30xf32>
    %52 = arith.truncf %51 : vector<14x30xf32> to vector<14x30xbf16>
    %c6_46 = arith.constant 6 : index
    %c0_47 = arith.constant 0 : index
    %c0_48 = arith.constant 0 : index
    %53 = vector.load %arg3[%c6_46, %c0_47, %c0_48] : memref<8x30x224xbf16, #tpu.memory_space<vmem>>, vector<1x30x224xbf16>
    %54 = vector.shape_cast %53 : vector<1x30x224xbf16> to vector<30x224xbf16>
    %cst_49 = arith.constant dense<0.000000e+00> : vector<14x224xf32>
    %55 = tpu.matmul %52, %54, %cst_49 {dimension_numbers = #tpu.dot_dimension_numbers<[1], [0], [0], [1], [0, 0, 1, 1], [], []>} : vector<14x30xbf16>, vector<30x224xbf16>, vector<14x224xf32> -> vector<14x224xf32>
    %56 = arith.addf %48, %55 : vector<14x224xf32>
    %c7 = arith.constant 7 : index
    %c0_50 = arith.constant 0 : index
    %c0_51 = arith.constant 0 : index
    %57 = vector.load %arg2[%c7, %c0_50, %c0_51] : memref<8x14x60xbf16, #tpu.memory_space<vmem>>, vector<1x14x60xbf16>
    %58 = vector.shape_cast %57 : vector<1x14x60xbf16> to vector<14x60xbf16>
    %cst_52 = arith.constant dense<0.000000e+00> : vector<14x30xf32>
    %59 = tpu.matmul %58, %1, %cst_52 {dimension_numbers = #tpu.dot_dimension_numbers<[1], [0], [0], [1], [0, 0, 1, 1], [], []>} : vector<14x60xbf16>, vector<60x30xbf16>, vector<14x30xf32> -> vector<14x30xf32>
    %60 = arith.truncf %59 : vector<14x30xf32> to vector<14x30xbf16>
    %c7_53 = arith.constant 7 : index
    %c0_54 = arith.constant 0 : index
    %c0_55 = arith.constant 0 : index
    %61 = vector.load %arg3[%c7_53, %c0_54, %c0_55] : memref<8x30x224xbf16, #tpu.memory_space<vmem>>, vector<1x30x224xbf16>
    %62 = vector.shape_cast %61 : vector<1x30x224xbf16> to vector<30x224xbf16>
    %cst_56 = arith.constant dense<0.000000e+00> : vector<14x224xf32>
    %63 = tpu.matmul %60, %62, %cst_56 {dimension_numbers = #tpu.dot_dimension_numbers<[1], [0], [0], [1], [0, 0, 1, 1], [], []>} : vector<14x30xbf16>, vector<30x224xbf16>, vector<14x224xf32> -> vector<14x224xf32>
    %64 = arith.addf %56, %63 : vector<14x224xf32>
    %c0_57 = arith.constant 0 : index
    %c0_58 = arith.constant 0 : index
    %65 = vector.load %arg4[%c0_57, %c0_58] : memref<1x224xf32, #tpu.memory_space<vmem>>, vector<1x224xf32>
    %66 = vector.broadcast %65 : vector<1x224xf32> to vector<14x224xf32>
    %67 = arith.addf %64, %66 : vector<14x224xf32>
    %cst_59 = arith.constant 0.000000e+00 : f32
    %68 = vector.broadcast %cst_59 : f32 to vector<14x224xf32>
    %69 = arith.maximumf %67, %68 : vector<14x224xf32>
    %70 = arith.truncf %69 : vector<14x224xf32> to vector<14x224xbf16>
    %c0_60 = arith.constant 0 : index
    %c0_61 = arith.constant 0 : index
    %c0_62 = arith.constant 0 : index
    %71 = vector.load %arg5[%c0_60, %c0_61, %c0_62] : memref<3x6x14xbf16, #tpu.memory_space<vmem>>, vector<1x6x14xbf16>
    %72 = vector.shape_cast %71 : vector<1x6x14xbf16> to vector<6x14xbf16>
    %cst_63 = arith.constant dense<0.000000e+00> : vector<6x224xf32>
    %73 = tpu.matmul %72, %70, %cst_63 {dimension_numbers = #tpu.dot_dimension_numbers<[1], [0], [0], [1], [0, 0, 1, 1], [], []>} : vector<6x14xbf16>, vector<14x224xbf16>, vector<6x224xf32> -> vector<6x224xf32>
    %74 = arith.truncf %73 : vector<6x224xf32> to vector<6x224xbf16>
    %c0_64 = arith.constant 0 : index
    %c0_65 = arith.constant 0 : index
    %c0_66 = arith.constant 0 : index
    %75 = vector.load %arg6[%c0_64, %c0_65, %c0_66] : memref<3x224x192xbf16, #tpu.memory_space<vmem>>, vector<1x224x192xbf16>
    %76 = vector.shape_cast %75 : vector<1x224x192xbf16> to vector<224x192xbf16>
    %cst_67 = arith.constant dense<0.000000e+00> : vector<6x192xf32>
    %77 = tpu.matmul %74, %76, %cst_67 {dimension_numbers = #tpu.dot_dimension_numbers<[1], [0], [0], [1], [0, 0, 1, 1], [], []>} : vector<6x224xbf16>, vector<224x192xbf16>, vector<6x192xf32> -> vector<6x192xf32>
    %c1_68 = arith.constant 1 : index
    %c0_69 = arith.constant 0 : index
    %c0_70 = arith.constant 0 : index
    %78 = vector.load %arg5[%c1_68, %c0_69, %c0_70] : memref<3x6x14xbf16, #tpu.memory_space<vmem>>, vector<1x6x14xbf16>
    %79 = vector.shape_cast %78 : vector<1x6x14xbf16> to vector<6x14xbf16>
    %cst_71 = arith.constant dense<0.000000e+00> : vector<6x224xf32>
    %80 = tpu.matmul %79, %70, %cst_71 {dimension_numbers = #tpu.dot_dimension_numbers<[1], [0], [0], [1], [0, 0, 1, 1], [], []>} : vector<6x14xbf16>, vector<14x224xbf16>, vector<6x224xf32> -> vector<6x224xf32>
    %81 = arith.truncf %80 : vector<6x224xf32> to vector<6x224xbf16>
    %c1_72 = arith.constant 1 : index
    %c0_73 = arith.constant 0 : index
    %c0_74 = arith.constant 0 : index
    %82 = vector.load %arg6[%c1_72, %c0_73, %c0_74] : memref<3x224x192xbf16, #tpu.memory_space<vmem>>, vector<1x224x192xbf16>
    %83 = vector.shape_cast %82 : vector<1x224x192xbf16> to vector<224x192xbf16>
    %cst_75 = arith.constant dense<0.000000e+00> : vector<6x192xf32>
    %84 = tpu.matmul %81, %83, %cst_75 {dimension_numbers = #tpu.dot_dimension_numbers<[1], [0], [0], [1], [0, 0, 1, 1], [], []>} : vector<6x224xbf16>, vector<224x192xbf16>, vector<6x192xf32> -> vector<6x192xf32>
    %85 = arith.addf %77, %84 : vector<6x192xf32>
    %c2_76 = arith.constant 2 : index
    %c0_77 = arith.constant 0 : index
    %c0_78 = arith.constant 0 : index
    %86 = vector.load %arg5[%c2_76, %c0_77, %c0_78] : memref<3x6x14xbf16, #tpu.memory_space<vmem>>, vector<1x6x14xbf16>
    %87 = vector.shape_cast %86 : vector<1x6x14xbf16> to vector<6x14xbf16>
    %cst_79 = arith.constant dense<0.000000e+00> : vector<6x224xf32>
    %88 = tpu.matmul %87, %70, %cst_79 {dimension_numbers = #tpu.dot_dimension_numbers<[1], [0], [0], [1], [0, 0, 1, 1], [], []>} : vector<6x14xbf16>, vector<14x224xbf16>, vector<6x224xf32> -> vector<6x224xf32>
    %89 = arith.truncf %88 : vector<6x224xf32> to vector<6x224xbf16>
    %c2_80 = arith.constant 2 : index
    %c0_81 = arith.constant 0 : index
    %c0_82 = arith.constant 0 : index
    %90 = vector.load %arg6[%c2_80, %c0_81, %c0_82] : memref<3x224x192xbf16, #tpu.memory_space<vmem>>, vector<1x224x192xbf16>
    %91 = vector.shape_cast %90 : vector<1x224x192xbf16> to vector<224x192xbf16>
    %cst_83 = arith.constant dense<0.000000e+00> : vector<6x192xf32>
    %92 = tpu.matmul %89, %91, %cst_83 {dimension_numbers = #tpu.dot_dimension_numbers<[1], [0], [0], [1], [0, 0, 1, 1], [], []>} : vector<6x224xbf16>, vector<224x192xbf16>, vector<6x192xf32> -> vector<6x192xf32>
    %93 = arith.addf %85, %92 : vector<6x192xf32>
    %c0_84 = arith.constant 0 : index
    %c0_85 = arith.constant 0 : index
    %94 = vector.load %arg7[%c0_84, %c0_85] : memref<1x192xf32, #tpu.memory_space<vmem>>, vector<1x192xf32>
    %95 = vector.broadcast %94 : vector<1x192xf32> to vector<6x192xf32>
    %96 = arith.addf %93, %95 : vector<6x192xf32>
    %cst_86 = arith.constant 0.000000e+00 : f32
    %97 = vector.broadcast %cst_86 : f32 to vector<6x192xf32>
    %98 = arith.maximumf %96, %97 : vector<6x192xf32>
    %99 = arith.truncf %98 : vector<6x192xf32> to vector<6x192xbf16>
    %c0_87 = arith.constant 0 : index
    %c0_88 = arith.constant 0 : index
    %c0_89 = arith.constant 0 : index
    %100 = vector.load %arg8[%c0_87, %c0_88, %c0_89] : memref<3x6x6xbf16, #tpu.memory_space<vmem>>, vector<1x6x6xbf16>
    %101 = vector.shape_cast %100 : vector<1x6x6xbf16> to vector<6x6xbf16>
    %cst_90 = arith.constant dense<0.000000e+00> : vector<6x192xf32>
    %102 = tpu.matmul %101, %99, %cst_90 {dimension_numbers = #tpu.dot_dimension_numbers<[1], [0], [0], [1], [0, 0, 1, 1], [], []>} : vector<6x6xbf16>, vector<6x192xbf16>, vector<6x192xf32> -> vector<6x192xf32>
    %103 = arith.truncf %102 : vector<6x192xf32> to vector<6x192xbf16>
    %c0_91 = arith.constant 0 : index
    %c0_92 = arith.constant 0 : index
    %c0_93 = arith.constant 0 : index
    %104 = vector.load %arg9[%c0_91, %c0_92, %c0_93] : memref<3x192x384xbf16, #tpu.memory_space<vmem>>, vector<1x192x384xbf16>
    %105 = vector.shape_cast %104 : vector<1x192x384xbf16> to vector<192x384xbf16>
    %cst_94 = arith.constant dense<0.000000e+00> : vector<6x384xf32>
    %106 = tpu.matmul %103, %105, %cst_94 {dimension_numbers = #tpu.dot_dimension_numbers<[1], [0], [0], [1], [0, 0, 1, 1], [], []>} : vector<6x192xbf16>, vector<192x384xbf16>, vector<6x384xf32> -> vector<6x384xf32>
    %c1_95 = arith.constant 1 : index
    %c0_96 = arith.constant 0 : index
    %c0_97 = arith.constant 0 : index
    %107 = vector.load %arg8[%c1_95, %c0_96, %c0_97] : memref<3x6x6xbf16, #tpu.memory_space<vmem>>, vector<1x6x6xbf16>
    %108 = vector.shape_cast %107 : vector<1x6x6xbf16> to vector<6x6xbf16>
    %cst_98 = arith.constant dense<0.000000e+00> : vector<6x192xf32>
    %109 = tpu.matmul %108, %99, %cst_98 {dimension_numbers = #tpu.dot_dimension_numbers<[1], [0], [0], [1], [0, 0, 1, 1], [], []>} : vector<6x6xbf16>, vector<6x192xbf16>, vector<6x192xf32> -> vector<6x192xf32>
    %110 = arith.truncf %109 : vector<6x192xf32> to vector<6x192xbf16>
    %c1_99 = arith.constant 1 : index
    %c0_100 = arith.constant 0 : index
    %c0_101 = arith.constant 0 : index
    %111 = vector.load %arg9[%c1_99, %c0_100, %c0_101] : memref<3x192x384xbf16, #tpu.memory_space<vmem>>, vector<1x192x384xbf16>
    %112 = vector.shape_cast %111 : vector<1x192x384xbf16> to vector<192x384xbf16>
    %cst_102 = arith.constant dense<0.000000e+00> : vector<6x384xf32>
    %113 = tpu.matmul %110, %112, %cst_102 {dimension_numbers = #tpu.dot_dimension_numbers<[1], [0], [0], [1], [0, 0, 1, 1], [], []>} : vector<6x192xbf16>, vector<192x384xbf16>, vector<6x384xf32> -> vector<6x384xf32>
    %114 = arith.addf %106, %113 : vector<6x384xf32>
    %c2_103 = arith.constant 2 : index
    %c0_104 = arith.constant 0 : index
    %c0_105 = arith.constant 0 : index
    %115 = vector.load %arg8[%c2_103, %c0_104, %c0_105] : memref<3x6x6xbf16, #tpu.memory_space<vmem>>, vector<1x6x6xbf16>
    %116 = vector.shape_cast %115 : vector<1x6x6xbf16> to vector<6x6xbf16>
    %cst_106 = arith.constant dense<0.000000e+00> : vector<6x192xf32>
    %117 = tpu.matmul %116, %99, %cst_106 {dimension_numbers = #tpu.dot_dimension_numbers<[1], [0], [0], [1], [0, 0, 1, 1], [], []>} : vector<6x6xbf16>, vector<6x192xbf16>, vector<6x192xf32> -> vector<6x192xf32>
    %118 = arith.truncf %117 : vector<6x192xf32> to vector<6x192xbf16>
    %c2_107 = arith.constant 2 : index
    %c0_108 = arith.constant 0 : index
    %c0_109 = arith.constant 0 : index
    %119 = vector.load %arg9[%c2_107, %c0_108, %c0_109] : memref<3x192x384xbf16, #tpu.memory_space<vmem>>, vector<1x192x384xbf16>
    %120 = vector.shape_cast %119 : vector<1x192x384xbf16> to vector<192x384xbf16>
    %cst_110 = arith.constant dense<0.000000e+00> : vector<6x384xf32>
    %121 = tpu.matmul %118, %120, %cst_110 {dimension_numbers = #tpu.dot_dimension_numbers<[1], [0], [0], [1], [0, 0, 1, 1], [], []>} : vector<6x192xbf16>, vector<192x384xbf16>, vector<6x384xf32> -> vector<6x384xf32>
    %122 = arith.addf %114, %121 : vector<6x384xf32>
    %c0_111 = arith.constant 0 : index
    %c0_112 = arith.constant 0 : index
    %123 = vector.load %arg10[%c0_111, %c0_112] : memref<1x384xf32, #tpu.memory_space<vmem>>, vector<1x384xf32>
    %124 = vector.broadcast %123 : vector<1x384xf32> to vector<6x384xf32>
    %125 = arith.addf %122, %124 : vector<6x384xf32>
    %cst_113 = arith.constant 0.000000e+00 : f32
    %126 = vector.broadcast %cst_113 : f32 to vector<6x384xf32>
    %127 = arith.maximumf %125, %126 : vector<6x384xf32>
    %128 = arith.truncf %127 : vector<6x384xf32> to vector<6x384xbf16>
    %c0_114 = arith.constant 0 : index
    %c0_115 = arith.constant 0 : index
    %c0_116 = arith.constant 0 : index
    %129 = vector.load %arg11[%c0_114, %c0_115, %c0_116] : memref<3x2x6xbf16, #tpu.memory_space<vmem>>, vector<1x2x6xbf16>
    %130 = vector.shape_cast %129 : vector<1x2x6xbf16> to vector<2x6xbf16>
    %cst_117 = arith.constant dense<0.000000e+00> : vector<2x384xf32>
    %131 = tpu.matmul %130, %128, %cst_117 {dimension_numbers = #tpu.dot_dimension_numbers<[1], [0], [0], [1], [0, 0, 1, 1], [], []>} : vector<2x6xbf16>, vector<6x384xbf16>, vector<2x384xf32> -> vector<2x384xf32>
    %132 = arith.truncf %131 : vector<2x384xf32> to vector<2x384xbf16>
    %c0_118 = arith.constant 0 : index
    %c0_119 = arith.constant 0 : index
    %c0_120 = arith.constant 0 : index
    %133 = vector.load %arg12[%c0_118, %c0_119, %c0_120] : memref<3x384x32xbf16, #tpu.memory_space<vmem>>, vector<1x384x32xbf16>
    %134 = vector.shape_cast %133 : vector<1x384x32xbf16> to vector<384x32xbf16>
    %cst_121 = arith.constant dense<0.000000e+00> : vector<2x32xf32>
    %135 = tpu.matmul %132, %134, %cst_121 {dimension_numbers = #tpu.dot_dimension_numbers<[1], [0], [0], [1], [0, 0, 1, 1], [], []>} : vector<2x384xbf16>, vector<384x32xbf16>, vector<2x32xf32> -> vector<2x32xf32>
    %c1_122 = arith.constant 1 : index
    %c0_123 = arith.constant 0 : index
    %c0_124 = arith.constant 0 : index
    %136 = vector.load %arg11[%c1_122, %c0_123, %c0_124] : memref<3x2x6xbf16, #tpu.memory_space<vmem>>, vector<1x2x6xbf16>
    %137 = vector.shape_cast %136 : vector<1x2x6xbf16> to vector<2x6xbf16>
    %cst_125 = arith.constant dense<0.000000e+00> : vector<2x384xf32>
    %138 = tpu.matmul %137, %128, %cst_125 {dimension_numbers = #tpu.dot_dimension_numbers<[1], [0], [0], [1], [0, 0, 1, 1], [], []>} : vector<2x6xbf16>, vector<6x384xbf16>, vector<2x384xf32> -> vector<2x384xf32>
    %139 = arith.truncf %138 : vector<2x384xf32> to vector<2x384xbf16>
    %c1_126 = arith.constant 1 : index
    %c0_127 = arith.constant 0 : index
    %c0_128 = arith.constant 0 : index
    %140 = vector.load %arg12[%c1_126, %c0_127, %c0_128] : memref<3x384x32xbf16, #tpu.memory_space<vmem>>, vector<1x384x32xbf16>
    %141 = vector.shape_cast %140 : vector<1x384x32xbf16> to vector<384x32xbf16>
    %cst_129 = arith.constant dense<0.000000e+00> : vector<2x32xf32>
    %142 = tpu.matmul %139, %141, %cst_129 {dimension_numbers = #tpu.dot_dimension_numbers<[1], [0], [0], [1], [0, 0, 1, 1], [], []>} : vector<2x384xbf16>, vector<384x32xbf16>, vector<2x32xf32> -> vector<2x32xf32>
    %143 = arith.addf %135, %142 : vector<2x32xf32>
    %c2_130 = arith.constant 2 : index
    %c0_131 = arith.constant 0 : index
    %c0_132 = arith.constant 0 : index
    %144 = vector.load %arg11[%c2_130, %c0_131, %c0_132] : memref<3x2x6xbf16, #tpu.memory_space<vmem>>, vector<1x2x6xbf16>
    %145 = vector.shape_cast %144 : vector<1x2x6xbf16> to vector<2x6xbf16>
    %cst_133 = arith.constant dense<0.000000e+00> : vector<2x384xf32>
    %146 = tpu.matmul %145, %128, %cst_133 {dimension_numbers = #tpu.dot_dimension_numbers<[1], [0], [0], [1], [0, 0, 1, 1], [], []>} : vector<2x6xbf16>, vector<6x384xbf16>, vector<2x384xf32> -> vector<2x384xf32>
    %147 = arith.truncf %146 : vector<2x384xf32> to vector<2x384xbf16>
    %c2_134 = arith.constant 2 : index
    %c0_135 = arith.constant 0 : index
    %c0_136 = arith.constant 0 : index
    %148 = vector.load %arg12[%c2_134, %c0_135, %c0_136] : memref<3x384x32xbf16, #tpu.memory_space<vmem>>, vector<1x384x32xbf16>
    %149 = vector.shape_cast %148 : vector<1x384x32xbf16> to vector<384x32xbf16>
    %cst_137 = arith.constant dense<0.000000e+00> : vector<2x32xf32>
    %150 = tpu.matmul %147, %149, %cst_137 {dimension_numbers = #tpu.dot_dimension_numbers<[1], [0], [0], [1], [0, 0, 1, 1], [], []>} : vector<2x384xbf16>, vector<384x32xbf16>, vector<2x32xf32> -> vector<2x32xf32>
    %151 = arith.addf %143, %150 : vector<2x32xf32>
    %c0_138 = arith.constant 0 : index
    %c0_139 = arith.constant 0 : index
    %152 = vector.load %arg13[%c0_138, %c0_139] : memref<1x32xf32, #tpu.memory_space<vmem>>, vector<1x32xf32>
    %153 = vector.broadcast %152 : vector<1x32xf32> to vector<2x32xf32>
    %154 = arith.addf %151, %153 : vector<2x32xf32>
    %155 = arith.truncf %154 : vector<2x32xf32> to vector<2x32xbf16>
    %c0_140 = arith.constant 0 : index
    %c0_141 = arith.constant 0 : index
    %156 = vector.load %arg14[%c0_140, %c0_141] : memref<32x8xbf16, #tpu.memory_space<vmem>>, vector<32x8xbf16>
    %cst_142 = arith.constant dense<0.000000e+00> : vector<2x8xf32>
    %157 = tpu.matmul %155, %156, %cst_142 {dimension_numbers = #tpu.dot_dimension_numbers<[1], [0], [0], [1], [0, 0, 1, 1], [], []>} : vector<2x32xbf16>, vector<32x8xbf16>, vector<2x8xf32> -> vector<2x8xf32>
    %c0_143 = arith.constant 0 : index
    %c0_144 = arith.constant 0 : index
    %158 = vector.load %arg15[%c0_143, %c0_144] : memref<1x8xf32, #tpu.memory_space<vmem>>, vector<1x8xf32>
    %159 = vector.broadcast %158 : vector<1x8xf32> to vector<2x8xf32>
    %160 = arith.addf %157, %159 : vector<2x8xf32>
    %c0_145 = arith.constant 0 : index
    %c0_146 = arith.constant 0 : index
    %161 = vector.load %arg16[%c0_145, %c0_146] : memref<32x8xbf16, #tpu.memory_space<vmem>>, vector<32x8xbf16>
    %cst_147 = arith.constant dense<0.000000e+00> : vector<2x8xf32>
    %162 = tpu.matmul %155, %161, %cst_147 {dimension_numbers = #tpu.dot_dimension_numbers<[1], [0], [0], [1], [0, 0, 1, 1], [], []>} : vector<2x32xbf16>, vector<32x8xbf16>, vector<2x8xf32> -> vector<2x8xf32>
    %c0_148 = arith.constant 0 : index
    %c0_149 = arith.constant 0 : index
    %163 = vector.load %arg17[%c0_148, %c0_149] : memref<1x8xf32, #tpu.memory_space<vmem>>, vector<1x8xf32>
    %164 = vector.broadcast %163 : vector<1x8xf32> to vector<2x8xf32>
    %165 = arith.addf %162, %164 : vector<2x8xf32>
    %c0_150 = arith.constant 0 : index
    %c0_151 = arith.constant 0 : index
    %166 = vector.load %arg1[%c0_150, %c0_151] : memref<2x8xf32, #tpu.memory_space<vmem>>, vector<2x8xf32>
    %cst_152 = arith.constant 5.000000e-01 : f32
    %167 = vector.broadcast %cst_152 : f32 to vector<2x8xf32>
    %168 = arith.mulf %167, %165 : vector<2x8xf32>
    %169 = math.exp %168 : vector<2x8xf32>
    %170 = arith.mulf %166, %169 : vector<2x8xf32>
    %171 = arith.addf %170, %160 : vector<2x8xf32>
    %c0_153 = arith.constant 0 : index
    %c0_154 = arith.constant 0 : index
    %172 = vector.load %arg31[%c0_153, %c0_154] : memref<2x8xf32, #tpu.memory_space<vmem>>, vector<2x8xf32>
    tpu.vector_store %arg31[%c0_153, %c0_154], %160 {strides = array<i32>} : memref<2x8xf32, #tpu.memory_space<vmem>>, vector<2x8xf32>,
    %c0_155 = arith.constant 0 : index
    %c0_156 = arith.constant 0 : index
    %173 = vector.load %arg32[%c0_155, %c0_156] : memref<2x8xf32, #tpu.memory_space<vmem>>, vector<2x8xf32>
    tpu.vector_store %arg32[%c0_155, %c0_156], %165 {strides = array<i32>} : memref<2x8xf32, #tpu.memory_space<vmem>>, vector<2x8xf32>,
    %174 = arith.truncf %171 : vector<2x8xf32> to vector<2x8xbf16>
    %c0_157 = arith.constant 0 : index
    %c0_158 = arith.constant 0 : index
    %c0_159 = arith.constant 0 : index
    %175 = vector.load %arg18[%c0_157, %c0_158, %c0_159] : memref<3x8x384xbf16, #tpu.memory_space<vmem>>, vector<1x8x384xbf16>
    %176 = vector.shape_cast %175 : vector<1x8x384xbf16> to vector<8x384xbf16>
    %cst_160 = arith.constant dense<0.000000e+00> : vector<2x384xf32>
    %177 = tpu.matmul %174, %176, %cst_160 {dimension_numbers = #tpu.dot_dimension_numbers<[1], [0], [0], [1], [0, 0, 1, 1], [], []>} : vector<2x8xbf16>, vector<8x384xbf16>, vector<2x384xf32> -> vector<2x384xf32>
    %c0_161 = arith.constant 0 : index
    %c0_162 = arith.constant 0 : index
    %c0_163 = arith.constant 0 : index
    %178 = vector.load %arg19[%c0_161, %c0_162, %c0_163] : memref<3x1x384xf32, #tpu.memory_space<vmem>>, vector<1x1x384xf32>
    %179 = vector.shape_cast %178 : vector<1x1x384xf32> to vector<1x384xf32>
    %180 = vector.broadcast %179 : vector<1x384xf32> to vector<2x384xf32>
    %181 = arith.addf %177, %180 : vector<2x384xf32>
    %cst_164 = arith.constant 0.000000e+00 : f32
    %182 = vector.broadcast %cst_164 : f32 to vector<2x384xf32>
    %183 = arith.maximumf %181, %182 : vector<2x384xf32>
    %c0_165 = arith.constant 0 : index
    %c0_166 = arith.constant 0 : index
    %c0_167 = arith.constant 0 : index
    %184 = vector.load %arg20[%c0_165, %c0_166, %c0_167] : memref<3x6x2xbf16, #tpu.memory_space<vmem>>, vector<1x6x2xbf16>
    %185 = vector.shape_cast %184 : vector<1x6x2xbf16> to vector<6x2xbf16>
    %186 = arith.truncf %183 : vector<2x384xf32> to vector<2x384xbf16>
    %cst_168 = arith.constant dense<0.000000e+00> : vector<6x384xf32>
    %187 = tpu.matmul %185, %186, %cst_168 {dimension_numbers = #tpu.dot_dimension_numbers<[1], [0], [0], [1], [0, 0, 1, 1], [], []>} : vector<6x2xbf16>, vector<2x384xbf16>, vector<6x384xf32> -> vector<6x384xf32>
    %c1_169 = arith.constant 1 : index
    %c0_170 = arith.constant 0 : index
    %c0_171 = arith.constant 0 : index
    %188 = vector.load %arg18[%c1_169, %c0_170, %c0_171] : memref<3x8x384xbf16, #tpu.memory_space<vmem>>, vector<1x8x384xbf16>
    %189 = vector.shape_cast %188 : vector<1x8x384xbf16> to vector<8x384xbf16>
    %cst_172 = arith.constant dense<0.000000e+00> : vector<2x384xf32>
    %190 = tpu.matmul %174, %189, %cst_172 {dimension_numbers = #tpu.dot_dimension_numbers<[1], [0], [0], [1], [0, 0, 1, 1], [], []>} : vector<2x8xbf16>, vector<8x384xbf16>, vector<2x384xf32> -> vector<2x384xf32>
    %c1_173 = arith.constant 1 : index
    %c0_174 = arith.constant 0 : index
    %c0_175 = arith.constant 0 : index
    %191 = vector.load %arg19[%c1_173, %c0_174, %c0_175] : memref<3x1x384xf32, #tpu.memory_space<vmem>>, vector<1x1x384xf32>
    %192 = vector.shape_cast %191 : vector<1x1x384xf32> to vector<1x384xf32>
    %193 = vector.broadcast %192 : vector<1x384xf32> to vector<2x384xf32>
    %194 = arith.addf %190, %193 : vector<2x384xf32>
    %cst_176 = arith.constant 0.000000e+00 : f32
    %195 = vector.broadcast %cst_176 : f32 to vector<2x384xf32>
    %196 = arith.maximumf %194, %195 : vector<2x384xf32>
    %c1_177 = arith.constant 1 : index
    %c0_178 = arith.constant 0 : index
    %c0_179 = arith.constant 0 : index
    %197 = vector.load %arg20[%c1_177, %c0_178, %c0_179] : memref<3x6x2xbf16, #tpu.memory_space<vmem>>, vector<1x6x2xbf16>
    %198 = vector.shape_cast %197 : vector<1x6x2xbf16> to vector<6x2xbf16>
    %199 = arith.truncf %196 : vector<2x384xf32> to vector<2x384xbf16>
    %cst_180 = arith.constant dense<0.000000e+00> : vector<6x384xf32>
    %200 = tpu.matmul %198, %199, %cst_180 {dimension_numbers = #tpu.dot_dimension_numbers<[1], [0], [0], [1], [0, 0, 1, 1], [], []>} : vector<6x2xbf16>, vector<2x384xbf16>, vector<6x384xf32> -> vector<6x384xf32>
    %201 = arith.addf %187, %200 : vector<6x384xf32>
    %c2_181 = arith.constant 2 : index
    %c0_182 = arith.constant 0 : index
    %c0_183 = arith.constant 0 : index
    %202 = vector.load %arg18[%c2_181, %c0_182, %c0_183] : memref<3x8x384xbf16, #tpu.memory_space<vmem>>, vector<1x8x384xbf16>
    %203 = vector.shape_cast %202 : vector<1x8x384xbf16> to vector<8x384xbf16>
    %cst_184 = arith.constant dense<0.000000e+00> : vector<2x384xf32>
    %204 = tpu.matmul %174, %203, %cst_184 {dimension_numbers = #tpu.dot_dimension_numbers<[1], [0], [0], [1], [0, 0, 1, 1], [], []>} : vector<2x8xbf16>, vector<8x384xbf16>, vector<2x384xf32> -> vector<2x384xf32>
    %c2_185 = arith.constant 2 : index
    %c0_186 = arith.constant 0 : index
    %c0_187 = arith.constant 0 : index
    %205 = vector.load %arg19[%c2_185, %c0_186, %c0_187] : memref<3x1x384xf32, #tpu.memory_space<vmem>>, vector<1x1x384xf32>
    %206 = vector.shape_cast %205 : vector<1x1x384xf32> to vector<1x384xf32>
    %207 = vector.broadcast %206 : vector<1x384xf32> to vector<2x384xf32>
    %208 = arith.addf %204, %207 : vector<2x384xf32>
    %cst_188 = arith.constant 0.000000e+00 : f32
    %209 = vector.broadcast %cst_188 : f32 to vector<2x384xf32>
    %210 = arith.maximumf %208, %209 : vector<2x384xf32>
    %c2_189 = arith.constant 2 : index
    %c0_190 = arith.constant 0 : index
    %c0_191 = arith.constant 0 : index
    %211 = vector.load %arg20[%c2_189, %c0_190, %c0_191] : memref<3x6x2xbf16, #tpu.memory_space<vmem>>, vector<1x6x2xbf16>
    %212 = vector.shape_cast %211 : vector<1x6x2xbf16> to vector<6x2xbf16>
    %213 = arith.truncf %210 : vector<2x384xf32> to vector<2x384xbf16>
    %cst_192 = arith.constant dense<0.000000e+00> : vector<6x384xf32>
    %214 = tpu.matmul %212, %213, %cst_192 {dimension_numbers = #tpu.dot_dimension_numbers<[1], [0], [0], [1], [0, 0, 1, 1], [], []>} : vector<6x2xbf16>, vector<2x384xbf16>, vector<6x384xf32> -> vector<6x384xf32>
    %215 = arith.addf %201, %214 : vector<6x384xf32>
    %216 = arith.truncf %215 : vector<6x384xf32> to vector<6x384xbf16>
    %c0_193 = arith.constant 0 : index
    %c0_194 = arith.constant 0 : index
    %c0_195 = arith.constant 0 : index
    %217 = vector.load %arg21[%c0_193, %c0_194, %c0_195] : memref<3x6x6xbf16, #tpu.memory_space<vmem>>, vector<1x6x6xbf16>
    %218 = vector.shape_cast %217 : vector<1x6x6xbf16> to vector<6x6xbf16>
    %cst_196 = arith.constant dense<0.000000e+00> : vector<6x384xf32>
    %219 = tpu.matmul %218, %216, %cst_196 {dimension_numbers = #tpu.dot_dimension_numbers<[1], [0], [0], [1], [0, 0, 1, 1], [], []>} : vector<6x6xbf16>, vector<6x384xbf16>, vector<6x384xf32> -> vector<6x384xf32>
    %220 = arith.truncf %219 : vector<6x384xf32> to vector<6x384xbf16>
    %c0_197 = arith.constant 0 : index
    %c0_198 = arith.constant 0 : index
    %c0_199 = arith.constant 0 : index
    %221 = vector.load %arg22[%c0_197, %c0_198, %c0_199] : memref<3x384x192xbf16, #tpu.memory_space<vmem>>, vector<1x384x192xbf16>
    %222 = vector.shape_cast %221 : vector<1x384x192xbf16> to vector<384x192xbf16>
    %cst_200 = arith.constant dense<0.000000e+00> : vector<6x192xf32>
    %223 = tpu.matmul %220, %222, %cst_200 {dimension_numbers = #tpu.dot_dimension_numbers<[1], [0], [0], [1], [0, 0, 1, 1], [], []>} : vector<6x384xbf16>, vector<384x192xbf16>, vector<6x192xf32> -> vector<6x192xf32>
    %c1_201 = arith.constant 1 : index
    %c0_202 = arith.constant 0 : index
    %c0_203 = arith.constant 0 : index
    %224 = vector.load %arg21[%c1_201, %c0_202, %c0_203] : memref<3x6x6xbf16, #tpu.memory_space<vmem>>, vector<1x6x6xbf16>
    %225 = vector.shape_cast %224 : vector<1x6x6xbf16> to vector<6x6xbf16>
    %cst_204 = arith.constant dense<0.000000e+00> : vector<6x384xf32>
    %226 = tpu.matmul %225, %216, %cst_204 {dimension_numbers = #tpu.dot_dimension_numbers<[1], [0], [0], [1], [0, 0, 1, 1], [], []>} : vector<6x6xbf16>, vector<6x384xbf16>, vector<6x384xf32> -> vector<6x384xf32>
    %227 = arith.truncf %226 : vector<6x384xf32> to vector<6x384xbf16>
    %c1_205 = arith.constant 1 : index
    %c0_206 = arith.constant 0 : index
    %c0_207 = arith.constant 0 : index
    %228 = vector.load %arg22[%c1_205, %c0_206, %c0_207] : memref<3x384x192xbf16, #tpu.memory_space<vmem>>, vector<1x384x192xbf16>
    %229 = vector.shape_cast %228 : vector<1x384x192xbf16> to vector<384x192xbf16>
    %cst_208 = arith.constant dense<0.000000e+00> : vector<6x192xf32>
    %230 = tpu.matmul %227, %229, %cst_208 {dimension_numbers = #tpu.dot_dimension_numbers<[1], [0], [0], [1], [0, 0, 1, 1], [], []>} : vector<6x384xbf16>, vector<384x192xbf16>, vector<6x192xf32> -> vector<6x192xf32>
    %231 = arith.addf %223, %230 : vector<6x192xf32>
    %c2_209 = arith.constant 2 : index
    %c0_210 = arith.constant 0 : index
    %c0_211 = arith.constant 0 : index
    %232 = vector.load %arg21[%c2_209, %c0_210, %c0_211] : memref<3x6x6xbf16, #tpu.memory_space<vmem>>, vector<1x6x6xbf16>
    %233 = vector.shape_cast %232 : vector<1x6x6xbf16> to vector<6x6xbf16>
    %cst_212 = arith.constant dense<0.000000e+00> : vector<6x384xf32>
    %234 = tpu.matmul %233, %216, %cst_212 {dimension_numbers = #tpu.dot_dimension_numbers<[1], [0], [0], [1], [0, 0, 1, 1], [], []>} : vector<6x6xbf16>, vector<6x384xbf16>, vector<6x384xf32> -> vector<6x384xf32>
    %235 = arith.truncf %234 : vector<6x384xf32> to vector<6x384xbf16>
    %c2_213 = arith.constant 2 : index
    %c0_214 = arith.constant 0 : index
    %c0_215 = arith.constant 0 : index
    %236 = vector.load %arg22[%c2_213, %c0_214, %c0_215] : memref<3x384x192xbf16, #tpu.memory_space<vmem>>, vector<1x384x192xbf16>
    %237 = vector.shape_cast %236 : vector<1x384x192xbf16> to vector<384x192xbf16>
    %cst_216 = arith.constant dense<0.000000e+00> : vector<6x192xf32>
    %238 = tpu.matmul %235, %237, %cst_216 {dimension_numbers = #tpu.dot_dimension_numbers<[1], [0], [0], [1], [0, 0, 1, 1], [], []>} : vector<6x384xbf16>, vector<384x192xbf16>, vector<6x192xf32> -> vector<6x192xf32>
    %239 = arith.addf %231, %238 : vector<6x192xf32>
    %c0_217 = arith.constant 0 : index
    %c0_218 = arith.constant 0 : index
    %240 = vector.load %arg23[%c0_217, %c0_218] : memref<1x192xf32, #tpu.memory_space<vmem>>, vector<1x192xf32>
    %241 = vector.broadcast %240 : vector<1x192xf32> to vector<6x192xf32>
    %242 = arith.addf %239, %241 : vector<6x192xf32>
    %cst_219 = arith.constant 0.000000e+00 : f32
    %243 = vector.broadcast %cst_219 : f32 to vector<6x192xf32>
    %244 = arith.maximumf %242, %243 : vector<6x192xf32>
    %245 = arith.truncf %244 : vector<6x192xf32> to vector<6x192xbf16>
    %c0_220 = arith.constant 0 : index
    %c0_221 = arith.constant 0 : index
    %c0_222 = arith.constant 0 : index
    %246 = vector.load %arg24[%c0_220, %c0_221, %c0_222] : memref<3x14x6xbf16, #tpu.memory_space<vmem>>, vector<1x14x6xbf16>
    %247 = vector.shape_cast %246 : vector<1x14x6xbf16> to vector<14x6xbf16>
    %cst_223 = arith.constant dense<0.000000e+00> : vector<14x192xf32>
    %248 = tpu.matmul %247, %245, %cst_223 {dimension_numbers = #tpu.dot_dimension_numbers<[1], [0], [0], [1], [0, 0, 1, 1], [], []>} : vector<14x6xbf16>, vector<6x192xbf16>, vector<14x192xf32> -> vector<14x192xf32>
    %249 = arith.truncf %248 : vector<14x192xf32> to vector<14x192xbf16>
    %c0_224 = arith.constant 0 : index
    %c0_225 = arith.constant 0 : index
    %c0_226 = arith.constant 0 : index
    %250 = vector.load %arg25[%c0_224, %c0_225, %c0_226] : memref<3x192x224xbf16, #tpu.memory_space<vmem>>, vector<1x192x224xbf16>
    %251 = vector.shape_cast %250 : vector<1x192x224xbf16> to vector<192x224xbf16>
    %cst_227 = arith.constant dense<0.000000e+00> : vector<14x224xf32>
    %252 = tpu.matmul %249, %251, %cst_227 {dimension_numbers = #tpu.dot_dimension_numbers<[1], [0], [0], [1], [0, 0, 1, 1], [], []>} : vector<14x192xbf16>, vector<192x224xbf16>, vector<14x224xf32> -> vector<14x224xf32>
    %c1_228 = arith.constant 1 : index
    %c0_229 = arith.constant 0 : index
    %c0_230 = arith.constant 0 : index
    %253 = vector.load %arg24[%c1_228, %c0_229, %c0_230] : memref<3x14x6xbf16, #tpu.memory_space<vmem>>, vector<1x14x6xbf16>
    %254 = vector.shape_cast %253 : vector<1x14x6xbf16> to vector<14x6xbf16>
    %cst_231 = arith.constant dense<0.000000e+00> : vector<14x192xf32>
    %255 = tpu.matmul %254, %245, %cst_231 {dimension_numbers = #tpu.dot_dimension_numbers<[1], [0], [0], [1], [0, 0, 1, 1], [], []>} : vector<14x6xbf16>, vector<6x192xbf16>, vector<14x192xf32> -> vector<14x192xf32>
    %256 = arith.truncf %255 : vector<14x192xf32> to vector<14x192xbf16>
    %c1_232 = arith.constant 1 : index
    %c0_233 = arith.constant 0 : index
    %c0_234 = arith.constant 0 : index
    %257 = vector.load %arg25[%c1_232, %c0_233, %c0_234] : memref<3x192x224xbf16, #tpu.memory_space<vmem>>, vector<1x192x224xbf16>
    %258 = vector.shape_cast %257 : vector<1x192x224xbf16> to vector<192x224xbf16>
    %cst_235 = arith.constant dense<0.000000e+00> : vector<14x224xf32>
    %259 = tpu.matmul %256, %258, %cst_235 {dimension_numbers = #tpu.dot_dimension_numbers<[1], [0], [0], [1], [0, 0, 1, 1], [], []>} : vector<14x192xbf16>, vector<192x224xbf16>, vector<14x224xf32> -> vector<14x224xf32>
    %260 = arith.addf %252, %259 : vector<14x224xf32>
    %c2_236 = arith.constant 2 : index
    %c0_237 = arith.constant 0 : index
    %c0_238 = arith.constant 0 : index
    %261 = vector.load %arg24[%c2_236, %c0_237, %c0_238] : memref<3x14x6xbf16, #tpu.memory_space<vmem>>, vector<1x14x6xbf16>
    %262 = vector.shape_cast %261 : vector<1x14x6xbf16> to vector<14x6xbf16>
    %cst_239 = arith.constant dense<0.000000e+00> : vector<14x192xf32>
    %263 = tpu.matmul %262, %245, %cst_239 {dimension_numbers = #tpu.dot_dimension_numbers<[1], [0], [0], [1], [0, 0, 1, 1], [], []>} : vector<14x6xbf16>, vector<6x192xbf16>, vector<14x192xf32> -> vector<14x192xf32>
    %264 = arith.truncf %263 : vector<14x192xf32> to vector<14x192xbf16>
    %c2_240 = arith.constant 2 : index
    %c0_241 = arith.constant 0 : index
    %c0_242 = arith.constant 0 : index
    %265 = vector.load %arg25[%c2_240, %c0_241, %c0_242] : memref<3x192x224xbf16, #tpu.memory_space<vmem>>, vector<1x192x224xbf16>
    %266 = vector.shape_cast %265 : vector<1x192x224xbf16> to vector<192x224xbf16>
    %cst_243 = arith.constant dense<0.000000e+00> : vector<14x224xf32>
    %267 = tpu.matmul %264, %266, %cst_243 {dimension_numbers = #tpu.dot_dimension_numbers<[1], [0], [0], [1], [0, 0, 1, 1], [], []>} : vector<14x192xbf16>, vector<192x224xbf16>, vector<14x224xf32> -> vector<14x224xf32>
    %268 = arith.addf %260, %267 : vector<14x224xf32>
    %c0_244 = arith.constant 0 : index
    %c0_245 = arith.constant 0 : index
    %269 = vector.load %arg26[%c0_244, %c0_245] : memref<1x224xf32, #tpu.memory_space<vmem>>, vector<1x224xf32>
    %270 = vector.broadcast %269 : vector<1x224xf32> to vector<14x224xf32>
    %271 = arith.addf %268, %270 : vector<14x224xf32>
    %cst_246 = arith.constant 0.000000e+00 : f32
    %272 = vector.broadcast %cst_246 : f32 to vector<14x224xf32>
    %273 = arith.maximumf %271, %272 : vector<14x224xf32>
    %274 = arith.truncf %273 : vector<14x224xf32> to vector<14x224xbf16>
    %c0_247 = arith.constant 0 : index
    %c0_248 = arith.constant 0 : index
    %c0_249 = arith.constant 0 : index
    %275 = vector.load %arg27[%c0_247, %c0_248, %c0_249] : memref<8x60x14xbf16, #tpu.memory_space<vmem>>, vector<1x60x14xbf16>
    %276 = vector.shape_cast %275 : vector<1x60x14xbf16> to vector<60x14xbf16>
    %cst_250 = arith.constant dense<0.000000e+00> : vector<60x224xf32>
    %277 = tpu.matmul %276, %274, %cst_250 {dimension_numbers = #tpu.dot_dimension_numbers<[1], [0], [0], [1], [0, 0, 1, 1], [], []>} : vector<60x14xbf16>, vector<14x224xbf16>, vector<60x224xf32> -> vector<60x224xf32>
    %278 = arith.truncf %277 : vector<60x224xf32> to vector<60x224xbf16>
    %c0_251 = arith.constant 0 : index
    %c0_252 = arith.constant 0 : index
    %c0_253 = arith.constant 0 : index
    %279 = vector.load %arg28[%c0_251, %c0_252, %c0_253] : memref<8x224x30xbf16, #tpu.memory_space<vmem>>, vector<1x224x30xbf16>
    %280 = vector.shape_cast %279 : vector<1x224x30xbf16> to vector<224x30xbf16>
    %cst_254 = arith.constant dense<0.000000e+00> : vector<60x30xf32>
    %281 = tpu.matmul %278, %280, %cst_254 {dimension_numbers = #tpu.dot_dimension_numbers<[1], [0], [0], [1], [0, 0, 1, 1], [], []>} : vector<60x224xbf16>, vector<224x30xbf16>, vector<60x30xf32> -> vector<60x30xf32>
    %c1_255 = arith.constant 1 : index
    %c0_256 = arith.constant 0 : index
    %c0_257 = arith.constant 0 : index
    %282 = vector.load %arg27[%c1_255, %c0_256, %c0_257] : memref<8x60x14xbf16, #tpu.memory_space<vmem>>, vector<1x60x14xbf16>
    %283 = vector.shape_cast %282 : vector<1x60x14xbf16> to vector<60x14xbf16>
    %cst_258 = arith.constant dense<0.000000e+00> : vector<60x224xf32>
    %284 = tpu.matmul %283, %274, %cst_258 {dimension_numbers = #tpu.dot_dimension_numbers<[1], [0], [0], [1], [0, 0, 1, 1], [], []>} : vector<60x14xbf16>, vector<14x224xbf16>, vector<60x224xf32> -> vector<60x224xf32>
    %285 = arith.truncf %284 : vector<60x224xf32> to vector<60x224xbf16>
    %c1_259 = arith.constant 1 : index
    %c0_260 = arith.constant 0 : index
    %c0_261 = arith.constant 0 : index
    %286 = vector.load %arg28[%c1_259, %c0_260, %c0_261] : memref<8x224x30xbf16, #tpu.memory_space<vmem>>, vector<1x224x30xbf16>
    %287 = vector.shape_cast %286 : vector<1x224x30xbf16> to vector<224x30xbf16>
    %cst_262 = arith.constant dense<0.000000e+00> : vector<60x30xf32>
    %288 = tpu.matmul %285, %287, %cst_262 {dimension_numbers = #tpu.dot_dimension_numbers<[1], [0], [0], [1], [0, 0, 1, 1], [], []>} : vector<60x224xbf16>, vector<224x30xbf16>, vector<60x30xf32> -> vector<60x30xf32>
    %289 = arith.addf %281, %288 : vector<60x30xf32>
    %c2_263 = arith.constant 2 : index
    %c0_264 = arith.constant 0 : index
    %c0_265 = arith.constant 0 : index
    %290 = vector.load %arg27[%c2_263, %c0_264, %c0_265] : memref<8x60x14xbf16, #tpu.memory_space<vmem>>, vector<1x60x14xbf16>
    %291 = vector.shape_cast %290 : vector<1x60x14xbf16> to vector<60x14xbf16>
    %cst_266 = arith.constant dense<0.000000e+00> : vector<60x224xf32>
    %292 = tpu.matmul %291, %274, %cst_266 {dimension_numbers = #tpu.dot_dimension_numbers<[1], [0], [0], [1], [0, 0, 1, 1], [], []>} : vector<60x14xbf16>, vector<14x224xbf16>, vector<60x224xf32> -> vector<60x224xf32>
    %293 = arith.truncf %292 : vector<60x224xf32> to vector<60x224xbf16>
    %c2_267 = arith.constant 2 : index
    %c0_268 = arith.constant 0 : index
    %c0_269 = arith.constant 0 : index
    %294 = vector.load %arg28[%c2_267, %c0_268, %c0_269] : memref<8x224x30xbf16, #tpu.memory_space<vmem>>, vector<1x224x30xbf16>
    %295 = vector.shape_cast %294 : vector<1x224x30xbf16> to vector<224x30xbf16>
    %cst_270 = arith.constant dense<0.000000e+00> : vector<60x30xf32>
    %296 = tpu.matmul %293, %295, %cst_270 {dimension_numbers = #tpu.dot_dimension_numbers<[1], [0], [0], [1], [0, 0, 1, 1], [], []>} : vector<60x224xbf16>, vector<224x30xbf16>, vector<60x30xf32> -> vector<60x30xf32>
    %297 = arith.addf %289, %296 : vector<60x30xf32>
    %c3_271 = arith.constant 3 : index
    %c0_272 = arith.constant 0 : index
    %c0_273 = arith.constant 0 : index
    %298 = vector.load %arg27[%c3_271, %c0_272, %c0_273] : memref<8x60x14xbf16, #tpu.memory_space<vmem>>, vector<1x60x14xbf16>
    %299 = vector.shape_cast %298 : vector<1x60x14xbf16> to vector<60x14xbf16>
    %cst_274 = arith.constant dense<0.000000e+00> : vector<60x224xf32>
    %300 = tpu.matmul %299, %274, %cst_274 {dimension_numbers = #tpu.dot_dimension_numbers<[1], [0], [0], [1], [0, 0, 1, 1], [], []>} : vector<60x14xbf16>, vector<14x224xbf16>, vector<60x224xf32> -> vector<60x224xf32>
    %301 = arith.truncf %300 : vector<60x224xf32> to vector<60x224xbf16>
    %c3_275 = arith.constant 3 : index
    %c0_276 = arith.constant 0 : index
    %c0_277 = arith.constant 0 : index
    %302 = vector.load %arg28[%c3_275, %c0_276, %c0_277] : memref<8x224x30xbf16, #tpu.memory_space<vmem>>, vector<1x224x30xbf16>
    %303 = vector.shape_cast %302 : vector<1x224x30xbf16> to vector<224x30xbf16>
    %cst_278 = arith.constant dense<0.000000e+00> : vector<60x30xf32>
    %304 = tpu.matmul %301, %303, %cst_278 {dimension_numbers = #tpu.dot_dimension_numbers<[1], [0], [0], [1], [0, 0, 1, 1], [], []>} : vector<60x224xbf16>, vector<224x30xbf16>, vector<60x30xf32> -> vector<60x30xf32>
    %305 = arith.addf %297, %304 : vector<60x30xf32>
    %c4_279 = arith.constant 4 : index
    %c0_280 = arith.constant 0 : index
    %c0_281 = arith.constant 0 : index
    %306 = vector.load %arg27[%c4_279, %c0_280, %c0_281] : memref<8x60x14xbf16, #tpu.memory_space<vmem>>, vector<1x60x14xbf16>
    %307 = vector.shape_cast %306 : vector<1x60x14xbf16> to vector<60x14xbf16>
    %cst_282 = arith.constant dense<0.000000e+00> : vector<60x224xf32>
    %308 = tpu.matmul %307, %274, %cst_282 {dimension_numbers = #tpu.dot_dimension_numbers<[1], [0], [0], [1], [0, 0, 1, 1], [], []>} : vector<60x14xbf16>, vector<14x224xbf16>, vector<60x224xf32> -> vector<60x224xf32>
    %309 = arith.truncf %308 : vector<60x224xf32> to vector<60x224xbf16>
    %c4_283 = arith.constant 4 : index
    %c0_284 = arith.constant 0 : index
    %c0_285 = arith.constant 0 : index
    %310 = vector.load %arg28[%c4_283, %c0_284, %c0_285] : memref<8x224x30xbf16, #tpu.memory_space<vmem>>, vector<1x224x30xbf16>
    %311 = vector.shape_cast %310 : vector<1x224x30xbf16> to vector<224x30xbf16>
    %cst_286 = arith.constant dense<0.000000e+00> : vector<60x30xf32>
    %312 = tpu.matmul %309, %311, %cst_286 {dimension_numbers = #tpu.dot_dimension_numbers<[1], [0], [0], [1], [0, 0, 1, 1], [], []>} : vector<60x224xbf16>, vector<224x30xbf16>, vector<60x30xf32> -> vector<60x30xf32>
    %313 = arith.addf %305, %312 : vector<60x30xf32>
    %c5_287 = arith.constant 5 : index
    %c0_288 = arith.constant 0 : index
    %c0_289 = arith.constant 0 : index
    %314 = vector.load %arg27[%c5_287, %c0_288, %c0_289] : memref<8x60x14xbf16, #tpu.memory_space<vmem>>, vector<1x60x14xbf16>
    %315 = vector.shape_cast %314 : vector<1x60x14xbf16> to vector<60x14xbf16>
    %cst_290 = arith.constant dense<0.000000e+00> : vector<60x224xf32>
    %316 = tpu.matmul %315, %274, %cst_290 {dimension_numbers = #tpu.dot_dimension_numbers<[1], [0], [0], [1], [0, 0, 1, 1], [], []>} : vector<60x14xbf16>, vector<14x224xbf16>, vector<60x224xf32> -> vector<60x224xf32>
    %317 = arith.truncf %316 : vector<60x224xf32> to vector<60x224xbf16>
    %c5_291 = arith.constant 5 : index
    %c0_292 = arith.constant 0 : index
    %c0_293 = arith.constant 0 : index
    %318 = vector.load %arg28[%c5_291, %c0_292, %c0_293] : memref<8x224x30xbf16, #tpu.memory_space<vmem>>, vector<1x224x30xbf16>
    %319 = vector.shape_cast %318 : vector<1x224x30xbf16> to vector<224x30xbf16>
    %cst_294 = arith.constant dense<0.000000e+00> : vector<60x30xf32>
    %320 = tpu.matmul %317, %319, %cst_294 {dimension_numbers = #tpu.dot_dimension_numbers<[1], [0], [0], [1], [0, 0, 1, 1], [], []>} : vector<60x224xbf16>, vector<224x30xbf16>, vector<60x30xf32> -> vector<60x30xf32>
    %321 = arith.addf %313, %320 : vector<60x30xf32>
    %c6_295 = arith.constant 6 : index
    %c0_296 = arith.constant 0 : index
    %c0_297 = arith.constant 0 : index
    %322 = vector.load %arg27[%c6_295, %c0_296, %c0_297] : memref<8x60x14xbf16, #tpu.memory_space<vmem>>, vector<1x60x14xbf16>
    %323 = vector.shape_cast %322 : vector<1x60x14xbf16> to vector<60x14xbf16>
    %cst_298 = arith.constant dense<0.000000e+00> : vector<60x224xf32>
    %324 = tpu.matmul %323, %274, %cst_298 {dimension_numbers = #tpu.dot_dimension_numbers<[1], [0], [0], [1], [0, 0, 1, 1], [], []>} : vector<60x14xbf16>, vector<14x224xbf16>, vector<60x224xf32> -> vector<60x224xf32>
    %325 = arith.truncf %324 : vector<60x224xf32> to vector<60x224xbf16>
    %c6_299 = arith.constant 6 : index
    %c0_300 = arith.constant 0 : index
    %c0_301 = arith.constant 0 : index
    %326 = vector.load %arg28[%c6_299, %c0_300, %c0_301] : memref<8x224x30xbf16, #tpu.memory_space<vmem>>, vector<1x224x30xbf16>
    %327 = vector.shape_cast %326 : vector<1x224x30xbf16> to vector<224x30xbf16>
    %cst_302 = arith.constant dense<0.000000e+00> : vector<60x30xf32>
    %328 = tpu.matmul %325, %327, %cst_302 {dimension_numbers = #tpu.dot_dimension_numbers<[1], [0], [0], [1], [0, 0, 1, 1], [], []>} : vector<60x224xbf16>, vector<224x30xbf16>, vector<60x30xf32> -> vector<60x30xf32>
    %329 = arith.addf %321, %328 : vector<60x30xf32>
    %c7_303 = arith.constant 7 : index
    %c0_304 = arith.constant 0 : index
    %c0_305 = arith.constant 0 : index
    %330 = vector.load %arg27[%c7_303, %c0_304, %c0_305] : memref<8x60x14xbf16, #tpu.memory_space<vmem>>, vector<1x60x14xbf16>
    %331 = vector.shape_cast %330 : vector<1x60x14xbf16> to vector<60x14xbf16>
    %cst_306 = arith.constant dense<0.000000e+00> : vector<60x224xf32>
    %332 = tpu.matmul %331, %274, %cst_306 {dimension_numbers = #tpu.dot_dimension_numbers<[1], [0], [0], [1], [0, 0, 1, 1], [], []>} : vector<60x14xbf16>, vector<14x224xbf16>, vector<60x224xf32> -> vector<60x224xf32>
    %333 = arith.truncf %332 : vector<60x224xf32> to vector<60x224xbf16>
    %c7_307 = arith.constant 7 : index
    %c0_308 = arith.constant 0 : index
    %c0_309 = arith.constant 0 : index
    %334 = vector.load %arg28[%c7_307, %c0_308, %c0_309] : memref<8x224x30xbf16, #tpu.memory_space<vmem>>, vector<1x224x30xbf16>
    %335 = vector.shape_cast %334 : vector<1x224x30xbf16> to vector<224x30xbf16>
    %cst_310 = arith.constant dense<0.000000e+00> : vector<60x30xf32>
    %336 = tpu.matmul %333, %335, %cst_310 {dimension_numbers = #tpu.dot_dimension_numbers<[1], [0], [0], [1], [0, 0, 1, 1], [], []>} : vector<60x224xbf16>, vector<224x30xbf16>, vector<60x30xf32> -> vector<60x30xf32>
    %337 = arith.addf %329, %336 : vector<60x30xf32>
    %c0_311 = arith.constant 0 : index
    %c0_312 = arith.constant 0 : index
    %338 = vector.load %arg29[%c0_311, %c0_312] : memref<1x30xf32, #tpu.memory_space<vmem>>, vector<1x30xf32>
    %339 = vector.broadcast %338 : vector<1x30xf32> to vector<60x30xf32>
    %340 = arith.addf %337, %339 : vector<60x30xf32>
    %cst_313 = arith.constant 0.000000e+00 : f32
    %341 = vector.broadcast %cst_313 : f32 to vector<60x30xf32>
    %342 = arith.subf %341, %340 : vector<60x30xf32>
    %343 = math.exp %342 : vector<60x30xf32>
    %cst_314 = arith.constant 1.000000e+00 : f32
    %344 = vector.broadcast %cst_314 : f32 to vector<60x30xf32>
    %345 = arith.addf %344, %343 : vector<60x30xf32>
    %cst_315 = arith.constant 1.000000e+00 : f32
    %346 = vector.broadcast %cst_315 : f32 to vector<60x30xf32>
    %347 = arith.divf %346, %345 : vector<60x30xf32>
    %c0_316 = arith.constant 0 : index
    %c0_317 = arith.constant 0 : index
    %348 = vector.load %arg30[%c0_316, %c0_317] : memref<60x30xf32, #tpu.memory_space<vmem>>, vector<60x30xf32>
    tpu.vector_store %arg30[%c0_316, %c0_317], %347 {strides = array<i32>} : memref<60x30xf32, #tpu.memory_space<vmem>>, vector<60x30xf32>,
    return
  }
}

</mosaic_0001>

<llo_original>
// kernel: cvae_forward.1
$region0: #{cvae_forward.1}
  #allocation0 [shape = 'u32[]', space=smem, size = 0x4, offset = 0x4, fixed_abs, tag = 'smem constant byte address 0x4 - core index']
  #allocation1 [shape = 'u32[144,128]{1,0:T(1,128)}', space=vmem, size = 0x12000, scoped, tag = 'internal scratch']
  %s0 = inlined_call_operand.smem [shape: u32[33], index: -1, kind: input, shape index: {}]
  %s1 = sld [smem:[%s0]]
  %s2 = scalar_lea.smem %s0, 1
  %s3 = sld [smem:[%s2]]
  %s4 = scalar_lea.smem %s0, 2
  %s5 = sld [smem:[%s4]]
  %s6 = scalar_lea.smem %s0, 3
  %s7 = sld [smem:[%s6]]
  %s8 = scalar_lea.smem %s0, 4
  %s9 = sld [smem:[%s8]]
  %s10 = scalar_lea.smem %s0, 5
  %s11 = sld [smem:[%s10]]
  %s12 = scalar_lea.smem %s0, 6
  %s13 = sld [smem:[%s12]]
  %s14 = scalar_lea.smem %s0, 7
  %s15 = sld [smem:[%s14]]
  %s16 = scalar_lea.smem %s0, 8
  %s17 = sld [smem:[%s16]]
  %s18 = scalar_lea.smem %s0, 9
  %s19 = sld [smem:[%s18]]
  %s20 = scalar_lea.smem %s0, 10
  %s21 = sld [smem:[%s20]]
  %s22 = scalar_lea.smem %s0, 11
  %s23 = sld [smem:[%s22]]
  %s24 = scalar_lea.smem %s0, 12
  %s25 = sld [smem:[%s24]]
  %s26 = scalar_lea.smem %s0, 13
  %s27 = sld [smem:[%s26]]
  %s28 = scalar_lea.smem %s0, 14
  %s29 = sld [smem:[%s28]]
  %s30 = scalar_lea.smem %s0, 15
  %s31 = sld [smem:[%s30]]
  %s32 = scalar_lea.smem %s0, 16
  %s33 = sld [smem:[%s32]]
  %s34 = scalar_lea.smem %s0, 17
  %s35 = sld [smem:[%s34]]
  %s36 = scalar_lea.smem %s0, 18
  %s37 = sld [smem:[%s36]]
  %s38 = scalar_lea.smem %s0, 19
  %s39 = sld [smem:[%s38]]
  %s40 = scalar_lea.smem %s0, 20
  %s41 = sld [smem:[%s40]]
  %s42 = scalar_lea.smem %s0, 21
  %s43 = sld [smem:[%s42]]
  %s44 = scalar_lea.smem %s0, 22
  %s45 = sld [smem:[%s44]]
  %s46 = scalar_lea.smem %s0, 23
  %s47 = sld [smem:[%s46]]
  %s48 = scalar_lea.smem %s0, 24
  %s49 = sld [smem:[%s48]]
  %s50 = scalar_lea.smem %s0, 25
  %s51 = sld [smem:[%s50]]
  %s52 = scalar_lea.smem %s0, 26
  %s53 = sld [smem:[%s52]]
  %s54 = scalar_lea.smem %s0, 27
  %s55 = sld [smem:[%s54]]
  %s56 = scalar_lea.smem %s0, 28
  %s57 = sld [smem:[%s56]]
  %s58 = scalar_lea.smem %s0, 29
  %s59 = sld [smem:[%s58]]
  %s60 = scalar_lea.smem %s0, 30
  %s61 = sld [smem:[%s60]]
  %s62 = scalar_lea.smem %s0, 31
  %s63 = sld [smem:[%s62]]
  %s64 = scalar_lea.smem %s0, 32
  %s65 = sld [smem:[%s64]]
  %66 = xla_tuple %s61, %s63, %s65
  %s67 = sld [smem:[#allocation0]]
  $region146: #{cvae_forward.1} parent=0
    _
  %s69 = ssub.s32 1, %s67
  %s70 = scalar_select 0, %s69, %s67
  $region1: #{cvae_forward.1} parent=0
    #allocation2 [shape = 'u8[1024]{0}', space=vmem, size = 0x400, scoped, tag = 'output window, operand 1, single buffered']
    #allocation3 [shape = 's32[1]{0}', space=sflag, size = 0x4, scoped, tag = 'scoped memory for cvae_forward.1']
    #allocation4 [shape = 'u8[1024]{0}', space=vmem, size = 0x400, scoped, tag = 'output window, operand 2, single buffered']
    #allocation5 [shape = 's32[1]{0}', space=sflag, size = 0x4, scoped, tag = 'scoped memory for cvae_forward.1']
    %71 = vsyncpa [#allocation3], 0
    %72 = vsyncpa [#allocation5], 0
    // Predicated region
    $region2: #{cvae_forward.1} parent=1 // pred_check
      _
    $region3: #{cvae_forward.1} parent=1 // pred_check_branch
      %74 = sbr.rel (0) target = $region5
    $region4: #{cvae_forward.1} parent=1 // pred_region
      _
    $region5: #{cvae_forward.1} parent=1 // pred_fallthru
      _
    // Predicated region
    $region6: #{cvae_forward.1} parent=1 // pred_check
      _
    $region7: #{cvae_forward.1} parent=1 // pred_check_branch
      %76 = sbr.rel (0) target = $region9
    $region8: #{cvae_forward.1} parent=1 // pred_region
      _
    $region9: #{cvae_forward.1} parent=1 // pred_fallthru
      _
    // Predicated region
    $region10: #{cvae_forward.1} parent=1 // pred_check
      _
    $region11: #{cvae_forward.1} parent=1 // pred_check_branch
      %78 = sbr.rel (0) target = $region13
    $region12: #{cvae_forward.1} parent=1 // pred_region
      _
    $region13: #{cvae_forward.1} parent=1 // pred_fallthru
      _
    // Predicated region
    $region14: #{cvae_forward.1} parent=1 // pred_check
      _
    $region15: #{cvae_forward.1} parent=1 // pred_check_branch
      %80 = sbr.rel (0) target = $region17
    $region16: #{cvae_forward.1} parent=1 // pred_region
      _
    $region17: #{cvae_forward.1} parent=1 // pred_fallthru
      _
    // Predicated region
    $region18: #{cvae_forward.1} parent=1 // pred_check
      _
    $region19: #{cvae_forward.1} parent=1 // pred_check_branch
      %82 = sbr.rel (0) target = $region21
    $region20: #{cvae_forward.1} parent=1 // pred_region
      _
    $region21: #{cvae_forward.1} parent=1 // pred_fallthru
      _
    // Predicated region
    $region22: #{cvae_forward.1} parent=1 // pred_check
      _
    $region23: #{cvae_forward.1} parent=1 // pred_check_branch
      %84 = sbr.rel (0) target = $region25
    $region24: #{cvae_forward.1} parent=1 // pred_region
      _
    $region25: #{cvae_forward.1} parent=1 // pred_fallthru
      _
    // Predicated region
    $region26: #{cvae_forward.1} parent=1 // pred_check
      _
    $region27: #{cvae_forward.1} parent=1 // pred_check_branch
      %86 = sbr.rel (0) target = $region29
    $region28: #{cvae_forward.1} parent=1 // pred_region
      _
    $region29: #{cvae_forward.1} parent=1 // pred_fallthru
      _
    // Predicated region
    $region30: #{cvae_forward.1} parent=1 // pred_check
      _
    $region31: #{cvae_forward.1} parent=1 // pred_check_branch
      %88 = sbr.rel (0) target = $region33
    $region32: #{cvae_forward.1} parent=1 // pred_region
      _
    $region33: #{cvae_forward.1} parent=1 // pred_fallthru
      _
    // Predicated region
    $region34: #{cvae_forward.1} parent=1 // pred_check
      _
    $region35: #{cvae_forward.1} parent=1 // pred_check_branch
      %90 = sbr.rel (0) target = $region37
    $region36: #{cvae_forward.1} parent=1 // pred_region
      _
    $region37: #{cvae_forward.1} parent=1 // pred_fallthru
      _
    // Predicated region
    $region38: #{cvae_forward.1} parent=1 // pred_check
      _
    $region39: #{cvae_forward.1} parent=1 // pred_check_branch
      %92 = sbr.rel (0) target = $region41
    $region40: #{cvae_forward.1} parent=1 // pred_region
      _
    $region41: #{cvae_forward.1} parent=1 // pred_fallthru
      _
    // Predicated region
    $region42: #{cvae_forward.1} parent=1 // pred_check
      _
    $region43: #{cvae_forward.1} parent=1 // pred_check_branch
      %94 = sbr.rel (0) target = $region45
    $region44: #{cvae_forward.1} parent=1 // pred_region
      _
    $region45: #{cvae_forward.1} parent=1 // pred_fallthru
      _
    // Predicated region
    $region46: #{cvae_forward.1} parent=1 // pred_check
      _
    $region47: #{cvae_forward.1} parent=1 // pred_check_branch
      %96 = sbr.rel (0) target = $region49
    $region48: #{cvae_forward.1} parent=1 // pred_region
      _
    $region49: #{cvae_forward.1} parent=1 // pred_fallthru
      _
    // Predicated region
    $region50: #{cvae_forward.1} parent=1 // pred_check
      _
    $region51: #{cvae_forward.1} parent=1 // pred_check_branch
      %98 = sbr.rel (0) target = $region53
    $region52: #{cvae_forward.1} parent=1 // pred_region
      _
    $region53: #{cvae_forward.1} parent=1 // pred_fallthru
      _
    // Predicated region
    $region54: #{cvae_forward.1} parent=1 // pred_check
      _
    $region55: #{cvae_forward.1} parent=1 // pred_check_branch
      %100 = sbr.rel (0) target = $region57
    $region56: #{cvae_forward.1} parent=1 // pred_region
      _
    $region57: #{cvae_forward.1} parent=1 // pred_fallthru
      _
    // Predicated region
    $region58: #{cvae_forward.1} parent=1 // pred_check
      _
    $region59: #{cvae_forward.1} parent=1 // pred_check_branch
      %102 = sbr.rel (0) target = $region61
    $region60: #{cvae_forward.1} parent=1 // pred_region
      _
    $region61: #{cvae_forward.1} parent=1 // pred_fallthru
      _
    // Predicated region
    $region62: #{cvae_forward.1} parent=1 // pred_check
      _
    $region63: #{cvae_forward.1} parent=1 // pred_check_branch
      %104 = sbr.rel (0) target = $region65
    $region64: #{cvae_forward.1} parent=1 // pred_region
      _
    $region65: #{cvae_forward.1} parent=1 // pred_fallthru
      _
    // Predicated region
    $region66: #{cvae_forward.1} parent=1 // pred_check
      _
    $region67: #{cvae_forward.1} parent=1 // pred_check_branch
      %106 = sbr.rel (0) target = $region69
    $region68: #{cvae_forward.1} parent=1 // pred_region
      _
    $region69: #{cvae_forward.1} parent=1 // pred_fallthru
      _
    // Predicated region
    $region70: #{cvae_forward.1} parent=1 // pred_check
      _
    $region71: #{cvae_forward.1} parent=1 // pred_check_branch
      %108 = sbr.rel (0) target = $region73
    $region72: #{cvae_forward.1} parent=1 // pred_region
      _
    $region73: #{cvae_forward.1} parent=1 // pred_fallthru
      _
    // Predicated region
    $region74: #{cvae_forward.1} parent=1 // pred_check
      _
    $region75: #{cvae_forward.1} parent=1 // pred_check_branch
      %110 = sbr.rel (0) target = $region77
    $region76: #{cvae_forward.1} parent=1 // pred_region
      _
    $region77: #{cvae_forward.1} parent=1 // pred_fallthru
      _
    // Predicated region
    $region78: #{cvae_forward.1} parent=1 // pred_check
      _
    $region79: #{cvae_forward.1} parent=1 // pred_check_branch
      %112 = sbr.rel (0) target = $region81
    $region80: #{cvae_forward.1} parent=1 // pred_region
      _
    $region81: #{cvae_forward.1} parent=1 // pred_fallthru
      _
    // Predicated region
    $region82: #{cvae_forward.1} parent=1 // pred_check
      _
    $region83: #{cvae_forward.1} parent=1 // pred_check_branch
      %114 = sbr.rel (0) target = $region85
    $region84: #{cvae_forward.1} parent=1 // pred_region
      _
    $region85: #{cvae_forward.1} parent=1 // pred_fallthru
      _
    // Predicated region
    $region86: #{cvae_forward.1} parent=1 // pred_check
      _
    $region87: #{cvae_forward.1} parent=1 // pred_check_branch
      %116 = sbr.rel (0) target = $region89
    $region88: #{cvae_forward.1} parent=1 // pred_region
      _
    $region89: #{cvae_forward.1} parent=1 // pred_fallthru
      _
    // Predicated region
    $region90: #{cvae_forward.1} parent=1 // pred_check
      _
    $region91: #{cvae_forward.1} parent=1 // pred_check_branch
      %118 = sbr.rel (0) target = $region93
    $region92: #{cvae_forward.1} parent=1 // pred_region
      _
    $region93: #{cvae_forward.1} parent=1 // pred_fallthru
      _
    // Predicated region
    $region94: #{cvae_forward.1} parent=1 // pred_check
      _
    $region95: #{cvae_forward.1} parent=1 // pred_check_branch
      %120 = sbr.rel (0) target = $region97
    $region96: #{cvae_forward.1} parent=1 // pred_region
      _
    $region97: #{cvae_forward.1} parent=1 // pred_fallthru
      _
    // Predicated region
    $region98: #{cvae_forward.1} parent=1 // pred_check
      _
    $region99: #{cvae_forward.1} parent=1 // pred_check_branch
      %122 = sbr.rel (0) target = $region101
    $region100: #{cvae_forward.1} parent=1 // pred_region
      _
    $region101: #{cvae_forward.1} parent=1 // pred_fallthru
      _
    // Predicated region
    $region102: #{cvae_forward.1} parent=1 // pred_check
      _
    $region103: #{cvae_forward.1} parent=1 // pred_check_branch
      %124 = sbr.rel (0) target = $region105
    $region104: #{cvae_forward.1} parent=1 // pred_region
      _
    $region105: #{cvae_forward.1} parent=1 // pred_fallthru
      _
    // Predicated region
    $region106: #{cvae_forward.1} parent=1 // pred_check
      _
    $region107: #{cvae_forward.1} parent=1 // pred_check_branch
      %126 = sbr.rel (0) target = $region109
    $region108: #{cvae_forward.1} parent=1 // pred_region
      _
    $region109: #{cvae_forward.1} parent=1 // pred_fallthru
      _
    // Predicated region
    $region110: #{cvae_forward.1} parent=1 // pred_check
      _
    $region111: #{cvae_forward.1} parent=1 // pred_check_branch
      %128 = sbr.rel (0) target = $region113
    $region112: #{cvae_forward.1} parent=1 // pred_region
      _
    $region113: #{cvae_forward.1} parent=1 // pred_fallthru
      _
    // Predicated region
    $region114: #{cvae_forward.1} parent=1 // pred_check
      _
    $region115: #{cvae_forward.1} parent=1 // pred_check_branch
      %130 = sbr.rel (0) target = $region117
    $region116: #{cvae_forward.1} parent=1 // pred_region
      _
    $region117: #{cvae_forward.1} parent=1 // pred_fallthru
      _
    // Predicated region
    $region118: #{cvae_forward.1} parent=1 // pred_check
      _
    $region119: #{cvae_forward.1} parent=1 // pred_check_branch
      %132 = sbr.rel (0) target = $region121
    $region120: #{cvae_forward.1} parent=1 // pred_region
      _
    $region121: #{cvae_forward.1} parent=1 // pred_fallthru
      _
    %v134 = vld [vmem:[%s1] sm:$0xff]
    %v135 = vld [vmem:[%s1 + $0x8] sm:$0xff]
    %v136 = vld [vmem:[%s1 + $0x10] sm:$0xff]
    %v137 = vld [vmem:[%s1 + $0x18] sm:$0xff]
    %v138 = vld [vmem:[%s1 + $0x20] sm:$0xff]
    %v139 = vld [vmem:[%s1 + $0x28] sm:$0xff]
    %v140 = vld [vmem:[%s1 + $0x30] sm:$0xff]
    %v141 = vld [vmem:[%s1 + $0x38] sm:$0xf]
    %v142 = vpack.c.bf16 %v135, %v134
    %v143 = vpack.c.bf16 %v137, %v136
    %v144 = vpack.c.bf16 %v139, %v138
    %v145 = vpack.c.bf16 %v141, %v140
    %v146 = vld [vmem:[%s5] sm:$0xf]
    %v147 = vld [vmem:[%s5 + $0x4] sm:$0x7]
    %v150 = vunpack.c.l.b16 %v146
    %v151 = vunpack.c.l.b16 %v147
    %v152 = vpack.c.b16 %v151, %v150
    %vm153 = vcmask 490496
    %v155 = vsel %vm153, %v152, 0
    %vm157 = vcmask 1045504
    %v159 = vsel %vm157, %v145, 0
    %161 = vmatprep.subr.bf16.mxu0 0
    %162 = vmatpush1.bf16.msra.mxu0 %v142
    %163 = vmatprep.subr.bf16.mxu0 0
    %164 = vmatpush1.bf16.msra.mxu0 %v143
    %165 = vmatprep.subr.bf16.mxu0 0
    %166 = vmatpush1.bf16.msra.mxu0 %v144
    %167 = vmatprep.subr.bf16.mxu0 0
    %168 = vmatpush1.bf16.msra.mxu0 %v159
    %169 = vmatprep.subr.bf16.mxu0 0
    %170 = vmatpush1.bf16.msra.mxu0 0
    %171 = vmatprep.subr.bf16.mxu0 0
    %172 = vmatpush1.bf16.msra.mxu0 0
    %173 = vmatprep.subr.bf16.mxu0 0
    %174 = vmatpush1.bf16.msra.mxu0 0
    %175 = vmatprep.subr.bf16.mxu0 0
    %176 = vmatpush1.bf16.msra.mxu0 0
    %177 = vmatprep.subr.bf16.mxu0 0
    %178 = vmatpush1.bf16.msra.mxu0 0
    %179 = vmatprep.subr.bf16.mxu0 0
    %180 = vmatpush1.bf16.msra.mxu0 0
    %181 = vmatprep.subr.bf16.mxu0 0
    %182 = vmatpush1.bf16.msra.mxu0 0
    %183 = vmatprep.subr.bf16.mxu0 0
    %184 = vmatpush1.bf16.msra.mxu0 0
    %185 = vmatprep.subr.bf16.mxu0 0
    %186 = vmatpush1.bf16.msra.mxu0 0
    %187 = vmatprep.subr.bf16.mxu0 0
    %188 = vmatpush1.bf16.msra.mxu0 0
    %189 = vmatprep.subr.bf16.mxu0 0
    %190 = vmatpush1.bf16.msra.mxu0 0
    %191 = vmatprep.subr.bf16.mxu0 0
    %192 = vmatpush1.bf16.msra.mxu0 0
    %193 = vmatprep.mubr.bf16.mxu0 0
    %194 = vmatmul.mubr.bf16.gmra.mrb[0].mxu0 %v155
    %v195 = vpop.f32.mrb[0].mxu0
    %v196 = vadd.f32 0.0, %v195
    %v197 = vpop.f32.mrb[0].mxu0
    %v198 = vpop.f32.mrb[0].mxu0
    %v199 = vadd.f32 0.0, %v198
    %v200 = vpop.f32.mrb[0].mxu0
    %201 = vdwg.mxu0
    %v202 = vpack.c.bf16 %v199, %v196
    %v203 = vld [vmem:[%s7] sm:$0xff]
    %v204 = vld [vmem:[%s7 + $0x8] sm:$0xff]
    %v205 = vld [vmem:[%s7 + $0x10] sm:$0xff]
    %v206 = vld [vmem:[%s7 + $0x18] sm:$0x77]
    %s207 = scalar_lea.vmem %s5, 8
    %v208 = vld [vmem:[%s207] sm:$0xf]
    %v209 = vld [vmem:[%s207 + $0x4] sm:$0x7]
    %v212 = vunpack.c.l.b16 %v208
    %v213 = vunpack.c.l.b16 %v209
    %v214 = vpack.c.b16 %v213, %v212
    %v216 = vsel %vm153, %v214, 0
    %218 = vmatprep.subr.bf16.mxu0 0
    %219 = vmatpush1.bf16.msra.mxu0 %v142
    %220 = vmatprep.subr.bf16.mxu0 0
    %221 = vmatpush1.bf16.msra.mxu0 %v143
    %222 = vmatprep.subr.bf16.mxu0 0
    %223 = vmatpush1.bf16.msra.mxu0 %v144
    %224 = vmatprep.subr.bf16.mxu0 0
    %225 = vmatpush1.bf16.msra.mxu0 %v159
    %226 = vmatprep.subr.bf16.mxu0 0
    %227 = vmatpush1.bf16.msra.mxu0 0
    %228 = vmatprep.subr.bf16.mxu0 0
    %229 = vmatpush1.bf16.msra.mxu0 0
    %230 = vmatprep.subr.bf16.mxu0 0
    %231 = vmatpush1.bf16.msra.mxu0 0
    %232 = vmatprep.subr.bf16.mxu0 0
    %233 = vmatpush1.bf16.msra.mxu0 0
    %234 = vmatprep.subr.bf16.mxu0 0
    %235 = vmatpush1.bf16.msra.mxu0 0
    %236 = vmatprep.subr.bf16.mxu0 0
    %237 = vmatpush1.bf16.msra.mxu0 0
    %238 = vmatprep.subr.bf16.mxu0 0
    %239 = vmatpush1.bf16.msra.mxu0 0
    %240 = vmatprep.subr.bf16.mxu0 0
    %241 = vmatpush1.bf16.msra.mxu0 0
    %242 = vmatprep.subr.bf16.mxu0 0
    %243 = vmatpush1.bf16.msra.mxu0 0
    %244 = vmatprep.subr.bf16.mxu0 0
    %245 = vmatpush1.bf16.msra.mxu0 0
    %246 = vmatprep.subr.bf16.mxu0 0
    %247 = vmatpush1.bf16.msra.mxu0 0
    %248 = vmatprep.subr.bf16.mxu0 0
    %249 = vmatpush1.bf16.msra.mxu0 0
    %250 = vmatprep.mubr.bf16.mxu0 0
    %251 = vmatmul.mubr.bf16.gmra.mrb[0].mxu0 %v216
    %v252 = vpop.f32.mrb[0].mxu0
    %v253 = vadd.f32 0.0, %v252
    %v254 = vpop.f32.mrb[0].mxu0
    %v255 = vpop.f32.mrb[0].mxu0
    %v256 = vadd.f32 0.0, %v255
    %v257 = vpop.f32.mrb[0].mxu0
    %258 = vdwg.mxu0
    %v259 = vpack.c.bf16 %v256, %v253
    %s260 = scalar_lea.vmem %s7, 32
    %v261 = vld [vmem:[%s260] sm:$0xff]
    %v262 = vld [vmem:[%s260 + $0x8] sm:$0xff]
    %v263 = vld [vmem:[%s260 + $0x10] sm:$0xff]
    %v264 = vld [vmem:[%s260 + $0x18] sm:$0x77]
    %v269 = vunpack.c.l.b16 %v261
    %v270 = vunpack.c.h.b16 %v261
    %v271 = vunpack.c.l.b16 %v262
    %v272 = vunpack.c.h.b16 %v262
    %v273 = vunpack.c.l.b16 %v263
    %v274 = vunpack.c.h.b16 %v263
    %v275 = vunpack.c.l.b16 %v264
    %v276 = vunpack.c.h.b16 %v264
    %v277 = vpack.c.b16 %v271, %v269
    %v278 = vpack.c.b16 %v272, %v270
    %v279 = vpack.c.b16 %v275, %v273
    %v280 = vpack.c.b16 %v276, %v274
    %vm283 = vcmask 244736
    %v285 = vsel %vm283, %v259, 0
    %vm287 = vcmask 1046528
    %v289 = vsel %vm287, %v279, 0
    %v292 = vsel %vm287, %v280, 0
    %294 = vmatprep.subr.bf16.mxu0 %v278
    %295 = vmatpush1.bf16.msra.mxu0 %v277
    %296 = vmatprep.subr.bf16.mxu0 %v292
    %297 = vmatpush1.bf16.msra.mxu0 %v289
    %298 = vmatprep.subr.bf16.mxu0 0
    %299 = vmatpush1.bf16.msra.mxu0 0
    %300 = vmatprep.subr.bf16.mxu0 0
    %301 = vmatpush1.bf16.msra.mxu0 0
    %302 = vmatprep.subr.bf16.mxu0 0
    %303 = vmatpush1.bf16.msra.mxu0 0
    %304 = vmatprep.subr.bf16.mxu0 0
    %305 = vmatpush1.bf16.msra.mxu0 0
    %306 = vmatprep.subr.bf16.mxu0 0
    %307 = vmatpush1.bf16.msra.mxu0 0
    %308 = vmatprep.subr.bf16.mxu0 0
    %309 = vmatpush1.bf16.msra.mxu0 0
    %310 = vmatprep.subr.bf16.mxu0 0
    %311 = vmatpush1.bf16.msra.mxu0 0
    %312 = vmatprep.subr.bf16.mxu0 0
    %313 = vmatpush1.bf16.msra.mxu0 0
    %314 = vmatprep.subr.bf16.mxu0 0
    %315 = vmatpush1.bf16.msra.mxu0 0
    %316 = vmatprep.subr.bf16.mxu0 0
    %317 = vmatpush1.bf16.msra.mxu0 0
    %318 = vmatprep.subr.bf16.mxu0 0
    %319 = vmatpush1.bf16.msra.mxu0 0
    %320 = vmatprep.subr.bf16.mxu0 0
    %321 = vmatpush1.bf16.msra.mxu0 0
    %322 = vmatprep.subr.bf16.mxu0 0
    %323 = vmatpush1.bf16.msra.mxu0 0
    %324 = vmatprep.subr.bf16.mxu0 0
    %325 = vmatpush1.bf16.msra.mxu0 0
    %326 = vmatprep.mubr.bf16.mxu0 0
    %327 = vmatmul.mubr.bf16.gmra.mrb[0].mxu0 %v285
    %v328 = vpop.f32.mrb[0].mxu0
    %v329 = vadd.f32 0.0, %v328
    %v330 = vpop.f32.mrb[0].mxu0
    %v331 = vadd.f32 0.0, %v330
    %v332 = vpop.f32.mrb[0].mxu0
    %v333 = vadd.f32 0.0, %v332
    %v334 = vpop.f32.mrb[0].mxu0
    %v335 = vadd.f32 0.0, %v334
    %336 = vdwg.mxu0
    %v341 = vunpack.c.l.b16 %v203
    %v342 = vunpack.c.h.b16 %v203
    %v343 = vunpack.c.l.b16 %v204
    %v344 = vunpack.c.h.b16 %v204
    %v345 = vunpack.c.l.b16 %v205
    %v346 = vunpack.c.h.b16 %v205
    %v347 = vunpack.c.l.b16 %v206
    %v348 = vunpack.c.h.b16 %v206
    %v349 = vpack.c.b16 %v343, %v341
    %v350 = vpack.c.b16 %v344, %v342
    %v351 = vpack.c.b16 %v347, %v345
    %v352 = vpack.c.b16 %v348, %v346
    %v356 = vsel %vm283, %v202, 0
    %v359 = vsel %vm287, %v351, 0
    %v362 = vsel %vm287, %v352, 0
    %364 = vmatprep.subr.bf16.mxu0 %v350
    %365 = vmatpush1.bf16.msra.mxu0 %v349
    %366 = vmatprep.subr.bf16.mxu0 %v362
    %367 = vmatpush1.bf16.msra.mxu0 %v359
    %368 = vmatprep.subr.bf16.mxu0 0
    %369 = vmatpush1.bf16.msra.mxu0 0
    %370 = vmatprep.subr.bf16.mxu0 0
    %371 = vmatpush1.bf16.msra.mxu0 0
    %372 = vmatprep.subr.bf16.mxu0 0
    %373 = vmatpush1.bf16.msra.mxu0 0
    %374 = vmatprep.subr.bf16.mxu0 0
    %375 = vmatpush1.bf16.msra.mxu0 0
    %376 = vmatprep.subr.bf16.mxu0 0
    %377 = vmatpush1.bf16.msra.mxu0 0
    %378 = vmatprep.subr.bf16.mxu0 0
    %379 = vmatpush1.bf16.msra.mxu0 0
    %380 = vmatprep.subr.bf16.mxu0 0
    %381 = vmatpush1.bf16.msra.mxu0 0
    %382 = vmatprep.subr.bf16.mxu0 0
    %383 = vmatpush1.bf16.msra.mxu0 0
    %384 = vmatprep.subr.bf16.mxu0 0
    %385 = vmatpush1.bf16.msra.mxu0 0
    %386 = vmatprep.subr.bf16.mxu0 0
    %387 = vmatpush1.bf16.msra.mxu0 0
    %388 = vmatprep.subr.bf16.mxu0 0
    %389 = vmatpush1.bf16.msra.mxu0 0
    %390 = vmatprep.subr.bf16.mxu0 0
    %391 = vmatpush1.bf16.msra.mxu0 0
    %392 = vmatprep.subr.bf16.mxu0 0
    %393 = vmatpush1.bf16.msra.mxu0 0
    %394 = vmatprep.subr.bf16.mxu0 0
    %395 = vmatpush1.bf16.msra.mxu0 0
    %396 = vmatprep.mubr.bf16.mxu0 0
    %397 = vmatmul.mubr.bf16.gmra.mrb[0].mxu0 %v356
    %v398 = vpop.f32.mrb[0].mxu0
    %v399 = vadd.f32 %v329, %v398
    %v400 = vpop.f32.mrb[0].mxu0
    %v401 = vadd.f32 %v331, %v400
    %v402 = vpop.f32.mrb[0].mxu0
    %v403 = vadd.f32 %v333, %v402
    %v404 = vpop.f32.mrb[0].mxu0
    %v405 = vadd.f32 %v335, %v404
    %406 = vdwg.mxu0
    %s407 = scalar_lea.vmem %s5, 16
    %v408 = vld [vmem:[%s407] sm:$0xf]
    %v409 = vld [vmem:[%s407 + $0x4] sm:$0x7]
    %v412 = vunpack.c.l.b16 %v408
    %v413 = vunpack.c.l.b16 %v409
    %v414 = vpack.c.b16 %v413, %v412
    %v416 = vsel %vm153, %v414, 0
    %418 = vmatprep.subr.bf16.mxu0 0
    %419 = vmatpush1.bf16.msra.mxu0 %v142
    %420 = vmatprep.subr.bf16.mxu0 0
    %421 = vmatpush1.bf16.msra.mxu0 %v143
    %422 = vmatprep.subr.bf16.mxu0 0
    %423 = vmatpush1.bf16.msra.mxu0 %v144
    %424 = vmatprep.subr.bf16.mxu0 0
    %425 = vmatpush1.bf16.msra.mxu0 %v159
    %426 = vmatprep.subr.bf16.mxu0 0
    %427 = vmatpush1.bf16.msra.mxu0 0
    %428 = vmatprep.subr.bf16.mxu0 0
    %429 = vmatpush1.bf16.msra.mxu0 0
    %430 = vmatprep.subr.bf16.mxu0 0
    %431 = vmatpush1.bf16.msra.mxu0 0
    %432 = vmatprep.subr.bf16.mxu0 0
    %433 = vmatpush1.bf16.msra.mxu0 0
    %434 = vmatprep.subr.bf16.mxu0 0
    %435 = vmatpush1.bf16.msra.mxu0 0
    %436 = vmatprep.subr.bf16.mxu0 0
    %437 = vmatpush1.bf16.msra.mxu0 0
    %438 = vmatprep.subr.bf16.mxu0 0
    %439 = vmatpush1.bf16.msra.mxu0 0
    %440 = vmatprep.subr.bf16.mxu0 0
    %441 = vmatpush1.bf16.msra.mxu0 0
    %442 = vmatprep.subr.bf16.mxu0 0
    %443 = vmatpush1.bf16.msra.mxu0 0
    %444 = vmatprep.subr.bf16.mxu0 0
    %445 = vmatpush1.bf16.msra.mxu0 0
    %446 = vmatprep.subr.bf16.mxu0 0
    %447 = vmatpush1.bf16.msra.mxu0 0
    %448 = vmatprep.subr.bf16.mxu0 0
    %449 = vmatpush1.bf16.msra.mxu0 0
    %450 = vmatprep.mubr.bf16.mxu0 0
    %451 = vmatmul.mubr.bf16.gmra.mrb[0].mxu0 %v416
    %v452 = vpop.f32.mrb[0].mxu0
    %v453 = vadd.f32 0.0, %v452
    %v454 = vpop.f32.mrb[0].mxu0
    %v455 = vpop.f32.mrb[0].mxu0
    %v456 = vadd.f32 0.0, %v455
    %v457 = vpop.f32.mrb[0].mxu0
    %458 = vdwg.mxu0
    %v459 = vpack.c.bf16 %v456, %v453
    %s460 = scalar_lea.vmem %s7, 64
    %v461 = vld [vmem:[%s460] sm:$0xff]
    %v462 = vld [vmem:[%s460 + $0x8] sm:$0xff]
    %v463 = vld [vmem:[%s460 + $0x10] sm:$0xff]
    %v464 = vld [vmem:[%s460 + $0x18] sm:$0x77]
    %v469 = vunpack.c.l.b16 %v461
    %v470 = vunpack.c.h.b16 %v461
    %v471 = vunpack.c.l.b16 %v462
    %v472 = vunpack.c.h.b16 %v462
    %v473 = vunpack.c.l.b16 %v463
    %v474 = vunpack.c.h.b16 %v463
    %v475 = vunpack.c.l.b16 %v464
    %v476 = vunpack.c.h.b16 %v464
    %v477 = vpack.c.b16 %v471, %v469
    %v478 = vpack.c.b16 %v472, %v470
    %v479 = vpack.c.b16 %v475, %v473
    %v480 = vpack.c.b16 %v476, %v474
    %v484 = vsel %vm283, %v459, 0
    %v487 = vsel %vm287, %v479, 0
    %v490 = vsel %vm287, %v480, 0
    %492 = vmatprep.subr.bf16.mxu0 %v478
    %493 = vmatpush1.bf16.msra.mxu0 %v477
    %494 = vmatprep.subr.bf16.mxu0 %v490
    %495 = vmatpush1.bf16.msra.mxu0 %v487
    %496 = vmatprep.subr.bf16.mxu0 0
    %497 = vmatpush1.bf16.msra.mxu0 0
    %498 = vmatprep.subr.bf16.mxu0 0
    %499 = vmatpush1.bf16.msra.mxu0 0
    %500 = vmatprep.subr.bf16.mxu0 0
    %501 = vmatpush1.bf16.msra.mxu0 0
    %502 = vmatprep.subr.bf16.mxu0 0
    %503 = vmatpush1.bf16.msra.mxu0 0
    %504 = vmatprep.subr.bf16.mxu0 0
    %505 = vmatpush1.bf16.msra.mxu0 0
    %506 = vmatprep.subr.bf16.mxu0 0
    %507 = vmatpush1.bf16.msra.mxu0 0
    %508 = vmatprep.subr.bf16.mxu0 0
    %509 = vmatpush1.bf16.msra.mxu0 0
    %510 = vmatprep.subr.bf16.mxu0 0
    %511 = vmatpush1.bf16.msra.mxu0 0
    %512 = vmatprep.subr.bf16.mxu0 0
    %513 = vmatpush1.bf16.msra.mxu0 0
    %514 = vmatprep.subr.bf16.mxu0 0
    %515 = vmatpush1.bf16.msra.mxu0 0
    %516 = vmatprep.subr.bf16.mxu0 0
    %517 = vmatpush1.bf16.msra.mxu0 0
    %518 = vmatprep.subr.bf16.mxu0 0
    %519 = vmatpush1.bf16.msra.mxu0 0
    %520 = vmatprep.subr.bf16.mxu0 0
    %521 = vmatpush1.bf16.msra.mxu0 0
    %522 = vmatprep.subr.bf16.mxu0 0
    %523 = vmatpush1.bf16.msra.mxu0 0
    %524 = vmatprep.mubr.bf16.mxu0 0
    %525 = vmatmul.mubr.bf16.gmra.mrb[0].mxu0 %v484
    %v526 = vpop.f32.mrb[0].mxu0
    %v527 = vadd.f32 0.0, %v526
    %v528 = vpop.f32.mrb[0].mxu0
    %v529 = vadd.f32 0.0, %v528
    %v530 = vpop.f32.mrb[0].mxu0
    %v531 = vadd.f32 0.0, %v530
    %v532 = vpop.f32.mrb[0].mxu0
    %v533 = vadd.f32 0.0, %v532
    %534 = vdwg.mxu0
    %v535 = vadd.f32 %v399, %v527
    %v536 = vadd.f32 %v401, %v529
    %v537 = vadd.f32 %v403, %v531
    %v538 = vadd.f32 %v405, %v533
    %s539 = scalar_lea.vmem %s5, 24
    %v540 = vld [vmem:[%s539] sm:$0xf]
    %v541 = vld [vmem:[%s539 + $0x4] sm:$0x7]
    %v544 = vunpack.c.l.b16 %v540
    %v545 = vunpack.c.l.b16 %v541
    %v546 = vpack.c.b16 %v545, %v544
    %v548 = vsel %vm153, %v546, 0
    %550 = vmatprep.subr.bf16.mxu0 0
    %551 = vmatpush1.bf16.msra.mxu0 %v142
    %552 = vmatprep.subr.bf16.mxu0 0
    %553 = vmatpush1.bf16.msra.mxu0 %v143
    %554 = vmatprep.subr.bf16.mxu0 0
    %555 = vmatpush1.bf16.msra.mxu0 %v144
    %556 = vmatprep.subr.bf16.mxu0 0
    %557 = vmatpush1.bf16.msra.mxu0 %v159
    %558 = vmatprep.subr.bf16.mxu0 0
    %559 = vmatpush1.bf16.msra.mxu0 0
    %560 = vmatprep.subr.bf16.mxu0 0
    %561 = vmatpush1.bf16.msra.mxu0 0
    %562 = vmatprep.subr.bf16.mxu0 0
    %563 = vmatpush1.bf16.msra.mxu0 0
    %564 = vmatprep.subr.bf16.mxu0 0
    %565 = vmatpush1.bf16.msra.mxu0 0
    %566 = vmatprep.subr.bf16.mxu0 0
    %567 = vmatpush1.bf16.msra.mxu0 0
    %568 = vmatprep.subr.bf16.mxu0 0
    %569 = vmatpush1.bf16.msra.mxu0 0
    %570 = vmatprep.subr.bf16.mxu0 0
    %571 = vmatpush1.bf16.msra.mxu0 0
    %572 = vmatprep.subr.bf16.mxu0 0
    %573 = vmatpush1.bf16.msra.mxu0 0
    %574 = vmatprep.subr.bf16.mxu0 0
    %575 = vmatpush1.bf16.msra.mxu0 0
    %576 = vmatprep.subr.bf16.mxu0 0
    %577 = vmatpush1.bf16.msra.mxu0 0
    %578 = vmatprep.subr.bf16.mxu0 0
    %579 = vmatpush1.bf16.msra.mxu0 0
    %580 = vmatprep.subr.bf16.mxu0 0
    %581 = vmatpush1.bf16.msra.mxu0 0
    %582 = vmatprep.mubr.bf16.mxu0 0
    %583 = vmatmul.mubr.bf16.gmra.mrb[0].mxu0 %v548
    %v584 = vpop.f32.mrb[0].mxu0
    %v585 = vadd.f32 0.0, %v584
    %v586 = vpop.f32.mrb[0].mxu0
    %v587 = vpop.f32.mrb[0].mxu0
    %v588 = vadd.f32 0.0, %v587
    %v589 = vpop.f32.mrb[0].mxu0
    %590 = vdwg.mxu0
    %v591 = vpack.c.bf16 %v588, %v585
    %s592 = scalar_lea.vmem %s7, 96
    %v593 = vld [vmem:[%s592] sm:$0xff]
    %v594 = vld [vmem:[%s592 + $0x8] sm:$0xff]
    %v595 = vld [vmem:[%s592 + $0x10] sm:$0xff]
    %v596 = vld [vmem:[%s592 + $0x18] sm:$0x77]
    %v601 = vunpack.c.l.b16 %v593
    %v602 = vunpack.c.h.b16 %v593
    %v603 = vunpack.c.l.b16 %v594
    %v604 = vunpack.c.h.b16 %v594
    %v605 = vunpack.c.l.b16 %v595
    %v606 = vunpack.c.h.b16 %v595
    %v607 = vunpack.c.l.b16 %v596
    %v608 = vunpack.c.h.b16 %v596
    %v609 = vpack.c.b16 %v603, %v601
    %v610 = vpack.c.b16 %v604, %v602
    %v611 = vpack.c.b16 %v607, %v605
    %v612 = vpack.c.b16 %v608, %v606
    %v616 = vsel %vm283, %v591, 0
    %v619 = vsel %vm287, %v611, 0
    %v622 = vsel %vm287, %v612, 0
    %624 = vmatprep.subr.bf16.mxu0 %v610
    %625 = vmatpush1.bf16.msra.mxu0 %v609
    %626 = vmatprep.subr.bf16.mxu0 %v622
    %627 = vmatpush1.bf16.msra.mxu0 %v619
    %628 = vmatprep.subr.bf16.mxu0 0
    %629 = vmatpush1.bf16.msra.mxu0 0
    %630 = vmatprep.subr.bf16.mxu0 0
    %631 = vmatpush1.bf16.msra.mxu0 0
    %632 = vmatprep.subr.bf16.mxu0 0
    %633 = vmatpush1.bf16.msra.mxu0 0
    %634 = vmatprep.subr.bf16.mxu0 0
    %635 = vmatpush1.bf16.msra.mxu0 0
    %636 = vmatprep.subr.bf16.mxu0 0
    %637 = vmatpush1.bf16.msra.mxu0 0
    %638 = vmatprep.subr.bf16.mxu0 0
    %639 = vmatpush1.bf16.msra.mxu0 0
    %640 = vmatprep.subr.bf16.mxu0 0
    %641 = vmatpush1.bf16.msra.mxu0 0
    %642 = vmatprep.subr.bf16.mxu0 0
    %643 = vmatpush1.bf16.msra.mxu0 0
    %644 = vmatprep.subr.bf16.mxu0 0
    %645 = vmatpush1.bf16.msra.mxu0 0
    %646 = vmatprep.subr.bf16.mxu0 0
    %647 = vmatpush1.bf16.msra.mxu0 0
    %648 = vmatprep.subr.bf16.mxu0 0
    %649 = vmatpush1.bf16.msra.mxu0 0
    %650 = vmatprep.subr.bf16.mxu0 0
    %651 = vmatpush1.bf16.msra.mxu0 0
    %652 = vmatprep.subr.bf16.mxu0 0
    %653 = vmatpush1.bf16.msra.mxu0 0
    %654 = vmatprep.subr.bf16.mxu0 0
    %655 = vmatpush1.bf16.msra.mxu0 0
    %656 = vmatprep.mubr.bf16.mxu0 0
    %657 = vmatmul.mubr.bf16.gmra.mrb[0].mxu0 %v616
    %v658 = vpop.f32.mrb[0].mxu0
    %v659 = vadd.f32 0.0, %v658
    %v660 = vpop.f32.mrb[0].mxu0
    %v661 = vadd.f32 0.0, %v660
    %v662 = vpop.f32.mrb[0].mxu0
    %v663 = vadd.f32 0.0, %v662
    %v664 = vpop.f32.mrb[0].mxu0
    %v665 = vadd.f32 0.0, %v664
    %666 = vdwg.mxu0
    %v667 = vadd.f32 %v535, %v659
    %v668 = vadd.f32 %v536, %v661
    %v669 = vadd.f32 %v537, %v663
    %v670 = vadd.f32 %v538, %v665
    %s671 = scalar_lea.vmem %s5, 32
    %v672 = vld [vmem:[%s671] sm:$0xf]
    %v673 = vld [vmem:[%s671 + $0x4] sm:$0x7]
    %v676 = vunpack.c.l.b16 %v672
    %v677 = vunpack.c.l.b16 %v673
    %v678 = vpack.c.b16 %v677, %v676
    %v680 = vsel %vm153, %v678, 0
    %682 = vmatprep.subr.bf16.mxu0 0
    %683 = vmatpush1.bf16.msra.mxu0 %v142
    %684 = vmatprep.subr.bf16.mxu0 0
    %685 = vmatpush1.bf16.msra.mxu0 %v143
    %686 = vmatprep.subr.bf16.mxu0 0
    %687 = vmatpush1.bf16.msra.mxu0 %v144
    %688 = vmatprep.subr.bf16.mxu0 0
    %689 = vmatpush1.bf16.msra.mxu0 %v159
    %690 = vmatprep.subr.bf16.mxu0 0
    %691 = vmatpush1.bf16.msra.mxu0 0
    %692 = vmatprep.subr.bf16.mxu0 0
    %693 = vmatpush1.bf16.msra.mxu0 0
    %694 = vmatprep.subr.bf16.mxu0 0
    %695 = vmatpush1.bf16.msra.mxu0 0
    %696 = vmatprep.subr.bf16.mxu0 0
    %697 = vmatpush1.bf16.msra.mxu0 0
    %698 = vmatprep.subr.bf16.mxu0 0
    %699 = vmatpush1.bf16.msra.mxu0 0
    %700 = vmatprep.subr.bf16.mxu0 0
    %701 = vmatpush1.bf16.msra.mxu0 0
    %702 = vmatprep.subr.bf16.mxu0 0
    %703 = vmatpush1.bf16.msra.mxu0 0
    %704 = vmatprep.subr.bf16.mxu0 0
    %705 = vmatpush1.bf16.msra.mxu0 0
    %706 = vmatprep.subr.bf16.mxu0 0
    %707 = vmatpush1.bf16.msra.mxu0 0
    %708 = vmatprep.subr.bf16.mxu0 0
    %709 = vmatpush1.bf16.msra.mxu0 0
    %710 = vmatprep.subr.bf16.mxu0 0
    %711 = vmatpush1.bf16.msra.mxu0 0
    %712 = vmatprep.subr.bf16.mxu0 0
    %713 = vmatpush1.bf16.msra.mxu0 0
    %714 = vmatprep.mubr.bf16.mxu0 0
    %715 = vmatmul.mubr.bf16.gmra.mrb[0].mxu0 %v680
    %v716 = vpop.f32.mrb[0].mxu0
    %v717 = vadd.f32 0.0, %v716
    %v718 = vpop.f32.mrb[0].mxu0
    %v719 = vpop.f32.mrb[0].mxu0
    %v720 = vadd.f32 0.0, %v719
    %v721 = vpop.f32.mrb[0].mxu0
    %722 = vdwg.mxu0
    %v723 = vpack.c.bf16 %v720, %v717
    %s724 = scalar_lea.vmem %s7, 128
    %v725 = vld [vmem:[%s724] sm:$0xff]
    %v726 = vld [vmem:[%s724 + $0x8] sm:$0xff]
    %v727 = vld [vmem:[%s724 + $0x10] sm:$0xff]
    %v728 = vld [vmem:[%s724 + $0x18] sm:$0x77]
    %v733 = vunpack.c.l.b16 %v725
    %v734 = vunpack.c.h.b16 %v725
    %v735 = vunpack.c.l.b16 %v726
    %v736 = vunpack.c.h.b16 %v726
    %v737 = vunpack.c.l.b16 %v727
    %v738 = vunpack.c.h.b16 %v727
    %v739 = vunpack.c.l.b16 %v728
    %v740 = vunpack.c.h.b16 %v728
    %v741 = vpack.c.b16 %v735, %v733
    %v742 = vpack.c.b16 %v736, %v734
    %v743 = vpack.c.b16 %v739, %v737
    %v744 = vpack.c.b16 %v740, %v738
    %v748 = vsel %vm283, %v723, 0
    %v751 = vsel %vm287, %v743, 0
    %v754 = vsel %vm287, %v744, 0
    %756 = vmatprep.subr.bf16.mxu0 %v742
    %757 = vmatpush1.bf16.msra.mxu0 %v741
    %758 = vmatprep.subr.bf16.mxu0 %v754
    %759 = vmatpush1.bf16.msra.mxu0 %v751
    %760 = vmatprep.subr.bf16.mxu0 0
    %761 = vmatpush1.bf16.msra.mxu0 0
    %762 = vmatprep.subr.bf16.mxu0 0
    %763 = vmatpush1.bf16.msra.mxu0 0
    %764 = vmatprep.subr.bf16.mxu0 0
    %765 = vmatpush1.bf16.msra.mxu0 0
    %766 = vmatprep.subr.bf16.mxu0 0
    %767 = vmatpush1.bf16.msra.mxu0 0
    %768 = vmatprep.subr.bf16.mxu0 0
    %769 = vmatpush1.bf16.msra.mxu0 0
    %770 = vmatprep.subr.bf16.mxu0 0
    %771 = vmatpush1.bf16.msra.mxu0 0
    %772 = vmatprep.subr.bf16.mxu0 0
    %773 = vmatpush1.bf16.msra.mxu0 0
    %774 = vmatprep.subr.bf16.mxu0 0
    %775 = vmatpush1.bf16.msra.mxu0 0
    %776 = vmatprep.subr.bf16.mxu0 0
    %777 = vmatpush1.bf16.msra.mxu0 0
    %778 = vmatprep.subr.bf16.mxu0 0
    %779 = vmatpush1.bf16.msra.mxu0 0
    %780 = vmatprep.subr.bf16.mxu0 0
    %781 = vmatpush1.bf16.msra.mxu0 0
    %782 = vmatprep.subr.bf16.mxu0 0
    %783 = vmatpush1.bf16.msra.mxu0 0
    %784 = vmatprep.subr.bf16.mxu0 0
    %785 = vmatpush1.bf16.msra.mxu0 0
    %786 = vmatprep.subr.bf16.mxu0 0
    %787 = vmatpush1.bf16.msra.mxu0 0
    %788 = vmatprep.mubr.bf16.mxu0 0
    %789 = vmatmul.mubr.bf16.gmra.mrb[0].mxu0 %v748
    %v790 = vpop.f32.mrb[0].mxu0
    %v791 = vadd.f32 0.0, %v790
    %v792 = vpop.f32.mrb[0].mxu0
    %v793 = vadd.f32 0.0, %v792
    %v794 = vpop.f32.mrb[0].mxu0
    %v795 = vadd.f32 0.0, %v794
    %v796 = vpop.f32.mrb[0].mxu0
    %v797 = vadd.f32 0.0, %v796
    %798 = vdwg.mxu0
    %v799 = vadd.f32 %v667, %v791
    %v800 = vadd.f32 %v668, %v793
    %v801 = vadd.f32 %v669, %v795
    %v802 = vadd.f32 %v670, %v797
    %s803 = scalar_lea.vmem %s5, 40
    %v804 = vld [vmem:[%s803] sm:$0xf]
    %v805 = vld [vmem:[%s803 + $0x4] sm:$0x7]
    %v808 = vunpack.c.l.b16 %v804
    %v809 = vunpack.c.l.b16 %v805
    %v810 = vpack.c.b16 %v809, %v808
    %v812 = vsel %vm153, %v810, 0
    %814 = vmatprep.subr.bf16.mxu0 0
    %815 = vmatpush1.bf16.msra.mxu0 %v142
    %816 = vmatprep.subr.bf16.mxu0 0
    %817 = vmatpush1.bf16.msra.mxu0 %v143
    %818 = vmatprep.subr.bf16.mxu0 0
    %819 = vmatpush1.bf16.msra.mxu0 %v144
    %820 = vmatprep.subr.bf16.mxu0 0
    %821 = vmatpush1.bf16.msra.mxu0 %v159
    %822 = vmatprep.subr.bf16.mxu0 0
    %823 = vmatpush1.bf16.msra.mxu0 0
    %824 = vmatprep.subr.bf16.mxu0 0
    %825 = vmatpush1.bf16.msra.mxu0 0
    %826 = vmatprep.subr.bf16.mxu0 0
    %827 = vmatpush1.bf16.msra.mxu0 0
    %828 = vmatprep.subr.bf16.mxu0 0
    %829 = vmatpush1.bf16.msra.mxu0 0
    %830 = vmatprep.subr.bf16.mxu0 0
    %831 = vmatpush1.bf16.msra.mxu0 0
    %832 = vmatprep.subr.bf16.mxu0 0
    %833 = vmatpush1.bf16.msra.mxu0 0
    %834 = vmatprep.subr.bf16.mxu0 0
    %835 = vmatpush1.bf16.msra.mxu0 0
    %836 = vmatprep.subr.bf16.mxu0 0
    %837 = vmatpush1.bf16.msra.mxu0 0
    %838 = vmatprep.subr.bf16.mxu0 0
    %839 = vmatpush1.bf16.msra.mxu0 0
    %840 = vmatprep.subr.bf16.mxu0 0
    %841 = vmatpush1.bf16.msra.mxu0 0
    %842 = vmatprep.subr.bf16.mxu0 0
    %843 = vmatpush1.bf16.msra.mxu0 0
    %844 = vmatprep.subr.bf16.mxu0 0
    %845 = vmatpush1.bf16.msra.mxu0 0
    %846 = vmatprep.mubr.bf16.mxu0 0
    %847 = vmatmul.mubr.bf16.gmra.mrb[0].mxu0 %v812
    %v848 = vpop.f32.mrb[0].mxu0
    %v849 = vadd.f32 0.0, %v848
    %v850 = vpop.f32.mrb[0].mxu0
    %v851 = vpop.f32.mrb[0].mxu0
    %v852 = vadd.f32 0.0, %v851
    %v853 = vpop.f32.mrb[0].mxu0
    %854 = vdwg.mxu0
    %v855 = vpack.c.bf16 %v852, %v849
    %s856 = scalar_lea.vmem %s7, 160
    %v857 = vld [vmem:[%s856] sm:$0xff]
    %v858 = vld [vmem:[%s856 + $0x8] sm:$0xff]
    %v859 = vld [vmem:[%s856 + $0x10] sm:$0xff]
    %v860 = vld [vmem:[%s856 + $0x18] sm:$0x77]
    %v865 = vunpack.c.l.b16 %v857
    %v866 = vunpack.c.h.b16 %v857
    %v867 = vunpack.c.l.b16 %v858
    %v868 = vunpack.c.h.b16 %v858
    %v869 = vunpack.c.l.b16 %v859
    %v870 = vunpack.c.h.b16 %v859
    %v871 = vunpack.c.l.b16 %v860
    %v872 = vunpack.c.h.b16 %v860
    %v873 = vpack.c.b16 %v867, %v865
    %v874 = vpack.c.b16 %v868, %v866
    %v875 = vpack.c.b16 %v871, %v869
    %v876 = vpack.c.b16 %v872, %v870
    %v880 = vsel %vm283, %v855, 0
    %v883 = vsel %vm287, %v875, 0
    %v886 = vsel %vm287, %v876, 0
    %888 = vmatprep.subr.bf16.mxu0 %v874
    %889 = vmatpush1.bf16.msra.mxu0 %v873
    %890 = vmatprep.subr.bf16.mxu0 %v886
    %891 = vmatpush1.bf16.msra.mxu0 %v883
    %892 = vmatprep.subr.bf16.mxu0 0
    %893 = vmatpush1.bf16.msra.mxu0 0
    %894 = vmatprep.subr.bf16.mxu0 0
    %895 = vmatpush1.bf16.msra.mxu0 0
    %896 = vmatprep.subr.bf16.mxu0 0
    %897 = vmatpush1.bf16.msra.mxu0 0
    %898 = vmatprep.subr.bf16.mxu0 0
    %899 = vmatpush1.bf16.msra.mxu0 0
    %900 = vmatprep.subr.bf16.mxu0 0
    %901 = vmatpush1.bf16.msra.mxu0 0
    %902 = vmatprep.subr.bf16.mxu0 0
    %903 = vmatpush1.bf16.msra.mxu0 0
    %904 = vmatprep.subr.bf16.mxu0 0
    %905 = vmatpush1.bf16.msra.mxu0 0
    %906 = vmatprep.subr.bf16.mxu0 0
    %907 = vmatpush1.bf16.msra.mxu0 0
    %908 = vmatprep.subr.bf16.mxu0 0
    %909 = vmatpush1.bf16.msra.mxu0 0
    %910 = vmatprep.subr.bf16.mxu0 0
    %911 = vmatpush1.bf16.msra.mxu0 0
    %912 = vmatprep.subr.bf16.mxu0 0
    %913 = vmatpush1.bf16.msra.mxu0 0
    %914 = vmatprep.subr.bf16.mxu0 0
    %915 = vmatpush1.bf16.msra.mxu0 0
    %916 = vmatprep.subr.bf16.mxu0 0
    %917 = vmatpush1.bf16.msra.mxu0 0
    %918 = vmatprep.subr.bf16.mxu0 0
    %919 = vmatpush1.bf16.msra.mxu0 0
    %920 = vmatprep.mubr.bf16.mxu0 0
    %921 = vmatmul.mubr.bf16.gmra.mrb[0].mxu0 %v880
    %v922 = vpop.f32.mrb[0].mxu0
    %v923 = vadd.f32 0.0, %v922
    %v924 = vpop.f32.mrb[0].mxu0
    %v925 = vadd.f32 0.0, %v924
    %v926 = vpop.f32.mrb[0].mxu0
    %v927 = vadd.f32 0.0, %v926
    %v928 = vpop.f32.mrb[0].mxu0
    %v929 = vadd.f32 0.0, %v928
    %930 = vdwg.mxu0
    %v931 = vadd.f32 %v799, %v923
    %v932 = vadd.f32 %v800, %v925
    %v933 = vadd.f32 %v801, %v927
    %v934 = vadd.f32 %v802, %v929
    %s935 = scalar_lea.vmem %s5, 48
    %v936 = vld [vmem:[%s935] sm:$0xf]
    %v937 = vld [vmem:[%s935 + $0x4] sm:$0x7]
    %v940 = vunpack.c.l.b16 %v936
    %v941 = vunpack.c.l.b16 %v937
    %v942 = vpack.c.b16 %v941, %v940
    %v944 = vsel %vm153, %v942, 0
    %946 = vmatprep.subr.bf16.mxu0 0
    %947 = vmatpush1.bf16.msra.mxu0 %v142
    %948 = vmatprep.subr.bf16.mxu0 0
    %949 = vmatpush1.bf16.msra.mxu0 %v143
    %950 = vmatprep.subr.bf16.mxu0 0
    %951 = vmatpush1.bf16.msra.mxu0 %v144
    %952 = vmatprep.subr.bf16.mxu0 0
    %953 = vmatpush1.bf16.msra.mxu0 %v159
    %954 = vmatprep.subr.bf16.mxu0 0
    %955 = vmatpush1.bf16.msra.mxu0 0
    %956 = vmatprep.subr.bf16.mxu0 0
    %957 = vmatpush1.bf16.msra.mxu0 0
    %958 = vmatprep.subr.bf16.mxu0 0
    %959 = vmatpush1.bf16.msra.mxu0 0
    %960 = vmatprep.subr.bf16.mxu0 0
    %961 = vmatpush1.bf16.msra.mxu0 0
    %962 = vmatprep.subr.bf16.mxu0 0
    %963 = vmatpush1.bf16.msra.mxu0 0
    %964 = vmatprep.subr.bf16.mxu0 0
    %965 = vmatpush1.bf16.msra.mxu0 0
    %966 = vmatprep.subr.bf16.mxu0 0
    %967 = vmatpush1.bf16.msra.mxu0 0
    %968 = vmatprep.subr.bf16.mxu0 0
    %969 = vmatpush1.bf16.msra.mxu0 0
    %970 = vmatprep.subr.bf16.mxu0 0
    %971 = vmatpush1.bf16.msra.mxu0 0
    %972 = vmatprep.subr.bf16.mxu0 0
    %973 = vmatpush1.bf16.msra.mxu0 0
    %974 = vmatprep.subr.bf16.mxu0 0
    %975 = vmatpush1.bf16.msra.mxu0 0
    %976 = vmatprep.subr.bf16.mxu0 0
    %977 = vmatpush1.bf16.msra.mxu0 0
    %978 = vmatprep.mubr.bf16.mxu0 0
    %979 = vmatmul.mubr.bf16.gmra.mrb[0].mxu0 %v944
    %v980 = vpop.f32.mrb[0].mxu0
    %v981 = vadd.f32 0.0, %v980
    %v982 = vpop.f32.mrb[0].mxu0
    %v983 = vpop.f32.mrb[0].mxu0
    %v984 = vadd.f32 0.0, %v983
    %v985 = vpop.f32.mrb[0].mxu0
    %986 = vdwg.mxu0
    %v987 = vpack.c.bf16 %v984, %v981
    %s988 = scalar_lea.vmem %s7, 192
    %v989 = vld [vmem:[%s988] sm:$0xff]
    %v990 = vld [vmem:[%s988 + $0x8] sm:$0xff]
    %v991 = vld [vmem:[%s988 + $0x10] sm:$0xff]
    %v992 = vld [vmem:[%s988 + $0x18] sm:$0x77]
    %v997 = vunpack.c.l.b16 %v989
    %v998 = vunpack.c.h.b16 %v989
    %v999 = vunpack.c.l.b16 %v990
    %v1000 = vunpack.c.h.b16 %v990
    %v1001 = vunpack.c.l.b16 %v991
    %v1002 = vunpack.c.h.b16 %v991
    %v1003 = vunpack.c.l.b16 %v992
    %v1004 = vunpack.c.h.b16 %v992
    %v1005 = vpack.c.b16 %v999, %v997
    %v1006 = vpack.c.b16 %v1000, %v998
    %v1007 = vpack.c.b16 %v1003, %v1001
    %v1008 = vpack.c.b16 %v1004, %v1002
    %v1012 = vsel %vm283, %v987, 0
    %v1015 = vsel %vm287, %v1007, 0
    %v1018 = vsel %vm287, %v1008, 0
    %1020 = vmatprep.subr.bf16.mxu0 %v1006
    %1021 = vmatpush1.bf16.msra.mxu0 %v1005
    %1022 = vmatprep.subr.bf16.mxu0 %v1018
    %1023 = vmatpush1.bf16.msra.mxu0 %v1015
    %1024 = vmatprep.subr.bf16.mxu0 0
    %1025 = vmatpush1.bf16.msra.mxu0 0
    %1026 = vmatprep.subr.bf16.mxu0 0
    %1027 = vmatpush1.bf16.msra.mxu0 0
    %1028 = vmatprep.subr.bf16.mxu0 0
    %1029 = vmatpush1.bf16.msra.mxu0 0
    %1030 = vmatprep.subr.bf16.mxu0 0
    %1031 = vmatpush1.bf16.msra.mxu0 0
    %1032 = vmatprep.subr.bf16.mxu0 0
    %1033 = vmatpush1.bf16.msra.mxu0 0
    %1034 = vmatprep.subr.bf16.mxu0 0
    %1035 = vmatpush1.bf16.msra.mxu0 0
    %1036 = vmatprep.subr.bf16.mxu0 0
    %1037 = vmatpush1.bf16.msra.mxu0 0
    %1038 = vmatprep.subr.bf16.mxu0 0
    %1039 = vmatpush1.bf16.msra.mxu0 0
    %1040 = vmatprep.subr.bf16.mxu0 0
    %1041 = vmatpush1.bf16.msra.mxu0 0
    %1042 = vmatprep.subr.bf16.mxu0 0
    %1043 = vmatpush1.bf16.msra.mxu0 0
    %1044 = vmatprep.subr.bf16.mxu0 0
    %1045 = vmatpush1.bf16.msra.mxu0 0
    %1046 = vmatprep.subr.bf16.mxu0 0
    %1047 = vmatpush1.bf16.msra.mxu0 0
    %1048 = vmatprep.subr.bf16.mxu0 0
    %1049 = vmatpush1.bf16.msra.mxu0 0
    %1050 = vmatprep.subr.bf16.mxu0 0
    %1051 = vmatpush1.bf16.msra.mxu0 0
    %1052 = vmatprep.mubr.bf16.mxu0 0
    %1053 = vmatmul.mubr.bf16.gmra.mrb[0].mxu0 %v1012
    %v1054 = vpop.f32.mrb[0].mxu0
    %v1055 = vadd.f32 0.0, %v1054
    %v1056 = vpop.f32.mrb[0].mxu0
    %v1057 = vadd.f32 0.0, %v1056
    %v1058 = vpop.f32.mrb[0].mxu0
    %v1059 = vadd.f32 0.0, %v1058
    %v1060 = vpop.f32.mrb[0].mxu0
    %v1061 = vadd.f32 0.0, %v1060
    %1062 = vdwg.mxu0
    %v1063 = vadd.f32 %v931, %v1055
    %v1064 = vadd.f32 %v932, %v1057
    %v1065 = vadd.f32 %v933, %v1059
    %v1066 = vadd.f32 %v934, %v1061
    %s1067 = scalar_lea.vmem %s5, 56
    %v1068 = vld [vmem:[%s1067] sm:$0xf]
    %v1069 = vld [vmem:[%s1067 + $0x4] sm:$0x7]
    %v1072 = vunpack.c.l.b16 %v1068
    %v1073 = vunpack.c.l.b16 %v1069
    %v1074 = vpack.c.b16 %v1073, %v1072
    %v1076 = vsel %vm153, %v1074, 0
    %1078 = vmatprep.subr.bf16.mxu0 0
    %1079 = vmatpush1.bf16.msra.mxu0 %v142
    %1080 = vmatprep.subr.bf16.mxu0 0
    %1081 = vmatpush1.bf16.msra.mxu0 %v143
    %1082 = vmatprep.subr.bf16.mxu0 0
    %1083 = vmatpush1.bf16.msra.mxu0 %v144
    %1084 = vmatprep.subr.bf16.mxu0 0
    %1085 = vmatpush1.bf16.msra.mxu0 %v159
    %1086 = vmatprep.subr.bf16.mxu0 0
    %1087 = vmatpush1.bf16.msra.mxu0 0
    %1088 = vmatprep.subr.bf16.mxu0 0
    %1089 = vmatpush1.bf16.msra.mxu0 0
    %1090 = vmatprep.subr.bf16.mxu0 0
    %1091 = vmatpush1.bf16.msra.mxu0 0
    %1092 = vmatprep.subr.bf16.mxu0 0
    %1093 = vmatpush1.bf16.msra.mxu0 0
    %1094 = vmatprep.subr.bf16.mxu0 0
    %1095 = vmatpush1.bf16.msra.mxu0 0
    %1096 = vmatprep.subr.bf16.mxu0 0
    %1097 = vmatpush1.bf16.msra.mxu0 0
    %1098 = vmatprep.subr.bf16.mxu0 0
    %1099 = vmatpush1.bf16.msra.mxu0 0
    %1100 = vmatprep.subr.bf16.mxu0 0
    %1101 = vmatpush1.bf16.msra.mxu0 0
    %1102 = vmatprep.subr.bf16.mxu0 0
    %1103 = vmatpush1.bf16.msra.mxu0 0
    %1104 = vmatprep.subr.bf16.mxu0 0
    %1105 = vmatpush1.bf16.msra.mxu0 0
    %1106 = vmatprep.subr.bf16.mxu0 0
    %1107 = vmatpush1.bf16.msra.mxu0 0
    %1108 = vmatprep.subr.bf16.mxu0 0
    %1109 = vmatpush1.bf16.msra.mxu0 0
    %1110 = vmatprep.mubr.bf16.mxu0 0
    %1111 = vmatmul.mubr.bf16.gmra.mrb[0].mxu0 %v1076
    %v1112 = vpop.f32.mrb[0].mxu0
    %v1113 = vadd.f32 0.0, %v1112
    %v1114 = vpop.f32.mrb[0].mxu0
    %v1115 = vpop.f32.mrb[0].mxu0
    %v1116 = vadd.f32 0.0, %v1115
    %v1117 = vpop.f32.mrb[0].mxu0
    %1118 = vdwg.mxu0
    %v1119 = vpack.c.bf16 %v1116, %v1113
    %s1120 = scalar_lea.vmem %s7, 224
    %v1121 = vld [vmem:[%s1120] sm:$0xff]
    %v1122 = vld [vmem:[%s1120 + $0x8] sm:$0xff]
    %v1123 = vld [vmem:[%s1120 + $0x10] sm:$0xff]
    %v1124 = vld [vmem:[%s1120 + $0x18] sm:$0x77]
    %v1129 = vunpack.c.l.b16 %v1121
    %v1130 = vunpack.c.h.b16 %v1121
    %v1131 = vunpack.c.l.b16 %v1122
    %v1132 = vunpack.c.h.b16 %v1122
    %v1133 = vunpack.c.l.b16 %v1123
    %v1134 = vunpack.c.h.b16 %v1123
    %v1135 = vunpack.c.l.b16 %v1124
    %v1136 = vunpack.c.h.b16 %v1124
    %v1137 = vpack.c.b16 %v1131, %v1129
    %v1138 = vpack.c.b16 %v1132, %v1130
    %v1139 = vpack.c.b16 %v1135, %v1133
    %v1140 = vpack.c.b16 %v1136, %v1134
    %v1144 = vsel %vm283, %v1119, 0
    %v1147 = vsel %vm287, %v1139, 0
    %v1150 = vsel %vm287, %v1140, 0
    %1152 = vmatprep.subr.bf16.mxu0 %v1138
    %1153 = vmatpush1.bf16.msra.mxu0 %v1137
    %1154 = vmatprep.subr.bf16.mxu0 %v1150
    %1155 = vmatpush1.bf16.msra.mxu0 %v1147
    %1156 = vmatprep.subr.bf16.mxu0 0
    %1157 = vmatpush1.bf16.msra.mxu0 0
    %1158 = vmatprep.subr.bf16.mxu0 0
    %1159 = vmatpush1.bf16.msra.mxu0 0
    %1160 = vmatprep.subr.bf16.mxu0 0
    %1161 = vmatpush1.bf16.msra.mxu0 0
    %1162 = vmatprep.subr.bf16.mxu0 0
    %1163 = vmatpush1.bf16.msra.mxu0 0
    %1164 = vmatprep.subr.bf16.mxu0 0
    %1165 = vmatpush1.bf16.msra.mxu0 0
    %1166 = vmatprep.subr.bf16.mxu0 0
    %1167 = vmatpush1.bf16.msra.mxu0 0
    %1168 = vmatprep.subr.bf16.mxu0 0
    %1169 = vmatpush1.bf16.msra.mxu0 0
    %1170 = vmatprep.subr.bf16.mxu0 0
    %1171 = vmatpush1.bf16.msra.mxu0 0
    %1172 = vmatprep.subr.bf16.mxu0 0
    %1173 = vmatpush1.bf16.msra.mxu0 0
    %1174 = vmatprep.subr.bf16.mxu0 0
    %1175 = vmatpush1.bf16.msra.mxu0 0
    %1176 = vmatprep.subr.bf16.mxu0 0
    %1177 = vmatpush1.bf16.msra.mxu0 0
    %1178 = vmatprep.subr.bf16.mxu0 0
    %1179 = vmatpush1.bf16.msra.mxu0 0
    %1180 = vmatprep.subr.bf16.mxu0 0
    %1181 = vmatpush1.bf16.msra.mxu0 0
    %1182 = vmatprep.subr.bf16.mxu0 0
    %1183 = vmatpush1.bf16.msra.mxu0 0
    %1184 = vmatprep.mubr.bf16.mxu0 0
    %1185 = vmatmul.mubr.bf16.gmra.mrb[0].mxu0 %v1144
    %v1186 = vpop.f32.mrb[0].mxu0
    %v1187 = vadd.f32 0.0, %v1186
    %v1188 = vpop.f32.mrb[0].mxu0
    %v1189 = vadd.f32 0.0, %v1188
    %v1190 = vpop.f32.mrb[0].mxu0
    %v1191 = vadd.f32 0.0, %v1190
    %v1192 = vpop.f32.mrb[0].mxu0
    %v1193 = vadd.f32 0.0, %v1192
    %1194 = vdwg.mxu0
    %v1195 = vadd.f32 %v1063, %v1187
    %v1196 = vadd.f32 %v1064, %v1189
    %v1197 = vadd.f32 %v1065, %v1191
    %v1198 = vadd.f32 %v1066, %v1193
    %v1199 = vld [vmem:[%s9] sm:$0x3]
    %v1201 = vlaneseq
    %v1202 = vshrl.u32 %v1201, 7
    %v1203 = vsub.s32 0, %v1202
    %v1204 = vrot.slane %v1199, %v1203
    %v1205 = vlaneseq
    %v1206 = vshrl.u32 %v1205, 7
    %v1207 = vsub.s32 1, %v1206
    %v1208 = vrot.slane %v1199, %v1207
    %v1211 = vadd.f32 %v1195, %v1204
    %v1212 = vadd.f32 %v1196, %v1208
    %v1213 = vadd.f32 %v1197, %v1204
    %v1214 = vadd.f32 %v1198, %v1208
    %v1215 = vmax.f32 %v1211, 0.0
    %v1216 = vmax.f32 %v1212, 0.0
    %v1217 = vmax.f32 %v1213, 0.0
    %v1218 = vmax.f32 %v1214, 0.0
    %v1219 = vpack.c.bf16 %v1217, %v1215
    %v1220 = vpack.c.bf16 %v1218, %v1216
    %v1221 = vld [vmem:[%s11] sm:$0x7]
    %vm1222 = vcmask 113664
    %v1224 = vsel %vm1222, %v1221, 0
    %v1227 = vsel %vm287, %v1219, 0
    %v1230 = vsel %vm287, %v1220, 0
    %1232 = vmatprep.subr.bf16.mxu0 %v1230
    %1233 = vmatpush1.bf16.msra.mxu0 %v1227
    %1234 = vmatprep.subr.bf16.mxu0 0
    %1235 = vmatpush1.bf16.msra.mxu0 0
    %1236 = vmatprep.subr.bf16.mxu0 0
    %1237 = vmatpush1.bf16.msra.mxu0 0
    %1238 = vmatprep.subr.bf16.mxu0 0
    %1239 = vmatpush1.bf16.msra.mxu0 0
    %1240 = vmatprep.subr.bf16.mxu0 0
    %1241 = vmatpush1.bf16.msra.mxu0 0
    %1242 = vmatprep.subr.bf16.mxu0 0
    %1243 = vmatpush1.bf16.msra.mxu0 0
    %1244 = vmatprep.subr.bf16.mxu0 0
    %1245 = vmatpush1.bf16.msra.mxu0 0
    %1246 = vmatprep.subr.bf16.mxu0 0
    %1247 = vmatpush1.bf16.msra.mxu0 0
    %1248 = vmatprep.subr.bf16.mxu0 0
    %1249 = vmatpush1.bf16.msra.mxu0 0
    %1250 = vmatprep.subr.bf16.mxu0 0
    %1251 = vmatpush1.bf16.msra.mxu0 0
    %1252 = vmatprep.subr.bf16.mxu0 0
    %1253 = vmatpush1.bf16.msra.mxu0 0
    %1254 = vmatprep.subr.bf16.mxu0 0
    %1255 = vmatpush1.bf16.msra.mxu0 0
    %1256 = vmatprep.subr.bf16.mxu0 0
    %1257 = vmatpush1.bf16.msra.mxu0 0
    %1258 = vmatprep.subr.bf16.mxu0 0
    %1259 = vmatpush1.bf16.msra.mxu0 0
    %1260 = vmatprep.subr.bf16.mxu0 0
    %1261 = vmatpush1.bf16.msra.mxu0 0
    %1262 = vmatprep.subr.bf16.mxu0 0
    %1263 = vmatpush1.bf16.msra.mxu0 0
    %1264 = vmatprep.mubr.bf16.mxu0 0
    %1265 = vmatmul.mubr.bf16.gmra.mrb[0].mxu0 %v1224
    %v1266 = vpop.f32.mrb[0].mxu0
    %v1267 = vadd.f32 0.0, %v1266
    %v1268 = vpop.f32.mrb[0].mxu0
    %v1269 = vadd.f32 0.0, %v1268
    %v1270 = vpop.f32.mrb[0].mxu0
    %v1271 = vpop.f32.mrb[0].mxu0
    %1272 = vdwg.mxu0
    %v1273 = vpack.c.bf16 %v1267, %v1267
    %v1274 = vpack.c.bf16 %v1269, %v1269
    %v1275 = vld [vmem:[%s13] sm:$0xff]
    %v1276 = vld [vmem:[%s13 + $0x8] sm:$0xff]
    %v1277 = vld [vmem:[%s13 + $0x10] sm:$0xff]
    %v1278 = vld [vmem:[%s13 + $0x18] sm:$0xff]
    %v1279 = vld [vmem:[%s13 + $0x20] sm:$0xff]
    %v1280 = vld [vmem:[%s13 + $0x28] sm:$0xff]
    %v1281 = vld [vmem:[%s13 + $0x30] sm:$0xff]
    %v1282 = vld [vmem:[%s13 + $0x38] sm:$0xff]
    %v1283 = vld [vmem:[%s13 + $0x40] sm:$0xff]
    %v1284 = vld [vmem:[%s13 + $0x48] sm:$0xff]
    %v1285 = vld [vmem:[%s13 + $0x50] sm:$0xff]
    %v1286 = vld [vmem:[%s13 + $0x58] sm:$0xff]
    %v1287 = vld [vmem:[%s13 + $0x60] sm:$0xff]
    %v1288 = vld [vmem:[%s13 + $0x68] sm:$0xff]
    %v1289 = vld [vmem:[%s13 + $0x70] sm:$0xff]
    %v1290 = vld [vmem:[%s13 + $0x78] sm:$0xff]
    %v1291 = vld [vmem:[%s13 + $0x80] sm:$0xff]
    %v1292 = vld [vmem:[%s13 + $0x88] sm:$0xff]
    %v1293 = vld [vmem:[%s13 + $0x90] sm:$0xff]
    %v1294 = vld [vmem:[%s13 + $0x98] sm:$0xff]
    %v1295 = vld [vmem:[%s13 + $0xa0] sm:$0xff]
    %v1296 = vld [vmem:[%s13 + $0xa8] sm:$0xff]
    %v1297 = vld [vmem:[%s13 + $0xb0] sm:$0xff]
    %v1298 = vld [vmem:[%s13 + $0xb8] sm:$0xff]
    %v1299 = vld [vmem:[%s13 + $0xc0] sm:$0xff]
    %v1300 = vld [vmem:[%s13 + $0xc8] sm:$0xff]
    %v1301 = vld [vmem:[%s13 + $0xd0] sm:$0xff]
    %v1302 = vld [vmem:[%s13 + $0xd8] sm:$0xff]
    %s1303 = scalar_lea.vmem %s11, 4
    %v1304 = vld [vmem:[%s1303] sm:$0x7]
    %v1306 = vsel %vm1222, %v1304, 0
    %1308 = vmatprep.subr.bf16.mxu0 %v1230
    %1309 = vmatpush1.bf16.msra.mxu0 %v1227
    %1310 = vmatprep.subr.bf16.mxu0 0
    %1311 = vmatpush1.bf16.msra.mxu0 0
    %1312 = vmatprep.subr.bf16.mxu0 0
    %1313 = vmatpush1.bf16.msra.mxu0 0
    %1314 = vmatprep.subr.bf16.mxu0 0
    %1315 = vmatpush1.bf16.msra.mxu0 0
    %1316 = vmatprep.subr.bf16.mxu0 0
    %1317 = vmatpush1.bf16.msra.mxu0 0
    %1318 = vmatprep.subr.bf16.mxu0 0
    %1319 = vmatpush1.bf16.msra.mxu0 0
    %1320 = vmatprep.subr.bf16.mxu0 0
    %1321 = vmatpush1.bf16.msra.mxu0 0
    %1322 = vmatprep.subr.bf16.mxu0 0
    %1323 = vmatpush1.bf16.msra.mxu0 0
    %1324 = vmatprep.subr.bf16.mxu0 0
    %1325 = vmatpush1.bf16.msra.mxu0 0
    %1326 = vmatprep.subr.bf16.mxu0 0
    %1327 = vmatpush1.bf16.msra.mxu0 0
    %1328 = vmatprep.subr.bf16.mxu0 0
    %1329 = vmatpush1.bf16.msra.mxu0 0
    %1330 = vmatprep.subr.bf16.mxu0 0
    %1331 = vmatpush1.bf16.msra.mxu0 0
    %1332 = vmatprep.subr.bf16.mxu0 0
    %1333 = vmatpush1.bf16.msra.mxu0 0
    %1334 = vmatprep.subr.bf16.mxu0 0
    %1335 = vmatpush1.bf16.msra.mxu0 0
    %1336 = vmatprep.subr.bf16.mxu0 0
    %1337 = vmatpush1.bf16.msra.mxu0 0
    %1338 = vmatprep.subr.bf16.mxu0 0
    %1339 = vmatpush1.bf16.msra.mxu0 0
    %1340 = vmatprep.mubr.bf16.mxu0 0
    %1341 = vmatmul.mubr.bf16.gmra.mrb[0].mxu0 %v1306
    %v1342 = vpop.f32.mrb[0].mxu0
    %v1343 = vadd.f32 0.0, %v1342
    %v1344 = vpop.f32.mrb[0].mxu0
    %v1345 = vadd.f32 0.0, %v1344
    %v1346 = vpop.f32.mrb[0].mxu0
    %v1347 = vpop.f32.mrb[0].mxu0
    %1348 = vdwg.mxu0
    %v1349 = vpack.c.bf16 %v1343, %v1343
    %v1350 = vpack.c.bf16 %v1345, %v1345
    %s1351 = scalar_lea.vmem %s13, 224
    %v1352 = vld [vmem:[%s1351] sm:$0xff]
    %v1353 = vld [vmem:[%s1351 + $0x8] sm:$0xff]
    %v1354 = vld [vmem:[%s1351 + $0x10] sm:$0xff]
    %v1355 = vld [vmem:[%s1351 + $0x18] sm:$0xff]
    %v1356 = vld [vmem:[%s1351 + $0x20] sm:$0xff]
    %v1357 = vld [vmem:[%s1351 + $0x28] sm:$0xff]
    %v1358 = vld [vmem:[%s1351 + $0x30] sm:$0xff]
    %v1359 = vld [vmem:[%s1351 + $0x38] sm:$0xff]
    %v1360 = vld [vmem:[%s1351 + $0x40] sm:$0xff]
    %v1361 = vld [vmem:[%s1351 + $0x48] sm:$0xff]
    %v1362 = vld [vmem:[%s1351 + $0x50] sm:$0xff]
    %v1363 = vld [vmem:[%s1351 + $0x58] sm:$0xff]
    %v1364 = vld [vmem:[%s1351 + $0x60] sm:$0xff]
    %v1365 = vld [vmem:[%s1351 + $0x68] sm:$0xff]
    %v1366 = vld [vmem:[%s1351 + $0x70] sm:$0xff]
    %v1367 = vld [vmem:[%s1351 + $0x78] sm:$0xff]
    %v1368 = vld [vmem:[%s1351 + $0x80] sm:$0xff]
    %v1369 = vld [vmem:[%s1351 + $0x88] sm:$0xff]
    %v1370 = vld [vmem:[%s1351 + $0x90] sm:$0xff]
    %v1371 = vld [vmem:[%s1351 + $0x98] sm:$0xff]
    %v1372 = vld [vmem:[%s1351 + $0xa0] sm:$0xff]
    %v1373 = vld [vmem:[%s1351 + $0xa8] sm:$0xff]
    %v1374 = vld [vmem:[%s1351 + $0xb0] sm:$0xff]
    %v1375 = vld [vmem:[%s1351 + $0xb8] sm:$0xff]
    %v1376 = vld [vmem:[%s1351 + $0xc0] sm:$0xff]
    %v1377 = vld [vmem:[%s1351 + $0xc8] sm:$0xff]
    %v1378 = vld [vmem:[%s1351 + $0xd0] sm:$0xff]
    %v1379 = vld [vmem:[%s1351 + $0xd8] sm:$0xff]
    %v1408 = vunpack.c.l.b16 %v1352
    %v1409 = vunpack.c.h.b16 %v1352
    %v1410 = vunpack.c.l.b16 %v1353
    %v1411 = vunpack.c.h.b16 %v1353
    %v1412 = vunpack.c.l.b16 %v1354
    %v1413 = vunpack.c.h.b16 %v1354
    %v1414 = vunpack.c.l.b16 %v1355
    %v1415 = vunpack.c.h.b16 %v1355
    %v1416 = vunpack.c.l.b16 %v1356
    %v1417 = vunpack.c.h.b16 %v1356
    %v1418 = vunpack.c.l.b16 %v1357
    %v1419 = vunpack.c.h.b16 %v1357
    %v1420 = vunpack.c.l.b16 %v1358
    %v1421 = vunpack.c.h.b16 %v1358
    %v1422 = vunpack.c.l.b16 %v1359
    %v1423 = vunpack.c.h.b16 %v1359
    %v1424 = vunpack.c.l.b16 %v1360
    %v1425 = vunpack.c.h.b16 %v1360
    %v1426 = vunpack.c.l.b16 %v1361
    %v1427 = vunpack.c.h.b16 %v1361
    %v1428 = vunpack.c.l.b16 %v1362
    %v1429 = vunpack.c.h.b16 %v1362
    %v1430 = vunpack.c.l.b16 %v1363
    %v1431 = vunpack.c.h.b16 %v1363
    %v1432 = vunpack.c.l.b16 %v1364
    %v1433 = vunpack.c.h.b16 %v1364
    %v1434 = vunpack.c.l.b16 %v1365
    %v1435 = vunpack.c.h.b16 %v1365
    %v1436 = vunpack.c.l.b16 %v1366
    %v1437 = vunpack.c.h.b16 %v1366
    %v1438 = vunpack.c.l.b16 %v1367
    %v1439 = vunpack.c.h.b16 %v1367
    %v1440 = vunpack.c.l.b16 %v1368
    %v1441 = vunpack.c.h.b16 %v1368
    %v1442 = vunpack.c.l.b16 %v1369
    %v1443 = vunpack.c.h.b16 %v1369
    %v1444 = vunpack.c.l.b16 %v1370
    %v1445 = vunpack.c.h.b16 %v1370
    %v1446 = vunpack.c.l.b16 %v1371
    %v1447 = vunpack.c.h.b16 %v1371
    %v1448 = vunpack.c.l.b16 %v1372
    %v1449 = vunpack.c.h.b16 %v1372
    %v1450 = vunpack.c.l.b16 %v1373
    %v1451 = vunpack.c.h.b16 %v1373
    %v1452 = vunpack.c.l.b16 %v1374
    %v1453 = vunpack.c.h.b16 %v1374
    %v1454 = vunpack.c.l.b16 %v1375
    %v1455 = vunpack.c.h.b16 %v1375
    %v1456 = vunpack.c.l.b16 %v1376
    %v1457 = vunpack.c.h.b16 %v1376
    %v1458 = vunpack.c.l.b16 %v1377
    %v1459 = vunpack.c.h.b16 %v1377
    %v1460 = vunpack.c.l.b16 %v1378
    %v1461 = vunpack.c.h.b16 %v1378
    %v1462 = vunpack.c.l.b16 %v1379
    %v1463 = vunpack.c.h.b16 %v1379
    %v1464 = vpack.c.b16 %v1410, %v1408
    %v1465 = vpack.c.b16 %v1411, %v1409
    %v1466 = vpack.c.b16 %v1414, %v1412
    %v1467 = vpack.c.b16 %v1415, %v1413
    %v1468 = vpack.c.b16 %v1418, %v1416
    %v1469 = vpack.c.b16 %v1419, %v1417
    %v1470 = vpack.c.b16 %v1422, %v1420
    %v1471 = vpack.c.b16 %v1423, %v1421
    %v1472 = vpack.c.b16 %v1426, %v1424
    %v1473 = vpack.c.b16 %v1427, %v1425
    %v1474 = vpack.c.b16 %v1430, %v1428
    %v1475 = vpack.c.b16 %v1431, %v1429
    %v1476 = vpack.c.b16 %v1434, %v1432
    %v1477 = vpack.c.b16 %v1435, %v1433
    %v1478 = vpack.c.b16 %v1438, %v1436
    %v1479 = vpack.c.b16 %v1439, %v1437
    %v1480 = vpack.c.b16 %v1442, %v1440
    %v1481 = vpack.c.b16 %v1443, %v1441
    %v1482 = vpack.c.b16 %v1446, %v1444
    %v1483 = vpack.c.b16 %v1447, %v1445
    %v1484 = vpack.c.b16 %v1450, %v1448
    %v1485 = vpack.c.b16 %v1451, %v1449
    %v1486 = vpack.c.b16 %v1454, %v1452
    %v1487 = vpack.c.b16 %v1455, %v1453
    %v1488 = vpack.c.b16 %v1458, %v1456
    %v1489 = vpack.c.b16 %v1459, %v1457
    %v1490 = vpack.c.b16 %v1462, %v1460
    %v1491 = vpack.c.b16 %v1463, %v1461
    %vm1520 = vcmask 785408
    %v1522 = vsel %vm1520, %v1350, 0
    %1524 = vmatprep.subr.bf16.mxu0 %v1465
    %1525 = vmatpush1.bf16.msra.mxu0 %v1464
    %1526 = vmatprep.subr.bf16.mxu0 %v1467
    %1527 = vmatpush1.bf16.msra.mxu0 %v1466
    %1528 = vmatprep.subr.bf16.mxu0 %v1469
    %1529 = vmatpush1.bf16.msra.mxu0 %v1468
    %1530 = vmatprep.subr.bf16.mxu0 %v1471
    %1531 = vmatpush1.bf16.msra.mxu0 %v1470
    %1532 = vmatprep.subr.bf16.mxu0 %v1473
    %1533 = vmatpush1.bf16.msra.mxu0 %v1472
    %1534 = vmatprep.subr.bf16.mxu0 %v1475
    %1535 = vmatpush1.bf16.msra.mxu0 %v1474
    %1536 = vmatprep.subr.bf16.mxu0 %v1477
    %1537 = vmatpush1.bf16.msra.mxu0 %v1476
    %1538 = vmatprep.subr.bf16.mxu0 %v1479
    %1539 = vmatpush1.bf16.msra.mxu0 %v1478
    %1540 = vmatprep.subr.bf16.mxu0 %v1481
    %1541 = vmatpush1.bf16.msra.mxu0 %v1480
    %1542 = vmatprep.subr.bf16.mxu0 %v1483
    %1543 = vmatpush1.bf16.msra.mxu0 %v1482
    %1544 = vmatprep.subr.bf16.mxu0 %v1485
    %1545 = vmatpush1.bf16.msra.mxu0 %v1484
    %1546 = vmatprep.subr.bf16.mxu0 %v1487
    %1547 = vmatpush1.bf16.msra.mxu0 %v1486
    %1548 = vmatprep.subr.bf16.mxu0 %v1489
    %1549 = vmatpush1.bf16.msra.mxu0 %v1488
    %1550 = vmatprep.subr.bf16.mxu0 %v1491
    %1551 = vmatpush1.bf16.msra.mxu0 %v1490
    %1552 = vmatprep.subr.bf16.mxu0 0
    %1553 = vmatpush1.bf16.msra.mxu0 0
    %1554 = vmatprep.subr.bf16.mxu0 0
    %1555 = vmatpush1.bf16.msra.mxu0 0
    %1556 = vmatprep.mubr.bf16.mxu0 %v1522
    %1557 = vmatmul.mubr.bf16.gmra.mrb[0].mxu0 %v1349
    %v1558 = vpop.f32.mrb[0].mxu0
    %v1559 = vadd.f32 0.0, %v1558
    %v1560 = vpop.f32.mrb[0].mxu0
    %v1561 = vadd.f32 0.0, %v1560
    %v1562 = vpop.f32.mrb[0].mxu0
    %v1563 = vpop.f32.mrb[0].mxu0
    %1564 = vdwg.mxu0
    %v1593 = vunpack.c.l.b16 %v1275
    %v1594 = vunpack.c.h.b16 %v1275
    %v1595 = vunpack.c.l.b16 %v1276
    %v1596 = vunpack.c.h.b16 %v1276
    %v1597 = vunpack.c.l.b16 %v1277
    %v1598 = vunpack.c.h.b16 %v1277
    %v1599 = vunpack.c.l.b16 %v1278
    %v1600 = vunpack.c.h.b16 %v1278
    %v1601 = vunpack.c.l.b16 %v1279
    %v1602 = vunpack.c.h.b16 %v1279
    %v1603 = vunpack.c.l.b16 %v1280
    %v1604 = vunpack.c.h.b16 %v1280
    %v1605 = vunpack.c.l.b16 %v1281
    %v1606 = vunpack.c.h.b16 %v1281
    %v1607 = vunpack.c.l.b16 %v1282
    %v1608 = vunpack.c.h.b16 %v1282
    %v1609 = vunpack.c.l.b16 %v1283
    %v1610 = vunpack.c.h.b16 %v1283
    %v1611 = vunpack.c.l.b16 %v1284
    %v1612 = vunpack.c.h.b16 %v1284
    %v1613 = vunpack.c.l.b16 %v1285
    %v1614 = vunpack.c.h.b16 %v1285
    %v1615 = vunpack.c.l.b16 %v1286
    %v1616 = vunpack.c.h.b16 %v1286
    %v1617 = vunpack.c.l.b16 %v1287
    %v1618 = vunpack.c.h.b16 %v1287
    %v1619 = vunpack.c.l.b16 %v1288
    %v1620 = vunpack.c.h.b16 %v1288
    %v1621 = vunpack.c.l.b16 %v1289
    %v1622 = vunpack.c.h.b16 %v1289
    %v1623 = vunpack.c.l.b16 %v1290
    %v1624 = vunpack.c.h.b16 %v1290
    %v1625 = vunpack.c.l.b16 %v1291
    %v1626 = vunpack.c.h.b16 %v1291
    %v1627 = vunpack.c.l.b16 %v1292
    %v1628 = vunpack.c.h.b16 %v1292
    %v1629 = vunpack.c.l.b16 %v1293
    %v1630 = vunpack.c.h.b16 %v1293
    %v1631 = vunpack.c.l.b16 %v1294
    %v1632 = vunpack.c.h.b16 %v1294
    %v1633 = vunpack.c.l.b16 %v1295
    %v1634 = vunpack.c.h.b16 %v1295
    %v1635 = vunpack.c.l.b16 %v1296
    %v1636 = vunpack.c.h.b16 %v1296
    %v1637 = vunpack.c.l.b16 %v1297
    %v1638 = vunpack.c.h.b16 %v1297
    %v1639 = vunpack.c.l.b16 %v1298
    %v1640 = vunpack.c.h.b16 %v1298
    %v1641 = vunpack.c.l.b16 %v1299
    %v1642 = vunpack.c.h.b16 %v1299
    %v1643 = vunpack.c.l.b16 %v1300
    %v1644 = vunpack.c.h.b16 %v1300
    %v1645 = vunpack.c.l.b16 %v1301
    %v1646 = vunpack.c.h.b16 %v1301
    %v1647 = vunpack.c.l.b16 %v1302
    %v1648 = vunpack.c.h.b16 %v1302
    %v1649 = vpack.c.b16 %v1595, %v1593
    %v1650 = vpack.c.b16 %v1596, %v1594
    %v1651 = vpack.c.b16 %v1599, %v1597
    %v1652 = vpack.c.b16 %v1600, %v1598
    %v1653 = vpack.c.b16 %v1603, %v1601
    %v1654 = vpack.c.b16 %v1604, %v1602
    %v1655 = vpack.c.b16 %v1607, %v1605
    %v1656 = vpack.c.b16 %v1608, %v1606
    %v1657 = vpack.c.b16 %v1611, %v1609
    %v1658 = vpack.c.b16 %v1612, %v1610
    %v1659 = vpack.c.b16 %v1615, %v1613
    %v1660 = vpack.c.b16 %v1616, %v1614
    %v1661 = vpack.c.b16 %v1619, %v1617
    %v1662 = vpack.c.b16 %v1620, %v1618
    %v1663 = vpack.c.b16 %v1623, %v1621
    %v1664 = vpack.c.b16 %v1624, %v1622
    %v1665 = vpack.c.b16 %v1627, %v1625
    %v1666 = vpack.c.b16 %v1628, %v1626
    %v1667 = vpack.c.b16 %v1631, %v1629
    %v1668 = vpack.c.b16 %v1632, %v1630
    %v1669 = vpack.c.b16 %v1635, %v1633
    %v1670 = vpack.c.b16 %v1636, %v1634
    %v1671 = vpack.c.b16 %v1639, %v1637
    %v1672 = vpack.c.b16 %v1640, %v1638
    %v1673 = vpack.c.b16 %v1643, %v1641
    %v1674 = vpack.c.b16 %v1644, %v1642
    %v1675 = vpack.c.b16 %v1647, %v1645
    %v1676 = vpack.c.b16 %v1648, %v1646
    %v1706 = vsel %vm1520, %v1274, 0
    %1708 = vmatprep.subr.bf16.mxu0 %v1650
    %1709 = vmatpush1.bf16.msra.mxu0 %v1649
    %1710 = vmatprep.subr.bf16.mxu0 %v1652
    %1711 = vmatpush1.bf16.msra.mxu0 %v1651
    %1712 = vmatprep.subr.bf16.mxu0 %v1654
    %1713 = vmatpush1.bf16.msra.mxu0 %v1653
    %1714 = vmatprep.subr.bf16.mxu0 %v1656
    %1715 = vmatpush1.bf16.msra.mxu0 %v1655
    %1716 = vmatprep.subr.bf16.mxu0 %v1658
    %1717 = vmatpush1.bf16.msra.mxu0 %v1657
    %1718 = vmatprep.subr.bf16.mxu0 %v1660
    %1719 = vmatpush1.bf16.msra.mxu0 %v1659
    %1720 = vmatprep.subr.bf16.mxu0 %v1662
    %1721 = vmatpush1.bf16.msra.mxu0 %v1661
    %1722 = vmatprep.subr.bf16.mxu0 %v1664
    %1723 = vmatpush1.bf16.msra.mxu0 %v1663
    %1724 = vmatprep.subr.bf16.mxu0 %v1666
    %1725 = vmatpush1.bf16.msra.mxu0 %v1665
    %1726 = vmatprep.subr.bf16.mxu0 %v1668
    %1727 = vmatpush1.bf16.msra.mxu0 %v1667
    %1728 = vmatprep.subr.bf16.mxu0 %v1670
    %1729 = vmatpush1.bf16.msra.mxu0 %v1669
    %1730 = vmatprep.subr.bf16.mxu0 %v1672
    %1731 = vmatpush1.bf16.msra.mxu0 %v1671
    %1732 = vmatprep.subr.bf16.mxu0 %v1674
    %1733 = vmatpush1.bf16.msra.mxu0 %v1673
    %1734 = vmatprep.subr.bf16.mxu0 %v1676
    %1735 = vmatpush1.bf16.msra.mxu0 %v1675
    %1736 = vmatprep.subr.bf16.mxu0 0
    %1737 = vmatpush1.bf16.msra.mxu0 0
    %1738 = vmatprep.subr.bf16.mxu0 0
    %1739 = vmatpush1.bf16.msra.mxu0 0
    %1740 = vmatprep.mubr.bf16.mxu0 %v1706
    %1741 = vmatmul.mubr.bf16.gmra.mrb[0].mxu0 %v1273
    %v1742 = vpop.f32.mrb[0].mxu0
    %v1743 = vadd.f32 %v1559, %v1742
    %v1744 = vpop.f32.mrb[0].mxu0
    %v1745 = vadd.f32 %v1561, %v1744
    %v1746 = vpop.f32.mrb[0].mxu0
    %v1747 = vpop.f32.mrb[0].mxu0
    %1748 = vdwg.mxu0
    %s1749 = scalar_lea.vmem %s11, 8
    %v1750 = vld [vmem:[%s1749] sm:$0x7]
    %v1752 = vsel %vm1222, %v1750, 0
    %1754 = vmatprep.subr.bf16.mxu0 %v1230
    %1755 = vmatpush1.bf16.msra.mxu0 %v1227
    %1756 = vmatprep.subr.bf16.mxu0 0
    %1757 = vmatpush1.bf16.msra.mxu0 0
    %1758 = vmatprep.subr.bf16.mxu0 0
    %1759 = vmatpush1.bf16.msra.mxu0 0
    %1760 = vmatprep.subr.bf16.mxu0 0
    %1761 = vmatpush1.bf16.msra.mxu0 0
    %1762 = vmatprep.subr.bf16.mxu0 0
    %1763 = vmatpush1.bf16.msra.mxu0 0
    %1764 = vmatprep.subr.bf16.mxu0 0
    %1765 = vmatpush1.bf16.msra.mxu0 0
    %1766 = vmatprep.subr.bf16.mxu0 0
    %1767 = vmatpush1.bf16.msra.mxu0 0
    %1768 = vmatprep.subr.bf16.mxu0 0
    %1769 = vmatpush1.bf16.msra.mxu0 0
    %1770 = vmatprep.subr.bf16.mxu0 0
    %1771 = vmatpush1.bf16.msra.mxu0 0
    %1772 = vmatprep.subr.bf16.mxu0 0
    %1773 = vmatpush1.bf16.msra.mxu0 0
    %1774 = vmatprep.subr.bf16.mxu0 0
    %1775 = vmatpush1.bf16.msra.mxu0 0
    %1776 = vmatprep.subr.bf16.mxu0 0
    %1777 = vmatpush1.bf16.msra.mxu0 0
    %1778 = vmatprep.subr.bf16.mxu0 0
    %1779 = vmatpush1.bf16.msra.mxu0 0
    %1780 = vmatprep.subr.bf16.mxu0 0
    %1781 = vmatpush1.bf16.msra.mxu0 0
    %1782 = vmatprep.subr.bf16.mxu0 0
    %1783 = vmatpush1.bf16.msra.mxu0 0
    %1784 = vmatprep.subr.bf16.mxu0 0
    %1785 = vmatpush1.bf16.msra.mxu0 0
    %1786 = vmatprep.mubr.bf16.mxu0 0
    %1787 = vmatmul.mubr.bf16.gmra.mrb[0].mxu0 %v1752
    %v1788 = vpop.f32.mrb[0].mxu0
    %v1789 = vadd.f32 0.0, %v1788
    %v1790 = vpop.f32.mrb[0].mxu0
    %v1791 = vadd.f32 0.0, %v1790
    %v1792 = vpop.f32.mrb[0].mxu0
    %v1793 = vpop.f32.mrb[0].mxu0
    %1794 = vdwg.mxu0
    %v1795 = vpack.c.bf16 %v1789, %v1789
    %v1796 = vpack.c.bf16 %v1791, %v1791
    %s1797 = scalar_lea.vmem %s13, 448
    %v1798 = vld [vmem:[%s1797] sm:$0xff]
    %v1799 = vld [vmem:[%s1797 + $0x8] sm:$0xff]
    %v1800 = vld [vmem:[%s1797 + $0x10] sm:$0xff]
    %v1801 = vld [vmem:[%s1797 + $0x18] sm:$0xff]
    %v1802 = vld [vmem:[%s1797 + $0x20] sm:$0xff]
    %v1803 = vld [vmem:[%s1797 + $0x28] sm:$0xff]
    %v1804 = vld [vmem:[%s1797 + $0x30] sm:$0xff]
    %v1805 = vld [vmem:[%s1797 + $0x38] sm:$0xff]
    %v1806 = vld [vmem:[%s1797 + $0x40] sm:$0xff]
    %v1807 = vld [vmem:[%s1797 + $0x48] sm:$0xff]
    %v1808 = vld [vmem:[%s1797 + $0x50] sm:$0xff]
    %v1809 = vld [vmem:[%s1797 + $0x58] sm:$0xff]
    %v1810 = vld [vmem:[%s1797 + $0x60] sm:$0xff]
    %v1811 = vld [vmem:[%s1797 + $0x68] sm:$0xff]
    %v1812 = vld [vmem:[%s1797 + $0x70] sm:$0xff]
    %v1813 = vld [vmem:[%s1797 + $0x78] sm:$0xff]
    %v1814 = vld [vmem:[%s1797 + $0x80] sm:$0xff]
    %v1815 = vld [vmem:[%s1797 + $0x88] sm:$0xff]
    %v1816 = vld [vmem:[%s1797 + $0x90] sm:$0xff]
    %v1817 = vld [vmem:[%s1797 + $0x98] sm:$0xff]
    %v1818 = vld [vmem:[%s1797 + $0xa0] sm:$0xff]
    %v1819 = vld [vmem:[%s1797 + $0xa8] sm:$0xff]
    %v1820 = vld [vmem:[%s1797 + $0xb0] sm:$0xff]
    %v1821 = vld [vmem:[%s1797 + $0xb8] sm:$0xff]
    %v1822 = vld [vmem:[%s1797 + $0xc0] sm:$0xff]
    %v1823 = vld [vmem:[%s1797 + $0xc8] sm:$0xff]
    %v1824 = vld [vmem:[%s1797 + $0xd0] sm:$0xff]
    %v1825 = vld [vmem:[%s1797 + $0xd8] sm:$0xff]
    %v1854 = vunpack.c.l.b16 %v1798
    %v1855 = vunpack.c.h.b16 %v1798
    %v1856 = vunpack.c.l.b16 %v1799
    %v1857 = vunpack.c.h.b16 %v1799
    %v1858 = vunpack.c.l.b16 %v1800
    %v1859 = vunpack.c.h.b16 %v1800
    %v1860 = vunpack.c.l.b16 %v1801
    %v1861 = vunpack.c.h.b16 %v1801
    %v1862 = vunpack.c.l.b16 %v1802
    %v1863 = vunpack.c.h.b16 %v1802
    %v1864 = vunpack.c.l.b16 %v1803
    %v1865 = vunpack.c.h.b16 %v1803
    %v1866 = vunpack.c.l.b16 %v1804
    %v1867 = vunpack.c.h.b16 %v1804
    %v1868 = vunpack.c.l.b16 %v1805
    %v1869 = vunpack.c.h.b16 %v1805
    %v1870 = vunpack.c.l.b16 %v1806
    %v1871 = vunpack.c.h.b16 %v1806
    %v1872 = vunpack.c.l.b16 %v1807
    %v1873 = vunpack.c.h.b16 %v1807
    %v1874 = vunpack.c.l.b16 %v1808
    %v1875 = vunpack.c.h.b16 %v1808
    %v1876 = vunpack.c.l.b16 %v1809
    %v1877 = vunpack.c.h.b16 %v1809
    %v1878 = vunpack.c.l.b16 %v1810
    %v1879 = vunpack.c.h.b16 %v1810
    %v1880 = vunpack.c.l.b16 %v1811
    %v1881 = vunpack.c.h.b16 %v1811
    %v1882 = vunpack.c.l.b16 %v1812
    %v1883 = vunpack.c.h.b16 %v1812
    %v1884 = vunpack.c.l.b16 %v1813
    %v1885 = vunpack.c.h.b16 %v1813
    %v1886 = vunpack.c.l.b16 %v1814
    %v1887 = vunpack.c.h.b16 %v1814
    %v1888 = vunpack.c.l.b16 %v1815
    %v1889 = vunpack.c.h.b16 %v1815
    %v1890 = vunpack.c.l.b16 %v1816
    %v1891 = vunpack.c.h.b16 %v1816
    %v1892 = vunpack.c.l.b16 %v1817
    %v1893 = vunpack.c.h.b16 %v1817
    %v1894 = vunpack.c.l.b16 %v1818
    %v1895 = vunpack.c.h.b16 %v1818
    %v1896 = vunpack.c.l.b16 %v1819
    %v1897 = vunpack.c.h.b16 %v1819
    %v1898 = vunpack.c.l.b16 %v1820
    %v1899 = vunpack.c.h.b16 %v1820
    %v1900 = vunpack.c.l.b16 %v1821
    %v1901 = vunpack.c.h.b16 %v1821
    %v1902 = vunpack.c.l.b16 %v1822
    %v1903 = vunpack.c.h.b16 %v1822
    %v1904 = vunpack.c.l.b16 %v1823
    %v1905 = vunpack.c.h.b16 %v1823
    %v1906 = vunpack.c.l.b16 %v1824
    %v1907 = vunpack.c.h.b16 %v1824
    %v1908 = vunpack.c.l.b16 %v1825
    %v1909 = vunpack.c.h.b16 %v1825
    %v1910 = vpack.c.b16 %v1856, %v1854
    %v1911 = vpack.c.b16 %v1857, %v1855
    %v1912 = vpack.c.b16 %v1860, %v1858
    %v1913 = vpack.c.b16 %v1861, %v1859
    %v1914 = vpack.c.b16 %v1864, %v1862
    %v1915 = vpack.c.b16 %v1865, %v1863
    %v1916 = vpack.c.b16 %v1868, %v1866
    %v1917 = vpack.c.b16 %v1869, %v1867
    %v1918 = vpack.c.b16 %v1872, %v1870
    %v1919 = vpack.c.b16 %v1873, %v1871
    %v1920 = vpack.c.b16 %v1876, %v1874
    %v1921 = vpack.c.b16 %v1877, %v1875
    %v1922 = vpack.c.b16 %v1880, %v1878
    %v1923 = vpack.c.b16 %v1881, %v1879
    %v1924 = vpack.c.b16 %v1884, %v1882
    %v1925 = vpack.c.b16 %v1885, %v1883
    %v1926 = vpack.c.b16 %v1888, %v1886
    %v1927 = vpack.c.b16 %v1889, %v1887
    %v1928 = vpack.c.b16 %v1892, %v1890
    %v1929 = vpack.c.b16 %v1893, %v1891
    %v1930 = vpack.c.b16 %v1896, %v1894
    %v1931 = vpack.c.b16 %v1897, %v1895
    %v1932 = vpack.c.b16 %v1900, %v1898
    %v1933 = vpack.c.b16 %v1901, %v1899
    %v1934 = vpack.c.b16 %v1904, %v1902
    %v1935 = vpack.c.b16 %v1905, %v1903
    %v1936 = vpack.c.b16 %v1908, %v1906
    %v1937 = vpack.c.b16 %v1909, %v1907
    %v1967 = vsel %vm1520, %v1796, 0
    %1969 = vmatprep.subr.bf16.mxu0 %v1911
    %1970 = vmatpush1.bf16.msra.mxu0 %v1910
    %1971 = vmatprep.subr.bf16.mxu0 %v1913
    %1972 = vmatpush1.bf16.msra.mxu0 %v1912
    %1973 = vmatprep.subr.bf16.mxu0 %v1915
    %1974 = vmatpush1.bf16.msra.mxu0 %v1914
    %1975 = vmatprep.subr.bf16.mxu0 %v1917
    %1976 = vmatpush1.bf16.msra.mxu0 %v1916
    %1977 = vmatprep.subr.bf16.mxu0 %v1919
    %1978 = vmatpush1.bf16.msra.mxu0 %v1918
    %1979 = vmatprep.subr.bf16.mxu0 %v1921
    %1980 = vmatpush1.bf16.msra.mxu0 %v1920
    %1981 = vmatprep.subr.bf16.mxu0 %v1923
    %1982 = vmatpush1.bf16.msra.mxu0 %v1922
    %1983 = vmatprep.subr.bf16.mxu0 %v1925
    %1984 = vmatpush1.bf16.msra.mxu0 %v1924
    %1985 = vmatprep.subr.bf16.mxu0 %v1927
    %1986 = vmatpush1.bf16.msra.mxu0 %v1926
    %1987 = vmatprep.subr.bf16.mxu0 %v1929
    %1988 = vmatpush1.bf16.msra.mxu0 %v1928
    %1989 = vmatprep.subr.bf16.mxu0 %v1931
    %1990 = vmatpush1.bf16.msra.mxu0 %v1930
    %1991 = vmatprep.subr.bf16.mxu0 %v1933
    %1992 = vmatpush1.bf16.msra.mxu0 %v1932
    %1993 = vmatprep.subr.bf16.mxu0 %v1935
    %1994 = vmatpush1.bf16.msra.mxu0 %v1934
    %1995 = vmatprep.subr.bf16.mxu0 %v1937
    %1996 = vmatpush1.bf16.msra.mxu0 %v1936
    %1997 = vmatprep.subr.bf16.mxu0 0
    %1998 = vmatpush1.bf16.msra.mxu0 0
    %1999 = vmatprep.subr.bf16.mxu0 0
    %2000 = vmatpush1.bf16.msra.mxu0 0
    %2001 = vmatprep.mubr.bf16.mxu0 %v1967
    %2002 = vmatmul.mubr.bf16.gmra.mrb[0].mxu0 %v1795
    %v2003 = vpop.f32.mrb[0].mxu0
    %v2004 = vadd.f32 0.0, %v2003
    %v2005 = vpop.f32.mrb[0].mxu0
    %v2006 = vadd.f32 0.0, %v2005
    %v2007 = vpop.f32.mrb[0].mxu0
    %v2008 = vpop.f32.mrb[0].mxu0
    %2009 = vdwg.mxu0
    %v2010 = vadd.f32 %v1743, %v2004
    %v2011 = vadd.f32 %v1745, %v2006
    %v2012 = vld [vmem:[%s15] sm:$0x3]
    %v2014 = vlaneseq
    %v2015 = vshrl.u32 %v2014, 7
    %v2016 = vsub.s32 0, %v2015
    %v2017 = vrot.slane %v2012, %v2016
    %v2018 = vlaneseq
    %v2019 = vshrl.u32 %v2018, 7
    %v2020 = vsub.s32 1, %v2019
    %v2021 = vrot.slane %v2012, %v2020
    %v2024 = vadd.f32 %v2010, %v2017
    %v2025 = vadd.f32 %v2011, %v2021
    %v2026 = vmax.f32 %v2024, 0.0
    %v2027 = vmax.f32 %v2025, 0.0
    %v2028 = vpack.c.bf16 %v2026, %v2026
    %v2029 = vpack.c.bf16 %v2027, %v2027
    %v2030 = vld [vmem:[%s17] sm:$0x7]
    %vm2031 = vcmask 48128
    %v2033 = vsel %vm2031, %v2030, 0
    %vm2035 = vcmask 1042432
    %v2037 = vsel %vm2035, %v2028, 0
    %v2040 = vsel %vm2035, %v2029, 0
    %2042 = vmatprep.subr.bf16.mxu0 %v2040
    %2043 = vmatpush1.bf16.msra.mxu0 %v2037
    %2044 = vmatprep.subr.bf16.mxu0 0
    %2045 = vmatpush1.bf16.msra.mxu0 0
    %2046 = vmatprep.subr.bf16.mxu0 0
    %2047 = vmatpush1.bf16.msra.mxu0 0
    %2048 = vmatprep.subr.bf16.mxu0 0
    %2049 = vmatpush1.bf16.msra.mxu0 0
    %2050 = vmatprep.subr.bf16.mxu0 0
    %2051 = vmatpush1.bf16.msra.mxu0 0
    %2052 = vmatprep.subr.bf16.mxu0 0
    %2053 = vmatpush1.bf16.msra.mxu0 0
    %2054 = vmatprep.subr.bf16.mxu0 0
    %2055 = vmatpush1.bf16.msra.mxu0 0
    %2056 = vmatprep.subr.bf16.mxu0 0
    %2057 = vmatpush1.bf16.msra.mxu0 0
    %2058 = vmatprep.subr.bf16.mxu0 0
    %2059 = vmatpush1.bf16.msra.mxu0 0
    %2060 = vmatprep.subr.bf16.mxu0 0
    %2061 = vmatpush1.bf16.msra.mxu0 0
    %2062 = vmatprep.subr.bf16.mxu0 0
    %2063 = vmatpush1.bf16.msra.mxu0 0
    %2064 = vmatprep.subr.bf16.mxu0 0
    %2065 = vmatpush1.bf16.msra.mxu0 0
    %2066 = vmatprep.subr.bf16.mxu0 0
    %2067 = vmatpush1.bf16.msra.mxu0 0
    %2068 = vmatprep.subr.bf16.mxu0 0
    %2069 = vmatpush1.bf16.msra.mxu0 0
    %2070 = vmatprep.subr.bf16.mxu0 0
    %2071 = vmatpush1.bf16.msra.mxu0 0
    %2072 = vmatprep.subr.bf16.mxu0 0
    %2073 = vmatpush1.bf16.msra.mxu0 0
    %2074 = vmatprep.mubr.bf16.mxu0 0
    %2075 = vmatmul.mubr.bf16.gmra.mrb[0].mxu0 %v2033
    %v2076 = vpop.f32.mrb[0].mxu0
    %v2077 = vadd.f32 0.0, %v2076
    %v2078 = vpop.f32.mrb[0].mxu0
    %v2079 = vadd.f32 0.0, %v2078
    %v2080 = vpop.f32.mrb[0].mxu0
    %v2081 = vpop.f32.mrb[0].mxu0
    %2082 = vdwg.mxu0
    %v2083 = vpack.c.bf16 %v2077, %v2077
    %v2084 = vpack.c.bf16 %v2079, %v2079
    %v2085 = vld [vmem:[%s19] sm:$0xff]
    %v2086 = vld [vmem:[%s19 + $0x8] sm:$0xf]
    %v2087 = vld [vmem:[%s19 + $0xc] sm:$0xff]
    %v2088 = vld [vmem:[%s19 + $0x14] sm:$0xf]
    %v2089 = vld [vmem:[%s19 + $0x18] sm:$0xff]
    %v2090 = vld [vmem:[%s19 + $0x20] sm:$0xf]
    %v2091 = vld [vmem:[%s19 + $0x24] sm:$0xff]
    %v2092 = vld [vmem:[%s19 + $0x2c] sm:$0xf]
    %v2093 = vld [vmem:[%s19 + $0x30] sm:$0xff]
    %v2094 = vld [vmem:[%s19 + $0x38] sm:$0xf]
    %v2095 = vld [vmem:[%s19 + $0x3c] sm:$0xff]
    %v2096 = vld [vmem:[%s19 + $0x44] sm:$0xf]
    %v2097 = vld [vmem:[%s19 + $0x48] sm:$0xff]
    %v2098 = vld [vmem:[%s19 + $0x50] sm:$0xf]
    %v2099 = vld [vmem:[%s19 + $0x54] sm:$0xff]
    %v2100 = vld [vmem:[%s19 + $0x5c] sm:$0xf]
    %v2101 = vld [vmem:[%s19 + $0x60] sm:$0xff]
    %v2102 = vld [vmem:[%s19 + $0x68] sm:$0xf]
    %v2103 = vld [vmem:[%s19 + $0x6c] sm:$0xff]
    %v2104 = vld [vmem:[%s19 + $0x74] sm:$0xf]
    %v2105 = vld [vmem:[%s19 + $0x78] sm:$0xff]
    %v2106 = vld [vmem:[%s19 + $0x80] sm:$0xf]
    %v2107 = vld [vmem:[%s19 + $0x84] sm:$0xff]
    %v2108 = vld [vmem:[%s19 + $0x8c] sm:$0xf]
    %v2109 = vld [vmem:[%s19 + $0x90] sm:$0xff]
    %v2110 = vld [vmem:[%s19 + $0x98] sm:$0xf]
    %v2111 = vld [vmem:[%s19 + $0x9c] sm:$0xff]
    %v2112 = vld [vmem:[%s19 + $0xa4] sm:$0xf]
    %v2113 = vld [vmem:[%s19 + $0xa8] sm:$0xff]
    %v2114 = vld [vmem:[%s19 + $0xb0] sm:$0xf]
    %v2115 = vld [vmem:[%s19 + $0xb4] sm:$0xff]
    %v2116 = vld [vmem:[%s19 + $0xbc] sm:$0xf]
    %v2117 = vld [vmem:[%s19 + $0xc0] sm:$0xff]
    %v2118 = vld [vmem:[%s19 + $0xc8] sm:$0xf]
    %v2119 = vld [vmem:[%s19 + $0xcc] sm:$0xff]
    %v2120 = vld [vmem:[%s19 + $0xd4] sm:$0xf]
    %v2121 = vld [vmem:[%s19 + $0xd8] sm:$0xff]
    %v2122 = vld [vmem:[%s19 + $0xe0] sm:$0xf]
    %v2123 = vld [vmem:[%s19 + $0xe4] sm:$0xff]
    %v2124 = vld [vmem:[%s19 + $0xec] sm:$0xf]
    %v2125 = vld [vmem:[%s19 + $0xf0] sm:$0xff]
    %v2126 = vld [vmem:[%s19 + $0xf8] sm:$0xf]
    %v2127 = vld [vmem:[%s19 + $0xfc] sm:$0xff]
    %v2128 = vld [vmem:[%s19 + $0x104] sm:$0xf]
    %v2129 = vld [vmem:[%s19 + $0x108] sm:$0xff]
    %v2130 = vld [vmem:[%s19 + $0x110] sm:$0xf]
    %v2131 = vld [vmem:[%s19 + $0x114] sm:$0xff]
    %v2132 = vld [vmem:[%s19 + $0x11c] sm:$0xf]
    %s2133 = scalar_lea.vmem %s17, 4
    %v2134 = vld [vmem:[%s2133] sm:$0x7]
    %v2136 = vsel %vm2031, %v2134, 0
    %2138 = vmatprep.subr.bf16.mxu0 %v2040
    %2139 = vmatpush1.bf16.msra.mxu0 %v2037
    %2140 = vmatprep.subr.bf16.mxu0 0
    %2141 = vmatpush1.bf16.msra.mxu0 0
    %2142 = vmatprep.subr.bf16.mxu0 0
    %2143 = vmatpush1.bf16.msra.mxu0 0
    %2144 = vmatprep.subr.bf16.mxu0 0
    %2145 = vmatpush1.bf16.msra.mxu0 0
    %2146 = vmatprep.subr.bf16.mxu0 0
    %2147 = vmatpush1.bf16.msra.mxu0 0
    %2148 = vmatprep.subr.bf16.mxu0 0
    %2149 = vmatpush1.bf16.msra.mxu0 0
    %2150 = vmatprep.subr.bf16.mxu0 0
    %2151 = vmatpush1.bf16.msra.mxu0 0
    %2152 = vmatprep.subr.bf16.mxu0 0
    %2153 = vmatpush1.bf16.msra.mxu0 0
    %2154 = vmatprep.subr.bf16.mxu0 0
    %2155 = vmatpush1.bf16.msra.mxu0 0
    %2156 = vmatprep.subr.bf16.mxu0 0
    %2157 = vmatpush1.bf16.msra.mxu0 0
    %2158 = vmatprep.subr.bf16.mxu0 0
    %2159 = vmatpush1.bf16.msra.mxu0 0
    %2160 = vmatprep.subr.bf16.mxu0 0
    %2161 = vmatpush1.bf16.msra.mxu0 0
    %2162 = vmatprep.subr.bf16.mxu0 0
    %2163 = vmatpush1.bf16.msra.mxu0 0
    %2164 = vmatprep.subr.bf16.mxu0 0
    %2165 = vmatpush1.bf16.msra.mxu0 0
    %2166 = vmatprep.subr.bf16.mxu0 0
    %2167 = vmatpush1.bf16.msra.mxu0 0
    %2168 = vmatprep.subr.bf16.mxu0 0
    %2169 = vmatpush1.bf16.msra.mxu0 0
    %2170 = vmatprep.mubr.bf16.mxu0 0
    %2171 = vmatmul.mubr.bf16.gmra.mrb[0].mxu0 %v2136
    %v2172 = vpop.f32.mrb[0].mxu0
    %v2173 = vadd.f32 0.0, %v2172
    %v2174 = vpop.f32.mrb[0].mxu0
    %v2175 = vadd.f32 0.0, %v2174
    %v2176 = vpop.f32.mrb[0].mxu0
    %v2177 = vpop.f32.mrb[0].mxu0
    %2178 = vdwg.mxu0
    %v2179 = vpack.c.bf16 %v2173, %v2173
    %v2180 = vpack.c.bf16 %v2175, %v2175
    %s2181 = scalar_lea.vmem %s19, 288
    %v2182 = vld [vmem:[%s2181] sm:$0xff]
    %v2183 = vld [vmem:[%s2181 + $0x8] sm:$0xf]
    %v2184 = vld [vmem:[%s2181 + $0xc] sm:$0xff]
    %v2185 = vld [vmem:[%s2181 + $0x14] sm:$0xf]
    %v2186 = vld [vmem:[%s2181 + $0x18] sm:$0xff]
    %v2187 = vld [vmem:[%s2181 + $0x20] sm:$0xf]
    %v2188 = vld [vmem:[%s2181 + $0x24] sm:$0xff]
    %v2189 = vld [vmem:[%s2181 + $0x2c] sm:$0xf]
    %v2190 = vld [vmem:[%s2181 + $0x30] sm:$0xff]
    %v2191 = vld [vmem:[%s2181 + $0x38] sm:$0xf]
    %v2192 = vld [vmem:[%s2181 + $0x3c] sm:$0xff]
    %v2193 = vld [vmem:[%s2181 + $0x44] sm:$0xf]
    %v2194 = vld [vmem:[%s2181 + $0x48] sm:$0xff]
    %v2195 = vld [vmem:[%s2181 + $0x50] sm:$0xf]
    %v2196 = vld [vmem:[%s2181 + $0x54] sm:$0xff]
    %v2197 = vld [vmem:[%s2181 + $0x5c] sm:$0xf]
    %v2198 = vld [vmem:[%s2181 + $0x60] sm:$0xff]
    %v2199 = vld [vmem:[%s2181 + $0x68] sm:$0xf]
    %v2200 = vld [vmem:[%s2181 + $0x6c] sm:$0xff]
    %v2201 = vld [vmem:[%s2181 + $0x74] sm:$0xf]
    %v2202 = vld [vmem:[%s2181 + $0x78] sm:$0xff]
    %v2203 = vld [vmem:[%s2181 + $0x80] sm:$0xf]
    %v2204 = vld [vmem:[%s2181 + $0x84] sm:$0xff]
    %v2205 = vld [vmem:[%s2181 + $0x8c] sm:$0xf]
    %v2206 = vld [vmem:[%s2181 + $0x90] sm:$0xff]
    %v2207 = vld [vmem:[%s2181 + $0x98] sm:$0xf]
    %v2208 = vld [vmem:[%s2181 + $0x9c] sm:$0xff]
    %v2209 = vld [vmem:[%s2181 + $0xa4] sm:$0xf]
    %v2210 = vld [vmem:[%s2181 + $0xa8] sm:$0xff]
    %v2211 = vld [vmem:[%s2181 + $0xb0] sm:$0xf]
    %v2212 = vld [vmem:[%s2181 + $0xb4] sm:$0xff]
    %v2213 = vld [vmem:[%s2181 + $0xbc] sm:$0xf]
    %v2214 = vld [vmem:[%s2181 + $0xc0] sm:$0xff]
    %v2215 = vld [vmem:[%s2181 + $0xc8] sm:$0xf]
    %v2216 = vld [vmem:[%s2181 + $0xcc] sm:$0xff]
    %v2217 = vld [vmem:[%s2181 + $0xd4] sm:$0xf]
    %v2218 = vld [vmem:[%s2181 + $0xd8] sm:$0xff]
    %v2219 = vld [vmem:[%s2181 + $0xe0] sm:$0xf]
    %v2220 = vld [vmem:[%s2181 + $0xe4] sm:$0xff]
    %v2221 = vld [vmem:[%s2181 + $0xec] sm:$0xf]
    %v2222 = vld [vmem:[%s2181 + $0xf0] sm:$0xff]
    %v2223 = vld [vmem:[%s2181 + $0xf8] sm:$0xf]
    %v2224 = vld [vmem:[%s2181 + $0xfc] sm:$0xff]
    %v2225 = vld [vmem:[%s2181 + $0x104] sm:$0xf]
    %v2226 = vld [vmem:[%s2181 + $0x108] sm:$0xff]
    %v2227 = vld [vmem:[%s2181 + $0x110] sm:$0xf]
    %v2228 = vld [vmem:[%s2181 + $0x114] sm:$0xff]
    %v2229 = vld [vmem:[%s2181 + $0x11c] sm:$0xf]
    %v2278 = vunpack.c.l.b16 %v2182
    %v2279 = vunpack.c.h.b16 %v2182
    %v2280 = vunpack.c.l.b16 %v2183
    %v2281 = vunpack.c.l.b16 %v2184
    %v2282 = vunpack.c.h.b16 %v2184
    %v2283 = vunpack.c.l.b16 %v2185
    %v2284 = vunpack.c.l.b16 %v2186
    %v2285 = vunpack.c.h.b16 %v2186
    %v2286 = vunpack.c.l.b16 %v2187
    %v2287 = vunpack.c.l.b16 %v2188
    %v2288 = vunpack.c.h.b16 %v2188
    %v2289 = vunpack.c.l.b16 %v2189
    %v2290 = vunpack.c.l.b16 %v2190
    %v2291 = vunpack.c.h.b16 %v2190
    %v2292 = vunpack.c.l.b16 %v2191
    %v2293 = vunpack.c.l.b16 %v2192
    %v2294 = vunpack.c.h.b16 %v2192
    %v2295 = vunpack.c.l.b16 %v2193
    %v2296 = vunpack.c.l.b16 %v2194
    %v2297 = vunpack.c.h.b16 %v2194
    %v2298 = vunpack.c.l.b16 %v2195
    %v2299 = vunpack.c.l.b16 %v2196
    %v2300 = vunpack.c.h.b16 %v2196
    %v2301 = vunpack.c.l.b16 %v2197
    %v2302 = vunpack.c.l.b16 %v2198
    %v2303 = vunpack.c.h.b16 %v2198
    %v2304 = vunpack.c.l.b16 %v2199
    %v2305 = vunpack.c.l.b16 %v2200
    %v2306 = vunpack.c.h.b16 %v2200
    %v2307 = vunpack.c.l.b16 %v2201
    %v2308 = vunpack.c.l.b16 %v2202
    %v2309 = vunpack.c.h.b16 %v2202
    %v2310 = vunpack.c.l.b16 %v2203
    %v2311 = vunpack.c.l.b16 %v2204
    %v2312 = vunpack.c.h.b16 %v2204
    %v2313 = vunpack.c.l.b16 %v2205
    %v2314 = vunpack.c.l.b16 %v2206
    %v2315 = vunpack.c.h.b16 %v2206
    %v2316 = vunpack.c.l.b16 %v2207
    %v2317 = vunpack.c.l.b16 %v2208
    %v2318 = vunpack.c.h.b16 %v2208
    %v2319 = vunpack.c.l.b16 %v2209
    %v2320 = vunpack.c.l.b16 %v2210
    %v2321 = vunpack.c.h.b16 %v2210
    %v2322 = vunpack.c.l.b16 %v2211
    %v2323 = vunpack.c.l.b16 %v2212
    %v2324 = vunpack.c.h.b16 %v2212
    %v2325 = vunpack.c.l.b16 %v2213
    %v2326 = vunpack.c.l.b16 %v2214
    %v2327 = vunpack.c.h.b16 %v2214
    %v2328 = vunpack.c.l.b16 %v2215
    %v2329 = vunpack.c.l.b16 %v2216
    %v2330 = vunpack.c.h.b16 %v2216
    %v2331 = vunpack.c.l.b16 %v2217
    %v2332 = vunpack.c.l.b16 %v2218
    %v2333 = vunpack.c.h.b16 %v2218
    %v2334 = vunpack.c.l.b16 %v2219
    %v2335 = vunpack.c.l.b16 %v2220
    %v2336 = vunpack.c.h.b16 %v2220
    %v2337 = vunpack.c.l.b16 %v2221
    %v2338 = vunpack.c.l.b16 %v2222
    %v2339 = vunpack.c.h.b16 %v2222
    %v2340 = vunpack.c.l.b16 %v2223
    %v2341 = vunpack.c.l.b16 %v2224
    %v2342 = vunpack.c.h.b16 %v2224
    %v2343 = vunpack.c.l.b16 %v2225
    %v2344 = vunpack.c.l.b16 %v2226
    %v2345 = vunpack.c.h.b16 %v2226
    %v2346 = vunpack.c.l.b16 %v2227
    %v2347 = vunpack.c.l.b16 %v2228
    %v2348 = vunpack.c.h.b16 %v2228
    %v2349 = vunpack.c.l.b16 %v2229
    %v2350 = vpack.c.b16 %v2281, %v2278
    %v2351 = vpack.c.b16 %v2282, %v2279
    %v2352 = vpack.c.b16 %v2283, %v2280
    %v2353 = vpack.c.b16 %v2287, %v2284
    %v2354 = vpack.c.b16 %v2288, %v2285
    %v2355 = vpack.c.b16 %v2289, %v2286
    %v2356 = vpack.c.b16 %v2293, %v2290
    %v2357 = vpack.c.b16 %v2294, %v2291
    %v2358 = vpack.c.b16 %v2295, %v2292
    %v2359 = vpack.c.b16 %v2299, %v2296
    %v2360 = vpack.c.b16 %v2300, %v2297
    %v2361 = vpack.c.b16 %v2301, %v2298
    %v2362 = vpack.c.b16 %v2305, %v2302
    %v2363 = vpack.c.b16 %v2306, %v2303
    %v2364 = vpack.c.b16 %v2307, %v2304
    %v2365 = vpack.c.b16 %v2311, %v2308
    %v2366 = vpack.c.b16 %v2312, %v2309
    %v2367 = vpack.c.b16 %v2313, %v2310
    %v2368 = vpack.c.b16 %v2317, %v2314
    %v2369 = vpack.c.b16 %v2318, %v2315
    %v2370 = vpack.c.b16 %v2319, %v2316
    %v2371 = vpack.c.b16 %v2323, %v2320
    %v2372 = vpack.c.b16 %v2324, %v2321
    %v2373 = vpack.c.b16 %v2325, %v2322
    %v2374 = vpack.c.b16 %v2329, %v2326
    %v2375 = vpack.c.b16 %v2330, %v2327
    %v2376 = vpack.c.b16 %v2331, %v2328
    %v2377 = vpack.c.b16 %v2335, %v2332
    %v2378 = vpack.c.b16 %v2336, %v2333
    %v2379 = vpack.c.b16 %v2337, %v2334
    %v2380 = vpack.c.b16 %v2341, %v2338
    %v2381 = vpack.c.b16 %v2342, %v2339
    %v2382 = vpack.c.b16 %v2343, %v2340
    %v2383 = vpack.c.b16 %v2347, %v2344
    %v2384 = vpack.c.b16 %v2348, %v2345
    %v2385 = vpack.c.b16 %v2349, %v2346
    %vm2422 = vcmask 523264
    %v2424 = vsel %vm2422, %v2180, 0
    %2426 = vmatprep.subr.bf16.mxu0 %v2351
    %2427 = vmatpush1.bf16.msra.mxu0 %v2350
    %2428 = vmatprep.subr.bf16.mxu0 %v2354
    %2429 = vmatpush1.bf16.msra.mxu0 %v2353
    %2430 = vmatprep.subr.bf16.mxu0 %v2357
    %2431 = vmatpush1.bf16.msra.mxu0 %v2356
    %2432 = vmatprep.subr.bf16.mxu0 %v2360
    %2433 = vmatpush1.bf16.msra.mxu0 %v2359
    %2434 = vmatprep.subr.bf16.mxu0 %v2363
    %2435 = vmatpush1.bf16.msra.mxu0 %v2362
    %2436 = vmatprep.subr.bf16.mxu0 %v2366
    %2437 = vmatpush1.bf16.msra.mxu0 %v2365
    %2438 = vmatprep.subr.bf16.mxu0 %v2369
    %2439 = vmatpush1.bf16.msra.mxu0 %v2368
    %2440 = vmatprep.subr.bf16.mxu0 %v2372
    %2441 = vmatpush1.bf16.msra.mxu0 %v2371
    %2442 = vmatprep.subr.bf16.mxu0 %v2375
    %2443 = vmatpush1.bf16.msra.mxu0 %v2374
    %2444 = vmatprep.subr.bf16.mxu0 %v2378
    %2445 = vmatpush1.bf16.msra.mxu0 %v2377
    %2446 = vmatprep.subr.bf16.mxu0 %v2381
    %2447 = vmatpush1.bf16.msra.mxu0 %v2380
    %2448 = vmatprep.subr.bf16.mxu0 %v2384
    %2449 = vmatpush1.bf16.msra.mxu0 %v2383
    %2450 = vmatprep.subr.bf16.mxu0 0
    %2451 = vmatpush1.bf16.msra.mxu0 0
    %2452 = vmatprep.subr.bf16.mxu0 0
    %2453 = vmatpush1.bf16.msra.mxu0 0
    %2454 = vmatprep.subr.bf16.mxu0 0
    %2455 = vmatpush1.bf16.msra.mxu0 0
    %2456 = vmatprep.subr.bf16.mxu0 0
    %2457 = vmatpush1.bf16.msra.mxu0 0
    %2458 = vmatprep.mubr.bf16.mxu0 %v2424
    %2459 = vmatmul.mubr.bf16.gmra.mrb[0].mxu0 %v2179
    %v2460 = vpop.f32.mrb[0].mxu0
    %v2461 = vadd.f32 0.0, %v2460
    %v2462 = vpop.f32.mrb[0].mxu0
    %v2463 = vadd.f32 0.0, %v2462
    %v2464 = vpop.f32.mrb[0].mxu0
    %v2465 = vpop.f32.mrb[0].mxu0
    %2466 = vdwg.mxu0
    %2467 = vmatprep.subr.bf16.mxu0 0
    %2468 = vmatpush1.bf16.msra.mxu0 %v2352
    %2469 = vmatprep.subr.bf16.mxu0 0
    %2470 = vmatpush1.bf16.msra.mxu0 %v2355
    %2471 = vmatprep.subr.bf16.mxu0 0
    %2472 = vmatpush1.bf16.msra.mxu0 %v2358
    %2473 = vmatprep.subr.bf16.mxu0 0
    %2474 = vmatpush1.bf16.msra.mxu0 %v2361
    %2475 = vmatprep.subr.bf16.mxu0 0
    %2476 = vmatpush1.bf16.msra.mxu0 %v2364
    %2477 = vmatprep.subr.bf16.mxu0 0
    %2478 = vmatpush1.bf16.msra.mxu0 %v2367
    %2479 = vmatprep.subr.bf16.mxu0 0
    %2480 = vmatpush1.bf16.msra.mxu0 %v2370
    %2481 = vmatprep.subr.bf16.mxu0 0
    %2482 = vmatpush1.bf16.msra.mxu0 %v2373
    %2483 = vmatprep.subr.bf16.mxu0 0
    %2484 = vmatpush1.bf16.msra.mxu0 %v2376
    %2485 = vmatprep.subr.bf16.mxu0 0
    %2486 = vmatpush1.bf16.msra.mxu0 %v2379
    %2487 = vmatprep.subr.bf16.mxu0 0
    %2488 = vmatpush1.bf16.msra.mxu0 %v2382
    %2489 = vmatprep.subr.bf16.mxu0 0
    %2490 = vmatpush1.bf16.msra.mxu0 %v2385
    %2491 = vmatprep.subr.bf16.mxu0 0
    %2492 = vmatpush1.bf16.msra.mxu0 0
    %2493 = vmatprep.subr.bf16.mxu0 0
    %2494 = vmatpush1.bf16.msra.mxu0 0
    %2495 = vmatprep.subr.bf16.mxu0 0
    %2496 = vmatpush1.bf16.msra.mxu0 0
    %2497 = vmatprep.subr.bf16.mxu0 0
    %2498 = vmatpush1.bf16.msra.mxu0 0
    %2499 = vmatprep.mubr.bf16.mxu0 %v2424
    %2500 = vmatmul.mubr.bf16.gmra.mrb[0].mxu0 %v2179
    %v2501 = vpop.f32.mrb[0].mxu0
    %v2502 = vadd.f32 0.0, %v2501
    %v2503 = vpop.f32.mrb[0].mxu0
    %v2504 = vpop.f32.mrb[0].mxu0
    %v2505 = vpop.f32.mrb[0].mxu0
    %2506 = vdwg.mxu0
    %v2555 = vunpack.c.l.b16 %v2085
    %v2556 = vunpack.c.h.b16 %v2085
    %v2557 = vunpack.c.l.b16 %v2086
    %v2558 = vunpack.c.l.b16 %v2087
    %v2559 = vunpack.c.h.b16 %v2087
    %v2560 = vunpack.c.l.b16 %v2088
    %v2561 = vunpack.c.l.b16 %v2089
    %v2562 = vunpack.c.h.b16 %v2089
    %v2563 = vunpack.c.l.b16 %v2090
    %v2564 = vunpack.c.l.b16 %v2091
    %v2565 = vunpack.c.h.b16 %v2091
    %v2566 = vunpack.c.l.b16 %v2092
    %v2567 = vunpack.c.l.b16 %v2093
    %v2568 = vunpack.c.h.b16 %v2093
    %v2569 = vunpack.c.l.b16 %v2094
    %v2570 = vunpack.c.l.b16 %v2095
    %v2571 = vunpack.c.h.b16 %v2095
    %v2572 = vunpack.c.l.b16 %v2096
    %v2573 = vunpack.c.l.b16 %v2097
    %v2574 = vunpack.c.h.b16 %v2097
    %v2575 = vunpack.c.l.b16 %v2098
    %v2576 = vunpack.c.l.b16 %v2099
    %v2577 = vunpack.c.h.b16 %v2099
    %v2578 = vunpack.c.l.b16 %v2100
    %v2579 = vunpack.c.l.b16 %v2101
    %v2580 = vunpack.c.h.b16 %v2101
    %v2581 = vunpack.c.l.b16 %v2102
    %v2582 = vunpack.c.l.b16 %v2103
    %v2583 = vunpack.c.h.b16 %v2103
    %v2584 = vunpack.c.l.b16 %v2104
    %v2585 = vunpack.c.l.b16 %v2105
    %v2586 = vunpack.c.h.b16 %v2105
    %v2587 = vunpack.c.l.b16 %v2106
    %v2588 = vunpack.c.l.b16 %v2107
    %v2589 = vunpack.c.h.b16 %v2107
    %v2590 = vunpack.c.l.b16 %v2108
    %v2591 = vunpack.c.l.b16 %v2109
    %v2592 = vunpack.c.h.b16 %v2109
    %v2593 = vunpack.c.l.b16 %v2110
    %v2594 = vunpack.c.l.b16 %v2111
    %v2595 = vunpack.c.h.b16 %v2111
    %v2596 = vunpack.c.l.b16 %v2112
    %v2597 = vunpack.c.l.b16 %v2113
    %v2598 = vunpack.c.h.b16 %v2113
    %v2599 = vunpack.c.l.b16 %v2114
    %v2600 = vunpack.c.l.b16 %v2115
    %v2601 = vunpack.c.h.b16 %v2115
    %v2602 = vunpack.c.l.b16 %v2116
    %v2603 = vunpack.c.l.b16 %v2117
    %v2604 = vunpack.c.h.b16 %v2117
    %v2605 = vunpack.c.l.b16 %v2118
    %v2606 = vunpack.c.l.b16 %v2119
    %v2607 = vunpack.c.h.b16 %v2119
    %v2608 = vunpack.c.l.b16 %v2120
    %v2609 = vunpack.c.l.b16 %v2121
    %v2610 = vunpack.c.h.b16 %v2121
    %v2611 = vunpack.c.l.b16 %v2122
    %v2612 = vunpack.c.l.b16 %v2123
    %v2613 = vunpack.c.h.b16 %v2123
    %v2614 = vunpack.c.l.b16 %v2124
    %v2615 = vunpack.c.l.b16 %v2125
    %v2616 = vunpack.c.h.b16 %v2125
    %v2617 = vunpack.c.l.b16 %v2126
    %v2618 = vunpack.c.l.b16 %v2127
    %v2619 = vunpack.c.h.b16 %v2127
    %v2620 = vunpack.c.l.b16 %v2128
    %v2621 = vunpack.c.l.b16 %v2129
    %v2622 = vunpack.c.h.b16 %v2129
    %v2623 = vunpack.c.l.b16 %v2130
    %v2624 = vunpack.c.l.b16 %v2131
    %v2625 = vunpack.c.h.b16 %v2131
    %v2626 = vunpack.c.l.b16 %v2132
    %v2627 = vpack.c.b16 %v2558, %v2555
    %v2628 = vpack.c.b16 %v2559, %v2556
    %v2629 = vpack.c.b16 %v2560, %v2557
    %v2630 = vpack.c.b16 %v2564, %v2561
    %v2631 = vpack.c.b16 %v2565, %v2562
    %v2632 = vpack.c.b16 %v2566, %v2563
    %v2633 = vpack.c.b16 %v2570, %v2567
    %v2634 = vpack.c.b16 %v2571, %v2568
    %v2635 = vpack.c.b16 %v2572, %v2569
    %v2636 = vpack.c.b16 %v2576, %v2573
    %v2637 = vpack.c.b16 %v2577, %v2574
    %v2638 = vpack.c.b16 %v2578, %v2575
    %v2639 = vpack.c.b16 %v2582, %v2579
    %v2640 = vpack.c.b16 %v2583, %v2580
    %v2641 = vpack.c.b16 %v2584, %v2581
    %v2642 = vpack.c.b16 %v2588, %v2585
    %v2643 = vpack.c.b16 %v2589, %v2586
    %v2644 = vpack.c.b16 %v2590, %v2587
    %v2645 = vpack.c.b16 %v2594, %v2591
    %v2646 = vpack.c.b16 %v2595, %v2592
    %v2647 = vpack.c.b16 %v2596, %v2593
    %v2648 = vpack.c.b16 %v2600, %v2597
    %v2649 = vpack.c.b16 %v2601, %v2598
    %v2650 = vpack.c.b16 %v2602, %v2599
    %v2651 = vpack.c.b16 %v2606, %v2603
    %v2652 = vpack.c.b16 %v2607, %v2604
    %v2653 = vpack.c.b16 %v2608, %v2605
    %v2654 = vpack.c.b16 %v2612, %v2609
    %v2655 = vpack.c.b16 %v2613, %v2610
    %v2656 = vpack.c.b16 %v2614, %v2611
    %v2657 = vpack.c.b16 %v2618, %v2615
    %v2658 = vpack.c.b16 %v2619, %v2616
    %v2659 = vpack.c.b16 %v2620, %v2617
    %v2660 = vpack.c.b16 %v2624, %v2621
    %v2661 = vpack.c.b16 %v2625, %v2622
    %v2662 = vpack.c.b16 %v2626, %v2623
    %v2700 = vsel %vm2422, %v2084, 0
    %2702 = vmatprep.subr.bf16.mxu0 %v2628
    %2703 = vmatpush1.bf16.msra.mxu0 %v2627
    %2704 = vmatprep.subr.bf16.mxu0 %v2631
    %2705 = vmatpush1.bf16.msra.mxu0 %v2630
    %2706 = vmatprep.subr.bf16.mxu0 %v2634
    %2707 = vmatpush1.bf16.msra.mxu0 %v2633
    %2708 = vmatprep.subr.bf16.mxu0 %v2637
    %2709 = vmatpush1.bf16.msra.mxu0 %v2636
    %2710 = vmatprep.subr.bf16.mxu0 %v2640
    %2711 = vmatpush1.bf16.msra.mxu0 %v2639
    %2712 = vmatprep.subr.bf16.mxu0 %v2643
    %2713 = vmatpush1.bf16.msra.mxu0 %v2642
    %2714 = vmatprep.subr.bf16.mxu0 %v2646
    %2715 = vmatpush1.bf16.msra.mxu0 %v2645
    %2716 = vmatprep.subr.bf16.mxu0 %v2649
    %2717 = vmatpush1.bf16.msra.mxu0 %v2648
    %2718 = vmatprep.subr.bf16.mxu0 %v2652
    %2719 = vmatpush1.bf16.msra.mxu0 %v2651
    %2720 = vmatprep.subr.bf16.mxu0 %v2655
    %2721 = vmatpush1.bf16.msra.mxu0 %v2654
    %2722 = vmatprep.subr.bf16.mxu0 %v2658
    %2723 = vmatpush1.bf16.msra.mxu0 %v2657
    %2724 = vmatprep.subr.bf16.mxu0 %v2661
    %2725 = vmatpush1.bf16.msra.mxu0 %v2660
    %2726 = vmatprep.subr.bf16.mxu0 0
    %2727 = vmatpush1.bf16.msra.mxu0 0
    %2728 = vmatprep.subr.bf16.mxu0 0
    %2729 = vmatpush1.bf16.msra.mxu0 0
    %2730 = vmatprep.subr.bf16.mxu0 0
    %2731 = vmatpush1.bf16.msra.mxu0 0
    %2732 = vmatprep.subr.bf16.mxu0 0
    %2733 = vmatpush1.bf16.msra.mxu0 0
    %2734 = vmatprep.mubr.bf16.mxu0 %v2700
    %2735 = vmatmul.mubr.bf16.gmra.mrb[0].mxu0 %v2083
    %v2736 = vpop.f32.mrb[0].mxu0
    %v2737 = vadd.f32 %v2461, %v2736
    %v2738 = vpop.f32.mrb[0].mxu0
    %v2739 = vadd.f32 %v2463, %v2738
    %v2740 = vpop.f32.mrb[0].mxu0
    %v2741 = vpop.f32.mrb[0].mxu0
    %2742 = vdwg.mxu0
    %2743 = vmatprep.subr.bf16.mxu0 0
    %2744 = vmatpush1.bf16.msra.mxu0 %v2629
    %2745 = vmatprep.subr.bf16.mxu0 0
    %2746 = vmatpush1.bf16.msra.mxu0 %v2632
    %2747 = vmatprep.subr.bf16.mxu0 0
    %2748 = vmatpush1.bf16.msra.mxu0 %v2635
    %2749 = vmatprep.subr.bf16.mxu0 0
    %2750 = vmatpush1.bf16.msra.mxu0 %v2638
    %2751 = vmatprep.subr.bf16.mxu0 0
    %2752 = vmatpush1.bf16.msra.mxu0 %v2641
    %2753 = vmatprep.subr.bf16.mxu0 0
    %2754 = vmatpush1.bf16.msra.mxu0 %v2644
    %2755 = vmatprep.subr.bf16.mxu0 0
    %2756 = vmatpush1.bf16.msra.mxu0 %v2647
    %2757 = vmatprep.subr.bf16.mxu0 0
    %2758 = vmatpush1.bf16.msra.mxu0 %v2650
    %2759 = vmatprep.subr.bf16.mxu0 0
    %2760 = vmatpush1.bf16.msra.mxu0 %v2653
    %2761 = vmatprep.subr.bf16.mxu0 0
    %2762 = vmatpush1.bf16.msra.mxu0 %v2656
    %2763 = vmatprep.subr.bf16.mxu0 0
    %2764 = vmatpush1.bf16.msra.mxu0 %v2659
    %2765 = vmatprep.subr.bf16.mxu0 0
    %2766 = vmatpush1.bf16.msra.mxu0 %v2662
    %2767 = vmatprep.subr.bf16.mxu0 0
    %2768 = vmatpush1.bf16.msra.mxu0 0
    %2769 = vmatprep.subr.bf16.mxu0 0
    %2770 = vmatpush1.bf16.msra.mxu0 0
    %2771 = vmatprep.subr.bf16.mxu0 0
    %2772 = vmatpush1.bf16.msra.mxu0 0
    %2773 = vmatprep.subr.bf16.mxu0 0
    %2774 = vmatpush1.bf16.msra.mxu0 0
    %2775 = vmatprep.mubr.bf16.mxu0 %v2700
    %2776 = vmatmul.mubr.bf16.gmra.mrb[0].mxu0 %v2083
    %v2777 = vpop.f32.mrb[0].mxu0
    %v2778 = vadd.f32 %v2502, %v2777
    %v2779 = vpop.f32.mrb[0].mxu0
    %v2780 = vpop.f32.mrb[0].mxu0
    %v2781 = vpop.f32.mrb[0].mxu0
    %2782 = vdwg.mxu0
    %s2783 = scalar_lea.vmem %s17, 8
    %v2784 = vld [vmem:[%s2783] sm:$0x7]
    %v2786 = vsel %vm2031, %v2784, 0
    %2788 = vmatprep.subr.bf16.mxu0 %v2040
    %2789 = vmatpush1.bf16.msra.mxu0 %v2037
    %2790 = vmatprep.subr.bf16.mxu0 0
    %2791 = vmatpush1.bf16.msra.mxu0 0
    %2792 = vmatprep.subr.bf16.mxu0 0
    %2793 = vmatpush1.bf16.msra.mxu0 0
    %2794 = vmatprep.subr.bf16.mxu0 0
    %2795 = vmatpush1.bf16.msra.mxu0 0
    %2796 = vmatprep.subr.bf16.mxu0 0
    %2797 = vmatpush1.bf16.msra.mxu0 0
    %2798 = vmatprep.subr.bf16.mxu0 0
    %2799 = vmatpush1.bf16.msra.mxu0 0
    %2800 = vmatprep.subr.bf16.mxu0 0
    %2801 = vmatpush1.bf16.msra.mxu0 0
    %2802 = vmatprep.subr.bf16.mxu0 0
    %2803 = vmatpush1.bf16.msra.mxu0 0
    %2804 = vmatprep.subr.bf16.mxu0 0
    %2805 = vmatpush1.bf16.msra.mxu0 0
    %2806 = vmatprep.subr.bf16.mxu0 0
    %2807 = vmatpush1.bf16.msra.mxu0 0
    %2808 = vmatprep.subr.bf16.mxu0 0
    %2809 = vmatpush1.bf16.msra.mxu0 0
    %2810 = vmatprep.subr.bf16.mxu0 0
    %2811 = vmatpush1.bf16.msra.mxu0 0
    %2812 = vmatprep.subr.bf16.mxu0 0
    %2813 = vmatpush1.bf16.msra.mxu0 0
    %2814 = vmatprep.subr.bf16.mxu0 0
    %2815 = vmatpush1.bf16.msra.mxu0 0
    %2816 = vmatprep.subr.bf16.mxu0 0
    %2817 = vmatpush1.bf16.msra.mxu0 0
    %2818 = vmatprep.subr.bf16.mxu0 0
    %2819 = vmatpush1.bf16.msra.mxu0 0
    %2820 = vmatprep.mubr.bf16.mxu0 0
    %2821 = vmatmul.mubr.bf16.gmra.mrb[0].mxu0 %v2786
    %v2822 = vpop.f32.mrb[0].mxu0
    %v2823 = vadd.f32 0.0, %v2822
    %v2824 = vpop.f32.mrb[0].mxu0
    %v2825 = vadd.f32 0.0, %v2824
    %v2826 = vpop.f32.mrb[0].mxu0
    %v2827 = vpop.f32.mrb[0].mxu0
    %2828 = vdwg.mxu0
    %v2829 = vpack.c.bf16 %v2823, %v2823
    %v2830 = vpack.c.bf16 %v2825, %v2825
    %s2831 = scalar_lea.vmem %s19, 576
    %v2832 = vld [vmem:[%s2831] sm:$0xff]
    %v2833 = vld [vmem:[%s2831 + $0x8] sm:$0xf]
    %v2834 = vld [vmem:[%s2831 + $0xc] sm:$0xff]
    %v2835 = vld [vmem:[%s2831 + $0x14] sm:$0xf]
    %v2836 = vld [vmem:[%s2831 + $0x18] sm:$0xff]
    %v2837 = vld [vmem:[%s2831 + $0x20] sm:$0xf]
    %v2838 = vld [vmem:[%s2831 + $0x24] sm:$0xff]
    %v2839 = vld [vmem:[%s2831 + $0x2c] sm:$0xf]
    %v2840 = vld [vmem:[%s2831 + $0x30] sm:$0xff]
    %v2841 = vld [vmem:[%s2831 + $0x38] sm:$0xf]
    %v2842 = vld [vmem:[%s2831 + $0x3c] sm:$0xff]
    %v2843 = vld [vmem:[%s2831 + $0x44] sm:$0xf]
    %v2844 = vld [vmem:[%s2831 + $0x48] sm:$0xff]
    %v2845 = vld [vmem:[%s2831 + $0x50] sm:$0xf]
    %v2846 = vld [vmem:[%s2831 + $0x54] sm:$0xff]
    %v2847 = vld [vmem:[%s2831 + $0x5c] sm:$0xf]
    %v2848 = vld [vmem:[%s2831 + $0x60] sm:$0xff]
    %v2849 = vld [vmem:[%s2831 + $0x68] sm:$0xf]
    %v2850 = vld [vmem:[%s2831 + $0x6c] sm:$0xff]
    %v2851 = vld [vmem:[%s2831 + $0x74] sm:$0xf]
    %v2852 = vld [vmem:[%s2831 + $0x78] sm:$0xff]
    %v2853 = vld [vmem:[%s2831 + $0x80] sm:$0xf]
    %v2854 = vld [vmem:[%s2831 + $0x84] sm:$0xff]
    %v2855 = vld [vmem:[%s2831 + $0x8c] sm:$0xf]
    %v2856 = vld [vmem:[%s2831 + $0x90] sm:$0xff]
    %v2857 = vld [vmem:[%s2831 + $0x98] sm:$0xf]
    %v2858 = vld [vmem:[%s2831 + $0x9c] sm:$0xff]
    %v2859 = vld [vmem:[%s2831 + $0xa4] sm:$0xf]
    %v2860 = vld [vmem:[%s2831 + $0xa8] sm:$0xff]
    %v2861 = vld [vmem:[%s2831 + $0xb0] sm:$0xf]
    %v2862 = vld [vmem:[%s2831 + $0xb4] sm:$0xff]
    %v2863 = vld [vmem:[%s2831 + $0xbc] sm:$0xf]
    %v2864 = vld [vmem:[%s2831 + $0xc0] sm:$0xff]
    %v2865 = vld [vmem:[%s2831 + $0xc8] sm:$0xf]
    %v2866 = vld [vmem:[%s2831 + $0xcc] sm:$0xff]
    %v2867 = vld [vmem:[%s2831 + $0xd4] sm:$0xf]
    %v2868 = vld [vmem:[%s2831 + $0xd8] sm:$0xff]
    %v2869 = vld [vmem:[%s2831 + $0xe0] sm:$0xf]
    %v2870 = vld [vmem:[%s2831 + $0xe4] sm:$0xff]
    %v2871 = vld [vmem:[%s2831 + $0xec] sm:$0xf]
    %v2872 = vld [vmem:[%s2831 + $0xf0] sm:$0xff]
    %v2873 = vld [vmem:[%s2831 + $0xf8] sm:$0xf]
    %v2874 = vld [vmem:[%s2831 + $0xfc] sm:$0xff]
    %v2875 = vld [vmem:[%s2831 + $0x104] sm:$0xf]
    %v2876 = vld [vmem:[%s2831 + $0x108] sm:$0xff]
    %v2877 = vld [vmem:[%s2831 + $0x110] sm:$0xf]
    %v2878 = vld [vmem:[%s2831 + $0x114] sm:$0xff]
    %v2879 = vld [vmem:[%s2831 + $0x11c] sm:$0xf]
    %v2928 = vunpack.c.l.b16 %v2832
    %v2929 = vunpack.c.h.b16 %v2832
    %v2930 = vunpack.c.l.b16 %v2833
    %v2931 = vunpack.c.l.b16 %v2834
    %v2932 = vunpack.c.h.b16 %v2834
    %v2933 = vunpack.c.l.b16 %v2835
    %v2934 = vunpack.c.l.b16 %v2836
    %v2935 = vunpack.c.h.b16 %v2836
    %v2936 = vunpack.c.l.b16 %v2837
    %v2937 = vunpack.c.l.b16 %v2838
    %v2938 = vunpack.c.h.b16 %v2838
    %v2939 = vunpack.c.l.b16 %v2839
    %v2940 = vunpack.c.l.b16 %v2840
    %v2941 = vunpack.c.h.b16 %v2840
    %v2942 = vunpack.c.l.b16 %v2841
    %v2943 = vunpack.c.l.b16 %v2842
    %v2944 = vunpack.c.h.b16 %v2842
    %v2945 = vunpack.c.l.b16 %v2843
    %v2946 = vunpack.c.l.b16 %v2844
    %v2947 = vunpack.c.h.b16 %v2844
    %v2948 = vunpack.c.l.b16 %v2845
    %v2949 = vunpack.c.l.b16 %v2846
    %v2950 = vunpack.c.h.b16 %v2846
    %v2951 = vunpack.c.l.b16 %v2847
    %v2952 = vunpack.c.l.b16 %v2848
    %v2953 = vunpack.c.h.b16 %v2848
    %v2954 = vunpack.c.l.b16 %v2849
    %v2955 = vunpack.c.l.b16 %v2850
    %v2956 = vunpack.c.h.b16 %v2850
    %v2957 = vunpack.c.l.b16 %v2851
    %v2958 = vunpack.c.l.b16 %v2852
    %v2959 = vunpack.c.h.b16 %v2852
    %v2960 = vunpack.c.l.b16 %v2853
    %v2961 = vunpack.c.l.b16 %v2854
    %v2962 = vunpack.c.h.b16 %v2854
    %v2963 = vunpack.c.l.b16 %v2855
    %v2964 = vunpack.c.l.b16 %v2856
    %v2965 = vunpack.c.h.b16 %v2856
    %v2966 = vunpack.c.l.b16 %v2857
    %v2967 = vunpack.c.l.b16 %v2858
    %v2968 = vunpack.c.h.b16 %v2858
    %v2969 = vunpack.c.l.b16 %v2859
    %v2970 = vunpack.c.l.b16 %v2860
    %v2971 = vunpack.c.h.b16 %v2860
    %v2972 = vunpack.c.l.b16 %v2861
    %v2973 = vunpack.c.l.b16 %v2862
    %v2974 = vunpack.c.h.b16 %v2862
    %v2975 = vunpack.c.l.b16 %v2863
    %v2976 = vunpack.c.l.b16 %v2864
    %v2977 = vunpack.c.h.b16 %v2864
    %v2978 = vunpack.c.l.b16 %v2865
    %v2979 = vunpack.c.l.b16 %v2866
    %v2980 = vunpack.c.h.b16 %v2866
    %v2981 = vunpack.c.l.b16 %v2867
    %v2982 = vunpack.c.l.b16 %v2868
    %v2983 = vunpack.c.h.b16 %v2868
    %v2984 = vunpack.c.l.b16 %v2869
    %v2985 = vunpack.c.l.b16 %v2870
    %v2986 = vunpack.c.h.b16 %v2870
    %v2987 = vunpack.c.l.b16 %v2871
    %v2988 = vunpack.c.l.b16 %v2872
    %v2989 = vunpack.c.h.b16 %v2872
    %v2990 = vunpack.c.l.b16 %v2873
    %v2991 = vunpack.c.l.b16 %v2874
    %v2992 = vunpack.c.h.b16 %v2874
    %v2993 = vunpack.c.l.b16 %v2875
    %v2994 = vunpack.c.l.b16 %v2876
    %v2995 = vunpack.c.h.b16 %v2876
    %v2996 = vunpack.c.l.b16 %v2877
    %v2997 = vunpack.c.l.b16 %v2878
    %v2998 = vunpack.c.h.b16 %v2878
    %v2999 = vunpack.c.l.b16 %v2879
    %v3000 = vpack.c.b16 %v2931, %v2928
    %v3001 = vpack.c.b16 %v2932, %v2929
    %v3002 = vpack.c.b16 %v2933, %v2930
    %v3003 = vpack.c.b16 %v2937, %v2934
    %v3004 = vpack.c.b16 %v2938, %v2935
    %v3005 = vpack.c.b16 %v2939, %v2936
    %v3006 = vpack.c.b16 %v2943, %v2940
    %v3007 = vpack.c.b16 %v2944, %v2941
    %v3008 = vpack.c.b16 %v2945, %v2942
    %v3009 = vpack.c.b16 %v2949, %v2946
    %v3010 = vpack.c.b16 %v2950, %v2947
    %v3011 = vpack.c.b16 %v2951, %v2948
    %v3012 = vpack.c.b16 %v2955, %v2952
    %v3013 = vpack.c.b16 %v2956, %v2953
    %v3014 = vpack.c.b16 %v2957, %v2954
    %v3015 = vpack.c.b16 %v2961, %v2958
    %v3016 = vpack.c.b16 %v2962, %v2959
    %v3017 = vpack.c.b16 %v2963, %v2960
    %v3018 = vpack.c.b16 %v2967, %v2964
    %v3019 = vpack.c.b16 %v2968, %v2965
    %v3020 = vpack.c.b16 %v2969, %v2966
    %v3021 = vpack.c.b16 %v2973, %v2970
    %v3022 = vpack.c.b16 %v2974, %v2971
    %v3023 = vpack.c.b16 %v2975, %v2972
    %v3024 = vpack.c.b16 %v2979, %v2976
    %v3025 = vpack.c.b16 %v2980, %v2977
    %v3026 = vpack.c.b16 %v2981, %v2978
    %v3027 = vpack.c.b16 %v2985, %v2982
    %v3028 = vpack.c.b16 %v2986, %v2983
    %v3029 = vpack.c.b16 %v2987, %v2984
    %v3030 = vpack.c.b16 %v2991, %v2988
    %v3031 = vpack.c.b16 %v2992, %v2989
    %v3032 = vpack.c.b16 %v2993, %v2990
    %v3033 = vpack.c.b16 %v2997, %v2994
    %v3034 = vpack.c.b16 %v2998, %v2995
    %v3035 = vpack.c.b16 %v2999, %v2996
    %v3073 = vsel %vm2422, %v2830, 0
    %3075 = vmatprep.subr.bf16.mxu0 %v3001
    %3076 = vmatpush1.bf16.msra.mxu0 %v3000
    %3077 = vmatprep.subr.bf16.mxu0 %v3004
    %3078 = vmatpush1.bf16.msra.mxu0 %v3003
    %3079 = vmatprep.subr.bf16.mxu0 %v3007
    %3080 = vmatpush1.bf16.msra.mxu0 %v3006
    %3081 = vmatprep.subr.bf16.mxu0 %v3010
    %3082 = vmatpush1.bf16.msra.mxu0 %v3009
    %3083 = vmatprep.subr.bf16.mxu0 %v3013
    %3084 = vmatpush1.bf16.msra.mxu0 %v3012
    %3085 = vmatprep.subr.bf16.mxu0 %v3016
    %3086 = vmatpush1.bf16.msra.mxu0 %v3015
    %3087 = vmatprep.subr.bf16.mxu0 %v3019
    %3088 = vmatpush1.bf16.msra.mxu0 %v3018
    %3089 = vmatprep.subr.bf16.mxu0 %v3022
    %3090 = vmatpush1.bf16.msra.mxu0 %v3021
    %3091 = vmatprep.subr.bf16.mxu0 %v3025
    %3092 = vmatpush1.bf16.msra.mxu0 %v3024
    %3093 = vmatprep.subr.bf16.mxu0 %v3028
    %3094 = vmatpush1.bf16.msra.mxu0 %v3027
    %3095 = vmatprep.subr.bf16.mxu0 %v3031
    %3096 = vmatpush1.bf16.msra.mxu0 %v3030
    %3097 = vmatprep.subr.bf16.mxu0 %v3034
    %3098 = vmatpush1.bf16.msra.mxu0 %v3033
    %3099 = vmatprep.subr.bf16.mxu0 0
    %3100 = vmatpush1.bf16.msra.mxu0 0
    %3101 = vmatprep.subr.bf16.mxu0 0
    %3102 = vmatpush1.bf16.msra.mxu0 0
    %3103 = vmatprep.subr.bf16.mxu0 0
    %3104 = vmatpush1.bf16.msra.mxu0 0
    %3105 = vmatprep.subr.bf16.mxu0 0
    %3106 = vmatpush1.bf16.msra.mxu0 0
    %3107 = vmatprep.mubr.bf16.mxu0 %v3073
    %3108 = vmatmul.mubr.bf16.gmra.mrb[0].mxu0 %v2829
    %v3109 = vpop.f32.mrb[0].mxu0
    %v3110 = vadd.f32 0.0, %v3109
    %v3111 = vpop.f32.mrb[0].mxu0
    %v3112 = vadd.f32 0.0, %v3111
    %v3113 = vpop.f32.mrb[0].mxu0
    %v3114 = vpop.f32.mrb[0].mxu0
    %3115 = vdwg.mxu0
    %3116 = vmatprep.subr.bf16.mxu0 0
    %3117 = vmatpush1.bf16.msra.mxu0 %v3002
    %3118 = vmatprep.subr.bf16.mxu0 0
    %3119 = vmatpush1.bf16.msra.mxu0 %v3005
    %3120 = vmatprep.subr.bf16.mxu0 0
    %3121 = vmatpush1.bf16.msra.mxu0 %v3008
    %3122 = vmatprep.subr.bf16.mxu0 0
    %3123 = vmatpush1.bf16.msra.mxu0 %v3011
    %3124 = vmatprep.subr.bf16.mxu0 0
    %3125 = vmatpush1.bf16.msra.mxu0 %v3014
    %3126 = vmatprep.subr.bf16.mxu0 0
    %3127 = vmatpush1.bf16.msra.mxu0 %v3017
    %3128 = vmatprep.subr.bf16.mxu0 0
    %3129 = vmatpush1.bf16.msra.mxu0 %v3020
    %3130 = vmatprep.subr.bf16.mxu0 0
    %3131 = vmatpush1.bf16.msra.mxu0 %v3023
    %3132 = vmatprep.subr.bf16.mxu0 0
    %3133 = vmatpush1.bf16.msra.mxu0 %v3026
    %3134 = vmatprep.subr.bf16.mxu0 0
    %3135 = vmatpush1.bf16.msra.mxu0 %v3029
    %3136 = vmatprep.subr.bf16.mxu0 0
    %3137 = vmatpush1.bf16.msra.mxu0 %v3032
    %3138 = vmatprep.subr.bf16.mxu0 0
    %3139 = vmatpush1.bf16.msra.mxu0 %v3035
    %3140 = vmatprep.subr.bf16.mxu0 0
    %3141 = vmatpush1.bf16.msra.mxu0 0
    %3142 = vmatprep.subr.bf16.mxu0 0
    %3143 = vmatpush1.bf16.msra.mxu0 0
    %3144 = vmatprep.subr.bf16.mxu0 0
    %3145 = vmatpush1.bf16.msra.mxu0 0
    %3146 = vmatprep.subr.bf16.mxu0 0
    %3147 = vmatpush1.bf16.msra.mxu0 0
    %3148 = vmatprep.mubr.bf16.mxu0 %v3073
    %3149 = vmatmul.mubr.bf16.gmra.mrb[0].mxu0 %v2829
    %v3150 = vpop.f32.mrb[0].mxu0
    %v3151 = vadd.f32 0.0, %v3150
    %v3152 = vpop.f32.mrb[0].mxu0
    %v3153 = vpop.f32.mrb[0].mxu0
    %v3154 = vpop.f32.mrb[0].mxu0
    %3155 = vdwg.mxu0
    %v3156 = vadd.f32 %v2737, %v3110
    %v3157 = vadd.f32 %v2739, %v3112
    %v3158 = vadd.f32 %v2778, %v3151
    %v3159 = vld [vmem:[%s21] sm:$0x7]
    %v3161 = vlaneseq
    %v3162 = vshrl.u32 %v3161, 7
    %v3163 = vsub.s32 0, %v3162
    %v3164 = vrot.slane %v3159, %v3163
    %v3165 = vlaneseq
    %v3166 = vshrl.u32 %v3165, 7
    %v3167 = vsub.s32 1, %v3166
    %v3168 = vrot.slane %v3159, %v3167
    %v3169 = vlaneseq
    %v3170 = vshrl.u32 %v3169, 7
    %v3171 = vsub.s32 2, %v3170
    %v3172 = vrot.slane %v3159, %v3171
    %v3176 = vadd.f32 %v3156, %v3164
    %v3177 = vadd.f32 %v3157, %v3168
    %v3178 = vadd.f32 %v3158, %v3172
    %v3179 = vmax.f32 %v3176, 0.0
    %v3180 = vmax.f32 %v3177, 0.0
    %v3181 = vmax.f32 %v3178, 0.0
    %v3182 = vpack.c.bf16 %v3179, %v3179
    %v3183 = vpack.c.bf16 %v3180, %v3180
    %v3184 = vpack.c.bf16 %v3181, %v3181
    %v3185 = vld [vmem:[%s23] sm:$0x1]
    %v3187 = vsel %vm2031, %v3185, 0
    %v3190 = vsel %vm2035, %v3182, 0
    %v3193 = vsel %vm2035, %v3183, 0
    %v3196 = vsel %vm2035, %v3184, 0
    %3198 = vmatprep.subr.bf16.mxu0 %v3193
    %3199 = vmatpush1.bf16.msra.mxu0 %v3190
    %3200 = vmatprep.subr.bf16.mxu0 0
    %3201 = vmatpush1.bf16.msra.mxu0 0
    %3202 = vmatprep.subr.bf16.mxu0 0
    %3203 = vmatpush1.bf16.msra.mxu0 0
    %3204 = vmatprep.subr.bf16.mxu0 0
    %3205 = vmatpush1.bf16.msra.mxu0 0
    %3206 = vmatprep.subr.bf16.mxu0 0
    %3207 = vmatpush1.bf16.msra.mxu0 0
    %3208 = vmatprep.subr.bf16.mxu0 0
    %3209 = vmatpush1.bf16.msra.mxu0 0
    %3210 = vmatprep.subr.bf16.mxu0 0
    %3211 = vmatpush1.bf16.msra.mxu0 0
    %3212 = vmatprep.subr.bf16.mxu0 0
    %3213 = vmatpush1.bf16.msra.mxu0 0
    %3214 = vmatprep.subr.bf16.mxu0 0
    %3215 = vmatpush1.bf16.msra.mxu0 0
    %3216 = vmatprep.subr.bf16.mxu0 0
    %3217 = vmatpush1.bf16.msra.mxu0 0
    %3218 = vmatprep.subr.bf16.mxu0 0
    %3219 = vmatpush1.bf16.msra.mxu0 0
    %3220 = vmatprep.subr.bf16.mxu0 0
    %3221 = vmatpush1.bf16.msra.mxu0 0
    %3222 = vmatprep.subr.bf16.mxu0 0
    %3223 = vmatpush1.bf16.msra.mxu0 0
    %3224 = vmatprep.subr.bf16.mxu0 0
    %3225 = vmatpush1.bf16.msra.mxu0 0
    %3226 = vmatprep.subr.bf16.mxu0 0
    %3227 = vmatpush1.bf16.msra.mxu0 0
    %3228 = vmatprep.subr.bf16.mxu0 0
    %3229 = vmatpush1.bf16.msra.mxu0 0
    %3230 = vmatprep.mubr.bf16.mxu0 0
    %3231 = vmatmul.mubr.bf16.gmra.mrb[0].mxu0 %v3187
    %v3232 = vpop.f32.mrb[0].mxu0
    %v3233 = vadd.f32 0.0, %v3232
    %v3234 = vpop.f32.mrb[0].mxu0
    %v3235 = vadd.f32 0.0, %v3234
    %v3236 = vpop.f32.mrb[0].mxu0
    %v3237 = vpop.f32.mrb[0].mxu0
    %3238 = vdwg.mxu0
    %3239 = vmatprep.subr.bf16.mxu0 0
    %3240 = vmatpush1.bf16.msra.mxu0 %v3196
    %3241 = vmatprep.subr.bf16.mxu0 0
    %3242 = vmatpush1.bf16.msra.mxu0 0
    %3243 = vmatprep.subr.bf16.mxu0 0
    %3244 = vmatpush1.bf16.msra.mxu0 0
    %3245 = vmatprep.subr.bf16.mxu0 0
    %3246 = vmatpush1.bf16.msra.mxu0 0
    %3247 = vmatprep.subr.bf16.mxu0 0
    %3248 = vmatpush1.bf16.msra.mxu0 0
    %3249 = vmatprep.subr.bf16.mxu0 0
    %3250 = vmatpush1.bf16.msra.mxu0 0
    %3251 = vmatprep.subr.bf16.mxu0 0
    %3252 = vmatpush1.bf16.msra.mxu0 0
    %3253 = vmatprep.subr.bf16.mxu0 0
    %3254 = vmatpush1.bf16.msra.mxu0 0
    %3255 = vmatprep.subr.bf16.mxu0 0
    %3256 = vmatpush1.bf16.msra.mxu0 0
    %3257 = vmatprep.subr.bf16.mxu0 0
    %3258 = vmatpush1.bf16.msra.mxu0 0
    %3259 = vmatprep.subr.bf16.mxu0 0
    %3260 = vmatpush1.bf16.msra.mxu0 0
    %3261 = vmatprep.subr.bf16.mxu0 0
    %3262 = vmatpush1.bf16.msra.mxu0 0
    %3263 = vmatprep.subr.bf16.mxu0 0
    %3264 = vmatpush1.bf16.msra.mxu0 0
    %3265 = vmatprep.subr.bf16.mxu0 0
    %3266 = vmatpush1.bf16.msra.mxu0 0
    %3267 = vmatprep.subr.bf16.mxu0 0
    %3268 = vmatpush1.bf16.msra.mxu0 0
    %3269 = vmatprep.subr.bf16.mxu0 0
    %3270 = vmatpush1.bf16.msra.mxu0 0
    %3271 = vmatprep.mubr.bf16.mxu0 0
    %3272 = vmatmul.mubr.bf16.gmra.mrb[0].mxu0 %v3187
    %v3273 = vpop.f32.mrb[0].mxu0
    %v3274 = vadd.f32 0.0, %v3273
    %v3275 = vpop.f32.mrb[0].mxu0
    %v3276 = vpop.f32.mrb[0].mxu0
    %v3277 = vpop.f32.mrb[0].mxu0
    %3278 = vdwg.mxu0
    %v3279 = vpack.c.bf16 %v3233, %v3233
    %v3280 = vpack.c.bf16 %v3235, %v3235
    %v3281 = vpack.c.bf16 %v3274, %v3274
    %v3282 = vld [vmem:[%s25] sm:$0xf]
    %v3283 = vld [vmem:[%s25 + $0x4] sm:$0xf]
    %v3284 = vld [vmem:[%s25 + $0x8] sm:$0xf]
    %v3285 = vld [vmem:[%s25 + $0xc] sm:$0xf]
    %v3286 = vld [vmem:[%s25 + $0x10] sm:$0xf]
    %v3287 = vld [vmem:[%s25 + $0x14] sm:$0xf]
    %v3288 = vld [vmem:[%s25 + $0x18] sm:$0xf]
    %v3289 = vld [vmem:[%s25 + $0x1c] sm:$0xf]
    %v3290 = vld [vmem:[%s25 + $0x20] sm:$0xf]
    %v3291 = vld [vmem:[%s25 + $0x24] sm:$0xf]
    %v3292 = vld [vmem:[%s25 + $0x28] sm:$0xf]
    %v3293 = vld [vmem:[%s25 + $0x2c] sm:$0xf]
    %v3294 = vld [vmem:[%s25 + $0x30] sm:$0xf]
    %v3295 = vld [vmem:[%s25 + $0x34] sm:$0xf]
    %v3296 = vld [vmem:[%s25 + $0x38] sm:$0xf]
    %v3297 = vld [vmem:[%s25 + $0x3c] sm:$0xf]
    %v3298 = vld [vmem:[%s25 + $0x40] sm:$0xf]
    %v3299 = vld [vmem:[%s25 + $0x44] sm:$0xf]
    %v3300 = vld [vmem:[%s25 + $0x48] sm:$0xf]
    %v3301 = vld [vmem:[%s25 + $0x4c] sm:$0xf]
    %v3302 = vld [vmem:[%s25 + $0x50] sm:$0xf]
    %v3303 = vld [vmem:[%s25 + $0x54] sm:$0xf]
    %v3304 = vld [vmem:[%s25 + $0x58] sm:$0xf]
    %v3305 = vld [vmem:[%s25 + $0x5c] sm:$0xf]
    %v3306 = vld [vmem:[%s25 + $0x60] sm:$0xf]
    %v3307 = vld [vmem:[%s25 + $0x64] sm:$0xf]
    %v3308 = vld [vmem:[%s25 + $0x68] sm:$0xf]
    %v3309 = vld [vmem:[%s25 + $0x6c] sm:$0xf]
    %v3310 = vld [vmem:[%s25 + $0x70] sm:$0xf]
    %v3311 = vld [vmem:[%s25 + $0x74] sm:$0xf]
    %v3312 = vld [vmem:[%s25 + $0x78] sm:$0xf]
    %v3313 = vld [vmem:[%s25 + $0x7c] sm:$0xf]
    %v3314 = vld [vmem:[%s25 + $0x80] sm:$0xf]
    %v3315 = vld [vmem:[%s25 + $0x84] sm:$0xf]
    %v3316 = vld [vmem:[%s25 + $0x88] sm:$0xf]
    %v3317 = vld [vmem:[%s25 + $0x8c] sm:$0xf]
    %v3318 = vld [vmem:[%s25 + $0x90] sm:$0xf]
    %v3319 = vld [vmem:[%s25 + $0x94] sm:$0xf]
    %v3320 = vld [vmem:[%s25 + $0x98] sm:$0xf]
    %v3321 = vld [vmem:[%s25 + $0x9c] sm:$0xf]
    %v3322 = vld [vmem:[%s25 + $0xa0] sm:$0xf]
    %v3323 = vld [vmem:[%s25 + $0xa4] sm:$0xf]
    %v3324 = vld [vmem:[%s25 + $0xa8] sm:$0xf]
    %v3325 = vld [vmem:[%s25 + $0xac] sm:$0xf]
    %v3326 = vld [vmem:[%s25 + $0xb0] sm:$0xf]
    %v3327 = vld [vmem:[%s25 + $0xb4] sm:$0xf]
    %v3328 = vld [vmem:[%s25 + $0xb8] sm:$0xf]
    %v3329 = vld [vmem:[%s25 + $0xbc] sm:$0xf]
    %s3330 = scalar_lea.vmem %s23, 1
    %v3331 = vld [vmem:[%s3330] sm:$0x1]
    %v3333 = vsel %vm2031, %v3331, 0
    %3335 = vmatprep.subr.bf16.mxu0 %v3193
    %3336 = vmatpush1.bf16.msra.mxu0 %v3190
    %3337 = vmatprep.subr.bf16.mxu0 0
    %3338 = vmatpush1.bf16.msra.mxu0 0
    %3339 = vmatprep.subr.bf16.mxu0 0
    %3340 = vmatpush1.bf16.msra.mxu0 0
    %3341 = vmatprep.subr.bf16.mxu0 0
    %3342 = vmatpush1.bf16.msra.mxu0 0
    %3343 = vmatprep.subr.bf16.mxu0 0
    %3344 = vmatpush1.bf16.msra.mxu0 0
    %3345 = vmatprep.subr.bf16.mxu0 0
    %3346 = vmatpush1.bf16.msra.mxu0 0
    %3347 = vmatprep.subr.bf16.mxu0 0
    %3348 = vmatpush1.bf16.msra.mxu0 0
    %3349 = vmatprep.subr.bf16.mxu0 0
    %3350 = vmatpush1.bf16.msra.mxu0 0
    %3351 = vmatprep.subr.bf16.mxu0 0
    %3352 = vmatpush1.bf16.msra.mxu0 0
    %3353 = vmatprep.subr.bf16.mxu0 0
    %3354 = vmatpush1.bf16.msra.mxu0 0
    %3355 = vmatprep.subr.bf16.mxu0 0
    %3356 = vmatpush1.bf16.msra.mxu0 0
    %3357 = vmatprep.subr.bf16.mxu0 0
    %3358 = vmatpush1.bf16.msra.mxu0 0
    %3359 = vmatprep.subr.bf16.mxu0 0
    %3360 = vmatpush1.bf16.msra.mxu0 0
    %3361 = vmatprep.subr.bf16.mxu0 0
    %3362 = vmatpush1.bf16.msra.mxu0 0
    %3363 = vmatprep.subr.bf16.mxu0 0
    %3364 = vmatpush1.bf16.msra.mxu0 0
    %3365 = vmatprep.subr.bf16.mxu0 0
    %3366 = vmatpush1.bf16.msra.mxu0 0
    %3367 = vmatprep.mubr.bf16.mxu0 0
    %3368 = vmatmul.mubr.bf16.gmra.mrb[0].mxu0 %v3333
    %v3369 = vpop.f32.mrb[0].mxu0
    %v3370 = vadd.f32 0.0, %v3369
    %v3371 = vpop.f32.mrb[0].mxu0
    %v3372 = vadd.f32 0.0, %v3371
    %v3373 = vpop.f32.mrb[0].mxu0
    %v3374 = vpop.f32.mrb[0].mxu0
    %3375 = vdwg.mxu0
    %3376 = vmatprep.subr.bf16.mxu0 0
    %3377 = vmatpush1.bf16.msra.mxu0 %v3196
    %3378 = vmatprep.subr.bf16.mxu0 0
    %3379 = vmatpush1.bf16.msra.mxu0 0
    %3380 = vmatprep.subr.bf16.mxu0 0
    %3381 = vmatpush1.bf16.msra.mxu0 0
    %3382 = vmatprep.subr.bf16.mxu0 0
    %3383 = vmatpush1.bf16.msra.mxu0 0
    %3384 = vmatprep.subr.bf16.mxu0 0
    %3385 = vmatpush1.bf16.msra.mxu0 0
    %3386 = vmatprep.subr.bf16.mxu0 0
    %3387 = vmatpush1.bf16.msra.mxu0 0
    %3388 = vmatprep.subr.bf16.mxu0 0
    %3389 = vmatpush1.bf16.msra.mxu0 0
    %3390 = vmatprep.subr.bf16.mxu0 0
    %3391 = vmatpush1.bf16.msra.mxu0 0
    %3392 = vmatprep.subr.bf16.mxu0 0
    %3393 = vmatpush1.bf16.msra.mxu0 0
    %3394 = vmatprep.subr.bf16.mxu0 0
    %3395 = vmatpush1.bf16.msra.mxu0 0
    %3396 = vmatprep.subr.bf16.mxu0 0
    %3397 = vmatpush1.bf16.msra.mxu0 0
    %3398 = vmatprep.subr.bf16.mxu0 0
    %3399 = vmatpush1.bf16.msra.mxu0 0
    %3400 = vmatprep.subr.bf16.mxu0 0
    %3401 = vmatpush1.bf16.msra.mxu0 0
    %3402 = vmatprep.subr.bf16.mxu0 0
    %3403 = vmatpush1.bf16.msra.mxu0 0
    %3404 = vmatprep.subr.bf16.mxu0 0
    %3405 = vmatpush1.bf16.msra.mxu0 0
    %3406 = vmatprep.subr.bf16.mxu0 0
    %3407 = vmatpush1.bf16.msra.mxu0 0
    %3408 = vmatprep.mubr.bf16.mxu0 0
    %3409 = vmatmul.mubr.bf16.gmra.mrb[0].mxu0 %v3333
    %v3410 = vpop.f32.mrb[0].mxu0
    %v3411 = vadd.f32 0.0, %v3410
    %v3412 = vpop.f32.mrb[0].mxu0
    %v3413 = vpop.f32.mrb[0].mxu0
    %v3414 = vpop.f32.mrb[0].mxu0
    %3415 = vdwg.mxu0
    %v3416 = vpack.c.bf16 %v3370, %v3370
    %v3417 = vpack.c.bf16 %v3372, %v3372
    %v3418 = vpack.c.bf16 %v3411, %v3411
    %s3419 = scalar_lea.vmem %s25, 192
    %v3420 = vld [vmem:[%s3419] sm:$0xf]
    %v3421 = vld [vmem:[%s3419 + $0x4] sm:$0xf]
    %v3422 = vld [vmem:[%s3419 + $0x8] sm:$0xf]
    %v3423 = vld [vmem:[%s3419 + $0xc] sm:$0xf]
    %v3424 = vld [vmem:[%s3419 + $0x10] sm:$0xf]
    %v3425 = vld [vmem:[%s3419 + $0x14] sm:$0xf]
    %v3426 = vld [vmem:[%s3419 + $0x18] sm:$0xf]
    %v3427 = vld [vmem:[%s3419 + $0x1c] sm:$0xf]
    %v3428 = vld [vmem:[%s3419 + $0x20] sm:$0xf]
    %v3429 = vld [vmem:[%s3419 + $0x24] sm:$0xf]
    %v3430 = vld [vmem:[%s3419 + $0x28] sm:$0xf]
    %v3431 = vld [vmem:[%s3419 + $0x2c] sm:$0xf]
    %v3432 = vld [vmem:[%s3419 + $0x30] sm:$0xf]
    %v3433 = vld [vmem:[%s3419 + $0x34] sm:$0xf]
    %v3434 = vld [vmem:[%s3419 + $0x38] sm:$0xf]
    %v3435 = vld [vmem:[%s3419 + $0x3c] sm:$0xf]
    %v3436 = vld [vmem:[%s3419 + $0x40] sm:$0xf]
    %v3437 = vld [vmem:[%s3419 + $0x44] sm:$0xf]
    %v3438 = vld [vmem:[%s3419 + $0x48] sm:$0xf]
    %v3439 = vld [vmem:[%s3419 + $0x4c] sm:$0xf]
    %v3440 = vld [vmem:[%s3419 + $0x50] sm:$0xf]
    %v3441 = vld [vmem:[%s3419 + $0x54] sm:$0xf]
    %v3442 = vld [vmem:[%s3419 + $0x58] sm:$0xf]
    %v3443 = vld [vmem:[%s3419 + $0x5c] sm:$0xf]
    %v3444 = vld [vmem:[%s3419 + $0x60] sm:$0xf]
    %v3445 = vld [vmem:[%s3419 + $0x64] sm:$0xf]
    %v3446 = vld [vmem:[%s3419 + $0x68] sm:$0xf]
    %v3447 = vld [vmem:[%s3419 + $0x6c] sm:$0xf]
    %v3448 = vld [vmem:[%s3419 + $0x70] sm:$0xf]
    %v3449 = vld [vmem:[%s3419 + $0x74] sm:$0xf]
    %v3450 = vld [vmem:[%s3419 + $0x78] sm:$0xf]
    %v3451 = vld [vmem:[%s3419 + $0x7c] sm:$0xf]
    %v3452 = vld [vmem:[%s3419 + $0x80] sm:$0xf]
    %v3453 = vld [vmem:[%s3419 + $0x84] sm:$0xf]
    %v3454 = vld [vmem:[%s3419 + $0x88] sm:$0xf]
    %v3455 = vld [vmem:[%s3419 + $0x8c] sm:$0xf]
    %v3456 = vld [vmem:[%s3419 + $0x90] sm:$0xf]
    %v3457 = vld [vmem:[%s3419 + $0x94] sm:$0xf]
    %v3458 = vld [vmem:[%s3419 + $0x98] sm:$0xf]
    %v3459 = vld [vmem:[%s3419 + $0x9c] sm:$0xf]
    %v3460 = vld [vmem:[%s3419 + $0xa0] sm:$0xf]
    %v3461 = vld [vmem:[%s3419 + $0xa4] sm:$0xf]
    %v3462 = vld [vmem:[%s3419 + $0xa8] sm:$0xf]
    %v3463 = vld [vmem:[%s3419 + $0xac] sm:$0xf]
    %v3464 = vld [vmem:[%s3419 + $0xb0] sm:$0xf]
    %v3465 = vld [vmem:[%s3419 + $0xb4] sm:$0xf]
    %v3466 = vld [vmem:[%s3419 + $0xb8] sm:$0xf]
    %v3467 = vld [vmem:[%s3419 + $0xbc] sm:$0xf]
    %v3516 = vunpack.c.l.b16 %v3420
    %v3517 = vunpack.c.l.b16 %v3421
    %v3518 = vunpack.c.l.b16 %v3422
    %v3519 = vunpack.c.l.b16 %v3423
    %v3520 = vunpack.c.l.b16 %v3424
    %v3521 = vunpack.c.l.b16 %v3425
    %v3522 = vunpack.c.l.b16 %v3426
    %v3523 = vunpack.c.l.b16 %v3427
    %v3524 = vunpack.c.l.b16 %v3428
    %v3525 = vunpack.c.l.b16 %v3429
    %v3526 = vunpack.c.l.b16 %v3430
    %v3527 = vunpack.c.l.b16 %v3431
    %v3528 = vunpack.c.l.b16 %v3432
    %v3529 = vunpack.c.l.b16 %v3433
    %v3530 = vunpack.c.l.b16 %v3434
    %v3531 = vunpack.c.l.b16 %v3435
    %v3532 = vunpack.c.l.b16 %v3436
    %v3533 = vunpack.c.l.b16 %v3437
    %v3534 = vunpack.c.l.b16 %v3438
    %v3535 = vunpack.c.l.b16 %v3439
    %v3536 = vunpack.c.l.b16 %v3440
    %v3537 = vunpack.c.l.b16 %v3441
    %v3538 = vunpack.c.l.b16 %v3442
    %v3539 = vunpack.c.l.b16 %v3443
    %v3540 = vunpack.c.l.b16 %v3444
    %v3541 = vunpack.c.l.b16 %v3445
    %v3542 = vunpack.c.l.b16 %v3446
    %v3543 = vunpack.c.l.b16 %v3447
    %v3544 = vunpack.c.l.b16 %v3448
    %v3545 = vunpack.c.l.b16 %v3449
    %v3546 = vunpack.c.l.b16 %v3450
    %v3547 = vunpack.c.l.b16 %v3451
    %v3548 = vunpack.c.l.b16 %v3452
    %v3549 = vunpack.c.l.b16 %v3453
    %v3550 = vunpack.c.l.b16 %v3454
    %v3551 = vunpack.c.l.b16 %v3455
    %v3552 = vunpack.c.l.b16 %v3456
    %v3553 = vunpack.c.l.b16 %v3457
    %v3554 = vunpack.c.l.b16 %v3458
    %v3555 = vunpack.c.l.b16 %v3459
    %v3556 = vunpack.c.l.b16 %v3460
    %v3557 = vunpack.c.l.b16 %v3461
    %v3558 = vunpack.c.l.b16 %v3462
    %v3559 = vunpack.c.l.b16 %v3463
    %v3560 = vunpack.c.l.b16 %v3464
    %v3561 = vunpack.c.l.b16 %v3465
    %v3562 = vunpack.c.l.b16 %v3466
    %v3563 = vunpack.c.l.b16 %v3467
    %v3564 = vpack.c.b16 %v3517, %v3516
    %v3565 = vpack.c.b16 %v3519, %v3518
    %v3566 = vpack.c.b16 %v3521, %v3520
    %v3567 = vpack.c.b16 %v3523, %v3522
    %v3568 = vpack.c.b16 %v3525, %v3524
    %v3569 = vpack.c.b16 %v3527, %v3526
    %v3570 = vpack.c.b16 %v3529, %v3528
    %v3571 = vpack.c.b16 %v3531, %v3530
    %v3572 = vpack.c.b16 %v3533, %v3532
    %v3573 = vpack.c.b16 %v3535, %v3534
    %v3574 = vpack.c.b16 %v3537, %v3536
    %v3575 = vpack.c.b16 %v3539, %v3538
    %v3576 = vpack.c.b16 %v3541, %v3540
    %v3577 = vpack.c.b16 %v3543, %v3542
    %v3578 = vpack.c.b16 %v3545, %v3544
    %v3579 = vpack.c.b16 %v3547, %v3546
    %v3580 = vpack.c.b16 %v3549, %v3548
    %v3581 = vpack.c.b16 %v3551, %v3550
    %v3582 = vpack.c.b16 %v3553, %v3552
    %v3583 = vpack.c.b16 %v3555, %v3554
    %v3584 = vpack.c.b16 %v3557, %v3556
    %v3585 = vpack.c.b16 %v3559, %v3558
    %v3586 = vpack.c.b16 %v3561, %v3560
    %v3587 = vpack.c.b16 %v3563, %v3562
    %3612 = vmatprep.subr.bf16.mxu0 0
    %3613 = vmatpush1.bf16.msra.mxu0 %v3564
    %3614 = vmatprep.subr.bf16.mxu0 0
    %3615 = vmatpush1.bf16.msra.mxu0 %v3565
    %3616 = vmatprep.subr.bf16.mxu0 0
    %3617 = vmatpush1.bf16.msra.mxu0 %v3566
    %3618 = vmatprep.subr.bf16.mxu0 0
    %3619 = vmatpush1.bf16.msra.mxu0 %v3567
    %3620 = vmatprep.subr.bf16.mxu0 0
    %3621 = vmatpush1.bf16.msra.mxu0 %v3568
    %3622 = vmatprep.subr.bf16.mxu0 0
    %3623 = vmatpush1.bf16.msra.mxu0 %v3569
    %3624 = vmatprep.subr.bf16.mxu0 0
    %3625 = vmatpush1.bf16.msra.mxu0 %v3570
    %3626 = vmatprep.subr.bf16.mxu0 0
    %3627 = vmatpush1.bf16.msra.mxu0 %v3571
    %3628 = vmatprep.subr.bf16.mxu0 0
    %3629 = vmatpush1.bf16.msra.mxu0 %v3572
    %3630 = vmatprep.subr.bf16.mxu0 0
    %3631 = vmatpush1.bf16.msra.mxu0 %v3573
    %3632 = vmatprep.subr.bf16.mxu0 0
    %3633 = vmatpush1.bf16.msra.mxu0 %v3574
    %3634 = vmatprep.subr.bf16.mxu0 0
    %3635 = vmatpush1.bf16.msra.mxu0 %v3575
    %3636 = vmatprep.subr.bf16.mxu0 0
    %3637 = vmatpush1.bf16.msra.mxu0 %v3576
    %3638 = vmatprep.subr.bf16.mxu0 0
    %3639 = vmatpush1.bf16.msra.mxu0 %v3577
    %3640 = vmatprep.subr.bf16.mxu0 0
    %3641 = vmatpush1.bf16.msra.mxu0 %v3578
    %3642 = vmatprep.subr.bf16.mxu0 0
    %3643 = vmatpush1.bf16.msra.mxu0 %v3579
    %3644 = vmatprep.mubr.bf16.mxu0 %v3417
    %3645 = vmatmul.mubr.bf16.gmra.mrb[0].mxu0 %v3416
    %v3646 = vpop.f32.mrb[0].mxu0
    %v3647 = vadd.f32 0.0, %v3646
    %v3648 = vpop.f32.mrb[0].mxu0
    %v3649 = vpop.f32.mrb[0].mxu0
    %v3650 = vpop.f32.mrb[0].mxu0
    %3651 = vdwg.mxu0
    %3652 = vmatprep.subr.bf16.mxu0 0
    %3653 = vmatpush1.bf16.msra.mxu0 %v3580
    %3654 = vmatprep.subr.bf16.mxu0 0
    %3655 = vmatpush1.bf16.msra.mxu0 %v3581
    %3656 = vmatprep.subr.bf16.mxu0 0
    %3657 = vmatpush1.bf16.msra.mxu0 %v3582
    %3658 = vmatprep.subr.bf16.mxu0 0
    %3659 = vmatpush1.bf16.msra.mxu0 %v3583
    %3660 = vmatprep.subr.bf16.mxu0 0
    %3661 = vmatpush1.bf16.msra.mxu0 %v3584
    %3662 = vmatprep.subr.bf16.mxu0 0
    %3663 = vmatpush1.bf16.msra.mxu0 %v3585
    %3664 = vmatprep.subr.bf16.mxu0 0
    %3665 = vmatpush1.bf16.msra.mxu0 %v3586
    %3666 = vmatprep.subr.bf16.mxu0 0
    %3667 = vmatpush1.bf16.msra.mxu0 %v3587
    %3668 = vmatprep.subr.bf16.mxu0 0
    %3669 = vmatpush1.bf16.msra.mxu0 0
    %3670 = vmatprep.subr.bf16.mxu0 0
    %3671 = vmatpush1.bf16.msra.mxu0 0
    %3672 = vmatprep.subr.bf16.mxu0 0
    %3673 = vmatpush1.bf16.msra.mxu0 0
    %3674 = vmatprep.subr.bf16.mxu0 0
    %3675 = vmatpush1.bf16.msra.mxu0 0
    %3676 = vmatprep.subr.bf16.mxu0 0
    %3677 = vmatpush1.bf16.msra.mxu0 0
    %3678 = vmatprep.subr.bf16.mxu0 0
    %3679 = vmatpush1.bf16.msra.mxu0 0
    %3680 = vmatprep.subr.bf16.mxu0 0
    %3681 = vmatpush1.bf16.msra.mxu0 0
    %3682 = vmatprep.subr.bf16.mxu0 0
    %3683 = vmatpush1.bf16.msra.mxu0 0
    %3684 = vmatprep.mubr.bf16.mxu0 0
    %3685 = vmatmul.mubr.bf16.gmra.mrb[0].mxu0 %v3418
    %v3686 = vpop.f32.mrb[0].mxu0
    %v3687 = vadd.f32 %v3647, %v3686
    %v3688 = vpop.f32.mrb[0].mxu0
    %v3689 = vpop.f32.mrb[0].mxu0
    %v3690 = vpop.f32.mrb[0].mxu0
    %3691 = vdwg.mxu0
    %v3740 = vunpack.c.l.b16 %v3282
    %v3741 = vunpack.c.l.b16 %v3283
    %v3742 = vunpack.c.l.b16 %v3284
    %v3743 = vunpack.c.l.b16 %v3285
    %v3744 = vunpack.c.l.b16 %v3286
    %v3745 = vunpack.c.l.b16 %v3287
    %v3746 = vunpack.c.l.b16 %v3288
    %v3747 = vunpack.c.l.b16 %v3289
    %v3748 = vunpack.c.l.b16 %v3290
    %v3749 = vunpack.c.l.b16 %v3291
    %v3750 = vunpack.c.l.b16 %v3292
    %v3751 = vunpack.c.l.b16 %v3293
    %v3752 = vunpack.c.l.b16 %v3294
    %v3753 = vunpack.c.l.b16 %v3295
    %v3754 = vunpack.c.l.b16 %v3296
    %v3755 = vunpack.c.l.b16 %v3297
    %v3756 = vunpack.c.l.b16 %v3298
    %v3757 = vunpack.c.l.b16 %v3299
    %v3758 = vunpack.c.l.b16 %v3300
    %v3759 = vunpack.c.l.b16 %v3301
    %v3760 = vunpack.c.l.b16 %v3302
    %v3761 = vunpack.c.l.b16 %v3303
    %v3762 = vunpack.c.l.b16 %v3304
    %v3763 = vunpack.c.l.b16 %v3305
    %v3764 = vunpack.c.l.b16 %v3306
    %v3765 = vunpack.c.l.b16 %v3307
    %v3766 = vunpack.c.l.b16 %v3308
    %v3767 = vunpack.c.l.b16 %v3309
    %v3768 = vunpack.c.l.b16 %v3310
    %v3769 = vunpack.c.l.b16 %v3311
    %v3770 = vunpack.c.l.b16 %v3312
    %v3771 = vunpack.c.l.b16 %v3313
    %v3772 = vunpack.c.l.b16 %v3314
    %v3773 = vunpack.c.l.b16 %v3315
    %v3774 = vunpack.c.l.b16 %v3316
    %v3775 = vunpack.c.l.b16 %v3317
    %v3776 = vunpack.c.l.b16 %v3318
    %v3777 = vunpack.c.l.b16 %v3319
    %v3778 = vunpack.c.l.b16 %v3320
    %v3779 = vunpack.c.l.b16 %v3321
    %v3780 = vunpack.c.l.b16 %v3322
    %v3781 = vunpack.c.l.b16 %v3323
    %v3782 = vunpack.c.l.b16 %v3324
    %v3783 = vunpack.c.l.b16 %v3325
    %v3784 = vunpack.c.l.b16 %v3326
    %v3785 = vunpack.c.l.b16 %v3327
    %v3786 = vunpack.c.l.b16 %v3328
    %v3787 = vunpack.c.l.b16 %v3329
    %v3788 = vpack.c.b16 %v3741, %v3740
    %v3789 = vpack.c.b16 %v3743, %v3742
    %v3790 = vpack.c.b16 %v3745, %v3744
    %v3791 = vpack.c.b16 %v3747, %v3746
    %v3792 = vpack.c.b16 %v3749, %v3748
    %v3793 = vpack.c.b16 %v3751, %v3750
    %v3794 = vpack.c.b16 %v3753, %v3752
    %v3795 = vpack.c.b16 %v3755, %v3754
    %v3796 = vpack.c.b16 %v3757, %v3756
    %v3797 = vpack.c.b16 %v3759, %v3758
    %v3798 = vpack.c.b16 %v3761, %v3760
    %v3799 = vpack.c.b16 %v3763, %v3762
    %v3800 = vpack.c.b16 %v3765, %v3764
    %v3801 = vpack.c.b16 %v3767, %v3766
    %v3802 = vpack.c.b16 %v3769, %v3768
    %v3803 = vpack.c.b16 %v3771, %v3770
    %v3804 = vpack.c.b16 %v3773, %v3772
    %v3805 = vpack.c.b16 %v3775, %v3774
    %v3806 = vpack.c.b16 %v3777, %v3776
    %v3807 = vpack.c.b16 %v3779, %v3778
    %v3808 = vpack.c.b16 %v3781, %v3780
    %v3809 = vpack.c.b16 %v3783, %v3782
    %v3810 = vpack.c.b16 %v3785, %v3784
    %v3811 = vpack.c.b16 %v3787, %v3786
    %3836 = vmatprep.subr.bf16.mxu0 0
    %3837 = vmatpush1.bf16.msra.mxu0 %v3788
    %3838 = vmatprep.subr.bf16.mxu0 0
    %3839 = vmatpush1.bf16.msra.mxu0 %v3789
    %3840 = vmatprep.subr.bf16.mxu0 0
    %3841 = vmatpush1.bf16.msra.mxu0 %v3790
    %3842 = vmatprep.subr.bf16.mxu0 0
    %3843 = vmatpush1.bf16.msra.mxu0 %v3791
    %3844 = vmatprep.subr.bf16.mxu0 0
    %3845 = vmatpush1.bf16.msra.mxu0 %v3792
    %3846 = vmatprep.subr.bf16.mxu0 0
    %3847 = vmatpush1.bf16.msra.mxu0 %v3793
    %3848 = vmatprep.subr.bf16.mxu0 0
    %3849 = vmatpush1.bf16.msra.mxu0 %v3794
    %3850 = vmatprep.subr.bf16.mxu0 0
    %3851 = vmatpush1.bf16.msra.mxu0 %v3795
    %3852 = vmatprep.subr.bf16.mxu0 0
    %3853 = vmatpush1.bf16.msra.mxu0 %v3796
    %3854 = vmatprep.subr.bf16.mxu0 0
    %3855 = vmatpush1.bf16.msra.mxu0 %v3797
    %3856 = vmatprep.subr.bf16.mxu0 0
    %3857 = vmatpush1.bf16.msra.mxu0 %v3798
    %3858 = vmatprep.subr.bf16.mxu0 0
    %3859 = vmatpush1.bf16.msra.mxu0 %v3799
    %3860 = vmatprep.subr.bf16.mxu0 0
    %3861 = vmatpush1.bf16.msra.mxu0 %v3800
    %3862 = vmatprep.subr.bf16.mxu0 0
    %3863 = vmatpush1.bf16.msra.mxu0 %v3801
    %3864 = vmatprep.subr.bf16.mxu0 0
    %3865 = vmatpush1.bf16.msra.mxu0 %v3802
    %3866 = vmatprep.subr.bf16.mxu0 0
    %3867 = vmatpush1.bf16.msra.mxu0 %v3803
    %3868 = vmatprep.mubr.bf16.mxu0 %v3280
    %3869 = vmatmul.mubr.bf16.gmra.mrb[0].mxu0 %v3279
    %v3870 = vpop.f32.mrb[0].mxu0
    %v3871 = vadd.f32 %v3687, %v3870
    %v3872 = vpop.f32.mrb[0].mxu0
    %v3873 = vpop.f32.mrb[0].mxu0
    %v3874 = vpop.f32.mrb[0].mxu0
    %3875 = vdwg.mxu0
    %3876 = vmatprep.subr.bf16.mxu0 0
    %3877 = vmatpush1.bf16.msra.mxu0 %v3804
    %3878 = vmatprep.subr.bf16.mxu0 0
    %3879 = vmatpush1.bf16.msra.mxu0 %v3805
    %3880 = vmatprep.subr.bf16.mxu0 0
    %3881 = vmatpush1.bf16.msra.mxu0 %v3806
    %3882 = vmatprep.subr.bf16.mxu0 0
    %3883 = vmatpush1.bf16.msra.mxu0 %v3807
    %3884 = vmatprep.subr.bf16.mxu0 0
    %3885 = vmatpush1.bf16.msra.mxu0 %v3808
    %3886 = vmatprep.subr.bf16.mxu0 0
    %3887 = vmatpush1.bf16.msra.mxu0 %v3809
    %3888 = vmatprep.subr.bf16.mxu0 0
    %3889 = vmatpush1.bf16.msra.mxu0 %v3810
    %3890 = vmatprep.subr.bf16.mxu0 0
    %3891 = vmatpush1.bf16.msra.mxu0 %v3811
    %3892 = vmatprep.subr.bf16.mxu0 0
    %3893 = vmatpush1.bf16.msra.mxu0 0
    %3894 = vmatprep.subr.bf16.mxu0 0
    %3895 = vmatpush1.bf16.msra.mxu0 0
    %3896 = vmatprep.subr.bf16.mxu0 0
    %3897 = vmatpush1.bf16.msra.mxu0 0
    %3898 = vmatprep.subr.bf16.mxu0 0
    %3899 = vmatpush1.bf16.msra.mxu0 0
    %3900 = vmatprep.subr.bf16.mxu0 0
    %3901 = vmatpush1.bf16.msra.mxu0 0
    %3902 = vmatprep.subr.bf16.mxu0 0
    %3903 = vmatpush1.bf16.msra.mxu0 0
    %3904 = vmatprep.subr.bf16.mxu0 0
    %3905 = vmatpush1.bf16.msra.mxu0 0
    %3906 = vmatprep.subr.bf16.mxu0 0
    %3907 = vmatpush1.bf16.msra.mxu0 0
    %3908 = vmatprep.mubr.bf16.mxu0 0
    %3909 = vmatmul.mubr.bf16.gmra.mrb[0].mxu0 %v3281
    %v3910 = vpop.f32.mrb[0].mxu0
    %v3911 = vadd.f32 %v3871, %v3910
    %v3912 = vpop.f32.mrb[0].mxu0
    %v3913 = vpop.f32.mrb[0].mxu0
    %v3914 = vpop.f32.mrb[0].mxu0
    %3915 = vdwg.mxu0
    %s3916 = scalar_lea.vmem %s23, 2
    %v3917 = vld [vmem:[%s3916] sm:$0x1]
    %v3919 = vsel %vm2031, %v3917, 0
    %3921 = vmatprep.subr.bf16.mxu0 %v3193
    %3922 = vmatpush1.bf16.msra.mxu0 %v3190
    %3923 = vmatprep.subr.bf16.mxu0 0
    %3924 = vmatpush1.bf16.msra.mxu0 0
    %3925 = vmatprep.subr.bf16.mxu0 0
    %3926 = vmatpush1.bf16.msra.mxu0 0
    %3927 = vmatprep.subr.bf16.mxu0 0
    %3928 = vmatpush1.bf16.msra.mxu0 0
    %3929 = vmatprep.subr.bf16.mxu0 0
    %3930 = vmatpush1.bf16.msra.mxu0 0
    %3931 = vmatprep.subr.bf16.mxu0 0
    %3932 = vmatpush1.bf16.msra.mxu0 0
    %3933 = vmatprep.subr.bf16.mxu0 0
    %3934 = vmatpush1.bf16.msra.mxu0 0
    %3935 = vmatprep.subr.bf16.mxu0 0
    %3936 = vmatpush1.bf16.msra.mxu0 0
    %3937 = vmatprep.subr.bf16.mxu0 0
    %3938 = vmatpush1.bf16.msra.mxu0 0
    %3939 = vmatprep.subr.bf16.mxu0 0
    %3940 = vmatpush1.bf16.msra.mxu0 0
    %3941 = vmatprep.subr.bf16.mxu0 0
    %3942 = vmatpush1.bf16.msra.mxu0 0
    %3943 = vmatprep.subr.bf16.mxu0 0
    %3944 = vmatpush1.bf16.msra.mxu0 0
    %3945 = vmatprep.subr.bf16.mxu0 0
    %3946 = vmatpush1.bf16.msra.mxu0 0
    %3947 = vmatprep.subr.bf16.mxu0 0
    %3948 = vmatpush1.bf16.msra.mxu0 0
    %3949 = vmatprep.subr.bf16.mxu0 0
    %3950 = vmatpush1.bf16.msra.mxu0 0
    %3951 = vmatprep.subr.bf16.mxu0 0
    %3952 = vmatpush1.bf16.msra.mxu0 0
    %3953 = vmatprep.mubr.bf16.mxu0 0
    %3954 = vmatmul.mubr.bf16.gmra.mrb[0].mxu0 %v3919
    %v3955 = vpop.f32.mrb[0].mxu0
    %v3956 = vadd.f32 0.0, %v3955
    %v3957 = vpop.f32.mrb[0].mxu0
    %v3958 = vadd.f32 0.0, %v3957
    %v3959 = vpop.f32.mrb[0].mxu0
    %v3960 = vpop.f32.mrb[0].mxu0
    %3961 = vdwg.mxu0
    %3962 = vmatprep.subr.bf16.mxu0 0
    %3963 = vmatpush1.bf16.msra.mxu0 %v3196
    %3964 = vmatprep.subr.bf16.mxu0 0
    %3965 = vmatpush1.bf16.msra.mxu0 0
    %3966 = vmatprep.subr.bf16.mxu0 0
    %3967 = vmatpush1.bf16.msra.mxu0 0
    %3968 = vmatprep.subr.bf16.mxu0 0
    %3969 = vmatpush1.bf16.msra.mxu0 0
    %3970 = vmatprep.subr.bf16.mxu0 0
    %3971 = vmatpush1.bf16.msra.mxu0 0
    %3972 = vmatprep.subr.bf16.mxu0 0
    %3973 = vmatpush1.bf16.msra.mxu0 0
    %3974 = vmatprep.subr.bf16.mxu0 0
    %3975 = vmatpush1.bf16.msra.mxu0 0
    %3976 = vmatprep.subr.bf16.mxu0 0
    %3977 = vmatpush1.bf16.msra.mxu0 0
    %3978 = vmatprep.subr.bf16.mxu0 0
    %3979 = vmatpush1.bf16.msra.mxu0 0
    %3980 = vmatprep.subr.bf16.mxu0 0
    %3981 = vmatpush1.bf16.msra.mxu0 0
    %3982 = vmatprep.subr.bf16.mxu0 0
    %3983 = vmatpush1.bf16.msra.mxu0 0
    %3984 = vmatprep.subr.bf16.mxu0 0
    %3985 = vmatpush1.bf16.msra.mxu0 0
    %3986 = vmatprep.subr.bf16.mxu0 0
    %3987 = vmatpush1.bf16.msra.mxu0 0
    %3988 = vmatprep.subr.bf16.mxu0 0
    %3989 = vmatpush1.bf16.msra.mxu0 0
    %3990 = vmatprep.subr.bf16.mxu0 0
    %3991 = vmatpush1.bf16.msra.mxu0 0
    %3992 = vmatprep.subr.bf16.mxu0 0
    %3993 = vmatpush1.bf16.msra.mxu0 0
    %3994 = vmatprep.mubr.bf16.mxu0 0
    %3995 = vmatmul.mubr.bf16.gmra.mrb[0].mxu0 %v3919
    %v3996 = vpop.f32.mrb[0].mxu0
    %v3997 = vadd.f32 0.0, %v3996
    %v3998 = vpop.f32.mrb[0].mxu0
    %v3999 = vpop.f32.mrb[0].mxu0
    %v4000 = vpop.f32.mrb[0].mxu0
    %4001 = vdwg.mxu0
    %v4002 = vpack.c.bf16 %v3956, %v3956
    %v4003 = vpack.c.bf16 %v3958, %v3958
    %v4004 = vpack.c.bf16 %v3997, %v3997
    %s4005 = scalar_lea.vmem %s25, 384
    %v4006 = vld [vmem:[%s4005] sm:$0xf]
    %v4007 = vld [vmem:[%s4005 + $0x4] sm:$0xf]
    %v4008 = vld [vmem:[%s4005 + $0x8] sm:$0xf]
    %v4009 = vld [vmem:[%s4005 + $0xc] sm:$0xf]
    %v4010 = vld [vmem:[%s4005 + $0x10] sm:$0xf]
    %v4011 = vld [vmem:[%s4005 + $0x14] sm:$0xf]
    %v4012 = vld [vmem:[%s4005 + $0x18] sm:$0xf]
    %v4013 = vld [vmem:[%s4005 + $0x1c] sm:$0xf]
    %v4014 = vld [vmem:[%s4005 + $0x20] sm:$0xf]
    %v4015 = vld [vmem:[%s4005 + $0x24] sm:$0xf]
    %v4016 = vld [vmem:[%s4005 + $0x28] sm:$0xf]
    %v4017 = vld [vmem:[%s4005 + $0x2c] sm:$0xf]
    %v4018 = vld [vmem:[%s4005 + $0x30] sm:$0xf]
    %v4019 = vld [vmem:[%s4005 + $0x34] sm:$0xf]
    %v4020 = vld [vmem:[%s4005 + $0x38] sm:$0xf]
    %v4021 = vld [vmem:[%s4005 + $0x3c] sm:$0xf]
    %v4022 = vld [vmem:[%s4005 + $0x40] sm:$0xf]
    %v4023 = vld [vmem:[%s4005 + $0x44] sm:$0xf]
    %v4024 = vld [vmem:[%s4005 + $0x48] sm:$0xf]
    %v4025 = vld [vmem:[%s4005 + $0x4c] sm:$0xf]
    %v4026 = vld [vmem:[%s4005 + $0x50] sm:$0xf]
    %v4027 = vld [vmem:[%s4005 + $0x54] sm:$0xf]
    %v4028 = vld [vmem:[%s4005 + $0x58] sm:$0xf]
    %v4029 = vld [vmem:[%s4005 + $0x5c] sm:$0xf]
    %v4030 = vld [vmem:[%s4005 + $0x60] sm:$0xf]
    %v4031 = vld [vmem:[%s4005 + $0x64] sm:$0xf]
    %v4032 = vld [vmem:[%s4005 + $0x68] sm:$0xf]
    %v4033 = vld [vmem:[%s4005 + $0x6c] sm:$0xf]
    %v4034 = vld [vmem:[%s4005 + $0x70] sm:$0xf]
    %v4035 = vld [vmem:[%s4005 + $0x74] sm:$0xf]
    %v4036 = vld [vmem:[%s4005 + $0x78] sm:$0xf]
    %v4037 = vld [vmem:[%s4005 + $0x7c] sm:$0xf]
    %v4038 = vld [vmem:[%s4005 + $0x80] sm:$0xf]
    %v4039 = vld [vmem:[%s4005 + $0x84] sm:$0xf]
    %v4040 = vld [vmem:[%s4005 + $0x88] sm:$0xf]
    %v4041 = vld [vmem:[%s4005 + $0x8c] sm:$0xf]
    %v4042 = vld [vmem:[%s4005 + $0x90] sm:$0xf]
    %v4043 = vld [vmem:[%s4005 + $0x94] sm:$0xf]
    %v4044 = vld [vmem:[%s4005 + $0x98] sm:$0xf]
    %v4045 = vld [vmem:[%s4005 + $0x9c] sm:$0xf]
    %v4046 = vld [vmem:[%s4005 + $0xa0] sm:$0xf]
    %v4047 = vld [vmem:[%s4005 + $0xa4] sm:$0xf]
    %v4048 = vld [vmem:[%s4005 + $0xa8] sm:$0xf]
    %v4049 = vld [vmem:[%s4005 + $0xac] sm:$0xf]
    %v4050 = vld [vmem:[%s4005 + $0xb0] sm:$0xf]
    %v4051 = vld [vmem:[%s4005 + $0xb4] sm:$0xf]
    %v4052 = vld [vmem:[%s4005 + $0xb8] sm:$0xf]
    %v4053 = vld [vmem:[%s4005 + $0xbc] sm:$0xf]
    %v4102 = vunpack.c.l.b16 %v4006
    %v4103 = vunpack.c.l.b16 %v4007
    %v4104 = vunpack.c.l.b16 %v4008
    %v4105 = vunpack.c.l.b16 %v4009
    %v4106 = vunpack.c.l.b16 %v4010
    %v4107 = vunpack.c.l.b16 %v4011
    %v4108 = vunpack.c.l.b16 %v4012
    %v4109 = vunpack.c.l.b16 %v4013
    %v4110 = vunpack.c.l.b16 %v4014
    %v4111 = vunpack.c.l.b16 %v4015
    %v4112 = vunpack.c.l.b16 %v4016
    %v4113 = vunpack.c.l.b16 %v4017
    %v4114 = vunpack.c.l.b16 %v4018
    %v4115 = vunpack.c.l.b16 %v4019
    %v4116 = vunpack.c.l.b16 %v4020
    %v4117 = vunpack.c.l.b16 %v4021
    %v4118 = vunpack.c.l.b16 %v4022
    %v4119 = vunpack.c.l.b16 %v4023
    %v4120 = vunpack.c.l.b16 %v4024
    %v4121 = vunpack.c.l.b16 %v4025
    %v4122 = vunpack.c.l.b16 %v4026
    %v4123 = vunpack.c.l.b16 %v4027
    %v4124 = vunpack.c.l.b16 %v4028
    %v4125 = vunpack.c.l.b16 %v4029
    %v4126 = vunpack.c.l.b16 %v4030
    %v4127 = vunpack.c.l.b16 %v4031
    %v4128 = vunpack.c.l.b16 %v4032
    %v4129 = vunpack.c.l.b16 %v4033
    %v4130 = vunpack.c.l.b16 %v4034
    %v4131 = vunpack.c.l.b16 %v4035
    %v4132 = vunpack.c.l.b16 %v4036
    %v4133 = vunpack.c.l.b16 %v4037
    %v4134 = vunpack.c.l.b16 %v4038
    %v4135 = vunpack.c.l.b16 %v4039
    %v4136 = vunpack.c.l.b16 %v4040
    %v4137 = vunpack.c.l.b16 %v4041
    %v4138 = vunpack.c.l.b16 %v4042
    %v4139 = vunpack.c.l.b16 %v4043
    %v4140 = vunpack.c.l.b16 %v4044
    %v4141 = vunpack.c.l.b16 %v4045
    %v4142 = vunpack.c.l.b16 %v4046
    %v4143 = vunpack.c.l.b16 %v4047
    %v4144 = vunpack.c.l.b16 %v4048
    %v4145 = vunpack.c.l.b16 %v4049
    %v4146 = vunpack.c.l.b16 %v4050
    %v4147 = vunpack.c.l.b16 %v4051
    %v4148 = vunpack.c.l.b16 %v4052
    %v4149 = vunpack.c.l.b16 %v4053
    %v4150 = vpack.c.b16 %v4103, %v4102
    %v4151 = vpack.c.b16 %v4105, %v4104
    %v4152 = vpack.c.b16 %v4107, %v4106
    %v4153 = vpack.c.b16 %v4109, %v4108
    %v4154 = vpack.c.b16 %v4111, %v4110
    %v4155 = vpack.c.b16 %v4113, %v4112
    %v4156 = vpack.c.b16 %v4115, %v4114
    %v4157 = vpack.c.b16 %v4117, %v4116
    %v4158 = vpack.c.b16 %v4119, %v4118
    %v4159 = vpack.c.b16 %v4121, %v4120
    %v4160 = vpack.c.b16 %v4123, %v4122
    %v4161 = vpack.c.b16 %v4125, %v4124
    %v4162 = vpack.c.b16 %v4127, %v4126
    %v4163 = vpack.c.b16 %v4129, %v4128
    %v4164 = vpack.c.b16 %v4131, %v4130
    %v4165 = vpack.c.b16 %v4133, %v4132
    %v4166 = vpack.c.b16 %v4135, %v4134
    %v4167 = vpack.c.b16 %v4137, %v4136
    %v4168 = vpack.c.b16 %v4139, %v4138
    %v4169 = vpack.c.b16 %v4141, %v4140
    %v4170 = vpack.c.b16 %v4143, %v4142
    %v4171 = vpack.c.b16 %v4145, %v4144
    %v4172 = vpack.c.b16 %v4147, %v4146
    %v4173 = vpack.c.b16 %v4149, %v4148
    %4198 = vmatprep.subr.bf16.mxu0 0
    %4199 = vmatpush1.bf16.msra.mxu0 %v4150
    %4200 = vmatprep.subr.bf16.mxu0 0
    %4201 = vmatpush1.bf16.msra.mxu0 %v4151
    %4202 = vmatprep.subr.bf16.mxu0 0
    %4203 = vmatpush1.bf16.msra.mxu0 %v4152
    %4204 = vmatprep.subr.bf16.mxu0 0
    %4205 = vmatpush1.bf16.msra.mxu0 %v4153
    %4206 = vmatprep.subr.bf16.mxu0 0
    %4207 = vmatpush1.bf16.msra.mxu0 %v4154
    %4208 = vmatprep.subr.bf16.mxu0 0
    %4209 = vmatpush1.bf16.msra.mxu0 %v4155
    %4210 = vmatprep.subr.bf16.mxu0 0
    %4211 = vmatpush1.bf16.msra.mxu0 %v4156
    %4212 = vmatprep.subr.bf16.mxu0 0
    %4213 = vmatpush1.bf16.msra.mxu0 %v4157
    %4214 = vmatprep.subr.bf16.mxu0 0
    %4215 = vmatpush1.bf16.msra.mxu0 %v4158
    %4216 = vmatprep.subr.bf16.mxu0 0
    %4217 = vmatpush1.bf16.msra.mxu0 %v4159
    %4218 = vmatprep.subr.bf16.mxu0 0
    %4219 = vmatpush1.bf16.msra.mxu0 %v4160
    %4220 = vmatprep.subr.bf16.mxu0 0
    %4221 = vmatpush1.bf16.msra.mxu0 %v4161
    %4222 = vmatprep.subr.bf16.mxu0 0
    %4223 = vmatpush1.bf16.msra.mxu0 %v4162
    %4224 = vmatprep.subr.bf16.mxu0 0
    %4225 = vmatpush1.bf16.msra.mxu0 %v4163
    %4226 = vmatprep.subr.bf16.mxu0 0
    %4227 = vmatpush1.bf16.msra.mxu0 %v4164
    %4228 = vmatprep.subr.bf16.mxu0 0
    %4229 = vmatpush1.bf16.msra.mxu0 %v4165
    %4230 = vmatprep.mubr.bf16.mxu0 %v4003
    %4231 = vmatmul.mubr.bf16.gmra.mrb[0].mxu0 %v4002
    %v4232 = vpop.f32.mrb[0].mxu0
    %v4233 = vadd.f32 0.0, %v4232
    %v4234 = vpop.f32.mrb[0].mxu0
    %v4235 = vpop.f32.mrb[0].mxu0
    %v4236 = vpop.f32.mrb[0].mxu0
    %4237 = vdwg.mxu0
    %4238 = vmatprep.subr.bf16.mxu0 0
    %4239 = vmatpush1.bf16.msra.mxu0 %v4166
    %4240 = vmatprep.subr.bf16.mxu0 0
    %4241 = vmatpush1.bf16.msra.mxu0 %v4167
    %4242 = vmatprep.subr.bf16.mxu0 0
    %4243 = vmatpush1.bf16.msra.mxu0 %v4168
    %4244 = vmatprep.subr.bf16.mxu0 0
    %4245 = vmatpush1.bf16.msra.mxu0 %v4169
    %4246 = vmatprep.subr.bf16.mxu0 0
    %4247 = vmatpush1.bf16.msra.mxu0 %v4170
    %4248 = vmatprep.subr.bf16.mxu0 0
    %4249 = vmatpush1.bf16.msra.mxu0 %v4171
    %4250 = vmatprep.subr.bf16.mxu0 0
    %4251 = vmatpush1.bf16.msra.mxu0 %v4172
    %4252 = vmatprep.subr.bf16.mxu0 0
    %4253 = vmatpush1.bf16.msra.mxu0 %v4173
    %4254 = vmatprep.subr.bf16.mxu0 0
    %4255 = vmatpush1.bf16.msra.mxu0 0
    %4256 = vmatprep.subr.bf16.mxu0 0
    %4257 = vmatpush1.bf16.msra.mxu0 0
    %4258 = vmatprep.subr.bf16.mxu0 0
    %4259 = vmatpush1.bf16.msra.mxu0 0
    %4260 = vmatprep.subr.bf16.mxu0 0
    %4261 = vmatpush1.bf16.msra.mxu0 0
    %4262 = vmatprep.subr.bf16.mxu0 0
    %4263 = vmatpush1.bf16.msra.mxu0 0
    %4264 = vmatprep.subr.bf16.mxu0 0
    %4265 = vmatpush1.bf16.msra.mxu0 0
    %4266 = vmatprep.subr.bf16.mxu0 0
    %4267 = vmatpush1.bf16.msra.mxu0 0
    %4268 = vmatprep.subr.bf16.mxu0 0
    %4269 = vmatpush1.bf16.msra.mxu0 0
    %4270 = vmatprep.mubr.bf16.mxu0 0
    %4271 = vmatmul.mubr.bf16.gmra.mrb[0].mxu0 %v4004
    %v4272 = vpop.f32.mrb[0].mxu0
    %v4273 = vadd.f32 %v4233, %v4272
    %v4274 = vpop.f32.mrb[0].mxu0
    %v4275 = vpop.f32.mrb[0].mxu0
    %v4276 = vpop.f32.mrb[0].mxu0
    %4277 = vdwg.mxu0
    %v4278 = vadd.f32 %v3911, %v4273
    %v4279 = vld [vmem:[%s27] sm:$0x1]
    %v4281 = vlaneseq
    %v4282 = vshrl.u32 %v4281, 7
    %v4283 = vsub.s32 0, %v4282
    %v4284 = vrot.slane %v4279, %v4283
    %v4286 = vadd.f32 %v4278, %v4284
    %v4287 = vpack.c.bf16 %v4286, %v4286
    %v4288 = vld [vmem:[%s29] sm:$0xf]
    %v4289 = vld [vmem:[%s29 + $0x4] sm:$0xf]
    %v4290 = vld [vmem:[%s29 + $0x8] sm:$0xf]
    %v4291 = vld [vmem:[%s29 + $0xc] sm:$0xf]
    %v4292 = vld [vmem:[%s31] sm:$0x1]
    %v4294 = vlaneseq
    %v4295 = vshrl.u32 %v4294, 7
    %v4296 = vsub.s32 0, %v4295
    %v4297 = vrot.slane %v4292, %v4296
    %v4303 = vunpack.c.l.b16 %v4288
    %v4304 = vunpack.c.l.b16 %v4289
    %v4305 = vunpack.c.l.b16 %v4290
    %v4306 = vunpack.c.l.b16 %v4291
    %v4307 = vpack.c.b16 %v4304, %v4303
    %v4308 = vpack.c.b16 %v4306, %v4305
    %vm4311 = vcmask 261120
    %v4313 = vsel %vm4311, %v4287, 0
    %4315 = vmatprep.subr.bf16.mxu0 0
    %4316 = vmatpush1.bf16.msra.mxu0 %v4307
    %4317 = vmatprep.subr.bf16.mxu0 0
    %4318 = vmatpush1.bf16.msra.mxu0 %v4308
    %4319 = vmatprep.subr.bf16.mxu0 0
    %4320 = vmatpush1.bf16.msra.mxu0 0
    %4321 = vmatprep.subr.bf16.mxu0 0
    %4322 = vmatpush1.bf16.msra.mxu0 0
    %4323 = vmatprep.subr.bf16.mxu0 0
    %4324 = vmatpush1.bf16.msra.mxu0 0
    %4325 = vmatprep.subr.bf16.mxu0 0
    %4326 = vmatpush1.bf16.msra.mxu0 0
    %4327 = vmatprep.subr.bf16.mxu0 0
    %4328 = vmatpush1.bf16.msra.mxu0 0
    %4329 = vmatprep.subr.bf16.mxu0 0
    %4330 = vmatpush1.bf16.msra.mxu0 0
    %4331 = vmatprep.subr.bf16.mxu0 0
    %4332 = vmatpush1.bf16.msra.mxu0 0
    %4333 = vmatprep.subr.bf16.mxu0 0
    %4334 = vmatpush1.bf16.msra.mxu0 0
    %4335 = vmatprep.subr.bf16.mxu0 0
    %4336 = vmatpush1.bf16.msra.mxu0 0
    %4337 = vmatprep.subr.bf16.mxu0 0
    %4338 = vmatpush1.bf16.msra.mxu0 0
    %4339 = vmatprep.subr.bf16.mxu0 0
    %4340 = vmatpush1.bf16.msra.mxu0 0
    %4341 = vmatprep.subr.bf16.mxu0 0
    %4342 = vmatpush1.bf16.msra.mxu0 0
    %4343 = vmatprep.subr.bf16.mxu0 0
    %4344 = vmatpush1.bf16.msra.mxu0 0
    %4345 = vmatprep.subr.bf16.mxu0 0
    %4346 = vmatpush1.bf16.msra.mxu0 0
    %4347 = vmatprep.mubr.bf16.mxu0 0
    %4348 = vmatmul.mubr.bf16.gmra.mrb[0].mxu0 %v4313
    %v4349 = vpop.f32.mrb[0].mxu0
    %v4350 = vadd.f32 %v4297, %v4349
    %v4351 = vpop.f32.mrb[0].mxu0
    %v4352 = vpop.f32.mrb[0].mxu0
    %v4353 = vpop.f32.mrb[0].mxu0
    %4354 = vdwg.mxu0
    %v4355 = vld [vmem:[%s33] sm:$0xf]
    %v4356 = vld [vmem:[%s33 + $0x4] sm:$0xf]
    %v4357 = vld [vmem:[%s33 + $0x8] sm:$0xf]
    %v4358 = vld [vmem:[%s33 + $0xc] sm:$0xf]
    %v4359 = vld [vmem:[%s35] sm:$0x1]
    %v4361 = vlaneseq
    %v4362 = vshrl.u32 %v4361, 7
    %v4363 = vsub.s32 0, %v4362
    %v4364 = vrot.slane %v4359, %v4363
    %v4370 = vunpack.c.l.b16 %v4355
    %v4371 = vunpack.c.l.b16 %v4356
    %v4372 = vunpack.c.l.b16 %v4357
    %v4373 = vunpack.c.l.b16 %v4358
    %v4374 = vpack.c.b16 %v4371, %v4370
    %v4375 = vpack.c.b16 %v4373, %v4372
    %4378 = vmatprep.subr.bf16.mxu0 0
    %4379 = vmatpush1.bf16.msra.mxu0 %v4374
    %4380 = vmatprep.subr.bf16.mxu0 0
    %4381 = vmatpush1.bf16.msra.mxu0 %v4375
    %4382 = vmatprep.subr.bf16.mxu0 0
    %4383 = vmatpush1.bf16.msra.mxu0 0
    %4384 = vmatprep.subr.bf16.mxu0 0
    %4385 = vmatpush1.bf16.msra.mxu0 0
    %4386 = vmatprep.subr.bf16.mxu0 0
    %4387 = vmatpush1.bf16.msra.mxu0 0
    %4388 = vmatprep.subr.bf16.mxu0 0
    %4389 = vmatpush1.bf16.msra.mxu0 0
    %4390 = vmatprep.subr.bf16.mxu0 0
    %4391 = vmatpush1.bf16.msra.mxu0 0
    %4392 = vmatprep.subr.bf16.mxu0 0
    %4393 = vmatpush1.bf16.msra.mxu0 0
    %4394 = vmatprep.subr.bf16.mxu0 0
    %4395 = vmatpush1.bf16.msra.mxu0 0
    %4396 = vmatprep.subr.bf16.mxu0 0
    %4397 = vmatpush1.bf16.msra.mxu0 0
    %4398 = vmatprep.subr.bf16.mxu0 0
    %4399 = vmatpush1.bf16.msra.mxu0 0
    %4400 = vmatprep.subr.bf16.mxu0 0
    %4401 = vmatpush1.bf16.msra.mxu0 0
    %4402 = vmatprep.subr.bf16.mxu0 0
    %4403 = vmatpush1.bf16.msra.mxu0 0
    %4404 = vmatprep.subr.bf16.mxu0 0
    %4405 = vmatpush1.bf16.msra.mxu0 0
    %4406 = vmatprep.subr.bf16.mxu0 0
    %4407 = vmatpush1.bf16.msra.mxu0 0
    %4408 = vmatprep.subr.bf16.mxu0 0
    %4409 = vmatpush1.bf16.msra.mxu0 0
    %4410 = vmatprep.mubr.bf16.mxu0 0
    %4411 = vmatmul.mubr.bf16.gmra.mrb[0].mxu0 %v4313
    %v4412 = vpop.f32.mrb[0].mxu0
    %v4413 = vadd.f32 %v4364, %v4412
    %v4414 = vpop.f32.mrb[0].mxu0
    %v4415 = vpop.f32.mrb[0].mxu0
    %v4416 = vpop.f32.mrb[0].mxu0
    %4417 = vdwg.mxu0
    %v4418 = vld [vmem:[%s3] sm:$0x3]
    %v4419 = vmul.f32 %v4413, 0.5
    %v4420 = vmul.f32 %v4419, 1.442695
    %v4421 = vpow.pop %v4420
    %v4422 = vmul.f32 %v4418, %v4421
    %v4423 = vadd.f32 %v4422, %v4350
    %vm4424 = vcmask 58368
    %4425 = vst.msk [vmem:[#allocation2] sm:$0x3] %vm4424, %v4350
    %4426 = vst.msk [vmem:[#allocation4] sm:$0x3] %vm4424, %v4413
    %v4427 = vpack.c.bf16 %v4423, %v4423
    %v4428 = vld [vmem:[%s37] sm:$0xff]
    %v4429 = vld [vmem:[%s37 + $0x8] sm:$0xf]
    %v4430 = vld [vmem:[%s39] sm:$0x7]
    %v4432 = vlaneseq
    %v4433 = vshrl.u32 %v4432, 7
    %v4434 = vsub.s32 0, %v4433
    %v4435 = vrot.slane %v4430, %v4434
    %v4436 = vlaneseq
    %v4437 = vshrl.u32 %v4436, 7
    %v4438 = vsub.s32 1, %v4437
    %v4439 = vrot.slane %v4430, %v4438
    %v4440 = vlaneseq
    %v4441 = vshrl.u32 %v4440, 7
    %v4442 = vsub.s32 2, %v4441
    %v4443 = vrot.slane %v4430, %v4442
    %v4449 = vunpack.c.l.b16 %v4428
    %v4450 = vunpack.c.h.b16 %v4428
    %v4451 = vunpack.c.l.b16 %v4429
    %v4452 = vpack.c.b16 %v4449, %v4449
    %v4453 = vpack.c.b16 %v4450, %v4450
    %v4454 = vpack.c.b16 %v4451, %v4451
    %vm4455 = vcmask 64512
    %v4457 = vsel %vm4455, %v4427, 0
    %vm4459 = vcmask 1043456
    %v4461 = vsel %vm4459, %v4452, 0
    %v4464 = vsel %vm4459, %v4453, 0
    %v4467 = vsel %vm4459, %v4454, 0
    %4469 = vmatprep.subr.bf16.mxu0 %v4464
    %4470 = vmatpush1.bf16.msra.mxu0 %v4461
    %4471 = vmatprep.subr.bf16.mxu0 0
    %4472 = vmatpush1.bf16.msra.mxu0 0
    %4473 = vmatprep.subr.bf16.mxu0 0
    %4474 = vmatpush1.bf16.msra.mxu0 0
    %4475 = vmatprep.subr.bf16.mxu0 0
    %4476 = vmatpush1.bf16.msra.mxu0 0
    %4477 = vmatprep.subr.bf16.mxu0 0
    %4478 = vmatpush1.bf16.msra.mxu0 0
    %4479 = vmatprep.subr.bf16.mxu0 0
    %4480 = vmatpush1.bf16.msra.mxu0 0
    %4481 = vmatprep.subr.bf16.mxu0 0
    %4482 = vmatpush1.bf16.msra.mxu0 0
    %4483 = vmatprep.subr.bf16.mxu0 0
    %4484 = vmatpush1.bf16.msra.mxu0 0
    %4485 = vmatprep.subr.bf16.mxu0 0
    %4486 = vmatpush1.bf16.msra.mxu0 0
    %4487 = vmatprep.subr.bf16.mxu0 0
    %4488 = vmatpush1.bf16.msra.mxu0 0
    %4489 = vmatprep.subr.bf16.mxu0 0
    %4490 = vmatpush1.bf16.msra.mxu0 0
    %4491 = vmatprep.subr.bf16.mxu0 0
    %4492 = vmatpush1.bf16.msra.mxu0 0
    %4493 = vmatprep.subr.bf16.mxu0 0
    %4494 = vmatpush1.bf16.msra.mxu0 0
    %4495 = vmatprep.subr.bf16.mxu0 0
    %4496 = vmatpush1.bf16.msra.mxu0 0
    %4497 = vmatprep.subr.bf16.mxu0 0
    %4498 = vmatpush1.bf16.msra.mxu0 0
    %4499 = vmatprep.subr.bf16.mxu0 0
    %4500 = vmatpush1.bf16.msra.mxu0 0
    %4501 = vmatprep.mubr.bf16.mxu0 0
    %4502 = vmatmul.mubr.bf16.gmra.mrb[0].mxu0 %v4457
    %v4503 = vpop.f32.mrb[0].mxu0
    %v4504 = vadd.f32 %v4435, %v4503
    %v4505 = vpop.f32.mrb[0].mxu0
    %v4506 = vadd.f32 %v4439, %v4505
    %v4507 = vpop.f32.mrb[0].mxu0
    %v4508 = vpop.f32.mrb[0].mxu0
    %4509 = vdwg.mxu0
    %4510 = vmatprep.subr.bf16.mxu0 0
    %4511 = vmatpush1.bf16.msra.mxu0 %v4467
    %4512 = vmatprep.subr.bf16.mxu0 0
    %4513 = vmatpush1.bf16.msra.mxu0 0
    %4514 = vmatprep.subr.bf16.mxu0 0
    %4515 = vmatpush1.bf16.msra.mxu0 0
    %4516 = vmatprep.subr.bf16.mxu0 0
    %4517 = vmatpush1.bf16.msra.mxu0 0
    %4518 = vmatprep.subr.bf16.mxu0 0
    %4519 = vmatpush1.bf16.msra.mxu0 0
    %4520 = vmatprep.subr.bf16.mxu0 0
    %4521 = vmatpush1.bf16.msra.mxu0 0
    %4522 = vmatprep.subr.bf16.mxu0 0
    %4523 = vmatpush1.bf16.msra.mxu0 0
    %4524 = vmatprep.subr.bf16.mxu0 0
    %4525 = vmatpush1.bf16.msra.mxu0 0
    %4526 = vmatprep.subr.bf16.mxu0 0
    %4527 = vmatpush1.bf16.msra.mxu0 0
    %4528 = vmatprep.subr.bf16.mxu0 0
    %4529 = vmatpush1.bf16.msra.mxu0 0
    %4530 = vmatprep.subr.bf16.mxu0 0
    %4531 = vmatpush1.bf16.msra.mxu0 0
    %4532 = vmatprep.subr.bf16.mxu0 0
    %4533 = vmatpush1.bf16.msra.mxu0 0
    %4534 = vmatprep.subr.bf16.mxu0 0
    %4535 = vmatpush1.bf16.msra.mxu0 0
    %4536 = vmatprep.subr.bf16.mxu0 0
    %4537 = vmatpush1.bf16.msra.mxu0 0
    %4538 = vmatprep.subr.bf16.mxu0 0
    %4539 = vmatpush1.bf16.msra.mxu0 0
    %4540 = vmatprep.subr.bf16.mxu0 0
    %4541 = vmatpush1.bf16.msra.mxu0 0
    %4542 = vmatprep.mubr.bf16.mxu0 0
    %4543 = vmatmul.mubr.bf16.gmra.mrb[0].mxu0 %v4457
    %v4544 = vpop.f32.mrb[0].mxu0
    %v4545 = vadd.f32 %v4443, %v4544
    %v4546 = vpop.f32.mrb[0].mxu0
    %v4547 = vpop.f32.mrb[0].mxu0
    %v4548 = vpop.f32.mrb[0].mxu0
    %4549 = vdwg.mxu0
    %v4550 = vmax.f32 %v4504, 0.0
    %v4551 = vmax.f32 %v4506, 0.0
    %v4552 = vmax.f32 %v4545, 0.0
    %v4553 = vld [vmem:[%s41] sm:$0x7]
    %v4554 = vpack.c.bf16 %v4550, %v4550
    %v4555 = vpack.c.bf16 %v4551, %v4551
    %v4556 = vpack.c.bf16 %v4552, %v4552
    %s4557 = scalar_lea.vmem %s37, 12
    %v4558 = vld [vmem:[%s4557] sm:$0xff]
    %v4559 = vld [vmem:[%s4557 + $0x8] sm:$0xf]
    %s4560 = scalar_lea.vmem %s39, 3
    %v4561 = vld [vmem:[%s4560] sm:$0x7]
    %v4563 = vlaneseq
    %v4564 = vshrl.u32 %v4563, 7
    %v4565 = vsub.s32 0, %v4564
    %v4566 = vrot.slane %v4561, %v4565
    %v4567 = vlaneseq
    %v4568 = vshrl.u32 %v4567, 7
    %v4569 = vsub.s32 1, %v4568
    %v4570 = vrot.slane %v4561, %v4569
    %v4571 = vlaneseq
    %v4572 = vshrl.u32 %v4571, 7
    %v4573 = vsub.s32 2, %v4572
    %v4574 = vrot.slane %v4561, %v4573
    %v4580 = vunpack.c.l.b16 %v4558
    %v4581 = vunpack.c.h.b16 %v4558
    %v4582 = vunpack.c.l.b16 %v4559
    %v4583 = vpack.c.b16 %v4580, %v4580
    %v4584 = vpack.c.b16 %v4581, %v4581
    %v4585 = vpack.c.b16 %v4582, %v4582
    %v4587 = vsel %vm4459, %v4583, 0
    %v4590 = vsel %vm4459, %v4584, 0
    %v4593 = vsel %vm4459, %v4585, 0
    %4595 = vmatprep.subr.bf16.mxu0 %v4590
    %4596 = vmatpush1.bf16.msra.mxu0 %v4587
    %4597 = vmatprep.subr.bf16.mxu0 0
    %4598 = vmatpush1.bf16.msra.mxu0 0
    %4599 = vmatprep.subr.bf16.mxu0 0
    %4600 = vmatpush1.bf16.msra.mxu0 0
    %4601 = vmatprep.subr.bf16.mxu0 0
    %4602 = vmatpush1.bf16.msra.mxu0 0
    %4603 = vmatprep.subr.bf16.mxu0 0
    %4604 = vmatpush1.bf16.msra.mxu0 0
    %4605 = vmatprep.subr.bf16.mxu0 0
    %4606 = vmatpush1.bf16.msra.mxu0 0
    %4607 = vmatprep.subr.bf16.mxu0 0
    %4608 = vmatpush1.bf16.msra.mxu0 0
    %4609 = vmatprep.subr.bf16.mxu0 0
    %4610 = vmatpush1.bf16.msra.mxu0 0
    %4611 = vmatprep.subr.bf16.mxu0 0
    %4612 = vmatpush1.bf16.msra.mxu0 0
    %4613 = vmatprep.subr.bf16.mxu0 0
    %4614 = vmatpush1.bf16.msra.mxu0 0
    %4615 = vmatprep.subr.bf16.mxu0 0
    %4616 = vmatpush1.bf16.msra.mxu0 0
    %4617 = vmatprep.subr.bf16.mxu0 0
    %4618 = vmatpush1.bf16.msra.mxu0 0
    %4619 = vmatprep.subr.bf16.mxu0 0
    %4620 = vmatpush1.bf16.msra.mxu0 0
    %4621 = vmatprep.subr.bf16.mxu0 0
    %4622 = vmatpush1.bf16.msra.mxu0 0
    %4623 = vmatprep.subr.bf16.mxu0 0
    %4624 = vmatpush1.bf16.msra.mxu0 0
    %4625 = vmatprep.subr.bf16.mxu0 0
    %4626 = vmatpush1.bf16.msra.mxu0 0
    %4627 = vmatprep.mubr.bf16.mxu0 0
    %4628 = vmatmul.mubr.bf16.gmra.mrb[0].mxu0 %v4457
    %v4629 = vpop.f32.mrb[0].mxu0
    %v4630 = vadd.f32 %v4566, %v4629
    %v4631 = vpop.f32.mrb[0].mxu0
    %v4632 = vadd.f32 %v4570, %v4631
    %v4633 = vpop.f32.mrb[0].mxu0
    %v4634 = vpop.f32.mrb[0].mxu0
    %4635 = vdwg.mxu0
    %4636 = vmatprep.subr.bf16.mxu0 0
    %4637 = vmatpush1.bf16.msra.mxu0 %v4593
    %4638 = vmatprep.subr.bf16.mxu0 0
    %4639 = vmatpush1.bf16.msra.mxu0 0
    %4640 = vmatprep.subr.bf16.mxu0 0
    %4641 = vmatpush1.bf16.msra.mxu0 0
    %4642 = vmatprep.subr.bf16.mxu0 0
    %4643 = vmatpush1.bf16.msra.mxu0 0
    %4644 = vmatprep.subr.bf16.mxu0 0
    %4645 = vmatpush1.bf16.msra.mxu0 0
    %4646 = vmatprep.subr.bf16.mxu0 0
    %4647 = vmatpush1.bf16.msra.mxu0 0
    %4648 = vmatprep.subr.bf16.mxu0 0
    %4649 = vmatpush1.bf16.msra.mxu0 0
    %4650 = vmatprep.subr.bf16.mxu0 0
    %4651 = vmatpush1.bf16.msra.mxu0 0
    %4652 = vmatprep.subr.bf16.mxu0 0
    %4653 = vmatpush1.bf16.msra.mxu0 0
    %4654 = vmatprep.subr.bf16.mxu0 0
    %4655 = vmatpush1.bf16.msra.mxu0 0
    %4656 = vmatprep.subr.bf16.mxu0 0
    %4657 = vmatpush1.bf16.msra.mxu0 0
    %4658 = vmatprep.subr.bf16.mxu0 0
    %4659 = vmatpush1.bf16.msra.mxu0 0
    %4660 = vmatprep.subr.bf16.mxu0 0
    %4661 = vmatpush1.bf16.msra.mxu0 0
    %4662 = vmatprep.subr.bf16.mxu0 0
    %4663 = vmatpush1.bf16.msra.mxu0 0
    %4664 = vmatprep.subr.bf16.mxu0 0
    %4665 = vmatpush1.bf16.msra.mxu0 0
    %4666 = vmatprep.subr.bf16.mxu0 0
    %4667 = vmatpush1.bf16.msra.mxu0 0
    %4668 = vmatprep.mubr.bf16.mxu0 0
    %4669 = vmatmul.mubr.bf16.gmra.mrb[0].mxu0 %v4457
    %v4670 = vpop.f32.mrb[0].mxu0
    %v4671 = vadd.f32 %v4574, %v4670
    %v4672 = vpop.f32.mrb[0].mxu0
    %v4673 = vpop.f32.mrb[0].mxu0
    %v4674 = vpop.f32.mrb[0].mxu0
    %4675 = vdwg.mxu0
    %v4676 = vmax.f32 %v4630, 0.0
    %v4677 = vmax.f32 %v4632, 0.0
    %v4678 = vmax.f32 %v4671, 0.0
    %s4679 = scalar_lea.vmem %s41, 4
    %v4680 = vld [vmem:[%s4679] sm:$0x7]
    %v4681 = vpack.c.bf16 %v4676, %v4676
    %v4682 = vpack.c.bf16 %v4677, %v4677
    %v4683 = vpack.c.bf16 %v4678, %v4678
    %vm4684 = vcmask 15360
    %v4686 = vsel %vm4684, %v4680, 0
    %vm4688 = vcmask 1040384
    %v4690 = vsel %vm4688, %v4681, 0
    %v4693 = vsel %vm4688, %v4682, 0
    %v4696 = vsel %vm4688, %v4683, 0
    %4698 = vmatprep.subr.bf16.mxu0 %v4693
    %4699 = vmatpush1.bf16.msra.mxu0 %v4690
    %4700 = vmatprep.subr.bf16.mxu0 0
    %4701 = vmatpush1.bf16.msra.mxu0 0
    %4702 = vmatprep.subr.bf16.mxu0 0
    %4703 = vmatpush1.bf16.msra.mxu0 0
    %4704 = vmatprep.subr.bf16.mxu0 0
    %4705 = vmatpush1.bf16.msra.mxu0 0
    %4706 = vmatprep.subr.bf16.mxu0 0
    %4707 = vmatpush1.bf16.msra.mxu0 0
    %4708 = vmatprep.subr.bf16.mxu0 0
    %4709 = vmatpush1.bf16.msra.mxu0 0
    %4710 = vmatprep.subr.bf16.mxu0 0
    %4711 = vmatpush1.bf16.msra.mxu0 0
    %4712 = vmatprep.subr.bf16.mxu0 0
    %4713 = vmatpush1.bf16.msra.mxu0 0
    %4714 = vmatprep.subr.bf16.mxu0 0
    %4715 = vmatpush1.bf16.msra.mxu0 0
    %4716 = vmatprep.subr.bf16.mxu0 0
    %4717 = vmatpush1.bf16.msra.mxu0 0
    %4718 = vmatprep.subr.bf16.mxu0 0
    %4719 = vmatpush1.bf16.msra.mxu0 0
    %4720 = vmatprep.subr.bf16.mxu0 0
    %4721 = vmatpush1.bf16.msra.mxu0 0
    %4722 = vmatprep.subr.bf16.mxu0 0
    %4723 = vmatpush1.bf16.msra.mxu0 0
    %4724 = vmatprep.subr.bf16.mxu0 0
    %4725 = vmatpush1.bf16.msra.mxu0 0
    %4726 = vmatprep.subr.bf16.mxu0 0
    %4727 = vmatpush1.bf16.msra.mxu0 0
    %4728 = vmatprep.subr.bf16.mxu0 0
    %4729 = vmatpush1.bf16.msra.mxu0 0
    %4730 = vmatprep.mubr.bf16.mxu0 0
    %4731 = vmatmul.mubr.bf16.gmra.mrb[0].mxu0 %v4686
    %v4732 = vpop.f32.mrb[0].mxu0
    %v4733 = vadd.f32 0.0, %v4732
    %v4734 = vpop.f32.mrb[0].mxu0
    %v4735 = vadd.f32 0.0, %v4734
    %v4736 = vpop.f32.mrb[0].mxu0
    %v4737 = vpop.f32.mrb[0].mxu0
    %4738 = vdwg.mxu0
    %4739 = vmatprep.subr.bf16.mxu0 0
    %4740 = vmatpush1.bf16.msra.mxu0 %v4696
    %4741 = vmatprep.subr.bf16.mxu0 0
    %4742 = vmatpush1.bf16.msra.mxu0 0
    %4743 = vmatprep.subr.bf16.mxu0 0
    %4744 = vmatpush1.bf16.msra.mxu0 0
    %4745 = vmatprep.subr.bf16.mxu0 0
    %4746 = vmatpush1.bf16.msra.mxu0 0
    %4747 = vmatprep.subr.bf16.mxu0 0
    %4748 = vmatpush1.bf16.msra.mxu0 0
    %4749 = vmatprep.subr.bf16.mxu0 0
    %4750 = vmatpush1.bf16.msra.mxu0 0
    %4751 = vmatprep.subr.bf16.mxu0 0
    %4752 = vmatpush1.bf16.msra.mxu0 0
    %4753 = vmatprep.subr.bf16.mxu0 0
    %4754 = vmatpush1.bf16.msra.mxu0 0
    %4755 = vmatprep.subr.bf16.mxu0 0
    %4756 = vmatpush1.bf16.msra.mxu0 0
    %4757 = vmatprep.subr.bf16.mxu0 0
    %4758 = vmatpush1.bf16.msra.mxu0 0
    %4759 = vmatprep.subr.bf16.mxu0 0
    %4760 = vmatpush1.bf16.msra.mxu0 0
    %4761 = vmatprep.subr.bf16.mxu0 0
    %4762 = vmatpush1.bf16.msra.mxu0 0
    %4763 = vmatprep.subr.bf16.mxu0 0
    %4764 = vmatpush1.bf16.msra.mxu0 0
    %4765 = vmatprep.subr.bf16.mxu0 0
    %4766 = vmatpush1.bf16.msra.mxu0 0
    %4767 = vmatprep.subr.bf16.mxu0 0
    %4768 = vmatpush1.bf16.msra.mxu0 0
    %4769 = vmatprep.subr.bf16.mxu0 0
    %4770 = vmatpush1.bf16.msra.mxu0 0
    %4771 = vmatprep.mubr.bf16.mxu0 0
    %4772 = vmatmul.mubr.bf16.gmra.mrb[0].mxu0 %v4686
    %v4773 = vpop.f32.mrb[0].mxu0
    %v4774 = vadd.f32 0.0, %v4773
    %v4775 = vpop.f32.mrb[0].mxu0
    %v4776 = vpop.f32.mrb[0].mxu0
    %v4777 = vpop.f32.mrb[0].mxu0
    %4778 = vdwg.mxu0
    %v4780 = vsel %vm4684, %v4553, 0
    %v4783 = vsel %vm4688, %v4554, 0
    %v4786 = vsel %vm4688, %v4555, 0
    %v4789 = vsel %vm4688, %v4556, 0
    %4791 = vmatprep.subr.bf16.mxu0 %v4786
    %4792 = vmatpush1.bf16.msra.mxu0 %v4783
    %4793 = vmatprep.subr.bf16.mxu0 0
    %4794 = vmatpush1.bf16.msra.mxu0 0
    %4795 = vmatprep.subr.bf16.mxu0 0
    %4796 = vmatpush1.bf16.msra.mxu0 0
    %4797 = vmatprep.subr.bf16.mxu0 0
    %4798 = vmatpush1.bf16.msra.mxu0 0
    %4799 = vmatprep.subr.bf16.mxu0 0
    %4800 = vmatpush1.bf16.msra.mxu0 0
    %4801 = vmatprep.subr.bf16.mxu0 0
    %4802 = vmatpush1.bf16.msra.mxu0 0
    %4803 = vmatprep.subr.bf16.mxu0 0
    %4804 = vmatpush1.bf16.msra.mxu0 0
    %4805 = vmatprep.subr.bf16.mxu0 0
    %4806 = vmatpush1.bf16.msra.mxu0 0
    %4807 = vmatprep.subr.bf16.mxu0 0
    %4808 = vmatpush1.bf16.msra.mxu0 0
    %4809 = vmatprep.subr.bf16.mxu0 0
    %4810 = vmatpush1.bf16.msra.mxu0 0
    %4811 = vmatprep.subr.bf16.mxu0 0
    %4812 = vmatpush1.bf16.msra.mxu0 0
    %4813 = vmatprep.subr.bf16.mxu0 0
    %4814 = vmatpush1.bf16.msra.mxu0 0
    %4815 = vmatprep.subr.bf16.mxu0 0
    %4816 = vmatpush1.bf16.msra.mxu0 0
    %4817 = vmatprep.subr.bf16.mxu0 0
    %4818 = vmatpush1.bf16.msra.mxu0 0
    %4819 = vmatprep.subr.bf16.mxu0 0
    %4820 = vmatpush1.bf16.msra.mxu0 0
    %4821 = vmatprep.subr.bf16.mxu0 0
    %4822 = vmatpush1.bf16.msra.mxu0 0
    %4823 = vmatprep.mubr.bf16.mxu0 0
    %4824 = vmatmul.mubr.bf16.gmra.mrb[0].mxu0 %v4780
    %v4825 = vpop.f32.mrb[0].mxu0
    %v4826 = vadd.f32 %v4733, %v4825
    %v4827 = vpop.f32.mrb[0].mxu0
    %v4828 = vadd.f32 %v4735, %v4827
    %v4829 = vpop.f32.mrb[0].mxu0
    %v4830 = vpop.f32.mrb[0].mxu0
    %4831 = vdwg.mxu0
    %4832 = vmatprep.subr.bf16.mxu0 0
    %4833 = vmatpush1.bf16.msra.mxu0 %v4789
    %4834 = vmatprep.subr.bf16.mxu0 0
    %4835 = vmatpush1.bf16.msra.mxu0 0
    %4836 = vmatprep.subr.bf16.mxu0 0
    %4837 = vmatpush1.bf16.msra.mxu0 0
    %4838 = vmatprep.subr.bf16.mxu0 0
    %4839 = vmatpush1.bf16.msra.mxu0 0
    %4840 = vmatprep.subr.bf16.mxu0 0
    %4841 = vmatpush1.bf16.msra.mxu0 0
    %4842 = vmatprep.subr.bf16.mxu0 0
    %4843 = vmatpush1.bf16.msra.mxu0 0
    %4844 = vmatprep.subr.bf16.mxu0 0
    %4845 = vmatpush1.bf16.msra.mxu0 0
    %4846 = vmatprep.subr.bf16.mxu0 0
    %4847 = vmatpush1.bf16.msra.mxu0 0
    %4848 = vmatprep.subr.bf16.mxu0 0
    %4849 = vmatpush1.bf16.msra.mxu0 0
    %4850 = vmatprep.subr.bf16.mxu0 0
    %4851 = vmatpush1.bf16.msra.mxu0 0
    %4852 = vmatprep.subr.bf16.mxu0 0
    %4853 = vmatpush1.bf16.msra.mxu0 0
    %4854 = vmatprep.subr.bf16.mxu0 0
    %4855 = vmatpush1.bf16.msra.mxu0 0
    %4856 = vmatprep.subr.bf16.mxu0 0
    %4857 = vmatpush1.bf16.msra.mxu0 0
    %4858 = vmatprep.subr.bf16.mxu0 0
    %4859 = vmatpush1.bf16.msra.mxu0 0
    %4860 = vmatprep.subr.bf16.mxu0 0
    %4861 = vmatpush1.bf16.msra.mxu0 0
    %4862 = vmatprep.subr.bf16.mxu0 0
    %4863 = vmatpush1.bf16.msra.mxu0 0
    %4864 = vmatprep.mubr.bf16.mxu0 0
    %4865 = vmatmul.mubr.bf16.gmra.mrb[0].mxu0 %v4780
    %v4866 = vpop.f32.mrb[0].mxu0
    %v4867 = vadd.f32 %v4774, %v4866
    %v4868 = vpop.f32.mrb[0].mxu0
    %v4869 = vpop.f32.mrb[0].mxu0
    %v4870 = vpop.f32.mrb[0].mxu0
    %4871 = vdwg.mxu0
    %s4872 = scalar_lea.vmem %s37, 24
    %v4873 = vld [vmem:[%s4872] sm:$0xff]
    %v4874 = vld [vmem:[%s4872 + $0x8] sm:$0xf]
    %s4875 = scalar_lea.vmem %s39, 6
    %v4876 = vld [vmem:[%s4875] sm:$0x7]
    %v4878 = vlaneseq
    %v4879 = vshrl.u32 %v4878, 7
    %v4880 = vsub.s32 0, %v4879
    %v4881 = vrot.slane %v4876, %v4880
    %v4882 = vlaneseq
    %v4883 = vshrl.u32 %v4882, 7
    %v4884 = vsub.s32 1, %v4883
    %v4885 = vrot.slane %v4876, %v4884
    %v4886 = vlaneseq
    %v4887 = vshrl.u32 %v4886, 7
    %v4888 = vsub.s32 2, %v4887
    %v4889 = vrot.slane %v4876, %v4888
    %v4895 = vunpack.c.l.b16 %v4873
    %v4896 = vunpack.c.h.b16 %v4873
    %v4897 = vunpack.c.l.b16 %v4874
    %v4898 = vpack.c.b16 %v4895, %v4895
    %v4899 = vpack.c.b16 %v4896, %v4896
    %v4900 = vpack.c.b16 %v4897, %v4897
    %v4902 = vsel %vm4459, %v4898, 0
    %v4905 = vsel %vm4459, %v4899, 0
    %v4908 = vsel %vm4459, %v4900, 0
    %4910 = vmatprep.subr.bf16.mxu0 %v4905
    %4911 = vmatpush1.bf16.msra.mxu0 %v4902
    %4912 = vmatprep.subr.bf16.mxu0 0
    %4913 = vmatpush1.bf16.msra.mxu0 0
    %4914 = vmatprep.subr.bf16.mxu0 0
    %4915 = vmatpush1.bf16.msra.mxu0 0
    %4916 = vmatprep.subr.bf16.mxu0 0
    %4917 = vmatpush1.bf16.msra.mxu0 0
    %4918 = vmatprep.subr.bf16.mxu0 0
    %4919 = vmatpush1.bf16.msra.mxu0 0
    %4920 = vmatprep.subr.bf16.mxu0 0
    %4921 = vmatpush1.bf16.msra.mxu0 0
    %4922 = vmatprep.subr.bf16.mxu0 0
    %4923 = vmatpush1.bf16.msra.mxu0 0
    %4924 = vmatprep.subr.bf16.mxu0 0
    %4925 = vmatpush1.bf16.msra.mxu0 0
    %4926 = vmatprep.subr.bf16.mxu0 0
    %4927 = vmatpush1.bf16.msra.mxu0 0
    %4928 = vmatprep.subr.bf16.mxu0 0
    %4929 = vmatpush1.bf16.msra.mxu0 0
    %4930 = vmatprep.subr.bf16.mxu0 0
    %4931 = vmatpush1.bf16.msra.mxu0 0
    %4932 = vmatprep.subr.bf16.mxu0 0
    %4933 = vmatpush1.bf16.msra.mxu0 0
    %4934 = vmatprep.subr.bf16.mxu0 0
    %4935 = vmatpush1.bf16.msra.mxu0 0
    %4936 = vmatprep.subr.bf16.mxu0 0
    %4937 = vmatpush1.bf16.msra.mxu0 0
    %4938 = vmatprep.subr.bf16.mxu0 0
    %4939 = vmatpush1.bf16.msra.mxu0 0
    %4940 = vmatprep.subr.bf16.mxu0 0
    %4941 = vmatpush1.bf16.msra.mxu0 0
    %4942 = vmatprep.mubr.bf16.mxu0 0
    %4943 = vmatmul.mubr.bf16.gmra.mrb[0].mxu0 %v4457
    %v4944 = vpop.f32.mrb[0].mxu0
    %v4945 = vadd.f32 %v4881, %v4944
    %v4946 = vpop.f32.mrb[0].mxu0
    %v4947 = vadd.f32 %v4885, %v4946
    %v4948 = vpop.f32.mrb[0].mxu0
    %v4949 = vpop.f32.mrb[0].mxu0
    %4950 = vdwg.mxu0
    %4951 = vmatprep.subr.bf16.mxu0 0
    %4952 = vmatpush1.bf16.msra.mxu0 %v4908
    %4953 = vmatprep.subr.bf16.mxu0 0
    %4954 = vmatpush1.bf16.msra.mxu0 0
    %4955 = vmatprep.subr.bf16.mxu0 0
    %4956 = vmatpush1.bf16.msra.mxu0 0
    %4957 = vmatprep.subr.bf16.mxu0 0
    %4958 = vmatpush1.bf16.msra.mxu0 0
    %4959 = vmatprep.subr.bf16.mxu0 0
    %4960 = vmatpush1.bf16.msra.mxu0 0
    %4961 = vmatprep.subr.bf16.mxu0 0
    %4962 = vmatpush1.bf16.msra.mxu0 0
    %4963 = vmatprep.subr.bf16.mxu0 0
    %4964 = vmatpush1.bf16.msra.mxu0 0
    %4965 = vmatprep.subr.bf16.mxu0 0
    %4966 = vmatpush1.bf16.msra.mxu0 0
    %4967 = vmatprep.subr.bf16.mxu0 0
    %4968 = vmatpush1.bf16.msra.mxu0 0
    %4969 = vmatprep.subr.bf16.mxu0 0
    %4970 = vmatpush1.bf16.msra.mxu0 0
    %4971 = vmatprep.subr.bf16.mxu0 0
    %4972 = vmatpush1.bf16.msra.mxu0 0
    %4973 = vmatprep.subr.bf16.mxu0 0
    %4974 = vmatpush1.bf16.msra.mxu0 0
    %4975 = vmatprep.subr.bf16.mxu0 0
    %4976 = vmatpush1.bf16.msra.mxu0 0
    %4977 = vmatprep.subr.bf16.mxu0 0
    %4978 = vmatpush1.bf16.msra.mxu0 0
    %4979 = vmatprep.subr.bf16.mxu0 0
    %4980 = vmatpush1.bf16.msra.mxu0 0
    %4981 = vmatprep.subr.bf16.mxu0 0
    %4982 = vmatpush1.bf16.msra.mxu0 0
    %4983 = vmatprep.mubr.bf16.mxu0 0
    %4984 = vmatmul.mubr.bf16.gmra.mrb[0].mxu0 %v4457
    %v4985 = vpop.f32.mrb[0].mxu0
    %v4986 = vadd.f32 %v4889, %v4985
    %v4987 = vpop.f32.mrb[0].mxu0
    %v4988 = vpop.f32.mrb[0].mxu0
    %v4989 = vpop.f32.mrb[0].mxu0
    %4990 = vdwg.mxu0
    %v4991 = vmax.f32 %v4945, 0.0
    %v4992 = vmax.f32 %v4947, 0.0
    %v4993 = vmax.f32 %v4986, 0.0
    %s4994 = scalar_lea.vmem %s41, 8
    %v4995 = vld [vmem:[%s4994] sm:$0x7]
    %v4996 = vpack.c.bf16 %v4991, %v4991
    %v4997 = vpack.c.bf16 %v4992, %v4992
    %v4998 = vpack.c.bf16 %v4993, %v4993
    %v5000 = vsel %vm4684, %v4995, 0
    %v5003 = vsel %vm4688, %v4996, 0
    %v5006 = vsel %vm4688, %v4997, 0
    %v5009 = vsel %vm4688, %v4998, 0
    %5011 = vmatprep.subr.bf16.mxu0 %v5006
    %5012 = vmatpush1.bf16.msra.mxu0 %v5003
    %5013 = vmatprep.subr.bf16.mxu0 0
    %5014 = vmatpush1.bf16.msra.mxu0 0
    %5015 = vmatprep.subr.bf16.mxu0 0
    %5016 = vmatpush1.bf16.msra.mxu0 0
    %5017 = vmatprep.subr.bf16.mxu0 0
    %5018 = vmatpush1.bf16.msra.mxu0 0
    %5019 = vmatprep.subr.bf16.mxu0 0
    %5020 = vmatpush1.bf16.msra.mxu0 0
    %5021 = vmatprep.subr.bf16.mxu0 0
    %5022 = vmatpush1.bf16.msra.mxu0 0
    %5023 = vmatprep.subr.bf16.mxu0 0
    %5024 = vmatpush1.bf16.msra.mxu0 0
    %5025 = vmatprep.subr.bf16.mxu0 0
    %5026 = vmatpush1.bf16.msra.mxu0 0
    %5027 = vmatprep.subr.bf16.mxu0 0
    %5028 = vmatpush1.bf16.msra.mxu0 0
    %5029 = vmatprep.subr.bf16.mxu0 0
    %5030 = vmatpush1.bf16.msra.mxu0 0
    %5031 = vmatprep.subr.bf16.mxu0 0
    %5032 = vmatpush1.bf16.msra.mxu0 0
    %5033 = vmatprep.subr.bf16.mxu0 0
    %5034 = vmatpush1.bf16.msra.mxu0 0
    %5035 = vmatprep.subr.bf16.mxu0 0
    %5036 = vmatpush1.bf16.msra.mxu0 0
    %5037 = vmatprep.subr.bf16.mxu0 0
    %5038 = vmatpush1.bf16.msra.mxu0 0
    %5039 = vmatprep.subr.bf16.mxu0 0
    %5040 = vmatpush1.bf16.msra.mxu0 0
    %5041 = vmatprep.subr.bf16.mxu0 0
    %5042 = vmatpush1.bf16.msra.mxu0 0
    %5043 = vmatprep.mubr.bf16.mxu0 0
    %5044 = vmatmul.mubr.bf16.gmra.mrb[0].mxu0 %v5000
    %v5045 = vpop.f32.mrb[0].mxu0
    %v5046 = vadd.f32 0.0, %v5045
    %v5047 = vpop.f32.mrb[0].mxu0
    %v5048 = vadd.f32 0.0, %v5047
    %v5049 = vpop.f32.mrb[0].mxu0
    %v5050 = vpop.f32.mrb[0].mxu0
    %5051 = vdwg.mxu0
    %5052 = vmatprep.subr.bf16.mxu0 0
    %5053 = vmatpush1.bf16.msra.mxu0 %v5009
    %5054 = vmatprep.subr.bf16.mxu0 0
    %5055 = vmatpush1.bf16.msra.mxu0 0
    %5056 = vmatprep.subr.bf16.mxu0 0
    %5057 = vmatpush1.bf16.msra.mxu0 0
    %5058 = vmatprep.subr.bf16.mxu0 0
    %5059 = vmatpush1.bf16.msra.mxu0 0
    %5060 = vmatprep.subr.bf16.mxu0 0
    %5061 = vmatpush1.bf16.msra.mxu0 0
    %5062 = vmatprep.subr.bf16.mxu0 0
    %5063 = vmatpush1.bf16.msra.mxu0 0
    %5064 = vmatprep.subr.bf16.mxu0 0
    %5065 = vmatpush1.bf16.msra.mxu0 0
    %5066 = vmatprep.subr.bf16.mxu0 0
    %5067 = vmatpush1.bf16.msra.mxu0 0
    %5068 = vmatprep.subr.bf16.mxu0 0
    %5069 = vmatpush1.bf16.msra.mxu0 0
    %5070 = vmatprep.subr.bf16.mxu0 0
    %5071 = vmatpush1.bf16.msra.mxu0 0
    %5072 = vmatprep.subr.bf16.mxu0 0
    %5073 = vmatpush1.bf16.msra.mxu0 0
    %5074 = vmatprep.subr.bf16.mxu0 0
    %5075 = vmatpush1.bf16.msra.mxu0 0
    %5076 = vmatprep.subr.bf16.mxu0 0
    %5077 = vmatpush1.bf16.msra.mxu0 0
    %5078 = vmatprep.subr.bf16.mxu0 0
    %5079 = vmatpush1.bf16.msra.mxu0 0
    %5080 = vmatprep.subr.bf16.mxu0 0
    %5081 = vmatpush1.bf16.msra.mxu0 0
    %5082 = vmatprep.subr.bf16.mxu0 0
    %5083 = vmatpush1.bf16.msra.mxu0 0
    %5084 = vmatprep.mubr.bf16.mxu0 0
    %5085 = vmatmul.mubr.bf16.gmra.mrb[0].mxu0 %v5000
    %v5086 = vpop.f32.mrb[0].mxu0
    %v5087 = vadd.f32 0.0, %v5086
    %v5088 = vpop.f32.mrb[0].mxu0
    %v5089 = vpop.f32.mrb[0].mxu0
    %v5090 = vpop.f32.mrb[0].mxu0
    %5091 = vdwg.mxu0
    %v5092 = vadd.f32 %v4826, %v5046
    %v5093 = vadd.f32 %v4828, %v5048
    %v5094 = vadd.f32 %v4867, %v5087
    %v5095 = vpack.c.bf16 %v5092, %v5092
    %v5096 = vpack.c.bf16 %v5093, %v5093
    %v5097 = vpack.c.bf16 %v5094, %v5094
    %v5098 = vld [vmem:[%s43] sm:$0x7]
    %v5100 = vsel %vm2031, %v5098, 0
    %v5103 = vsel %vm2035, %v5095, 0
    %v5106 = vsel %vm2035, %v5096, 0
    %v5109 = vsel %vm2035, %v5097, 0
    %5111 = vmatprep.subr.bf16.mxu0 %v5106
    %5112 = vmatpush1.bf16.msra.mxu0 %v5103
    %5113 = vmatprep.subr.bf16.mxu0 0
    %5114 = vmatpush1.bf16.msra.mxu0 0
    %5115 = vmatprep.subr.bf16.mxu0 0
    %5116 = vmatpush1.bf16.msra.mxu0 0
    %5117 = vmatprep.subr.bf16.mxu0 0
    %5118 = vmatpush1.bf16.msra.mxu0 0
    %5119 = vmatprep.subr.bf16.mxu0 0
    %5120 = vmatpush1.bf16.msra.mxu0 0
    %5121 = vmatprep.subr.bf16.mxu0 0
    %5122 = vmatpush1.bf16.msra.mxu0 0
    %5123 = vmatprep.subr.bf16.mxu0 0
    %5124 = vmatpush1.bf16.msra.mxu0 0
    %5125 = vmatprep.subr.bf16.mxu0 0
    %5126 = vmatpush1.bf16.msra.mxu0 0
    %5127 = vmatprep.subr.bf16.mxu0 0
    %5128 = vmatpush1.bf16.msra.mxu0 0
    %5129 = vmatprep.subr.bf16.mxu0 0
    %5130 = vmatpush1.bf16.msra.mxu0 0
    %5131 = vmatprep.subr.bf16.mxu0 0
    %5132 = vmatpush1.bf16.msra.mxu0 0
    %5133 = vmatprep.subr.bf16.mxu0 0
    %5134 = vmatpush1.bf16.msra.mxu0 0
    %5135 = vmatprep.subr.bf16.mxu0 0
    %5136 = vmatpush1.bf16.msra.mxu0 0
    %5137 = vmatprep.subr.bf16.mxu0 0
    %5138 = vmatpush1.bf16.msra.mxu0 0
    %5139 = vmatprep.subr.bf16.mxu0 0
    %5140 = vmatpush1.bf16.msra.mxu0 0
    %5141 = vmatprep.subr.bf16.mxu0 0
    %5142 = vmatpush1.bf16.msra.mxu0 0
    %5143 = vmatprep.mubr.bf16.mxu0 0
    %5144 = vmatmul.mubr.bf16.gmra.mrb[0].mxu0 %v5100
    %v5145 = vpop.f32.mrb[0].mxu0
    %v5146 = vadd.f32 0.0, %v5145
    %v5147 = vpop.f32.mrb[0].mxu0
    %v5148 = vadd.f32 0.0, %v5147
    %v5149 = vpop.f32.mrb[0].mxu0
    %v5150 = vpop.f32.mrb[0].mxu0
    %5151 = vdwg.mxu0
    %5152 = vmatprep.subr.bf16.mxu0 0
    %5153 = vmatpush1.bf16.msra.mxu0 %v5109
    %5154 = vmatprep.subr.bf16.mxu0 0
    %5155 = vmatpush1.bf16.msra.mxu0 0
    %5156 = vmatprep.subr.bf16.mxu0 0
    %5157 = vmatpush1.bf16.msra.mxu0 0
    %5158 = vmatprep.subr.bf16.mxu0 0
    %5159 = vmatpush1.bf16.msra.mxu0 0
    %5160 = vmatprep.subr.bf16.mxu0 0
    %5161 = vmatpush1.bf16.msra.mxu0 0
    %5162 = vmatprep.subr.bf16.mxu0 0
    %5163 = vmatpush1.bf16.msra.mxu0 0
    %5164 = vmatprep.subr.bf16.mxu0 0
    %5165 = vmatpush1.bf16.msra.mxu0 0
    %5166 = vmatprep.subr.bf16.mxu0 0
    %5167 = vmatpush1.bf16.msra.mxu0 0
    %5168 = vmatprep.subr.bf16.mxu0 0
    %5169 = vmatpush1.bf16.msra.mxu0 0
    %5170 = vmatprep.subr.bf16.mxu0 0
    %5171 = vmatpush1.bf16.msra.mxu0 0
    %5172 = vmatprep.subr.bf16.mxu0 0
    %5173 = vmatpush1.bf16.msra.mxu0 0
    %5174 = vmatprep.subr.bf16.mxu0 0
    %5175 = vmatpush1.bf16.msra.mxu0 0
    %5176 = vmatprep.subr.bf16.mxu0 0
    %5177 = vmatpush1.bf16.msra.mxu0 0
    %5178 = vmatprep.subr.bf16.mxu0 0
    %5179 = vmatpush1.bf16.msra.mxu0 0
    %5180 = vmatprep.subr.bf16.mxu0 0
    %5181 = vmatpush1.bf16.msra.mxu0 0
    %5182 = vmatprep.subr.bf16.mxu0 0
    %5183 = vmatpush1.bf16.msra.mxu0 0
    %5184 = vmatprep.mubr.bf16.mxu0 0
    %5185 = vmatmul.mubr.bf16.gmra.mrb[0].mxu0 %v5100
    %v5186 = vpop.f32.mrb[0].mxu0
    %v5187 = vadd.f32 0.0, %v5186
    %v5188 = vpop.f32.mrb[0].mxu0
    %v5189 = vpop.f32.mrb[0].mxu0
    %v5190 = vpop.f32.mrb[0].mxu0
    %5191 = vdwg.mxu0
    %v5192 = vpack.c.bf16 %v5146, %v5146
    %v5193 = vpack.c.bf16 %v5148, %v5148
    %v5194 = vpack.c.bf16 %v5187, %v5187
    %v5195 = vld [vmem:[%s45] sm:$0xff]
    %v5196 = vld [vmem:[%s45 + $0x8] sm:$0xff]
    %v5197 = vld [vmem:[%s45 + $0x10] sm:$0xff]
    %v5198 = vld [vmem:[%s45 + $0x18] sm:$0xff]
    %v5199 = vld [vmem:[%s45 + $0x20] sm:$0xff]
    %v5200 = vld [vmem:[%s45 + $0x28] sm:$0xff]
    %v5201 = vld [vmem:[%s45 + $0x30] sm:$0xff]
    %v5202 = vld [vmem:[%s45 + $0x38] sm:$0xff]
    %v5203 = vld [vmem:[%s45 + $0x40] sm:$0xff]
    %v5204 = vld [vmem:[%s45 + $0x48] sm:$0xff]
    %v5205 = vld [vmem:[%s45 + $0x50] sm:$0xff]
    %v5206 = vld [vmem:[%s45 + $0x58] sm:$0xff]
    %v5207 = vld [vmem:[%s45 + $0x60] sm:$0xff]
    %v5208 = vld [vmem:[%s45 + $0x68] sm:$0xff]
    %v5209 = vld [vmem:[%s45 + $0x70] sm:$0xff]
    %v5210 = vld [vmem:[%s45 + $0x78] sm:$0xff]
    %v5211 = vld [vmem:[%s45 + $0x80] sm:$0xff]
    %v5212 = vld [vmem:[%s45 + $0x88] sm:$0xff]
    %v5213 = vld [vmem:[%s45 + $0x90] sm:$0xff]
    %v5214 = vld [vmem:[%s45 + $0x98] sm:$0xff]
    %v5215 = vld [vmem:[%s45 + $0xa0] sm:$0xff]
    %v5216 = vld [vmem:[%s45 + $0xa8] sm:$0xff]
    %v5217 = vld [vmem:[%s45 + $0xb0] sm:$0xff]
    %v5218 = vld [vmem:[%s45 + $0xb8] sm:$0xff]
    %v5219 = vld [vmem:[%s45 + $0xc0] sm:$0xff]
    %v5220 = vld [vmem:[%s45 + $0xc8] sm:$0xff]
    %v5221 = vld [vmem:[%s45 + $0xd0] sm:$0xff]
    %v5222 = vld [vmem:[%s45 + $0xd8] sm:$0xff]
    %v5223 = vld [vmem:[%s45 + $0xe0] sm:$0xff]
    %v5224 = vld [vmem:[%s45 + $0xe8] sm:$0xff]
    %v5225 = vld [vmem:[%s45 + $0xf0] sm:$0xff]
    %v5226 = vld [vmem:[%s45 + $0xf8] sm:$0xff]
    %v5227 = vld [vmem:[%s45 + $0x100] sm:$0xff]
    %v5228 = vld [vmem:[%s45 + $0x108] sm:$0xff]
    %v5229 = vld [vmem:[%s45 + $0x110] sm:$0xff]
    %v5230 = vld [vmem:[%s45 + $0x118] sm:$0xff]
    %v5231 = vld [vmem:[%s45 + $0x120] sm:$0xff]
    %v5232 = vld [vmem:[%s45 + $0x128] sm:$0xff]
    %v5233 = vld [vmem:[%s45 + $0x130] sm:$0xff]
    %v5234 = vld [vmem:[%s45 + $0x138] sm:$0xff]
    %v5235 = vld [vmem:[%s45 + $0x140] sm:$0xff]
    %v5236 = vld [vmem:[%s45 + $0x148] sm:$0xff]
    %v5237 = vld [vmem:[%s45 + $0x150] sm:$0xff]
    %v5238 = vld [vmem:[%s45 + $0x158] sm:$0xff]
    %v5239 = vld [vmem:[%s45 + $0x160] sm:$0xff]
    %v5240 = vld [vmem:[%s45 + $0x168] sm:$0xff]
    %v5241 = vld [vmem:[%s45 + $0x170] sm:$0xff]
    %v5242 = vld [vmem:[%s45 + $0x178] sm:$0xff]
    %s5243 = scalar_lea.vmem %s43, 4
    %v5244 = vld [vmem:[%s5243] sm:$0x7]
    %v5246 = vsel %vm2031, %v5244, 0
    %5248 = vmatprep.subr.bf16.mxu0 %v5106
    %5249 = vmatpush1.bf16.msra.mxu0 %v5103
    %5250 = vmatprep.subr.bf16.mxu0 0
    %5251 = vmatpush1.bf16.msra.mxu0 0
    %5252 = vmatprep.subr.bf16.mxu0 0
    %5253 = vmatpush1.bf16.msra.mxu0 0
    %5254 = vmatprep.subr.bf16.mxu0 0
    %5255 = vmatpush1.bf16.msra.mxu0 0
    %5256 = vmatprep.subr.bf16.mxu0 0
    %5257 = vmatpush1.bf16.msra.mxu0 0
    %5258 = vmatprep.subr.bf16.mxu0 0
    %5259 = vmatpush1.bf16.msra.mxu0 0
    %5260 = vmatprep.subr.bf16.mxu0 0
    %5261 = vmatpush1.bf16.msra.mxu0 0
    %5262 = vmatprep.subr.bf16.mxu0 0
    %5263 = vmatpush1.bf16.msra.mxu0 0
    %5264 = vmatprep.subr.bf16.mxu0 0
    %5265 = vmatpush1.bf16.msra.mxu0 0
    %5266 = vmatprep.subr.bf16.mxu0 0
    %5267 = vmatpush1.bf16.msra.mxu0 0
    %5268 = vmatprep.subr.bf16.mxu0 0
    %5269 = vmatpush1.bf16.msra.mxu0 0
    %5270 = vmatprep.subr.bf16.mxu0 0
    %5271 = vmatpush1.bf16.msra.mxu0 0
    %5272 = vmatprep.subr.bf16.mxu0 0
    %5273 = vmatpush1.bf16.msra.mxu0 0
    %5274 = vmatprep.subr.bf16.mxu0 0
    %5275 = vmatpush1.bf16.msra.mxu0 0
    %5276 = vmatprep.subr.bf16.mxu0 0
    %5277 = vmatpush1.bf16.msra.mxu0 0
    %5278 = vmatprep.subr.bf16.mxu0 0
    %5279 = vmatpush1.bf16.msra.mxu0 0
    %5280 = vmatprep.mubr.bf16.mxu0 0
    %5281 = vmatmul.mubr.bf16.gmra.mrb[0].mxu0 %v5246
    %v5282 = vpop.f32.mrb[0].mxu0
    %v5283 = vadd.f32 0.0, %v5282
    %v5284 = vpop.f32.mrb[0].mxu0
    %v5285 = vadd.f32 0.0, %v5284
    %v5286 = vpop.f32.mrb[0].mxu0
    %v5287 = vpop.f32.mrb[0].mxu0
    %5288 = vdwg.mxu0
    %5289 = vmatprep.subr.bf16.mxu0 0
    %5290 = vmatpush1.bf16.msra.mxu0 %v5109
    %5291 = vmatprep.subr.bf16.mxu0 0
    %5292 = vmatpush1.bf16.msra.mxu0 0
    %5293 = vmatprep.subr.bf16.mxu0 0
    %5294 = vmatpush1.bf16.msra.mxu0 0
    %5295 = vmatprep.subr.bf16.mxu0 0
    %5296 = vmatpush1.bf16.msra.mxu0 0
    %5297 = vmatprep.subr.bf16.mxu0 0
    %5298 = vmatpush1.bf16.msra.mxu0 0
    %5299 = vmatprep.subr.bf16.mxu0 0
    %5300 = vmatpush1.bf16.msra.mxu0 0
    %5301 = vmatprep.subr.bf16.mxu0 0
    %5302 = vmatpush1.bf16.msra.mxu0 0
    %5303 = vmatprep.subr.bf16.mxu0 0
    %5304 = vmatpush1.bf16.msra.mxu0 0
    %5305 = vmatprep.subr.bf16.mxu0 0
    %5306 = vmatpush1.bf16.msra.mxu0 0
    %5307 = vmatprep.subr.bf16.mxu0 0
    %5308 = vmatpush1.bf16.msra.mxu0 0
    %5309 = vmatprep.subr.bf16.mxu0 0
    %5310 = vmatpush1.bf16.msra.mxu0 0
    %5311 = vmatprep.subr.bf16.mxu0 0
    %5312 = vmatpush1.bf16.msra.mxu0 0
    %5313 = vmatprep.subr.bf16.mxu0 0
    %5314 = vmatpush1.bf16.msra.mxu0 0
    %5315 = vmatprep.subr.bf16.mxu0 0
    %5316 = vmatpush1.bf16.msra.mxu0 0
    %5317 = vmatprep.subr.bf16.mxu0 0
    %5318 = vmatpush1.bf16.msra.mxu0 0
    %5319 = vmatprep.subr.bf16.mxu0 0
    %5320 = vmatpush1.bf16.msra.mxu0 0
    %5321 = vmatprep.mubr.bf16.mxu0 0
    %5322 = vmatmul.mubr.bf16.gmra.mrb[0].mxu0 %v5246
    %v5323 = vpop.f32.mrb[0].mxu0
    %v5324 = vadd.f32 0.0, %v5323
    %v5325 = vpop.f32.mrb[0].mxu0
    %v5326 = vpop.f32.mrb[0].mxu0
    %v5327 = vpop.f32.mrb[0].mxu0
    %5328 = vdwg.mxu0
    %v5329 = vpack.c.bf16 %v5283, %v5283
    %v5330 = vpack.c.bf16 %v5285, %v5285
    %v5331 = vpack.c.bf16 %v5324, %v5324
    %s5332 = scalar_lea.vmem %s45, 384
    %v5333 = vld [vmem:[%s5332] sm:$0xff]
    %v5334 = vld [vmem:[%s5332 + $0x8] sm:$0xff]
    %v5335 = vld [vmem:[%s5332 + $0x10] sm:$0xff]
    %v5336 = vld [vmem:[%s5332 + $0x18] sm:$0xff]
    %v5337 = vld [vmem:[%s5332 + $0x20] sm:$0xff]
    %v5338 = vld [vmem:[%s5332 + $0x28] sm:$0xff]
    %v5339 = vld [vmem:[%s5332 + $0x30] sm:$0xff]
    %v5340 = vld [vmem:[%s5332 + $0x38] sm:$0xff]
    %v5341 = vld [vmem:[%s5332 + $0x40] sm:$0xff]
    %v5342 = vld [vmem:[%s5332 + $0x48] sm:$0xff]
    %v5343 = vld [vmem:[%s5332 + $0x50] sm:$0xff]
    %v5344 = vld [vmem:[%s5332 + $0x58] sm:$0xff]
    %v5345 = vld [vmem:[%s5332 + $0x60] sm:$0xff]
    %v5346 = vld [vmem:[%s5332 + $0x68] sm:$0xff]
    %v5347 = vld [vmem:[%s5332 + $0x70] sm:$0xff]
    %v5348 = vld [vmem:[%s5332 + $0x78] sm:$0xff]
    %v5349 = vld [vmem:[%s5332 + $0x80] sm:$0xff]
    %v5350 = vld [vmem:[%s5332 + $0x88] sm:$0xff]
    %v5351 = vld [vmem:[%s5332 + $0x90] sm:$0xff]
    %v5352 = vld [vmem:[%s5332 + $0x98] sm:$0xff]
    %v5353 = vld [vmem:[%s5332 + $0xa0] sm:$0xff]
    %v5354 = vld [vmem:[%s5332 + $0xa8] sm:$0xff]
    %v5355 = vld [vmem:[%s5332 + $0xb0] sm:$0xff]
    %v5356 = vld [vmem:[%s5332 + $0xb8] sm:$0xff]
    %v5357 = vld [vmem:[%s5332 + $0xc0] sm:$0xff]
    %v5358 = vld [vmem:[%s5332 + $0xc8] sm:$0xff]
    %v5359 = vld [vmem:[%s5332 + $0xd0] sm:$0xff]
    %v5360 = vld [vmem:[%s5332 + $0xd8] sm:$0xff]
    %v5361 = vld [vmem:[%s5332 + $0xe0] sm:$0xff]
    %v5362 = vld [vmem:[%s5332 + $0xe8] sm:$0xff]
    %v5363 = vld [vmem:[%s5332 + $0xf0] sm:$0xff]
    %v5364 = vld [vmem:[%s5332 + $0xf8] sm:$0xff]
    %v5365 = vld [vmem:[%s5332 + $0x100] sm:$0xff]
    %v5366 = vld [vmem:[%s5332 + $0x108] sm:$0xff]
    %v5367 = vld [vmem:[%s5332 + $0x110] sm:$0xff]
    %v5368 = vld [vmem:[%s5332 + $0x118] sm:$0xff]
    %v5369 = vld [vmem:[%s5332 + $0x120] sm:$0xff]
    %v5370 = vld [vmem:[%s5332 + $0x128] sm:$0xff]
    %v5371 = vld [vmem:[%s5332 + $0x130] sm:$0xff]
    %v5372 = vld [vmem:[%s5332 + $0x138] sm:$0xff]
    %v5373 = vld [vmem:[%s5332 + $0x140] sm:$0xff]
    %v5374 = vld [vmem:[%s5332 + $0x148] sm:$0xff]
    %v5375 = vld [vmem:[%s5332 + $0x150] sm:$0xff]
    %v5376 = vld [vmem:[%s5332 + $0x158] sm:$0xff]
    %v5377 = vld [vmem:[%s5332 + $0x160] sm:$0xff]
    %v5378 = vld [vmem:[%s5332 + $0x168] sm:$0xff]
    %v5379 = vld [vmem:[%s5332 + $0x170] sm:$0xff]
    %v5380 = vld [vmem:[%s5332 + $0x178] sm:$0xff]
    %v5429 = vunpack.c.l.b16 %v5333
    %v5430 = vunpack.c.h.b16 %v5333
    %v5431 = vunpack.c.l.b16 %v5334
    %v5432 = vunpack.c.h.b16 %v5334
    %v5433 = vunpack.c.l.b16 %v5335
    %v5434 = vunpack.c.h.b16 %v5335
    %v5435 = vunpack.c.l.b16 %v5336
    %v5436 = vunpack.c.h.b16 %v5336
    %v5437 = vunpack.c.l.b16 %v5337
    %v5438 = vunpack.c.h.b16 %v5337
    %v5439 = vunpack.c.l.b16 %v5338
    %v5440 = vunpack.c.h.b16 %v5338
    %v5441 = vunpack.c.l.b16 %v5339
    %v5442 = vunpack.c.h.b16 %v5339
    %v5443 = vunpack.c.l.b16 %v5340
    %v5444 = vunpack.c.h.b16 %v5340
    %v5445 = vunpack.c.l.b16 %v5341
    %v5446 = vunpack.c.h.b16 %v5341
    %v5447 = vunpack.c.l.b16 %v5342
    %v5448 = vunpack.c.h.b16 %v5342
    %v5449 = vunpack.c.l.b16 %v5343
    %v5450 = vunpack.c.h.b16 %v5343
    %v5451 = vunpack.c.l.b16 %v5344
    %v5452 = vunpack.c.h.b16 %v5344
    %v5453 = vunpack.c.l.b16 %v5345
    %v5454 = vunpack.c.h.b16 %v5345
    %v5455 = vunpack.c.l.b16 %v5346
    %v5456 = vunpack.c.h.b16 %v5346
    %v5457 = vunpack.c.l.b16 %v5347
    %v5458 = vunpack.c.h.b16 %v5347
    %v5459 = vunpack.c.l.b16 %v5348
    %v5460 = vunpack.c.h.b16 %v5348
    %v5461 = vunpack.c.l.b16 %v5349
    %v5462 = vunpack.c.h.b16 %v5349
    %v5463 = vunpack.c.l.b16 %v5350
    %v5464 = vunpack.c.h.b16 %v5350
    %v5465 = vunpack.c.l.b16 %v5351
    %v5466 = vunpack.c.h.b16 %v5351
    %v5467 = vunpack.c.l.b16 %v5352
    %v5468 = vunpack.c.h.b16 %v5352
    %v5469 = vunpack.c.l.b16 %v5353
    %v5470 = vunpack.c.h.b16 %v5353
    %v5471 = vunpack.c.l.b16 %v5354
    %v5472 = vunpack.c.h.b16 %v5354
    %v5473 = vunpack.c.l.b16 %v5355
    %v5474 = vunpack.c.h.b16 %v5355
    %v5475 = vunpack.c.l.b16 %v5356
    %v5476 = vunpack.c.h.b16 %v5356
    %v5477 = vunpack.c.l.b16 %v5357
    %v5478 = vunpack.c.h.b16 %v5357
    %v5479 = vunpack.c.l.b16 %v5358
    %v5480 = vunpack.c.h.b16 %v5358
    %v5481 = vunpack.c.l.b16 %v5359
    %v5482 = vunpack.c.h.b16 %v5359
    %v5483 = vunpack.c.l.b16 %v5360
    %v5484 = vunpack.c.h.b16 %v5360
    %v5485 = vunpack.c.l.b16 %v5361
    %v5486 = vunpack.c.h.b16 %v5361
    %v5487 = vunpack.c.l.b16 %v5362
    %v5488 = vunpack.c.h.b16 %v5362
    %v5489 = vunpack.c.l.b16 %v5363
    %v5490 = vunpack.c.h.b16 %v5363
    %v5491 = vunpack.c.l.b16 %v5364
    %v5492 = vunpack.c.h.b16 %v5364
    %v5493 = vunpack.c.l.b16 %v5365
    %v5494 = vunpack.c.h.b16 %v5365
    %v5495 = vunpack.c.l.b16 %v5366
    %v5496 = vunpack.c.h.b16 %v5366
    %v5497 = vunpack.c.l.b16 %v5367
    %v5498 = vunpack.c.h.b16 %v5367
    %v5499 = vunpack.c.l.b16 %v5368
    %v5500 = vunpack.c.h.b16 %v5368
    %v5501 = vunpack.c.l.b16 %v5369
    %v5502 = vunpack.c.h.b16 %v5369
    %v5503 = vunpack.c.l.b16 %v5370
    %v5504 = vunpack.c.h.b16 %v5370
    %v5505 = vunpack.c.l.b16 %v5371
    %v5506 = vunpack.c.h.b16 %v5371
    %v5507 = vunpack.c.l.b16 %v5372
    %v5508 = vunpack.c.h.b16 %v5372
    %v5509 = vunpack.c.l.b16 %v5373
    %v5510 = vunpack.c.h.b16 %v5373
    %v5511 = vunpack.c.l.b16 %v5374
    %v5512 = vunpack.c.h.b16 %v5374
    %v5513 = vunpack.c.l.b16 %v5375
    %v5514 = vunpack.c.h.b16 %v5375
    %v5515 = vunpack.c.l.b16 %v5376
    %v5516 = vunpack.c.h.b16 %v5376
    %v5517 = vunpack.c.l.b16 %v5377
    %v5518 = vunpack.c.h.b16 %v5377
    %v5519 = vunpack.c.l.b16 %v5378
    %v5520 = vunpack.c.h.b16 %v5378
    %v5521 = vunpack.c.l.b16 %v5379
    %v5522 = vunpack.c.h.b16 %v5379
    %v5523 = vunpack.c.l.b16 %v5380
    %v5524 = vunpack.c.h.b16 %v5380
    %v5525 = vpack.c.b16 %v5431, %v5429
    %v5526 = vpack.c.b16 %v5432, %v5430
    %v5527 = vpack.c.b16 %v5435, %v5433
    %v5528 = vpack.c.b16 %v5436, %v5434
    %v5529 = vpack.c.b16 %v5439, %v5437
    %v5530 = vpack.c.b16 %v5440, %v5438
    %v5531 = vpack.c.b16 %v5443, %v5441
    %v5532 = vpack.c.b16 %v5444, %v5442
    %v5533 = vpack.c.b16 %v5447, %v5445
    %v5534 = vpack.c.b16 %v5448, %v5446
    %v5535 = vpack.c.b16 %v5451, %v5449
    %v5536 = vpack.c.b16 %v5452, %v5450
    %v5537 = vpack.c.b16 %v5455, %v5453
    %v5538 = vpack.c.b16 %v5456, %v5454
    %v5539 = vpack.c.b16 %v5459, %v5457
    %v5540 = vpack.c.b16 %v5460, %v5458
    %v5541 = vpack.c.b16 %v5463, %v5461
    %v5542 = vpack.c.b16 %v5464, %v5462
    %v5543 = vpack.c.b16 %v5467, %v5465
    %v5544 = vpack.c.b16 %v5468, %v5466
    %v5545 = vpack.c.b16 %v5471, %v5469
    %v5546 = vpack.c.b16 %v5472, %v5470
    %v5547 = vpack.c.b16 %v5475, %v5473
    %v5548 = vpack.c.b16 %v5476, %v5474
    %v5549 = vpack.c.b16 %v5479, %v5477
    %v5550 = vpack.c.b16 %v5480, %v5478
    %v5551 = vpack.c.b16 %v5483, %v5481
    %v5552 = vpack.c.b16 %v5484, %v5482
    %v5553 = vpack.c.b16 %v5487, %v5485
    %v5554 = vpack.c.b16 %v5488, %v5486
    %v5555 = vpack.c.b16 %v5491, %v5489
    %v5556 = vpack.c.b16 %v5492, %v5490
    %v5557 = vpack.c.b16 %v5495, %v5493
    %v5558 = vpack.c.b16 %v5496, %v5494
    %v5559 = vpack.c.b16 %v5499, %v5497
    %v5560 = vpack.c.b16 %v5500, %v5498
    %v5561 = vpack.c.b16 %v5503, %v5501
    %v5562 = vpack.c.b16 %v5504, %v5502
    %v5563 = vpack.c.b16 %v5507, %v5505
    %v5564 = vpack.c.b16 %v5508, %v5506
    %v5565 = vpack.c.b16 %v5511, %v5509
    %v5566 = vpack.c.b16 %v5512, %v5510
    %v5567 = vpack.c.b16 %v5515, %v5513
    %v5568 = vpack.c.b16 %v5516, %v5514
    %v5569 = vpack.c.b16 %v5519, %v5517
    %v5570 = vpack.c.b16 %v5520, %v5518
    %v5571 = vpack.c.b16 %v5523, %v5521
    %v5572 = vpack.c.b16 %v5524, %v5522
    %5621 = vmatprep.subr.bf16.mxu0 %v5526
    %5622 = vmatpush1.bf16.msra.mxu0 %v5525
    %5623 = vmatprep.subr.bf16.mxu0 %v5528
    %5624 = vmatpush1.bf16.msra.mxu0 %v5527
    %5625 = vmatprep.subr.bf16.mxu0 %v5530
    %5626 = vmatpush1.bf16.msra.mxu0 %v5529
    %5627 = vmatprep.subr.bf16.mxu0 %v5532
    %5628 = vmatpush1.bf16.msra.mxu0 %v5531
    %5629 = vmatprep.subr.bf16.mxu0 %v5534
    %5630 = vmatpush1.bf16.msra.mxu0 %v5533
    %5631 = vmatprep.subr.bf16.mxu0 %v5536
    %5632 = vmatpush1.bf16.msra.mxu0 %v5535
    %5633 = vmatprep.subr.bf16.mxu0 %v5538
    %5634 = vmatpush1.bf16.msra.mxu0 %v5537
    %5635 = vmatprep.subr.bf16.mxu0 %v5540
    %5636 = vmatpush1.bf16.msra.mxu0 %v5539
    %5637 = vmatprep.subr.bf16.mxu0 %v5542
    %5638 = vmatpush1.bf16.msra.mxu0 %v5541
    %5639 = vmatprep.subr.bf16.mxu0 %v5544
    %5640 = vmatpush1.bf16.msra.mxu0 %v5543
    %5641 = vmatprep.subr.bf16.mxu0 %v5546
    %5642 = vmatpush1.bf16.msra.mxu0 %v5545
    %5643 = vmatprep.subr.bf16.mxu0 %v5548
    %5644 = vmatpush1.bf16.msra.mxu0 %v5547
    %5645 = vmatprep.subr.bf16.mxu0 %v5550
    %5646 = vmatpush1.bf16.msra.mxu0 %v5549
    %5647 = vmatprep.subr.bf16.mxu0 %v5552
    %5648 = vmatpush1.bf16.msra.mxu0 %v5551
    %5649 = vmatprep.subr.bf16.mxu0 %v5554
    %5650 = vmatpush1.bf16.msra.mxu0 %v5553
    %5651 = vmatprep.subr.bf16.mxu0 %v5556
    %5652 = vmatpush1.bf16.msra.mxu0 %v5555
    %5653 = vmatprep.mubr.bf16.mxu0 %v5330
    %5654 = vmatmul.mubr.bf16.gmra.mrb[0].mxu0 %v5329
    %v5655 = vpop.f32.mrb[0].mxu0
    %v5656 = vadd.f32 0.0, %v5655
    %v5657 = vpop.f32.mrb[0].mxu0
    %v5658 = vadd.f32 0.0, %v5657
    %v5659 = vpop.f32.mrb[0].mxu0
    %v5660 = vpop.f32.mrb[0].mxu0
    %5661 = vdwg.mxu0
    %5662 = vmatprep.subr.bf16.mxu0 %v5558
    %5663 = vmatpush1.bf16.msra.mxu0 %v5557
    %5664 = vmatprep.subr.bf16.mxu0 %v5560
    %5665 = vmatpush1.bf16.msra.mxu0 %v5559
    %5666 = vmatprep.subr.bf16.mxu0 %v5562
    %5667 = vmatpush1.bf16.msra.mxu0 %v5561
    %5668 = vmatprep.subr.bf16.mxu0 %v5564
    %5669 = vmatpush1.bf16.msra.mxu0 %v5563
    %5670 = vmatprep.subr.bf16.mxu0 %v5566
    %5671 = vmatpush1.bf16.msra.mxu0 %v5565
    %5672 = vmatprep.subr.bf16.mxu0 %v5568
    %5673 = vmatpush1.bf16.msra.mxu0 %v5567
    %5674 = vmatprep.subr.bf16.mxu0 %v5570
    %5675 = vmatpush1.bf16.msra.mxu0 %v5569
    %5676 = vmatprep.subr.bf16.mxu0 %v5572
    %5677 = vmatpush1.bf16.msra.mxu0 %v5571
    %5678 = vmatprep.subr.bf16.mxu0 0
    %5679 = vmatpush1.bf16.msra.mxu0 0
    %5680 = vmatprep.subr.bf16.mxu0 0
    %5681 = vmatpush1.bf16.msra.mxu0 0
    %5682 = vmatprep.subr.bf16.mxu0 0
    %5683 = vmatpush1.bf16.msra.mxu0 0
    %5684 = vmatprep.subr.bf16.mxu0 0
    %5685 = vmatpush1.bf16.msra.mxu0 0
    %5686 = vmatprep.subr.bf16.mxu0 0
    %5687 = vmatpush1.bf16.msra.mxu0 0
    %5688 = vmatprep.subr.bf16.mxu0 0
    %5689 = vmatpush1.bf16.msra.mxu0 0
    %5690 = vmatprep.subr.bf16.mxu0 0
    %5691 = vmatpush1.bf16.msra.mxu0 0
    %5692 = vmatprep.subr.bf16.mxu0 0
    %5693 = vmatpush1.bf16.msra.mxu0 0
    %5694 = vmatprep.mubr.bf16.mxu0 0
    %5695 = vmatmul.mubr.bf16.gmra.mrb[0].mxu0 %v5331
    %v5696 = vpop.f32.mrb[0].mxu0
    %v5697 = vadd.f32 %v5656, %v5696
    %v5698 = vpop.f32.mrb[0].mxu0
    %v5699 = vadd.f32 %v5658, %v5698
    %v5700 = vpop.f32.mrb[0].mxu0
    %v5701 = vpop.f32.mrb[0].mxu0
    %5702 = vdwg.mxu0
    %v5751 = vunpack.c.l.b16 %v5195
    %v5752 = vunpack.c.h.b16 %v5195
    %v5753 = vunpack.c.l.b16 %v5196
    %v5754 = vunpack.c.h.b16 %v5196
    %v5755 = vunpack.c.l.b16 %v5197
    %v5756 = vunpack.c.h.b16 %v5197
    %v5757 = vunpack.c.l.b16 %v5198
    %v5758 = vunpack.c.h.b16 %v5198
    %v5759 = vunpack.c.l.b16 %v5199
    %v5760 = vunpack.c.h.b16 %v5199
    %v5761 = vunpack.c.l.b16 %v5200
    %v5762 = vunpack.c.h.b16 %v5200
    %v5763 = vunpack.c.l.b16 %v5201
    %v5764 = vunpack.c.h.b16 %v5201
    %v5765 = vunpack.c.l.b16 %v5202
    %v5766 = vunpack.c.h.b16 %v5202
    %v5767 = vunpack.c.l.b16 %v5203
    %v5768 = vunpack.c.h.b16 %v5203
    %v5769 = vunpack.c.l.b16 %v5204
    %v5770 = vunpack.c.h.b16 %v5204
    %v5771 = vunpack.c.l.b16 %v5205
    %v5772 = vunpack.c.h.b16 %v5205
    %v5773 = vunpack.c.l.b16 %v5206
    %v5774 = vunpack.c.h.b16 %v5206
    %v5775 = vunpack.c.l.b16 %v5207
    %v5776 = vunpack.c.h.b16 %v5207
    %v5777 = vunpack.c.l.b16 %v5208
    %v5778 = vunpack.c.h.b16 %v5208
    %v5779 = vunpack.c.l.b16 %v5209
    %v5780 = vunpack.c.h.b16 %v5209
    %v5781 = vunpack.c.l.b16 %v5210
    %v5782 = vunpack.c.h.b16 %v5210
    %v5783 = vunpack.c.l.b16 %v5211
    %v5784 = vunpack.c.h.b16 %v5211
    %v5785 = vunpack.c.l.b16 %v5212
    %v5786 = vunpack.c.h.b16 %v5212
    %v5787 = vunpack.c.l.b16 %v5213
    %v5788 = vunpack.c.h.b16 %v5213
    %v5789 = vunpack.c.l.b16 %v5214
    %v5790 = vunpack.c.h.b16 %v5214
    %v5791 = vunpack.c.l.b16 %v5215
    %v5792 = vunpack.c.h.b16 %v5215
    %v5793 = vunpack.c.l.b16 %v5216
    %v5794 = vunpack.c.h.b16 %v5216
    %v5795 = vunpack.c.l.b16 %v5217
    %v5796 = vunpack.c.h.b16 %v5217
    %v5797 = vunpack.c.l.b16 %v5218
    %v5798 = vunpack.c.h.b16 %v5218
    %v5799 = vunpack.c.l.b16 %v5219
    %v5800 = vunpack.c.h.b16 %v5219
    %v5801 = vunpack.c.l.b16 %v5220
    %v5802 = vunpack.c.h.b16 %v5220
    %v5803 = vunpack.c.l.b16 %v5221
    %v5804 = vunpack.c.h.b16 %v5221
    %v5805 = vunpack.c.l.b16 %v5222
    %v5806 = vunpack.c.h.b16 %v5222
    %v5807 = vunpack.c.l.b16 %v5223
    %v5808 = vunpack.c.h.b16 %v5223
    %v5809 = vunpack.c.l.b16 %v5224
    %v5810 = vunpack.c.h.b16 %v5224
    %v5811 = vunpack.c.l.b16 %v5225
    %v5812 = vunpack.c.h.b16 %v5225
    %v5813 = vunpack.c.l.b16 %v5226
    %v5814 = vunpack.c.h.b16 %v5226
    %v5815 = vunpack.c.l.b16 %v5227
    %v5816 = vunpack.c.h.b16 %v5227
    %v5817 = vunpack.c.l.b16 %v5228
    %v5818 = vunpack.c.h.b16 %v5228
    %v5819 = vunpack.c.l.b16 %v5229
    %v5820 = vunpack.c.h.b16 %v5229
    %v5821 = vunpack.c.l.b16 %v5230
    %v5822 = vunpack.c.h.b16 %v5230
    %v5823 = vunpack.c.l.b16 %v5231
    %v5824 = vunpack.c.h.b16 %v5231
    %v5825 = vunpack.c.l.b16 %v5232
    %v5826 = vunpack.c.h.b16 %v5232
    %v5827 = vunpack.c.l.b16 %v5233
    %v5828 = vunpack.c.h.b16 %v5233
    %v5829 = vunpack.c.l.b16 %v5234
    %v5830 = vunpack.c.h.b16 %v5234
    %v5831 = vunpack.c.l.b16 %v5235
    %v5832 = vunpack.c.h.b16 %v5235
    %v5833 = vunpack.c.l.b16 %v5236
    %v5834 = vunpack.c.h.b16 %v5236
    %v5835 = vunpack.c.l.b16 %v5237
    %v5836 = vunpack.c.h.b16 %v5237
    %v5837 = vunpack.c.l.b16 %v5238
    %v5838 = vunpack.c.h.b16 %v5238
    %v5839 = vunpack.c.l.b16 %v5239
    %v5840 = vunpack.c.h.b16 %v5239
    %v5841 = vunpack.c.l.b16 %v5240
    %v5842 = vunpack.c.h.b16 %v5240
    %v5843 = vunpack.c.l.b16 %v5241
    %v5844 = vunpack.c.h.b16 %v5241
    %v5845 = vunpack.c.l.b16 %v5242
    %v5846 = vunpack.c.h.b16 %v5242
    %v5847 = vpack.c.b16 %v5753, %v5751
    %v5848 = vpack.c.b16 %v5754, %v5752
    %v5849 = vpack.c.b16 %v5757, %v5755
    %v5850 = vpack.c.b16 %v5758, %v5756
    %v5851 = vpack.c.b16 %v5761, %v5759
    %v5852 = vpack.c.b16 %v5762, %v5760
    %v5853 = vpack.c.b16 %v5765, %v5763
    %v5854 = vpack.c.b16 %v5766, %v5764
    %v5855 = vpack.c.b16 %v5769, %v5767
    %v5856 = vpack.c.b16 %v5770, %v5768
    %v5857 = vpack.c.b16 %v5773, %v5771
    %v5858 = vpack.c.b16 %v5774, %v5772
    %v5859 = vpack.c.b16 %v5777, %v5775
    %v5860 = vpack.c.b16 %v5778, %v5776
    %v5861 = vpack.c.b16 %v5781, %v5779
    %v5862 = vpack.c.b16 %v5782, %v5780
    %v5863 = vpack.c.b16 %v5785, %v5783
    %v5864 = vpack.c.b16 %v5786, %v5784
    %v5865 = vpack.c.b16 %v5789, %v5787
    %v5866 = vpack.c.b16 %v5790, %v5788
    %v5867 = vpack.c.b16 %v5793, %v5791
    %v5868 = vpack.c.b16 %v5794, %v5792
    %v5869 = vpack.c.b16 %v5797, %v5795
    %v5870 = vpack.c.b16 %v5798, %v5796
    %v5871 = vpack.c.b16 %v5801, %v5799
    %v5872 = vpack.c.b16 %v5802, %v5800
    %v5873 = vpack.c.b16 %v5805, %v5803
    %v5874 = vpack.c.b16 %v5806, %v5804
    %v5875 = vpack.c.b16 %v5809, %v5807
    %v5876 = vpack.c.b16 %v5810, %v5808
    %v5877 = vpack.c.b16 %v5813, %v5811
    %v5878 = vpack.c.b16 %v5814, %v5812
    %v5879 = vpack.c.b16 %v5817, %v5815
    %v5880 = vpack.c.b16 %v5818, %v5816
    %v5881 = vpack.c.b16 %v5821, %v5819
    %v5882 = vpack.c.b16 %v5822, %v5820
    %v5883 = vpack.c.b16 %v5825, %v5823
    %v5884 = vpack.c.b16 %v5826, %v5824
    %v5885 = vpack.c.b16 %v5829, %v5827
    %v5886 = vpack.c.b16 %v5830, %v5828
    %v5887 = vpack.c.b16 %v5833, %v5831
    %v5888 = vpack.c.b16 %v5834, %v5832
    %v5889 = vpack.c.b16 %v5837, %v5835
    %v5890 = vpack.c.b16 %v5838, %v5836
    %v5891 = vpack.c.b16 %v5841, %v5839
    %v5892 = vpack.c.b16 %v5842, %v5840
    %v5893 = vpack.c.b16 %v5845, %v5843
    %v5894 = vpack.c.b16 %v5846, %v5844
    %5943 = vmatprep.subr.bf16.mxu0 %v5848
    %5944 = vmatpush1.bf16.msra.mxu0 %v5847
    %5945 = vmatprep.subr.bf16.mxu0 %v5850
    %5946 = vmatpush1.bf16.msra.mxu0 %v5849
    %5947 = vmatprep.subr.bf16.mxu0 %v5852
    %5948 = vmatpush1.bf16.msra.mxu0 %v5851
    %5949 = vmatprep.subr.bf16.mxu0 %v5854
    %5950 = vmatpush1.bf16.msra.mxu0 %v5853
    %5951 = vmatprep.subr.bf16.mxu0 %v5856
    %5952 = vmatpush1.bf16.msra.mxu0 %v5855
    %5953 = vmatprep.subr.bf16.mxu0 %v5858
    %5954 = vmatpush1.bf16.msra.mxu0 %v5857
    %5955 = vmatprep.subr.bf16.mxu0 %v5860
    %5956 = vmatpush1.bf16.msra.mxu0 %v5859
    %5957 = vmatprep.subr.bf16.mxu0 %v5862
    %5958 = vmatpush1.bf16.msra.mxu0 %v5861
    %5959 = vmatprep.subr.bf16.mxu0 %v5864
    %5960 = vmatpush1.bf16.msra.mxu0 %v5863
    %5961 = vmatprep.subr.bf16.mxu0 %v5866
    %5962 = vmatpush1.bf16.msra.mxu0 %v5865
    %5963 = vmatprep.subr.bf16.mxu0 %v5868
    %5964 = vmatpush1.bf16.msra.mxu0 %v5867
    %5965 = vmatprep.subr.bf16.mxu0 %v5870
    %5966 = vmatpush1.bf16.msra.mxu0 %v5869
    %5967 = vmatprep.subr.bf16.mxu0 %v5872
    %5968 = vmatpush1.bf16.msra.mxu0 %v5871
    %5969 = vmatprep.subr.bf16.mxu0 %v5874
    %5970 = vmatpush1.bf16.msra.mxu0 %v5873
    %5971 = vmatprep.subr.bf16.mxu0 %v5876
    %5972 = vmatpush1.bf16.msra.mxu0 %v5875
    %5973 = vmatprep.subr.bf16.mxu0 %v5878
    %5974 = vmatpush1.bf16.msra.mxu0 %v5877
    %5975 = vmatprep.mubr.bf16.mxu0 %v5193
    %5976 = vmatmul.mubr.bf16.gmra.mrb[0].mxu0 %v5192
    %v5977 = vpop.f32.mrb[0].mxu0
    %v5978 = vadd.f32 %v5697, %v5977
    %v5979 = vpop.f32.mrb[0].mxu0
    %v5980 = vadd.f32 %v5699, %v5979
    %v5981 = vpop.f32.mrb[0].mxu0
    %v5982 = vpop.f32.mrb[0].mxu0
    %5983 = vdwg.mxu0
    %5984 = vmatprep.subr.bf16.mxu0 %v5880
    %5985 = vmatpush1.bf16.msra.mxu0 %v5879
    %5986 = vmatprep.subr.bf16.mxu0 %v5882
    %5987 = vmatpush1.bf16.msra.mxu0 %v5881
    %5988 = vmatprep.subr.bf16.mxu0 %v5884
    %5989 = vmatpush1.bf16.msra.mxu0 %v5883
    %5990 = vmatprep.subr.bf16.mxu0 %v5886
    %5991 = vmatpush1.bf16.msra.mxu0 %v5885
    %5992 = vmatprep.subr.bf16.mxu0 %v5888
    %5993 = vmatpush1.bf16.msra.mxu0 %v5887
    %5994 = vmatprep.subr.bf16.mxu0 %v5890
    %5995 = vmatpush1.bf16.msra.mxu0 %v5889
    %5996 = vmatprep.subr.bf16.mxu0 %v5892
    %5997 = vmatpush1.bf16.msra.mxu0 %v5891
    %5998 = vmatprep.subr.bf16.mxu0 %v5894
    %5999 = vmatpush1.bf16.msra.mxu0 %v5893
    %6000 = vmatprep.subr.bf16.mxu0 0
    %6001 = vmatpush1.bf16.msra.mxu0 0
    %6002 = vmatprep.subr.bf16.mxu0 0
    %6003 = vmatpush1.bf16.msra.mxu0 0
    %6004 = vmatprep.subr.bf16.mxu0 0
    %6005 = vmatpush1.bf16.msra.mxu0 0
    %6006 = vmatprep.subr.bf16.mxu0 0
    %6007 = vmatpush1.bf16.msra.mxu0 0
    %6008 = vmatprep.subr.bf16.mxu0 0
    %6009 = vmatpush1.bf16.msra.mxu0 0
    %6010 = vmatprep.subr.bf16.mxu0 0
    %6011 = vmatpush1.bf16.msra.mxu0 0
    %6012 = vmatprep.subr.bf16.mxu0 0
    %6013 = vmatpush1.bf16.msra.mxu0 0
    %6014 = vmatprep.subr.bf16.mxu0 0
    %6015 = vmatpush1.bf16.msra.mxu0 0
    %6016 = vmatprep.mubr.bf16.mxu0 0
    %6017 = vmatmul.mubr.bf16.gmra.mrb[0].mxu0 %v5194
    %v6018 = vpop.f32.mrb[0].mxu0
    %v6019 = vadd.f32 %v5978, %v6018
    %v6020 = vpop.f32.mrb[0].mxu0
    %v6021 = vadd.f32 %v5980, %v6020
    %v6022 = vpop.f32.mrb[0].mxu0
    %v6023 = vpop.f32.mrb[0].mxu0
    %6024 = vdwg.mxu0
    %s6025 = scalar_lea.vmem %s43, 8
    %v6026 = vld [vmem:[%s6025] sm:$0x7]
    %v6028 = vsel %vm2031, %v6026, 0
    %6030 = vmatprep.subr.bf16.mxu0 %v5106
    %6031 = vmatpush1.bf16.msra.mxu0 %v5103
    %6032 = vmatprep.subr.bf16.mxu0 0
    %6033 = vmatpush1.bf16.msra.mxu0 0
    %6034 = vmatprep.subr.bf16.mxu0 0
    %6035 = vmatpush1.bf16.msra.mxu0 0
    %6036 = vmatprep.subr.bf16.mxu0 0
    %6037 = vmatpush1.bf16.msra.mxu0 0
    %6038 = vmatprep.subr.bf16.mxu0 0
    %6039 = vmatpush1.bf16.msra.mxu0 0
    %6040 = vmatprep.subr.bf16.mxu0 0
    %6041 = vmatpush1.bf16.msra.mxu0 0
    %6042 = vmatprep.subr.bf16.mxu0 0
    %6043 = vmatpush1.bf16.msra.mxu0 0
    %6044 = vmatprep.subr.bf16.mxu0 0
    %6045 = vmatpush1.bf16.msra.mxu0 0
    %6046 = vmatprep.subr.bf16.mxu0 0
    %6047 = vmatpush1.bf16.msra.mxu0 0
    %6048 = vmatprep.subr.bf16.mxu0 0
    %6049 = vmatpush1.bf16.msra.mxu0 0
    %6050 = vmatprep.subr.bf16.mxu0 0
    %6051 = vmatpush1.bf16.msra.mxu0 0
    %6052 = vmatprep.subr.bf16.mxu0 0
    %6053 = vmatpush1.bf16.msra.mxu0 0
    %6054 = vmatprep.subr.bf16.mxu0 0
    %6055 = vmatpush1.bf16.msra.mxu0 0
    %6056 = vmatprep.subr.bf16.mxu0 0
    %6057 = vmatpush1.bf16.msra.mxu0 0
    %6058 = vmatprep.subr.bf16.mxu0 0
    %6059 = vmatpush1.bf16.msra.mxu0 0
    %6060 = vmatprep.subr.bf16.mxu0 0
    %6061 = vmatpush1.bf16.msra.mxu0 0
    %6062 = vmatprep.mubr.bf16.mxu0 0
    %6063 = vmatmul.mubr.bf16.gmra.mrb[0].mxu0 %v6028
    %v6064 = vpop.f32.mrb[0].mxu0
    %v6065 = vadd.f32 0.0, %v6064
    %v6066 = vpop.f32.mrb[0].mxu0
    %v6067 = vadd.f32 0.0, %v6066
    %v6068 = vpop.f32.mrb[0].mxu0
    %v6069 = vpop.f32.mrb[0].mxu0
    %6070 = vdwg.mxu0
    %6071 = vmatprep.subr.bf16.mxu0 0
    %6072 = vmatpush1.bf16.msra.mxu0 %v5109
    %6073 = vmatprep.subr.bf16.mxu0 0
    %6074 = vmatpush1.bf16.msra.mxu0 0
    %6075 = vmatprep.subr.bf16.mxu0 0
    %6076 = vmatpush1.bf16.msra.mxu0 0
    %6077 = vmatprep.subr.bf16.mxu0 0
    %6078 = vmatpush1.bf16.msra.mxu0 0
    %6079 = vmatprep.subr.bf16.mxu0 0
    %6080 = vmatpush1.bf16.msra.mxu0 0
    %6081 = vmatprep.subr.bf16.mxu0 0
    %6082 = vmatpush1.bf16.msra.mxu0 0
    %6083 = vmatprep.subr.bf16.mxu0 0
    %6084 = vmatpush1.bf16.msra.mxu0 0
    %6085 = vmatprep.subr.bf16.mxu0 0
    %6086 = vmatpush1.bf16.msra.mxu0 0
    %6087 = vmatprep.subr.bf16.mxu0 0
    %6088 = vmatpush1.bf16.msra.mxu0 0
    %6089 = vmatprep.subr.bf16.mxu0 0
    %6090 = vmatpush1.bf16.msra.mxu0 0
    %6091 = vmatprep.subr.bf16.mxu0 0
    %6092 = vmatpush1.bf16.msra.mxu0 0
    %6093 = vmatprep.subr.bf16.mxu0 0
    %6094 = vmatpush1.bf16.msra.mxu0 0
    %6095 = vmatprep.subr.bf16.mxu0 0
    %6096 = vmatpush1.bf16.msra.mxu0 0
    %6097 = vmatprep.subr.bf16.mxu0 0
    %6098 = vmatpush1.bf16.msra.mxu0 0
    %6099 = vmatprep.subr.bf16.mxu0 0
    %6100 = vmatpush1.bf16.msra.mxu0 0
    %6101 = vmatprep.subr.bf16.mxu0 0
    %6102 = vmatpush1.bf16.msra.mxu0 0
    %6103 = vmatprep.mubr.bf16.mxu0 0
    %6104 = vmatmul.mubr.bf16.gmra.mrb[0].mxu0 %v6028
    %v6105 = vpop.f32.mrb[0].mxu0
    %v6106 = vadd.f32 0.0, %v6105
    %v6107 = vpop.f32.mrb[0].mxu0
    %v6108 = vpop.f32.mrb[0].mxu0
    %v6109 = vpop.f32.mrb[0].mxu0
    %6110 = vdwg.mxu0
    %v6111 = vpack.c.bf16 %v6065, %v6065
    %v6112 = vpack.c.bf16 %v6067, %v6067
    %v6113 = vpack.c.bf16 %v6106, %v6106
    %s6114 = scalar_lea.vmem %s45, 768
    %v6115 = vld [vmem:[%s6114] sm:$0xff]
    %v6116 = vld [vmem:[%s6114 + $0x8] sm:$0xff]
    %v6117 = vld [vmem:[%s6114 + $0x10] sm:$0xff]
    %v6118 = vld [vmem:[%s6114 + $0x18] sm:$0xff]
    %v6119 = vld [vmem:[%s6114 + $0x20] sm:$0xff]
    %v6120 = vld [vmem:[%s6114 + $0x28] sm:$0xff]
    %v6121 = vld [vmem:[%s6114 + $0x30] sm:$0xff]
    %v6122 = vld [vmem:[%s6114 + $0x38] sm:$0xff]
    %v6123 = vld [vmem:[%s6114 + $0x40] sm:$0xff]
    %v6124 = vld [vmem:[%s6114 + $0x48] sm:$0xff]
    %v6125 = vld [vmem:[%s6114 + $0x50] sm:$0xff]
    %v6126 = vld [vmem:[%s6114 + $0x58] sm:$0xff]
    %v6127 = vld [vmem:[%s6114 + $0x60] sm:$0xff]
    %v6128 = vld [vmem:[%s6114 + $0x68] sm:$0xff]
    %v6129 = vld [vmem:[%s6114 + $0x70] sm:$0xff]
    %v6130 = vld [vmem:[%s6114 + $0x78] sm:$0xff]
    %v6131 = vld [vmem:[%s6114 + $0x80] sm:$0xff]
    %v6132 = vld [vmem:[%s6114 + $0x88] sm:$0xff]
    %v6133 = vld [vmem:[%s6114 + $0x90] sm:$0xff]
    %v6134 = vld [vmem:[%s6114 + $0x98] sm:$0xff]
    %v6135 = vld [vmem:[%s6114 + $0xa0] sm:$0xff]
    %v6136 = vld [vmem:[%s6114 + $0xa8] sm:$0xff]
    %v6137 = vld [vmem:[%s6114 + $0xb0] sm:$0xff]
    %v6138 = vld [vmem:[%s6114 + $0xb8] sm:$0xff]
    %v6139 = vld [vmem:[%s6114 + $0xc0] sm:$0xff]
    %v6140 = vld [vmem:[%s6114 + $0xc8] sm:$0xff]
    %v6141 = vld [vmem:[%s6114 + $0xd0] sm:$0xff]
    %v6142 = vld [vmem:[%s6114 + $0xd8] sm:$0xff]
    %v6143 = vld [vmem:[%s6114 + $0xe0] sm:$0xff]
    %v6144 = vld [vmem:[%s6114 + $0xe8] sm:$0xff]
    %v6145 = vld [vmem:[%s6114 + $0xf0] sm:$0xff]
    %v6146 = vld [vmem:[%s6114 + $0xf8] sm:$0xff]
    %v6147 = vld [vmem:[%s6114 + $0x100] sm:$0xff]
    %v6148 = vld [vmem:[%s6114 + $0x108] sm:$0xff]
    %v6149 = vld [vmem:[%s6114 + $0x110] sm:$0xff]
    %v6150 = vld [vmem:[%s6114 + $0x118] sm:$0xff]
    %v6151 = vld [vmem:[%s6114 + $0x120] sm:$0xff]
    %v6152 = vld [vmem:[%s6114 + $0x128] sm:$0xff]
    %v6153 = vld [vmem:[%s6114 + $0x130] sm:$0xff]
    %v6154 = vld [vmem:[%s6114 + $0x138] sm:$0xff]
    %v6155 = vld [vmem:[%s6114 + $0x140] sm:$0xff]
    %v6156 = vld [vmem:[%s6114 + $0x148] sm:$0xff]
    %v6157 = vld [vmem:[%s6114 + $0x150] sm:$0xff]
    %v6158 = vld [vmem:[%s6114 + $0x158] sm:$0xff]
    %v6159 = vld [vmem:[%s6114 + $0x160] sm:$0xff]
    %v6160 = vld [vmem:[%s6114 + $0x168] sm:$0xff]
    %v6161 = vld [vmem:[%s6114 + $0x170] sm:$0xff]
    %v6162 = vld [vmem:[%s6114 + $0x178] sm:$0xff]
    %v6211 = vunpack.c.l.b16 %v6115
    %v6212 = vunpack.c.h.b16 %v6115
    %v6213 = vunpack.c.l.b16 %v6116
    %v6214 = vunpack.c.h.b16 %v6116
    %v6215 = vunpack.c.l.b16 %v6117
    %v6216 = vunpack.c.h.b16 %v6117
    %v6217 = vunpack.c.l.b16 %v6118
    %v6218 = vunpack.c.h.b16 %v6118
    %v6219 = vunpack.c.l.b16 %v6119
    %v6220 = vunpack.c.h.b16 %v6119
    %v6221 = vunpack.c.l.b16 %v6120
    %v6222 = vunpack.c.h.b16 %v6120
    %v6223 = vunpack.c.l.b16 %v6121
    %v6224 = vunpack.c.h.b16 %v6121
    %v6225 = vunpack.c.l.b16 %v6122
    %v6226 = vunpack.c.h.b16 %v6122
    %v6227 = vunpack.c.l.b16 %v6123
    %v6228 = vunpack.c.h.b16 %v6123
    %v6229 = vunpack.c.l.b16 %v6124
    %v6230 = vunpack.c.h.b16 %v6124
    %v6231 = vunpack.c.l.b16 %v6125
    %v6232 = vunpack.c.h.b16 %v6125
    %v6233 = vunpack.c.l.b16 %v6126
    %v6234 = vunpack.c.h.b16 %v6126
    %v6235 = vunpack.c.l.b16 %v6127
    %v6236 = vunpack.c.h.b16 %v6127
    %v6237 = vunpack.c.l.b16 %v6128
    %v6238 = vunpack.c.h.b16 %v6128
    %v6239 = vunpack.c.l.b16 %v6129
    %v6240 = vunpack.c.h.b16 %v6129
    %v6241 = vunpack.c.l.b16 %v6130
    %v6242 = vunpack.c.h.b16 %v6130
    %v6243 = vunpack.c.l.b16 %v6131
    %v6244 = vunpack.c.h.b16 %v6131
    %v6245 = vunpack.c.l.b16 %v6132
    %v6246 = vunpack.c.h.b16 %v6132
    %v6247 = vunpack.c.l.b16 %v6133
    %v6248 = vunpack.c.h.b16 %v6133
    %v6249 = vunpack.c.l.b16 %v6134
    %v6250 = vunpack.c.h.b16 %v6134
    %v6251 = vunpack.c.l.b16 %v6135
    %v6252 = vunpack.c.h.b16 %v6135
    %v6253 = vunpack.c.l.b16 %v6136
    %v6254 = vunpack.c.h.b16 %v6136
    %v6255 = vunpack.c.l.b16 %v6137
    %v6256 = vunpack.c.h.b16 %v6137
    %v6257 = vunpack.c.l.b16 %v6138
    %v6258 = vunpack.c.h.b16 %v6138
    %v6259 = vunpack.c.l.b16 %v6139
    %v6260 = vunpack.c.h.b16 %v6139
    %v6261 = vunpack.c.l.b16 %v6140
    %v6262 = vunpack.c.h.b16 %v6140
    %v6263 = vunpack.c.l.b16 %v6141
    %v6264 = vunpack.c.h.b16 %v6141
    %v6265 = vunpack.c.l.b16 %v6142
    %v6266 = vunpack.c.h.b16 %v6142
    %v6267 = vunpack.c.l.b16 %v6143
    %v6268 = vunpack.c.h.b16 %v6143
    %v6269 = vunpack.c.l.b16 %v6144
    %v6270 = vunpack.c.h.b16 %v6144
    %v6271 = vunpack.c.l.b16 %v6145
    %v6272 = vunpack.c.h.b16 %v6145
    %v6273 = vunpack.c.l.b16 %v6146
    %v6274 = vunpack.c.h.b16 %v6146
    %v6275 = vunpack.c.l.b16 %v6147
    %v6276 = vunpack.c.h.b16 %v6147
    %v6277 = vunpack.c.l.b16 %v6148
    %v6278 = vunpack.c.h.b16 %v6148
    %v6279 = vunpack.c.l.b16 %v6149
    %v6280 = vunpack.c.h.b16 %v6149
    %v6281 = vunpack.c.l.b16 %v6150
    %v6282 = vunpack.c.h.b16 %v6150
    %v6283 = vunpack.c.l.b16 %v6151
    %v6284 = vunpack.c.h.b16 %v6151
    %v6285 = vunpack.c.l.b16 %v6152
    %v6286 = vunpack.c.h.b16 %v6152
    %v6287 = vunpack.c.l.b16 %v6153
    %v6288 = vunpack.c.h.b16 %v6153
    %v6289 = vunpack.c.l.b16 %v6154
    %v6290 = vunpack.c.h.b16 %v6154
    %v6291 = vunpack.c.l.b16 %v6155
    %v6292 = vunpack.c.h.b16 %v6155
    %v6293 = vunpack.c.l.b16 %v6156
    %v6294 = vunpack.c.h.b16 %v6156
    %v6295 = vunpack.c.l.b16 %v6157
    %v6296 = vunpack.c.h.b16 %v6157
    %v6297 = vunpack.c.l.b16 %v6158
    %v6298 = vunpack.c.h.b16 %v6158
    %v6299 = vunpack.c.l.b16 %v6159
    %v6300 = vunpack.c.h.b16 %v6159
    %v6301 = vunpack.c.l.b16 %v6160
    %v6302 = vunpack.c.h.b16 %v6160
    %v6303 = vunpack.c.l.b16 %v6161
    %v6304 = vunpack.c.h.b16 %v6161
    %v6305 = vunpack.c.l.b16 %v6162
    %v6306 = vunpack.c.h.b16 %v6162
    %v6307 = vpack.c.b16 %v6213, %v6211
    %v6308 = vpack.c.b16 %v6214, %v6212
    %v6309 = vpack.c.b16 %v6217, %v6215
    %v6310 = vpack.c.b16 %v6218, %v6216
    %v6311 = vpack.c.b16 %v6221, %v6219
    %v6312 = vpack.c.b16 %v6222, %v6220
    %v6313 = vpack.c.b16 %v6225, %v6223
    %v6314 = vpack.c.b16 %v6226, %v6224
    %v6315 = vpack.c.b16 %v6229, %v6227
    %v6316 = vpack.c.b16 %v6230, %v6228
    %v6317 = vpack.c.b16 %v6233, %v6231
    %v6318 = vpack.c.b16 %v6234, %v6232
    %v6319 = vpack.c.b16 %v6237, %v6235
    %v6320 = vpack.c.b16 %v6238, %v6236
    %v6321 = vpack.c.b16 %v6241, %v6239
    %v6322 = vpack.c.b16 %v6242, %v6240
    %v6323 = vpack.c.b16 %v6245, %v6243
    %v6324 = vpack.c.b16 %v6246, %v6244
    %v6325 = vpack.c.b16 %v6249, %v6247
    %v6326 = vpack.c.b16 %v6250, %v6248
    %v6327 = vpack.c.b16 %v6253, %v6251
    %v6328 = vpack.c.b16 %v6254, %v6252
    %v6329 = vpack.c.b16 %v6257, %v6255
    %v6330 = vpack.c.b16 %v6258, %v6256
    %v6331 = vpack.c.b16 %v6261, %v6259
    %v6332 = vpack.c.b16 %v6262, %v6260
    %v6333 = vpack.c.b16 %v6265, %v6263
    %v6334 = vpack.c.b16 %v6266, %v6264
    %v6335 = vpack.c.b16 %v6269, %v6267
    %v6336 = vpack.c.b16 %v6270, %v6268
    %v6337 = vpack.c.b16 %v6273, %v6271
    %v6338 = vpack.c.b16 %v6274, %v6272
    %v6339 = vpack.c.b16 %v6277, %v6275
    %v6340 = vpack.c.b16 %v6278, %v6276
    %v6341 = vpack.c.b16 %v6281, %v6279
    %v6342 = vpack.c.b16 %v6282, %v6280
    %v6343 = vpack.c.b16 %v6285, %v6283
    %v6344 = vpack.c.b16 %v6286, %v6284
    %v6345 = vpack.c.b16 %v6289, %v6287
    %v6346 = vpack.c.b16 %v6290, %v6288
    %v6347 = vpack.c.b16 %v6293, %v6291
    %v6348 = vpack.c.b16 %v6294, %v6292
    %v6349 = vpack.c.b16 %v6297, %v6295
    %v6350 = vpack.c.b16 %v6298, %v6296
    %v6351 = vpack.c.b16 %v6301, %v6299
    %v6352 = vpack.c.b16 %v6302, %v6300
    %v6353 = vpack.c.b16 %v6305, %v6303
    %v6354 = vpack.c.b16 %v6306, %v6304
    %6403 = vmatprep.subr.bf16.mxu0 %v6308
    %6404 = vmatpush1.bf16.msra.mxu0 %v6307
    %6405 = vmatprep.subr.bf16.mxu0 %v6310
    %6406 = vmatpush1.bf16.msra.mxu0 %v6309
    %6407 = vmatprep.subr.bf16.mxu0 %v6312
    %6408 = vmatpush1.bf16.msra.mxu0 %v6311
    %6409 = vmatprep.subr.bf16.mxu0 %v6314
    %6410 = vmatpush1.bf16.msra.mxu0 %v6313
    %6411 = vmatprep.subr.bf16.mxu0 %v6316
    %6412 = vmatpush1.bf16.msra.mxu0 %v6315
    %6413 = vmatprep.subr.bf16.mxu0 %v6318
    %6414 = vmatpush1.bf16.msra.mxu0 %v6317
    %6415 = vmatprep.subr.bf16.mxu0 %v6320
    %6416 = vmatpush1.bf16.msra.mxu0 %v6319
    %6417 = vmatprep.subr.bf16.mxu0 %v6322
    %6418 = vmatpush1.bf16.msra.mxu0 %v6321
    %6419 = vmatprep.subr.bf16.mxu0 %v6324
    %6420 = vmatpush1.bf16.msra.mxu0 %v6323
    %6421 = vmatprep.subr.bf16.mxu0 %v6326
    %6422 = vmatpush1.bf16.msra.mxu0 %v6325
    %6423 = vmatprep.subr.bf16.mxu0 %v6328
    %6424 = vmatpush1.bf16.msra.mxu0 %v6327
    %6425 = vmatprep.subr.bf16.mxu0 %v6330
    %6426 = vmatpush1.bf16.msra.mxu0 %v6329
    %6427 = vmatprep.subr.bf16.mxu0 %v6332
    %6428 = vmatpush1.bf16.msra.mxu0 %v6331
    %6429 = vmatprep.subr.bf16.mxu0 %v6334
    %6430 = vmatpush1.bf16.msra.mxu0 %v6333
    %6431 = vmatprep.subr.bf16.mxu0 %v6336
    %6432 = vmatpush1.bf16.msra.mxu0 %v6335
    %6433 = vmatprep.subr.bf16.mxu0 %v6338
    %6434 = vmatpush1.bf16.msra.mxu0 %v6337
    %6435 = vmatprep.mubr.bf16.mxu0 %v6112
    %6436 = vmatmul.mubr.bf16.gmra.mrb[0].mxu0 %v6111
    %v6437 = vpop.f32.mrb[0].mxu0
    %v6438 = vadd.f32 0.0, %v6437
    %v6439 = vpop.f32.mrb[0].mxu0
    %v6440 = vadd.f32 0.0, %v6439
    %v6441 = vpop.f32.mrb[0].mxu0
    %v6442 = vpop.f32.mrb[0].mxu0
    %6443 = vdwg.mxu0
    %6444 = vmatprep.subr.bf16.mxu0 %v6340
    %6445 = vmatpush1.bf16.msra.mxu0 %v6339
    %6446 = vmatprep.subr.bf16.mxu0 %v6342
    %6447 = vmatpush1.bf16.msra.mxu0 %v6341
    %6448 = vmatprep.subr.bf16.mxu0 %v6344
    %6449 = vmatpush1.bf16.msra.mxu0 %v6343
    %6450 = vmatprep.subr.bf16.mxu0 %v6346
    %6451 = vmatpush1.bf16.msra.mxu0 %v6345
    %6452 = vmatprep.subr.bf16.mxu0 %v6348
    %6453 = vmatpush1.bf16.msra.mxu0 %v6347
    %6454 = vmatprep.subr.bf16.mxu0 %v6350
    %6455 = vmatpush1.bf16.msra.mxu0 %v6349
    %6456 = vmatprep.subr.bf16.mxu0 %v6352
    %6457 = vmatpush1.bf16.msra.mxu0 %v6351
    %6458 = vmatprep.subr.bf16.mxu0 %v6354
    %6459 = vmatpush1.bf16.msra.mxu0 %v6353
    %6460 = vmatprep.subr.bf16.mxu0 0
    %6461 = vmatpush1.bf16.msra.mxu0 0
    %6462 = vmatprep.subr.bf16.mxu0 0
    %6463 = vmatpush1.bf16.msra.mxu0 0
    %6464 = vmatprep.subr.bf16.mxu0 0
    %6465 = vmatpush1.bf16.msra.mxu0 0
    %6466 = vmatprep.subr.bf16.mxu0 0
    %6467 = vmatpush1.bf16.msra.mxu0 0
    %6468 = vmatprep.subr.bf16.mxu0 0
    %6469 = vmatpush1.bf16.msra.mxu0 0
    %6470 = vmatprep.subr.bf16.mxu0 0
    %6471 = vmatpush1.bf16.msra.mxu0 0
    %6472 = vmatprep.subr.bf16.mxu0 0
    %6473 = vmatpush1.bf16.msra.mxu0 0
    %6474 = vmatprep.subr.bf16.mxu0 0
    %6475 = vmatpush1.bf16.msra.mxu0 0
    %6476 = vmatprep.mubr.bf16.mxu0 0
    %6477 = vmatmul.mubr.bf16.gmra.mrb[0].mxu0 %v6113
    %v6478 = vpop.f32.mrb[0].mxu0
    %v6479 = vadd.f32 %v6438, %v6478
    %v6480 = vpop.f32.mrb[0].mxu0
    %v6481 = vadd.f32 %v6440, %v6480
    %v6482 = vpop.f32.mrb[0].mxu0
    %v6483 = vpop.f32.mrb[0].mxu0
    %6484 = vdwg.mxu0
    %v6485 = vadd.f32 %v6019, %v6479
    %v6486 = vadd.f32 %v6021, %v6481
    %v6487 = vld [vmem:[%s47] sm:$0x3]
    %v6489 = vlaneseq
    %v6490 = vshrl.u32 %v6489, 7
    %v6491 = vsub.s32 0, %v6490
    %v6492 = vrot.slane %v6487, %v6491
    %v6493 = vlaneseq
    %v6494 = vshrl.u32 %v6493, 7
    %v6495 = vsub.s32 1, %v6494
    %v6496 = vrot.slane %v6487, %v6495
    %v6499 = vadd.f32 %v6485, %v6492
    %v6500 = vadd.f32 %v6486, %v6496
    %v6501 = vmax.f32 %v6499, 0.0
    %v6502 = vmax.f32 %v6500, 0.0
    %v6503 = vpack.c.bf16 %v6501, %v6501
    %v6504 = vpack.c.bf16 %v6502, %v6502
    %v6505 = vld [vmem:[%s49] sm:$0xf]
    %v6506 = vld [vmem:[%s49 + $0x4] sm:$0x7]
    %v6509 = vunpack.c.l.b16 %v6505
    %v6510 = vunpack.c.l.b16 %v6506
    %v6511 = vpack.c.b16 %v6510, %v6509
    %v6513 = vsel %vm2031, %v6511, 0
    %v6516 = vsel %vm2035, %v6503, 0
    %v6519 = vsel %vm2035, %v6504, 0
    %6521 = vmatprep.subr.bf16.mxu0 %v6519
    %6522 = vmatpush1.bf16.msra.mxu0 %v6516
    %6523 = vmatprep.subr.bf16.mxu0 0
    %6524 = vmatpush1.bf16.msra.mxu0 0
    %6525 = vmatprep.subr.bf16.mxu0 0
    %6526 = vmatpush1.bf16.msra.mxu0 0
    %6527 = vmatprep.subr.bf16.mxu0 0
    %6528 = vmatpush1.bf16.msra.mxu0 0
    %6529 = vmatprep.subr.bf16.mxu0 0
    %6530 = vmatpush1.bf16.msra.mxu0 0
    %6531 = vmatprep.subr.bf16.mxu0 0
    %6532 = vmatpush1.bf16.msra.mxu0 0
    %6533 = vmatprep.subr.bf16.mxu0 0
    %6534 = vmatpush1.bf16.msra.mxu0 0
    %6535 = vmatprep.subr.bf16.mxu0 0
    %6536 = vmatpush1.bf16.msra.mxu0 0
    %6537 = vmatprep.subr.bf16.mxu0 0
    %6538 = vmatpush1.bf16.msra.mxu0 0
    %6539 = vmatprep.subr.bf16.mxu0 0
    %6540 = vmatpush1.bf16.msra.mxu0 0
    %6541 = vmatprep.subr.bf16.mxu0 0
    %6542 = vmatpush1.bf16.msra.mxu0 0
    %6543 = vmatprep.subr.bf16.mxu0 0
    %6544 = vmatpush1.bf16.msra.mxu0 0
    %6545 = vmatprep.subr.bf16.mxu0 0
    %6546 = vmatpush1.bf16.msra.mxu0 0
    %6547 = vmatprep.subr.bf16.mxu0 0
    %6548 = vmatpush1.bf16.msra.mxu0 0
    %6549 = vmatprep.subr.bf16.mxu0 0
    %6550 = vmatpush1.bf16.msra.mxu0 0
    %6551 = vmatprep.subr.bf16.mxu0 0
    %6552 = vmatpush1.bf16.msra.mxu0 0
    %6553 = vmatprep.mubr.bf16.mxu0 0
    %6554 = vmatmul.mubr.bf16.gmra.mrb[0].mxu0 %v6513
    %v6555 = vpop.f32.mrb[0].mxu0
    %v6556 = vadd.f32 0.0, %v6555
    %v6557 = vpop.f32.mrb[0].mxu0
    %v6558 = vadd.f32 0.0, %v6557
    %v6559 = vpop.f32.mrb[0].mxu0
    %v6560 = vadd.f32 0.0, %v6559
    %v6561 = vpop.f32.mrb[0].mxu0
    %v6562 = vadd.f32 0.0, %v6561
    %6563 = vdwg.mxu0
    %v6564 = vpack.c.bf16 %v6560, %v6556
    %v6565 = vpack.c.bf16 %v6562, %v6558
    %v6566 = vld [vmem:[%s51] sm:$0xff]
    %v6567 = vld [vmem:[%s51 + $0x8] sm:$0xff]
    %v6568 = vld [vmem:[%s51 + $0x10] sm:$0xff]
    %v6569 = vld [vmem:[%s51 + $0x18] sm:$0xff]
    %v6570 = vld [vmem:[%s51 + $0x20] sm:$0xff]
    %v6571 = vld [vmem:[%s51 + $0x28] sm:$0xff]
    %v6572 = vld [vmem:[%s51 + $0x30] sm:$0xff]
    %v6573 = vld [vmem:[%s51 + $0x38] sm:$0xff]
    %v6574 = vld [vmem:[%s51 + $0x40] sm:$0xff]
    %v6575 = vld [vmem:[%s51 + $0x48] sm:$0xff]
    %v6576 = vld [vmem:[%s51 + $0x50] sm:$0xff]
    %v6577 = vld [vmem:[%s51 + $0x58] sm:$0xff]
    %v6578 = vld [vmem:[%s51 + $0x60] sm:$0xff]
    %v6579 = vld [vmem:[%s51 + $0x68] sm:$0xff]
    %v6580 = vld [vmem:[%s51 + $0x70] sm:$0xff]
    %v6581 = vld [vmem:[%s51 + $0x78] sm:$0xff]
    %v6582 = vld [vmem:[%s51 + $0x80] sm:$0xff]
    %v6583 = vld [vmem:[%s51 + $0x88] sm:$0xff]
    %v6584 = vld [vmem:[%s51 + $0x90] sm:$0xff]
    %v6585 = vld [vmem:[%s51 + $0x98] sm:$0xff]
    %v6586 = vld [vmem:[%s51 + $0xa0] sm:$0xff]
    %v6587 = vld [vmem:[%s51 + $0xa8] sm:$0xff]
    %v6588 = vld [vmem:[%s51 + $0xb0] sm:$0xff]
    %v6589 = vld [vmem:[%s51 + $0xb8] sm:$0xff]
    %s6590 = scalar_lea.vmem %s49, 8
    %v6591 = vld [vmem:[%s6590] sm:$0xf]
    %v6592 = vld [vmem:[%s6590 + $0x4] sm:$0x7]
    %v6595 = vunpack.c.l.b16 %v6591
    %v6596 = vunpack.c.l.b16 %v6592
    %v6597 = vpack.c.b16 %v6596, %v6595
    %v6599 = vsel %vm2031, %v6597, 0
    %6601 = vmatprep.subr.bf16.mxu0 %v6519
    %6602 = vmatpush1.bf16.msra.mxu0 %v6516
    %6603 = vmatprep.subr.bf16.mxu0 0
    %6604 = vmatpush1.bf16.msra.mxu0 0
    %6605 = vmatprep.subr.bf16.mxu0 0
    %6606 = vmatpush1.bf16.msra.mxu0 0
    %6607 = vmatprep.subr.bf16.mxu0 0
    %6608 = vmatpush1.bf16.msra.mxu0 0
    %6609 = vmatprep.subr.bf16.mxu0 0
    %6610 = vmatpush1.bf16.msra.mxu0 0
    %6611 = vmatprep.subr.bf16.mxu0 0
    %6612 = vmatpush1.bf16.msra.mxu0 0
    %6613 = vmatprep.subr.bf16.mxu0 0
    %6614 = vmatpush1.bf16.msra.mxu0 0
    %6615 = vmatprep.subr.bf16.mxu0 0
    %6616 = vmatpush1.bf16.msra.mxu0 0
    %6617 = vmatprep.subr.bf16.mxu0 0
    %6618 = vmatpush1.bf16.msra.mxu0 0
    %6619 = vmatprep.subr.bf16.mxu0 0
    %6620 = vmatpush1.bf16.msra.mxu0 0
    %6621 = vmatprep.subr.bf16.mxu0 0
    %6622 = vmatpush1.bf16.msra.mxu0 0
    %6623 = vmatprep.subr.bf16.mxu0 0
    %6624 = vmatpush1.bf16.msra.mxu0 0
    %6625 = vmatprep.subr.bf16.mxu0 0
    %6626 = vmatpush1.bf16.msra.mxu0 0
    %6627 = vmatprep.subr.bf16.mxu0 0
    %6628 = vmatpush1.bf16.msra.mxu0 0
    %6629 = vmatprep.subr.bf16.mxu0 0
    %6630 = vmatpush1.bf16.msra.mxu0 0
    %6631 = vmatprep.subr.bf16.mxu0 0
    %6632 = vmatpush1.bf16.msra.mxu0 0
    %6633 = vmatprep.mubr.bf16.mxu0 0
    %6634 = vmatmul.mubr.bf16.gmra.mrb[0].mxu0 %v6599
    %v6635 = vpop.f32.mrb[0].mxu0
    %v6636 = vadd.f32 0.0, %v6635
    %v6637 = vpop.f32.mrb[0].mxu0
    %v6638 = vadd.f32 0.0, %v6637
    %v6639 = vpop.f32.mrb[0].mxu0
    %v6640 = vadd.f32 0.0, %v6639
    %v6641 = vpop.f32.mrb[0].mxu0
    %v6642 = vadd.f32 0.0, %v6641
    %6643 = vdwg.mxu0
    %v6644 = vpack.c.bf16 %v6640, %v6636
    %v6645 = vpack.c.bf16 %v6642, %v6638
    %s6646 = scalar_lea.vmem %s51, 192
    %v6647 = vld [vmem:[%s6646] sm:$0xff]
    %v6648 = vld [vmem:[%s6646 + $0x8] sm:$0xff]
    %v6649 = vld [vmem:[%s6646 + $0x10] sm:$0xff]
    %v6650 = vld [vmem:[%s6646 + $0x18] sm:$0xff]
    %v6651 = vld [vmem:[%s6646 + $0x20] sm:$0xff]
    %v6652 = vld [vmem:[%s6646 + $0x28] sm:$0xff]
    %v6653 = vld [vmem:[%s6646 + $0x30] sm:$0xff]
    %v6654 = vld [vmem:[%s6646 + $0x38] sm:$0xff]
    %v6655 = vld [vmem:[%s6646 + $0x40] sm:$0xff]
    %v6656 = vld [vmem:[%s6646 + $0x48] sm:$0xff]
    %v6657 = vld [vmem:[%s6646 + $0x50] sm:$0xff]
    %v6658 = vld [vmem:[%s6646 + $0x58] sm:$0xff]
    %v6659 = vld [vmem:[%s6646 + $0x60] sm:$0xff]
    %v6660 = vld [vmem:[%s6646 + $0x68] sm:$0xff]
    %v6661 = vld [vmem:[%s6646 + $0x70] sm:$0xff]
    %v6662 = vld [vmem:[%s6646 + $0x78] sm:$0xff]
    %v6663 = vld [vmem:[%s6646 + $0x80] sm:$0xff]
    %v6664 = vld [vmem:[%s6646 + $0x88] sm:$0xff]
    %v6665 = vld [vmem:[%s6646 + $0x90] sm:$0xff]
    %v6666 = vld [vmem:[%s6646 + $0x98] sm:$0xff]
    %v6667 = vld [vmem:[%s6646 + $0xa0] sm:$0xff]
    %v6668 = vld [vmem:[%s6646 + $0xa8] sm:$0xff]
    %v6669 = vld [vmem:[%s6646 + $0xb0] sm:$0xff]
    %v6670 = vld [vmem:[%s6646 + $0xb8] sm:$0xff]
    %v6695 = vunpack.c.l.b16 %v6647
    %v6696 = vunpack.c.h.b16 %v6647
    %v6697 = vunpack.c.l.b16 %v6648
    %v6698 = vunpack.c.h.b16 %v6648
    %v6699 = vunpack.c.l.b16 %v6649
    %v6700 = vunpack.c.h.b16 %v6649
    %v6701 = vunpack.c.l.b16 %v6650
    %v6702 = vunpack.c.h.b16 %v6650
    %v6703 = vunpack.c.l.b16 %v6651
    %v6704 = vunpack.c.h.b16 %v6651
    %v6705 = vunpack.c.l.b16 %v6652
    %v6706 = vunpack.c.h.b16 %v6652
    %v6707 = vunpack.c.l.b16 %v6653
    %v6708 = vunpack.c.h.b16 %v6653
    %v6709 = vunpack.c.l.b16 %v6654
    %v6710 = vunpack.c.h.b16 %v6654
    %v6711 = vunpack.c.l.b16 %v6655
    %v6712 = vunpack.c.h.b16 %v6655
    %v6713 = vunpack.c.l.b16 %v6656
    %v6714 = vunpack.c.h.b16 %v6656
    %v6715 = vunpack.c.l.b16 %v6657
    %v6716 = vunpack.c.h.b16 %v6657
    %v6717 = vunpack.c.l.b16 %v6658
    %v6718 = vunpack.c.h.b16 %v6658
    %v6719 = vunpack.c.l.b16 %v6659
    %v6720 = vunpack.c.h.b16 %v6659
    %v6721 = vunpack.c.l.b16 %v6660
    %v6722 = vunpack.c.h.b16 %v6660
    %v6723 = vunpack.c.l.b16 %v6661
    %v6724 = vunpack.c.h.b16 %v6661
    %v6725 = vunpack.c.l.b16 %v6662
    %v6726 = vunpack.c.h.b16 %v6662
    %v6727 = vunpack.c.l.b16 %v6663
    %v6728 = vunpack.c.h.b16 %v6663
    %v6729 = vunpack.c.l.b16 %v6664
    %v6730 = vunpack.c.h.b16 %v6664
    %v6731 = vunpack.c.l.b16 %v6665
    %v6732 = vunpack.c.h.b16 %v6665
    %v6733 = vunpack.c.l.b16 %v6666
    %v6734 = vunpack.c.h.b16 %v6666
    %v6735 = vunpack.c.l.b16 %v6667
    %v6736 = vunpack.c.h.b16 %v6667
    %v6737 = vunpack.c.l.b16 %v6668
    %v6738 = vunpack.c.h.b16 %v6668
    %v6739 = vunpack.c.l.b16 %v6669
    %v6740 = vunpack.c.h.b16 %v6669
    %v6741 = vunpack.c.l.b16 %v6670
    %v6742 = vunpack.c.h.b16 %v6670
    %v6743 = vpack.c.b16 %v6697, %v6695
    %v6744 = vpack.c.b16 %v6698, %v6696
    %v6745 = vpack.c.b16 %v6701, %v6699
    %v6746 = vpack.c.b16 %v6702, %v6700
    %v6747 = vpack.c.b16 %v6705, %v6703
    %v6748 = vpack.c.b16 %v6706, %v6704
    %v6749 = vpack.c.b16 %v6709, %v6707
    %v6750 = vpack.c.b16 %v6710, %v6708
    %v6751 = vpack.c.b16 %v6713, %v6711
    %v6752 = vpack.c.b16 %v6714, %v6712
    %v6753 = vpack.c.b16 %v6717, %v6715
    %v6754 = vpack.c.b16 %v6718, %v6716
    %v6755 = vpack.c.b16 %v6721, %v6719
    %v6756 = vpack.c.b16 %v6722, %v6720
    %v6757 = vpack.c.b16 %v6725, %v6723
    %v6758 = vpack.c.b16 %v6726, %v6724
    %v6759 = vpack.c.b16 %v6729, %v6727
    %v6760 = vpack.c.b16 %v6730, %v6728
    %v6761 = vpack.c.b16 %v6733, %v6731
    %v6762 = vpack.c.b16 %v6734, %v6732
    %v6763 = vpack.c.b16 %v6737, %v6735
    %v6764 = vpack.c.b16 %v6738, %v6736
    %v6765 = vpack.c.b16 %v6741, %v6739
    %v6766 = vpack.c.b16 %v6742, %v6740
    %v6792 = vsel %vm2422, %v6645, 0
    %6794 = vmatprep.subr.bf16.mxu0 %v6744
    %6795 = vmatpush1.bf16.msra.mxu0 %v6743
    %6796 = vmatprep.subr.bf16.mxu0 %v6746
    %6797 = vmatpush1.bf16.msra.mxu0 %v6745
    %6798 = vmatprep.subr.bf16.mxu0 %v6748
    %6799 = vmatpush1.bf16.msra.mxu0 %v6747
    %6800 = vmatprep.subr.bf16.mxu0 %v6750
    %6801 = vmatpush1.bf16.msra.mxu0 %v6749
    %6802 = vmatprep.subr.bf16.mxu0 %v6752
    %6803 = vmatpush1.bf16.msra.mxu0 %v6751
    %6804 = vmatprep.subr.bf16.mxu0 %v6754
    %6805 = vmatpush1.bf16.msra.mxu0 %v6753
    %6806 = vmatprep.subr.bf16.mxu0 %v6756
    %6807 = vmatpush1.bf16.msra.mxu0 %v6755
    %6808 = vmatprep.subr.bf16.mxu0 %v6758
    %6809 = vmatpush1.bf16.msra.mxu0 %v6757
    %6810 = vmatprep.subr.bf16.mxu0 %v6760
    %6811 = vmatpush1.bf16.msra.mxu0 %v6759
    %6812 = vmatprep.subr.bf16.mxu0 %v6762
    %6813 = vmatpush1.bf16.msra.mxu0 %v6761
    %6814 = vmatprep.subr.bf16.mxu0 %v6764
    %6815 = vmatpush1.bf16.msra.mxu0 %v6763
    %6816 = vmatprep.subr.bf16.mxu0 %v6766
    %6817 = vmatpush1.bf16.msra.mxu0 %v6765
    %6818 = vmatprep.subr.bf16.mxu0 0
    %6819 = vmatpush1.bf16.msra.mxu0 0
    %6820 = vmatprep.subr.bf16.mxu0 0
    %6821 = vmatpush1.bf16.msra.mxu0 0
    %6822 = vmatprep.subr.bf16.mxu0 0
    %6823 = vmatpush1.bf16.msra.mxu0 0
    %6824 = vmatprep.subr.bf16.mxu0 0
    %6825 = vmatpush1.bf16.msra.mxu0 0
    %6826 = vmatprep.mubr.bf16.mxu0 %v6792
    %6827 = vmatmul.mubr.bf16.gmra.mrb[0].mxu0 %v6644
    %v6828 = vpop.f32.mrb[0].mxu0
    %v6829 = vadd.f32 0.0, %v6828
    %v6830 = vpop.f32.mrb[0].mxu0
    %v6831 = vadd.f32 0.0, %v6830
    %v6832 = vpop.f32.mrb[0].mxu0
    %v6833 = vadd.f32 0.0, %v6832
    %v6834 = vpop.f32.mrb[0].mxu0
    %v6835 = vadd.f32 0.0, %v6834
    %6836 = vdwg.mxu0
    %v6861 = vunpack.c.l.b16 %v6566
    %v6862 = vunpack.c.h.b16 %v6566
    %v6863 = vunpack.c.l.b16 %v6567
    %v6864 = vunpack.c.h.b16 %v6567
    %v6865 = vunpack.c.l.b16 %v6568
    %v6866 = vunpack.c.h.b16 %v6568
    %v6867 = vunpack.c.l.b16 %v6569
    %v6868 = vunpack.c.h.b16 %v6569
    %v6869 = vunpack.c.l.b16 %v6570
    %v6870 = vunpack.c.h.b16 %v6570
    %v6871 = vunpack.c.l.b16 %v6571
    %v6872 = vunpack.c.h.b16 %v6571
    %v6873 = vunpack.c.l.b16 %v6572
    %v6874 = vunpack.c.h.b16 %v6572
    %v6875 = vunpack.c.l.b16 %v6573
    %v6876 = vunpack.c.h.b16 %v6573
    %v6877 = vunpack.c.l.b16 %v6574
    %v6878 = vunpack.c.h.b16 %v6574
    %v6879 = vunpack.c.l.b16 %v6575
    %v6880 = vunpack.c.h.b16 %v6575
    %v6881 = vunpack.c.l.b16 %v6576
    %v6882 = vunpack.c.h.b16 %v6576
    %v6883 = vunpack.c.l.b16 %v6577
    %v6884 = vunpack.c.h.b16 %v6577
    %v6885 = vunpack.c.l.b16 %v6578
    %v6886 = vunpack.c.h.b16 %v6578
    %v6887 = vunpack.c.l.b16 %v6579
    %v6888 = vunpack.c.h.b16 %v6579
    %v6889 = vunpack.c.l.b16 %v6580
    %v6890 = vunpack.c.h.b16 %v6580
    %v6891 = vunpack.c.l.b16 %v6581
    %v6892 = vunpack.c.h.b16 %v6581
    %v6893 = vunpack.c.l.b16 %v6582
    %v6894 = vunpack.c.h.b16 %v6582
    %v6895 = vunpack.c.l.b16 %v6583
    %v6896 = vunpack.c.h.b16 %v6583
    %v6897 = vunpack.c.l.b16 %v6584
    %v6898 = vunpack.c.h.b16 %v6584
    %v6899 = vunpack.c.l.b16 %v6585
    %v6900 = vunpack.c.h.b16 %v6585
    %v6901 = vunpack.c.l.b16 %v6586
    %v6902 = vunpack.c.h.b16 %v6586
    %v6903 = vunpack.c.l.b16 %v6587
    %v6904 = vunpack.c.h.b16 %v6587
    %v6905 = vunpack.c.l.b16 %v6588
    %v6906 = vunpack.c.h.b16 %v6588
    %v6907 = vunpack.c.l.b16 %v6589
    %v6908 = vunpack.c.h.b16 %v6589
    %v6909 = vpack.c.b16 %v6863, %v6861
    %v6910 = vpack.c.b16 %v6864, %v6862
    %v6911 = vpack.c.b16 %v6867, %v6865
    %v6912 = vpack.c.b16 %v6868, %v6866
    %v6913 = vpack.c.b16 %v6871, %v6869
    %v6914 = vpack.c.b16 %v6872, %v6870
    %v6915 = vpack.c.b16 %v6875, %v6873
    %v6916 = vpack.c.b16 %v6876, %v6874
    %v6917 = vpack.c.b16 %v6879, %v6877
    %v6918 = vpack.c.b16 %v6880, %v6878
    %v6919 = vpack.c.b16 %v6883, %v6881
    %v6920 = vpack.c.b16 %v6884, %v6882
    %v6921 = vpack.c.b16 %v6887, %v6885
    %v6922 = vpack.c.b16 %v6888, %v6886
    %v6923 = vpack.c.b16 %v6891, %v6889
    %v6924 = vpack.c.b16 %v6892, %v6890
    %v6925 = vpack.c.b16 %v6895, %v6893
    %v6926 = vpack.c.b16 %v6896, %v6894
    %v6927 = vpack.c.b16 %v6899, %v6897
    %v6928 = vpack.c.b16 %v6900, %v6898
    %v6929 = vpack.c.b16 %v6903, %v6901
    %v6930 = vpack.c.b16 %v6904, %v6902
    %v6931 = vpack.c.b16 %v6907, %v6905
    %v6932 = vpack.c.b16 %v6908, %v6906
    %v6958 = vsel %vm2422, %v6565, 0
    %6960 = vmatprep.subr.bf16.mxu0 %v6910
    %6961 = vmatpush1.bf16.msra.mxu0 %v6909
    %6962 = vmatprep.subr.bf16.mxu0 %v6912
    %6963 = vmatpush1.bf16.msra.mxu0 %v6911
    %6964 = vmatprep.subr.bf16.mxu0 %v6914
    %6965 = vmatpush1.bf16.msra.mxu0 %v6913
    %6966 = vmatprep.subr.bf16.mxu0 %v6916
    %6967 = vmatpush1.bf16.msra.mxu0 %v6915
    %6968 = vmatprep.subr.bf16.mxu0 %v6918
    %6969 = vmatpush1.bf16.msra.mxu0 %v6917
    %6970 = vmatprep.subr.bf16.mxu0 %v6920
    %6971 = vmatpush1.bf16.msra.mxu0 %v6919
    %6972 = vmatprep.subr.bf16.mxu0 %v6922
    %6973 = vmatpush1.bf16.msra.mxu0 %v6921
    %6974 = vmatprep.subr.bf16.mxu0 %v6924
    %6975 = vmatpush1.bf16.msra.mxu0 %v6923
    %6976 = vmatprep.subr.bf16.mxu0 %v6926
    %6977 = vmatpush1.bf16.msra.mxu0 %v6925
    %6978 = vmatprep.subr.bf16.mxu0 %v6928
    %6979 = vmatpush1.bf16.msra.mxu0 %v6927
    %6980 = vmatprep.subr.bf16.mxu0 %v6930
    %6981 = vmatpush1.bf16.msra.mxu0 %v6929
    %6982 = vmatprep.subr.bf16.mxu0 %v6932
    %6983 = vmatpush1.bf16.msra.mxu0 %v6931
    %6984 = vmatprep.subr.bf16.mxu0 0
    %6985 = vmatpush1.bf16.msra.mxu0 0
    %6986 = vmatprep.subr.bf16.mxu0 0
    %6987 = vmatpush1.bf16.msra.mxu0 0
    %6988 = vmatprep.subr.bf16.mxu0 0
    %6989 = vmatpush1.bf16.msra.mxu0 0
    %6990 = vmatprep.subr.bf16.mxu0 0
    %6991 = vmatpush1.bf16.msra.mxu0 0
    %6992 = vmatprep.mubr.bf16.mxu0 %v6958
    %6993 = vmatmul.mubr.bf16.gmra.mrb[0].mxu0 %v6564
    %v6994 = vpop.f32.mrb[0].mxu0
    %v6995 = vadd.f32 %v6829, %v6994
    %v6996 = vpop.f32.mrb[0].mxu0
    %v6997 = vadd.f32 %v6831, %v6996
    %v6998 = vpop.f32.mrb[0].mxu0
    %v6999 = vadd.f32 %v6833, %v6998
    %v7000 = vpop.f32.mrb[0].mxu0
    %v7001 = vadd.f32 %v6835, %v7000
    %7002 = vdwg.mxu0
    %s7003 = scalar_lea.vmem %s49, 16
    %v7004 = vld [vmem:[%s7003] sm:$0xf]
    %v7005 = vld [vmem:[%s7003 + $0x4] sm:$0x7]
    %v7008 = vunpack.c.l.b16 %v7004
    %v7009 = vunpack.c.l.b16 %v7005
    %v7010 = vpack.c.b16 %v7009, %v7008
    %v7012 = vsel %vm2031, %v7010, 0
    %7014 = vmatprep.subr.bf16.mxu0 %v6519
    %7015 = vmatpush1.bf16.msra.mxu0 %v6516
    %7016 = vmatprep.subr.bf16.mxu0 0
    %7017 = vmatpush1.bf16.msra.mxu0 0
    %7018 = vmatprep.subr.bf16.mxu0 0
    %7019 = vmatpush1.bf16.msra.mxu0 0
    %7020 = vmatprep.subr.bf16.mxu0 0
    %7021 = vmatpush1.bf16.msra.mxu0 0
    %7022 = vmatprep.subr.bf16.mxu0 0
    %7023 = vmatpush1.bf16.msra.mxu0 0
    %7024 = vmatprep.subr.bf16.mxu0 0
    %7025 = vmatpush1.bf16.msra.mxu0 0
    %7026 = vmatprep.subr.bf16.mxu0 0
    %7027 = vmatpush1.bf16.msra.mxu0 0
    %7028 = vmatprep.subr.bf16.mxu0 0
    %7029 = vmatpush1.bf16.msra.mxu0 0
    %7030 = vmatprep.subr.bf16.mxu0 0
    %7031 = vmatpush1.bf16.msra.mxu0 0
    %7032 = vmatprep.subr.bf16.mxu0 0
    %7033 = vmatpush1.bf16.msra.mxu0 0
    %7034 = vmatprep.subr.bf16.mxu0 0
    %7035 = vmatpush1.bf16.msra.mxu0 0
    %7036 = vmatprep.subr.bf16.mxu0 0
    %7037 = vmatpush1.bf16.msra.mxu0 0
    %7038 = vmatprep.subr.bf16.mxu0 0
    %7039 = vmatpush1.bf16.msra.mxu0 0
    %7040 = vmatprep.subr.bf16.mxu0 0
    %7041 = vmatpush1.bf16.msra.mxu0 0
    %7042 = vmatprep.subr.bf16.mxu0 0
    %7043 = vmatpush1.bf16.msra.mxu0 0
    %7044 = vmatprep.subr.bf16.mxu0 0
    %7045 = vmatpush1.bf16.msra.mxu0 0
    %7046 = vmatprep.mubr.bf16.mxu0 0
    %7047 = vmatmul.mubr.bf16.gmra.mrb[0].mxu0 %v7012
    %v7048 = vpop.f32.mrb[0].mxu0
    %v7049 = vadd.f32 0.0, %v7048
    %v7050 = vpop.f32.mrb[0].mxu0
    %v7051 = vadd.f32 0.0, %v7050
    %v7052 = vpop.f32.mrb[0].mxu0
    %v7053 = vadd.f32 0.0, %v7052
    %v7054 = vpop.f32.mrb[0].mxu0
    %v7055 = vadd.f32 0.0, %v7054
    %7056 = vdwg.mxu0
    %v7057 = vpack.c.bf16 %v7053, %v7049
    %v7058 = vpack.c.bf16 %v7055, %v7051
    %s7059 = scalar_lea.vmem %s51, 384
    %v7060 = vld [vmem:[%s7059] sm:$0xff]
    %v7061 = vld [vmem:[%s7059 + $0x8] sm:$0xff]
    %v7062 = vld [vmem:[%s7059 + $0x10] sm:$0xff]
    %v7063 = vld [vmem:[%s7059 + $0x18] sm:$0xff]
    %v7064 = vld [vmem:[%s7059 + $0x20] sm:$0xff]
    %v7065 = vld [vmem:[%s7059 + $0x28] sm:$0xff]
    %v7066 = vld [vmem:[%s7059 + $0x30] sm:$0xff]
    %v7067 = vld [vmem:[%s7059 + $0x38] sm:$0xff]
    %v7068 = vld [vmem:[%s7059 + $0x40] sm:$0xff]
    %v7069 = vld [vmem:[%s7059 + $0x48] sm:$0xff]
    %v7070 = vld [vmem:[%s7059 + $0x50] sm:$0xff]
    %v7071 = vld [vmem:[%s7059 + $0x58] sm:$0xff]
    %v7072 = vld [vmem:[%s7059 + $0x60] sm:$0xff]
    %v7073 = vld [vmem:[%s7059 + $0x68] sm:$0xff]
    %v7074 = vld [vmem:[%s7059 + $0x70] sm:$0xff]
    %v7075 = vld [vmem:[%s7059 + $0x78] sm:$0xff]
    %v7076 = vld [vmem:[%s7059 + $0x80] sm:$0xff]
    %v7077 = vld [vmem:[%s7059 + $0x88] sm:$0xff]
    %v7078 = vld [vmem:[%s7059 + $0x90] sm:$0xff]
    %v7079 = vld [vmem:[%s7059 + $0x98] sm:$0xff]
    %v7080 = vld [vmem:[%s7059 + $0xa0] sm:$0xff]
    %v7081 = vld [vmem:[%s7059 + $0xa8] sm:$0xff]
    %v7082 = vld [vmem:[%s7059 + $0xb0] sm:$0xff]
    %v7083 = vld [vmem:[%s7059 + $0xb8] sm:$0xff]
    %v7108 = vunpack.c.l.b16 %v7060
    %v7109 = vunpack.c.h.b16 %v7060
    %v7110 = vunpack.c.l.b16 %v7061
    %v7111 = vunpack.c.h.b16 %v7061
    %v7112 = vunpack.c.l.b16 %v7062
    %v7113 = vunpack.c.h.b16 %v7062
    %v7114 = vunpack.c.l.b16 %v7063
    %v7115 = vunpack.c.h.b16 %v7063
    %v7116 = vunpack.c.l.b16 %v7064
    %v7117 = vunpack.c.h.b16 %v7064
    %v7118 = vunpack.c.l.b16 %v7065
    %v7119 = vunpack.c.h.b16 %v7065
    %v7120 = vunpack.c.l.b16 %v7066
    %v7121 = vunpack.c.h.b16 %v7066
    %v7122 = vunpack.c.l.b16 %v7067
    %v7123 = vunpack.c.h.b16 %v7067
    %v7124 = vunpack.c.l.b16 %v7068
    %v7125 = vunpack.c.h.b16 %v7068
    %v7126 = vunpack.c.l.b16 %v7069
    %v7127 = vunpack.c.h.b16 %v7069
    %v7128 = vunpack.c.l.b16 %v7070
    %v7129 = vunpack.c.h.b16 %v7070
    %v7130 = vunpack.c.l.b16 %v7071
    %v7131 = vunpack.c.h.b16 %v7071
    %v7132 = vunpack.c.l.b16 %v7072
    %v7133 = vunpack.c.h.b16 %v7072
    %v7134 = vunpack.c.l.b16 %v7073
    %v7135 = vunpack.c.h.b16 %v7073
    %v7136 = vunpack.c.l.b16 %v7074
    %v7137 = vunpack.c.h.b16 %v7074
    %v7138 = vunpack.c.l.b16 %v7075
    %v7139 = vunpack.c.h.b16 %v7075
    %v7140 = vunpack.c.l.b16 %v7076
    %v7141 = vunpack.c.h.b16 %v7076
    %v7142 = vunpack.c.l.b16 %v7077
    %v7143 = vunpack.c.h.b16 %v7077
    %v7144 = vunpack.c.l.b16 %v7078
    %v7145 = vunpack.c.h.b16 %v7078
    %v7146 = vunpack.c.l.b16 %v7079
    %v7147 = vunpack.c.h.b16 %v7079
    %v7148 = vunpack.c.l.b16 %v7080
    %v7149 = vunpack.c.h.b16 %v7080
    %v7150 = vunpack.c.l.b16 %v7081
    %v7151 = vunpack.c.h.b16 %v7081
    %v7152 = vunpack.c.l.b16 %v7082
    %v7153 = vunpack.c.h.b16 %v7082
    %v7154 = vunpack.c.l.b16 %v7083
    %v7155 = vunpack.c.h.b16 %v7083
    %v7156 = vpack.c.b16 %v7110, %v7108
    %v7157 = vpack.c.b16 %v7111, %v7109
    %v7158 = vpack.c.b16 %v7114, %v7112
    %v7159 = vpack.c.b16 %v7115, %v7113
    %v7160 = vpack.c.b16 %v7118, %v7116
    %v7161 = vpack.c.b16 %v7119, %v7117
    %v7162 = vpack.c.b16 %v7122, %v7120
    %v7163 = vpack.c.b16 %v7123, %v7121
    %v7164 = vpack.c.b16 %v7126, %v7124
    %v7165 = vpack.c.b16 %v7127, %v7125
    %v7166 = vpack.c.b16 %v7130, %v7128
    %v7167 = vpack.c.b16 %v7131, %v7129
    %v7168 = vpack.c.b16 %v7134, %v7132
    %v7169 = vpack.c.b16 %v7135, %v7133
    %v7170 = vpack.c.b16 %v7138, %v7136
    %v7171 = vpack.c.b16 %v7139, %v7137
    %v7172 = vpack.c.b16 %v7142, %v7140
    %v7173 = vpack.c.b16 %v7143, %v7141
    %v7174 = vpack.c.b16 %v7146, %v7144
    %v7175 = vpack.c.b16 %v7147, %v7145
    %v7176 = vpack.c.b16 %v7150, %v7148
    %v7177 = vpack.c.b16 %v7151, %v7149
    %v7178 = vpack.c.b16 %v7154, %v7152
    %v7179 = vpack.c.b16 %v7155, %v7153
    %v7205 = vsel %vm2422, %v7058, 0
    %7207 = vmatprep.subr.bf16.mxu0 %v7157
    %7208 = vmatpush1.bf16.msra.mxu0 %v7156
    %7209 = vmatprep.subr.bf16.mxu0 %v7159
    %7210 = vmatpush1.bf16.msra.mxu0 %v7158
    %7211 = vmatprep.subr.bf16.mxu0 %v7161
    %7212 = vmatpush1.bf16.msra.mxu0 %v7160
    %7213 = vmatprep.subr.bf16.mxu0 %v7163
    %7214 = vmatpush1.bf16.msra.mxu0 %v7162
    %7215 = vmatprep.subr.bf16.mxu0 %v7165
    %7216 = vmatpush1.bf16.msra.mxu0 %v7164
    %7217 = vmatprep.subr.bf16.mxu0 %v7167
    %7218 = vmatpush1.bf16.msra.mxu0 %v7166
    %7219 = vmatprep.subr.bf16.mxu0 %v7169
    %7220 = vmatpush1.bf16.msra.mxu0 %v7168
    %7221 = vmatprep.subr.bf16.mxu0 %v7171
    %7222 = vmatpush1.bf16.msra.mxu0 %v7170
    %7223 = vmatprep.subr.bf16.mxu0 %v7173
    %7224 = vmatpush1.bf16.msra.mxu0 %v7172
    %7225 = vmatprep.subr.bf16.mxu0 %v7175
    %7226 = vmatpush1.bf16.msra.mxu0 %v7174
    %7227 = vmatprep.subr.bf16.mxu0 %v7177
    %7228 = vmatpush1.bf16.msra.mxu0 %v7176
    %7229 = vmatprep.subr.bf16.mxu0 %v7179
    %7230 = vmatpush1.bf16.msra.mxu0 %v7178
    %7231 = vmatprep.subr.bf16.mxu0 0
    %7232 = vmatpush1.bf16.msra.mxu0 0
    %7233 = vmatprep.subr.bf16.mxu0 0
    %7234 = vmatpush1.bf16.msra.mxu0 0
    %7235 = vmatprep.subr.bf16.mxu0 0
    %7236 = vmatpush1.bf16.msra.mxu0 0
    %7237 = vmatprep.subr.bf16.mxu0 0
    %7238 = vmatpush1.bf16.msra.mxu0 0
    %7239 = vmatprep.mubr.bf16.mxu0 %v7205
    %7240 = vmatmul.mubr.bf16.gmra.mrb[0].mxu0 %v7057
    %v7241 = vpop.f32.mrb[0].mxu0
    %v7242 = vadd.f32 0.0, %v7241
    %v7243 = vpop.f32.mrb[0].mxu0
    %v7244 = vadd.f32 0.0, %v7243
    %v7245 = vpop.f32.mrb[0].mxu0
    %v7246 = vadd.f32 0.0, %v7245
    %v7247 = vpop.f32.mrb[0].mxu0
    %v7248 = vadd.f32 0.0, %v7247
    %7249 = vdwg.mxu0
    %v7250 = vadd.f32 %v6995, %v7242
    %v7251 = vadd.f32 %v6997, %v7244
    %v7252 = vadd.f32 %v6999, %v7246
    %v7253 = vadd.f32 %v7001, %v7248
    %v7254 = vld [vmem:[%s53] sm:$0x3]
    %v7256 = vlaneseq
    %v7257 = vshrl.u32 %v7256, 7
    %v7258 = vsub.s32 0, %v7257
    %v7259 = vrot.slane %v7254, %v7258
    %v7260 = vlaneseq
    %v7261 = vshrl.u32 %v7260, 7
    %v7262 = vsub.s32 1, %v7261
    %v7263 = vrot.slane %v7254, %v7262
    %v7266 = vadd.f32 %v7250, %v7259
    %v7267 = vadd.f32 %v7251, %v7263
    %v7268 = vadd.f32 %v7252, %v7259
    %v7269 = vadd.f32 %v7253, %v7263
    %v7270 = vmax.f32 %v7266, 0.0
    %v7271 = vmax.f32 %v7267, 0.0
    %v7272 = vmax.f32 %v7268, 0.0
    %v7273 = vmax.f32 %v7269, 0.0
    %v7274 = vpack.c.bf16 %v7272, %v7270
    %v7275 = vpack.c.bf16 %v7273, %v7271
    %v7276 = vld [vmem:[%s55] sm:$0xf]
    %v7277 = vld [vmem:[%s55 + $0x4] sm:$0xf]
    %v7278 = vld [vmem:[%s55 + $0x8] sm:$0xf]
    %v7279 = vld [vmem:[%s55 + $0xc] sm:$0xf]
    %v7280 = vld [vmem:[%s55 + $0x10] sm:$0xf]
    %v7281 = vld [vmem:[%s55 + $0x14] sm:$0xf]
    %v7282 = vld [vmem:[%s55 + $0x18] sm:$0xf]
    %v7283 = vld [vmem:[%s55 + $0x1c] sm:$0x3]
    %v7292 = vunpack.c.l.b16 %v7276
    %v7293 = vunpack.c.l.b16 %v7277
    %v7294 = vunpack.c.l.b16 %v7278
    %v7295 = vunpack.c.l.b16 %v7279
    %v7296 = vunpack.c.l.b16 %v7280
    %v7297 = vunpack.c.l.b16 %v7281
    %v7298 = vunpack.c.l.b16 %v7282
    %v7299 = vunpack.c.l.b16 %v7283
    %v7300 = vpack.c.b16 %v7293, %v7292
    %v7301 = vpack.c.b16 %v7295, %v7294
    %v7302 = vpack.c.b16 %v7297, %v7296
    %v7303 = vpack.c.b16 %v7299, %v7298
    %v7305 = vsel %vm1222, %v7300, 0
    %v7308 = vsel %vm1222, %v7301, 0
    %v7311 = vsel %vm1222, %v7302, 0
    %v7314 = vsel %vm1222, %v7303, 0
    %v7317 = vsel %vm287, %v7274, 0
    %v7320 = vsel %vm287, %v7275, 0
    %7322 = vmatprep.subr.bf16.mxu0 %v7320
    %7323 = vmatpush1.bf16.msra.mxu0 %v7317
    %7324 = vmatprep.subr.bf16.mxu0 0
    %7325 = vmatpush1.bf16.msra.mxu0 0
    %7326 = vmatprep.subr.bf16.mxu0 0
    %7327 = vmatpush1.bf16.msra.mxu0 0
    %7328 = vmatprep.subr.bf16.mxu0 0
    %7329 = vmatpush1.bf16.msra.mxu0 0
    %7330 = vmatprep.subr.bf16.mxu0 0
    %7331 = vmatpush1.bf16.msra.mxu0 0
    %7332 = vmatprep.subr.bf16.mxu0 0
    %7333 = vmatpush1.bf16.msra.mxu0 0
    %7334 = vmatprep.subr.bf16.mxu0 0
    %7335 = vmatpush1.bf16.msra.mxu0 0
    %7336 = vmatprep.subr.bf16.mxu0 0
    %7337 = vmatpush1.bf16.msra.mxu0 0
    %7338 = vmatprep.subr.bf16.mxu0 0
    %7339 = vmatpush1.bf16.msra.mxu0 0
    %7340 = vmatprep.subr.bf16.mxu0 0
    %7341 = vmatpush1.bf16.msra.mxu0 0
    %7342 = vmatprep.subr.bf16.mxu0 0
    %7343 = vmatpush1.bf16.msra.mxu0 0
    %7344 = vmatprep.subr.bf16.mxu0 0
    %7345 = vmatpush1.bf16.msra.mxu0 0
    %7346 = vmatprep.subr.bf16.mxu0 0
    %7347 = vmatpush1.bf16.msra.mxu0 0
    %7348 = vmatprep.subr.bf16.mxu0 0
    %7349 = vmatpush1.bf16.msra.mxu0 0
    %7350 = vmatprep.subr.bf16.mxu0 0
    %7351 = vmatpush1.bf16.msra.mxu0 0
    %7352 = vmatprep.subr.bf16.mxu0 0
    %7353 = vmatpush1.bf16.msra.mxu0 0
    %7354 = vmatprep.mubr.bf16.mxu0 0
    %7355 = vmatmul.mubr.bf16.gmra.mrb[0].mxu0 %v7305
    %v7356 = vpop.f32.mrb[0].mxu0
    %v7357 = vadd.f32 0.0, %v7356
    %v7358 = vpop.f32.mrb[0].mxu0
    %v7359 = vadd.f32 0.0, %v7358
    %v7360 = vpop.f32.mrb[0].mxu0
    %v7361 = vadd.f32 0.0, %v7360
    %v7362 = vpop.f32.mrb[0].mxu0
    %v7363 = vadd.f32 0.0, %v7362
    %7364 = vmatprep.mubr.bf16.mxu0 0
    %7365 = vmatmul.mubr.bf16.gmra.mrb[0].mxu0 %v7308
    %v7366 = vpop.f32.mrb[0].mxu0
    %v7367 = vadd.f32 0.0, %v7366
    %v7368 = vpop.f32.mrb[0].mxu0
    %v7369 = vadd.f32 0.0, %v7368
    %v7370 = vpop.f32.mrb[0].mxu0
    %v7371 = vadd.f32 0.0, %v7370
    %v7372 = vpop.f32.mrb[0].mxu0
    %v7373 = vadd.f32 0.0, %v7372
    %7374 = vmatprep.mubr.bf16.mxu0 0
    %7375 = vmatmul.mubr.bf16.gmra.mrb[0].mxu0 %v7311
    %v7376 = vpop.f32.mrb[0].mxu0
    %v7377 = vadd.f32 0.0, %v7376
    %v7378 = vpop.f32.mrb[0].mxu0
    %v7379 = vadd.f32 0.0, %v7378
    %v7380 = vpop.f32.mrb[0].mxu0
    %v7381 = vadd.f32 0.0, %v7380
    %v7382 = vpop.f32.mrb[0].mxu0
    %v7383 = vadd.f32 0.0, %v7382
    %7384 = vmatprep.mubr.bf16.mxu0 0
    %7385 = vmatmul.mubr.bf16.gmra.mrb[0].mxu0 %v7314
    %v7386 = vpop.f32.mrb[0].mxu0
    %v7387 = vadd.f32 0.0, %v7386
    %v7388 = vpop.f32.mrb[0].mxu0
    %v7389 = vadd.f32 0.0, %v7388
    %v7390 = vpop.f32.mrb[0].mxu0
    %v7391 = vadd.f32 0.0, %v7390
    %v7392 = vpop.f32.mrb[0].mxu0
    %v7393 = vadd.f32 0.0, %v7392
    %7394 = vdwg.mxu0
    %v7395 = vpack.c.bf16 %v7361, %v7357
    %v7396 = vpack.c.bf16 %v7363, %v7359
    %v7397 = vpack.c.bf16 %v7371, %v7367
    %v7398 = vpack.c.bf16 %v7373, %v7369
    %v7399 = vpack.c.bf16 %v7381, %v7377
    %v7400 = vpack.c.bf16 %v7383, %v7379
    %v7401 = vpack.c.bf16 %v7391, %v7387
    %v7402 = vpack.c.bf16 %v7393, %v7389
    %v7403 = vld [vmem:[%s57] sm:$0xf]
    %v7404 = vld [vmem:[%s57 + $0x4] sm:$0xf]
    %v7405 = vld [vmem:[%s57 + $0x8] sm:$0xf]
    %v7406 = vld [vmem:[%s57 + $0xc] sm:$0xf]
    %v7407 = vld [vmem:[%s57 + $0x10] sm:$0xf]
    %v7408 = vld [vmem:[%s57 + $0x14] sm:$0xf]
    %v7409 = vld [vmem:[%s57 + $0x18] sm:$0xf]
    %v7410 = vld [vmem:[%s57 + $0x1c] sm:$0xf]
    %v7411 = vld [vmem:[%s57 + $0x20] sm:$0xf]
    %v7412 = vld [vmem:[%s57 + $0x24] sm:$0xf]
    %v7413 = vld [vmem:[%s57 + $0x28] sm:$0xf]
    %v7414 = vld [vmem:[%s57 + $0x2c] sm:$0xf]
    %v7415 = vld [vmem:[%s57 + $0x30] sm:$0xf]
    %v7416 = vld [vmem:[%s57 + $0x34] sm:$0xf]
    %v7417 = vld [vmem:[%s57 + $0x38] sm:$0xf]
    %v7418 = vld [vmem:[%s57 + $0x3c] sm:$0xf]
    %v7419 = vld [vmem:[%s57 + $0x40] sm:$0xf]
    %v7420 = vld [vmem:[%s57 + $0x44] sm:$0xf]
    %v7421 = vld [vmem:[%s57 + $0x48] sm:$0xf]
    %v7422 = vld [vmem:[%s57 + $0x4c] sm:$0xf]
    %v7423 = vld [vmem:[%s57 + $0x50] sm:$0xf]
    %v7424 = vld [vmem:[%s57 + $0x54] sm:$0xf]
    %v7425 = vld [vmem:[%s57 + $0x58] sm:$0xf]
    %v7426 = vld [vmem:[%s57 + $0x5c] sm:$0xf]
    %v7427 = vld [vmem:[%s57 + $0x60] sm:$0xf]
    %v7428 = vld [vmem:[%s57 + $0x64] sm:$0xf]
    %v7429 = vld [vmem:[%s57 + $0x68] sm:$0xf]
    %v7430 = vld [vmem:[%s57 + $0x6c] sm:$0xf]
    %s7431 = scalar_lea.vmem %s55, 32
    %v7432 = vld [vmem:[%s7431] sm:$0xf]
    %v7433 = vld [vmem:[%s7431 + $0x4] sm:$0xf]
    %v7434 = vld [vmem:[%s7431 + $0x8] sm:$0xf]
    %v7435 = vld [vmem:[%s7431 + $0xc] sm:$0xf]
    %v7436 = vld [vmem:[%s7431 + $0x10] sm:$0xf]
    %v7437 = vld [vmem:[%s7431 + $0x14] sm:$0xf]
    %v7438 = vld [vmem:[%s7431 + $0x18] sm:$0xf]
    %v7439 = vld [vmem:[%s7431 + $0x1c] sm:$0x3]
    %v7448 = vunpack.c.l.b16 %v7432
    %v7449 = vunpack.c.l.b16 %v7433
    %v7450 = vunpack.c.l.b16 %v7434
    %v7451 = vunpack.c.l.b16 %v7435
    %v7452 = vunpack.c.l.b16 %v7436
    %v7453 = vunpack.c.l.b16 %v7437
    %v7454 = vunpack.c.l.b16 %v7438
    %v7455 = vunpack.c.l.b16 %v7439
    %v7456 = vpack.c.b16 %v7449, %v7448
    %v7457 = vpack.c.b16 %v7451, %v7450
    %v7458 = vpack.c.b16 %v7453, %v7452
    %v7459 = vpack.c.b16 %v7455, %v7454
    %v7461 = vsel %vm1222, %v7456, 0
    %v7464 = vsel %vm1222, %v7457, 0
    %v7467 = vsel %vm1222, %v7458, 0
    %v7470 = vsel %vm1222, %v7459, 0
    %7472 = vmatprep.subr.bf16.mxu0 %v7320
    %7473 = vmatpush1.bf16.msra.mxu0 %v7317
    %7474 = vmatprep.subr.bf16.mxu0 0
    %7475 = vmatpush1.bf16.msra.mxu0 0
    %7476 = vmatprep.subr.bf16.mxu0 0
    %7477 = vmatpush1.bf16.msra.mxu0 0
    %7478 = vmatprep.subr.bf16.mxu0 0
    %7479 = vmatpush1.bf16.msra.mxu0 0
    %7480 = vmatprep.subr.bf16.mxu0 0
    %7481 = vmatpush1.bf16.msra.mxu0 0
    %7482 = vmatprep.subr.bf16.mxu0 0
    %7483 = vmatpush1.bf16.msra.mxu0 0
    %7484 = vmatprep.subr.bf16.mxu0 0
    %7485 = vmatpush1.bf16.msra.mxu0 0
    %7486 = vmatprep.subr.bf16.mxu0 0
    %7487 = vmatpush1.bf16.msra.mxu0 0
    %7488 = vmatprep.subr.bf16.mxu0 0
    %7489 = vmatpush1.bf16.msra.mxu0 0
    %7490 = vmatprep.subr.bf16.mxu0 0
    %7491 = vmatpush1.bf16.msra.mxu0 0
    %7492 = vmatprep.subr.bf16.mxu0 0
    %7493 = vmatpush1.bf16.msra.mxu0 0
    %7494 = vmatprep.subr.bf16.mxu0 0
    %7495 = vmatpush1.bf16.msra.mxu0 0
    %7496 = vmatprep.subr.bf16.mxu0 0
    %7497 = vmatpush1.bf16.msra.mxu0 0
    %7498 = vmatprep.subr.bf16.mxu0 0
    %7499 = vmatpush1.bf16.msra.mxu0 0
    %7500 = vmatprep.subr.bf16.mxu0 0
    %7501 = vmatpush1.bf16.msra.mxu0 0
    %7502 = vmatprep.subr.bf16.mxu0 0
    %7503 = vmatpush1.bf16.msra.mxu0 0
    %7504 = vmatprep.mubr.bf16.mxu0 0
    %7505 = vmatmul.mubr.bf16.gmra.mrb[0].mxu0 %v7461
    %v7506 = vpop.f32.mrb[0].mxu0
    %v7507 = vadd.f32 0.0, %v7506
    %v7508 = vpop.f32.mrb[0].mxu0
    %v7509 = vadd.f32 0.0, %v7508
    %v7510 = vpop.f32.mrb[0].mxu0
    %v7511 = vadd.f32 0.0, %v7510
    %v7512 = vpop.f32.mrb[0].mxu0
    %v7513 = vadd.f32 0.0, %v7512
    %7514 = vmatprep.mubr.bf16.mxu0 0
    %7515 = vmatmul.mubr.bf16.gmra.mrb[0].mxu0 %v7464
    %v7516 = vpop.f32.mrb[0].mxu0
    %v7517 = vadd.f32 0.0, %v7516
    %v7518 = vpop.f32.mrb[0].mxu0
    %v7519 = vadd.f32 0.0, %v7518
    %v7520 = vpop.f32.mrb[0].mxu0
    %v7521 = vadd.f32 0.0, %v7520
    %v7522 = vpop.f32.mrb[0].mxu0
    %v7523 = vadd.f32 0.0, %v7522
    %7524 = vmatprep.mubr.bf16.mxu0 0
    %7525 = vmatmul.mubr.bf16.gmra.mrb[0].mxu0 %v7467
    %v7526 = vpop.f32.mrb[0].mxu0
    %v7527 = vadd.f32 0.0, %v7526
    %v7528 = vpop.f32.mrb[0].mxu0
    %v7529 = vadd.f32 0.0, %v7528
    %v7530 = vpop.f32.mrb[0].mxu0
    %v7531 = vadd.f32 0.0, %v7530
    %v7532 = vpop.f32.mrb[0].mxu0
    %v7533 = vadd.f32 0.0, %v7532
    %7534 = vmatprep.mubr.bf16.mxu0 0
    %7535 = vmatmul.mubr.bf16.gmra.mrb[0].mxu0 %v7470
    %v7536 = vpop.f32.mrb[0].mxu0
    %v7537 = vadd.f32 0.0, %v7536
    %v7538 = vpop.f32.mrb[0].mxu0
    %v7539 = vadd.f32 0.0, %v7538
    %v7540 = vpop.f32.mrb[0].mxu0
    %v7541 = vadd.f32 0.0, %v7540
    %v7542 = vpop.f32.mrb[0].mxu0
    %v7543 = vadd.f32 0.0, %v7542
    %7544 = vdwg.mxu0
    %v7545 = vpack.c.bf16 %v7511, %v7507
    %v7546 = vpack.c.bf16 %v7513, %v7509
    %v7547 = vpack.c.bf16 %v7521, %v7517
    %v7548 = vpack.c.bf16 %v7523, %v7519
    %v7549 = vpack.c.bf16 %v7531, %v7527
    %v7550 = vpack.c.bf16 %v7533, %v7529
    %v7551 = vpack.c.bf16 %v7541, %v7537
    %v7552 = vpack.c.bf16 %v7543, %v7539
    %s7553 = scalar_lea.vmem %s57, 112
    %v7554 = vld [vmem:[%s7553] sm:$0xf]
    %v7555 = vld [vmem:[%s7553 + $0x4] sm:$0xf]
    %v7556 = vld [vmem:[%s7553 + $0x8] sm:$0xf]
    %v7557 = vld [vmem:[%s7553 + $0xc] sm:$0xf]
    %v7558 = vld [vmem:[%s7553 + $0x10] sm:$0xf]
    %v7559 = vld [vmem:[%s7553 + $0x14] sm:$0xf]
    %v7560 = vld [vmem:[%s7553 + $0x18] sm:$0xf]
    %v7561 = vld [vmem:[%s7553 + $0x1c] sm:$0xf]
    %v7562 = vld [vmem:[%s7553 + $0x20] sm:$0xf]
    %v7563 = vld [vmem:[%s7553 + $0x24] sm:$0xf]
    %v7564 = vld [vmem:[%s7553 + $0x28] sm:$0xf]
    %v7565 = vld [vmem:[%s7553 + $0x2c] sm:$0xf]
    %v7566 = vld [vmem:[%s7553 + $0x30] sm:$0xf]
    %v7567 = vld [vmem:[%s7553 + $0x34] sm:$0xf]
    %v7568 = vld [vmem:[%s7553 + $0x38] sm:$0xf]
    %v7569 = vld [vmem:[%s7553 + $0x3c] sm:$0xf]
    %v7570 = vld [vmem:[%s7553 + $0x40] sm:$0xf]
    %v7571 = vld [vmem:[%s7553 + $0x44] sm:$0xf]
    %v7572 = vld [vmem:[%s7553 + $0x48] sm:$0xf]
    %v7573 = vld [vmem:[%s7553 + $0x4c] sm:$0xf]
    %v7574 = vld [vmem:[%s7553 + $0x50] sm:$0xf]
    %v7575 = vld [vmem:[%s7553 + $0x54] sm:$0xf]
    %v7576 = vld [vmem:[%s7553 + $0x58] sm:$0xf]
    %v7577 = vld [vmem:[%s7553 + $0x5c] sm:$0xf]
    %v7578 = vld [vmem:[%s7553 + $0x60] sm:$0xf]
    %v7579 = vld [vmem:[%s7553 + $0x64] sm:$0xf]
    %v7580 = vld [vmem:[%s7553 + $0x68] sm:$0xf]
    %v7581 = vld [vmem:[%s7553 + $0x6c] sm:$0xf]
    %v7610 = vunpack.c.l.b16 %v7554
    %v7611 = vunpack.c.l.b16 %v7555
    %v7612 = vunpack.c.l.b16 %v7556
    %v7613 = vunpack.c.l.b16 %v7557
    %v7614 = vunpack.c.l.b16 %v7558
    %v7615 = vunpack.c.l.b16 %v7559
    %v7616 = vunpack.c.l.b16 %v7560
    %v7617 = vunpack.c.l.b16 %v7561
    %v7618 = vunpack.c.l.b16 %v7562
    %v7619 = vunpack.c.l.b16 %v7563
    %v7620 = vunpack.c.l.b16 %v7564
    %v7621 = vunpack.c.l.b16 %v7565
    %v7622 = vunpack.c.l.b16 %v7566
    %v7623 = vunpack.c.l.b16 %v7567
    %v7624 = vunpack.c.l.b16 %v7568
    %v7625 = vunpack.c.l.b16 %v7569
    %v7626 = vunpack.c.l.b16 %v7570
    %v7627 = vunpack.c.l.b16 %v7571
    %v7628 = vunpack.c.l.b16 %v7572
    %v7629 = vunpack.c.l.b16 %v7573
    %v7630 = vunpack.c.l.b16 %v7574
    %v7631 = vunpack.c.l.b16 %v7575
    %v7632 = vunpack.c.l.b16 %v7576
    %v7633 = vunpack.c.l.b16 %v7577
    %v7634 = vunpack.c.l.b16 %v7578
    %v7635 = vunpack.c.l.b16 %v7579
    %v7636 = vunpack.c.l.b16 %v7580
    %v7637 = vunpack.c.l.b16 %v7581
    %v7638 = vpack.c.b16 %v7611, %v7610
    %v7639 = vpack.c.b16 %v7613, %v7612
    %v7640 = vpack.c.b16 %v7615, %v7614
    %v7641 = vpack.c.b16 %v7617, %v7616
    %v7642 = vpack.c.b16 %v7619, %v7618
    %v7643 = vpack.c.b16 %v7621, %v7620
    %v7644 = vpack.c.b16 %v7623, %v7622
    %v7645 = vpack.c.b16 %v7625, %v7624
    %v7646 = vpack.c.b16 %v7627, %v7626
    %v7647 = vpack.c.b16 %v7629, %v7628
    %v7648 = vpack.c.b16 %v7631, %v7630
    %v7649 = vpack.c.b16 %v7633, %v7632
    %v7650 = vpack.c.b16 %v7635, %v7634
    %v7651 = vpack.c.b16 %v7637, %v7636
    %v7667 = vsel %vm1520, %v7546, 0
    %v7670 = vsel %vm1520, %v7548, 0
    %v7673 = vsel %vm1520, %v7550, 0
    %v7676 = vsel %vm1520, %v7552, 0
    %7678 = vmatprep.subr.bf16.mxu0 0
    %7679 = vmatpush1.bf16.msra.mxu0 %v7638
    %7680 = vmatprep.subr.bf16.mxu0 0
    %7681 = vmatpush1.bf16.msra.mxu0 %v7639
    %7682 = vmatprep.subr.bf16.mxu0 0
    %7683 = vmatpush1.bf16.msra.mxu0 %v7640
    %7684 = vmatprep.subr.bf16.mxu0 0
    %7685 = vmatpush1.bf16.msra.mxu0 %v7641
    %7686 = vmatprep.subr.bf16.mxu0 0
    %7687 = vmatpush1.bf16.msra.mxu0 %v7642
    %7688 = vmatprep.subr.bf16.mxu0 0
    %7689 = vmatpush1.bf16.msra.mxu0 %v7643
    %7690 = vmatprep.subr.bf16.mxu0 0
    %7691 = vmatpush1.bf16.msra.mxu0 %v7644
    %7692 = vmatprep.subr.bf16.mxu0 0
    %7693 = vmatpush1.bf16.msra.mxu0 %v7645
    %7694 = vmatprep.subr.bf16.mxu0 0
    %7695 = vmatpush1.bf16.msra.mxu0 %v7646
    %7696 = vmatprep.subr.bf16.mxu0 0
    %7697 = vmatpush1.bf16.msra.mxu0 %v7647
    %7698 = vmatprep.subr.bf16.mxu0 0
    %7699 = vmatpush1.bf16.msra.mxu0 %v7648
    %7700 = vmatprep.subr.bf16.mxu0 0
    %7701 = vmatpush1.bf16.msra.mxu0 %v7649
    %7702 = vmatprep.subr.bf16.mxu0 0
    %7703 = vmatpush1.bf16.msra.mxu0 %v7650
    %7704 = vmatprep.subr.bf16.mxu0 0
    %7705 = vmatpush1.bf16.msra.mxu0 %v7651
    %7706 = vmatprep.subr.bf16.mxu0 0
    %7707 = vmatpush1.bf16.msra.mxu0 0
    %7708 = vmatprep.subr.bf16.mxu0 0
    %7709 = vmatpush1.bf16.msra.mxu0 0
    %7710 = vmatprep.mubr.bf16.mxu0 %v7667
    %7711 = vmatmul.mubr.bf16.gmra.mrb[0].mxu0 %v7545
    %v7712 = vpop.f32.mrb[0].mxu0
    %v7713 = vadd.f32 0.0, %v7712
    %v7714 = vpop.f32.mrb[0].mxu0
    %v7715 = vpop.f32.mrb[0].mxu0
    %v7716 = vadd.f32 0.0, %v7715
    %v7717 = vpop.f32.mrb[0].mxu0
    %7718 = vmatprep.mubr.bf16.mxu0 %v7670
    %7719 = vmatmul.mubr.bf16.gmra.mrb[0].mxu0 %v7547
    %v7720 = vpop.f32.mrb[0].mxu0
    %v7721 = vadd.f32 0.0, %v7720
    %v7722 = vpop.f32.mrb[0].mxu0
    %v7723 = vpop.f32.mrb[0].mxu0
    %v7724 = vadd.f32 0.0, %v7723
    %v7725 = vpop.f32.mrb[0].mxu0
    %7726 = vmatprep.mubr.bf16.mxu0 %v7673
    %7727 = vmatmul.mubr.bf16.gmra.mrb[0].mxu0 %v7549
    %v7728 = vpop.f32.mrb[0].mxu0
    %v7729 = vadd.f32 0.0, %v7728
    %v7730 = vpop.f32.mrb[0].mxu0
    %v7731 = vpop.f32.mrb[0].mxu0
    %v7732 = vadd.f32 0.0, %v7731
    %v7733 = vpop.f32.mrb[0].mxu0
    %7734 = vmatprep.mubr.bf16.mxu0 %v7676
    %7735 = vmatmul.mubr.bf16.gmra.mrb[0].mxu0 %v7551
    %v7736 = vpop.f32.mrb[0].mxu0
    %v7737 = vadd.f32 0.0, %v7736
    %v7738 = vpop.f32.mrb[0].mxu0
    %v7739 = vpop.f32.mrb[0].mxu0
    %v7740 = vadd.f32 0.0, %v7739
    %v7741 = vpop.f32.mrb[0].mxu0
    %7742 = vdwg.mxu0
    %v7771 = vunpack.c.l.b16 %v7403
    %v7772 = vunpack.c.l.b16 %v7404
    %v7773 = vunpack.c.l.b16 %v7405
    %v7774 = vunpack.c.l.b16 %v7406
    %v7775 = vunpack.c.l.b16 %v7407
    %v7776 = vunpack.c.l.b16 %v7408
    %v7777 = vunpack.c.l.b16 %v7409
    %v7778 = vunpack.c.l.b16 %v7410
    %v7779 = vunpack.c.l.b16 %v7411
    %v7780 = vunpack.c.l.b16 %v7412
    %v7781 = vunpack.c.l.b16 %v7413
    %v7782 = vunpack.c.l.b16 %v7414
    %v7783 = vunpack.c.l.b16 %v7415
    %v7784 = vunpack.c.l.b16 %v7416
    %v7785 = vunpack.c.l.b16 %v7417
    %v7786 = vunpack.c.l.b16 %v7418
    %v7787 = vunpack.c.l.b16 %v7419
    %v7788 = vunpack.c.l.b16 %v7420
    %v7789 = vunpack.c.l.b16 %v7421
    %v7790 = vunpack.c.l.b16 %v7422
    %v7791 = vunpack.c.l.b16 %v7423
    %v7792 = vunpack.c.l.b16 %v7424
    %v7793 = vunpack.c.l.b16 %v7425
    %v7794 = vunpack.c.l.b16 %v7426
    %v7795 = vunpack.c.l.b16 %v7427
    %v7796 = vunpack.c.l.b16 %v7428
    %v7797 = vunpack.c.l.b16 %v7429
    %v7798 = vunpack.c.l.b16 %v7430
    %v7799 = vpack.c.b16 %v7772, %v7771
    %v7800 = vpack.c.b16 %v7774, %v7773
    %v7801 = vpack.c.b16 %v7776, %v7775
    %v7802 = vpack.c.b16 %v7778, %v7777
    %v7803 = vpack.c.b16 %v7780, %v7779
    %v7804 = vpack.c.b16 %v7782, %v7781
    %v7805 = vpack.c.b16 %v7784, %v7783
    %v7806 = vpack.c.b16 %v7786, %v7785
    %v7807 = vpack.c.b16 %v7788, %v7787
    %v7808 = vpack.c.b16 %v7790, %v7789
    %v7809 = vpack.c.b16 %v7792, %v7791
    %v7810 = vpack.c.b16 %v7794, %v7793
    %v7811 = vpack.c.b16 %v7796, %v7795
    %v7812 = vpack.c.b16 %v7798, %v7797
    %v7828 = vsel %vm1520, %v7396, 0
    %v7831 = vsel %vm1520, %v7398, 0
    %v7834 = vsel %vm1520, %v7400, 0
    %v7837 = vsel %vm1520, %v7402, 0
    %7839 = vmatprep.subr.bf16.mxu0 0
    %7840 = vmatpush1.bf16.msra.mxu0 %v7799
    %7841 = vmatprep.subr.bf16.mxu0 0
    %7842 = vmatpush1.bf16.msra.mxu0 %v7800
    %7843 = vmatprep.subr.bf16.mxu0 0
    %7844 = vmatpush1.bf16.msra.mxu0 %v7801
    %7845 = vmatprep.subr.bf16.mxu0 0
    %7846 = vmatpush1.bf16.msra.mxu0 %v7802
    %7847 = vmatprep.subr.bf16.mxu0 0
    %7848 = vmatpush1.bf16.msra.mxu0 %v7803
    %7849 = vmatprep.subr.bf16.mxu0 0
    %7850 = vmatpush1.bf16.msra.mxu0 %v7804
    %7851 = vmatprep.subr.bf16.mxu0 0
    %7852 = vmatpush1.bf16.msra.mxu0 %v7805
    %7853 = vmatprep.subr.bf16.mxu0 0
    %7854 = vmatpush1.bf16.msra.mxu0 %v7806
    %7855 = vmatprep.subr.bf16.mxu0 0
    %7856 = vmatpush1.bf16.msra.mxu0 %v7807
    %7857 = vmatprep.subr.bf16.mxu0 0
    %7858 = vmatpush1.bf16.msra.mxu0 %v7808
    %7859 = vmatprep.subr.bf16.mxu0 0
    %7860 = vmatpush1.bf16.msra.mxu0 %v7809
    %7861 = vmatprep.subr.bf16.mxu0 0
    %7862 = vmatpush1.bf16.msra.mxu0 %v7810
    %7863 = vmatprep.subr.bf16.mxu0 0
    %7864 = vmatpush1.bf16.msra.mxu0 %v7811
    %7865 = vmatprep.subr.bf16.mxu0 0
    %7866 = vmatpush1.bf16.msra.mxu0 %v7812
    %7867 = vmatprep.subr.bf16.mxu0 0
    %7868 = vmatpush1.bf16.msra.mxu0 0
    %7869 = vmatprep.subr.bf16.mxu0 0
    %7870 = vmatpush1.bf16.msra.mxu0 0
    %7871 = vmatprep.mubr.bf16.mxu0 %v7828
    %7872 = vmatmul.mubr.bf16.gmra.mrb[0].mxu0 %v7395
    %v7873 = vpop.f32.mrb[0].mxu0
    %v7874 = vadd.f32 %v7713, %v7873
    %v7875 = vpop.f32.mrb[0].mxu0
    %v7876 = vpop.f32.mrb[0].mxu0
    %v7877 = vadd.f32 %v7716, %v7876
    %v7878 = vpop.f32.mrb[0].mxu0
    %7879 = vmatprep.mubr.bf16.mxu0 %v7831
    %7880 = vmatmul.mubr.bf16.gmra.mrb[0].mxu0 %v7397
    %v7881 = vpop.f32.mrb[0].mxu0
    %v7882 = vadd.f32 %v7721, %v7881
    %v7883 = vpop.f32.mrb[0].mxu0
    %v7884 = vpop.f32.mrb[0].mxu0
    %v7885 = vadd.f32 %v7724, %v7884
    %v7886 = vpop.f32.mrb[0].mxu0
    %7887 = vmatprep.mubr.bf16.mxu0 %v7834
    %7888 = vmatmul.mubr.bf16.gmra.mrb[0].mxu0 %v7399
    %v7889 = vpop.f32.mrb[0].mxu0
    %v7890 = vadd.f32 %v7729, %v7889
    %v7891 = vpop.f32.mrb[0].mxu0
    %v7892 = vpop.f32.mrb[0].mxu0
    %v7893 = vadd.f32 %v7732, %v7892
    %v7894 = vpop.f32.mrb[0].mxu0
    %7895 = vmatprep.mubr.bf16.mxu0 %v7837
    %7896 = vmatmul.mubr.bf16.gmra.mrb[0].mxu0 %v7401
    %v7897 = vpop.f32.mrb[0].mxu0
    %v7898 = vadd.f32 %v7737, %v7897
    %v7899 = vpop.f32.mrb[0].mxu0
    %v7900 = vpop.f32.mrb[0].mxu0
    %v7901 = vadd.f32 %v7740, %v7900
    %v7902 = vpop.f32.mrb[0].mxu0
    %7903 = vdwg.mxu0
    %s7904 = scalar_lea.vmem %s55, 64
    %v7905 = vld [vmem:[%s7904] sm:$0xf]
    %v7906 = vld [vmem:[%s7904 + $0x4] sm:$0xf]
    %v7907 = vld [vmem:[%s7904 + $0x8] sm:$0xf]
    %v7908 = vld [vmem:[%s7904 + $0xc] sm:$0xf]
    %v7909 = vld [vmem:[%s7904 + $0x10] sm:$0xf]
    %v7910 = vld [vmem:[%s7904 + $0x14] sm:$0xf]
    %v7911 = vld [vmem:[%s7904 + $0x18] sm:$0xf]
    %v7912 = vld [vmem:[%s7904 + $0x1c] sm:$0x3]
    %v7921 = vunpack.c.l.b16 %v7905
    %v7922 = vunpack.c.l.b16 %v7906
    %v7923 = vunpack.c.l.b16 %v7907
    %v7924 = vunpack.c.l.b16 %v7908
    %v7925 = vunpack.c.l.b16 %v7909
    %v7926 = vunpack.c.l.b16 %v7910
    %v7927 = vunpack.c.l.b16 %v7911
    %v7928 = vunpack.c.l.b16 %v7912
    %v7929 = vpack.c.b16 %v7922, %v7921
    %v7930 = vpack.c.b16 %v7924, %v7923
    %v7931 = vpack.c.b16 %v7926, %v7925
    %v7932 = vpack.c.b16 %v7928, %v7927
    %v7934 = vsel %vm1222, %v7929, 0
    %v7937 = vsel %vm1222, %v7930, 0
    %v7940 = vsel %vm1222, %v7931, 0
    %v7943 = vsel %vm1222, %v7932, 0
    %7945 = vmatprep.subr.bf16.mxu0 %v7320
    %7946 = vmatpush1.bf16.msra.mxu0 %v7317
    %7947 = vmatprep.subr.bf16.mxu0 0
    %7948 = vmatpush1.bf16.msra.mxu0 0
    %7949 = vmatprep.subr.bf16.mxu0 0
    %7950 = vmatpush1.bf16.msra.mxu0 0
    %7951 = vmatprep.subr.bf16.mxu0 0
    %7952 = vmatpush1.bf16.msra.mxu0 0
    %7953 = vmatprep.subr.bf16.mxu0 0
    %7954 = vmatpush1.bf16.msra.mxu0 0
    %7955 = vmatprep.subr.bf16.mxu0 0
    %7956 = vmatpush1.bf16.msra.mxu0 0
    %7957 = vmatprep.subr.bf16.mxu0 0
    %7958 = vmatpush1.bf16.msra.mxu0 0
    %7959 = vmatprep.subr.bf16.mxu0 0
    %7960 = vmatpush1.bf16.msra.mxu0 0
    %7961 = vmatprep.subr.bf16.mxu0 0
    %7962 = vmatpush1.bf16.msra.mxu0 0
    %7963 = vmatprep.subr.bf16.mxu0 0
    %7964 = vmatpush1.bf16.msra.mxu0 0
    %7965 = vmatprep.subr.bf16.mxu0 0
    %7966 = vmatpush1.bf16.msra.mxu0 0
    %7967 = vmatprep.subr.bf16.mxu0 0
    %7968 = vmatpush1.bf16.msra.mxu0 0
    %7969 = vmatprep.subr.bf16.mxu0 0
    %7970 = vmatpush1.bf16.msra.mxu0 0
    %7971 = vmatprep.subr.bf16.mxu0 0
    %7972 = vmatpush1.bf16.msra.mxu0 0
    %7973 = vmatprep.subr.bf16.mxu0 0
    %7974 = vmatpush1.bf16.msra.mxu0 0
    %7975 = vmatprep.subr.bf16.mxu0 0
    %7976 = vmatpush1.bf16.msra.mxu0 0
    %7977 = vmatprep.mubr.bf16.mxu0 0
    %7978 = vmatmul.mubr.bf16.gmra.mrb[0].mxu0 %v7934
    %v7979 = vpop.f32.mrb[0].mxu0
    %v7980 = vadd.f32 0.0, %v7979
    %v7981 = vpop.f32.mrb[0].mxu0
    %v7982 = vadd.f32 0.0, %v7981
    %v7983 = vpop.f32.mrb[0].mxu0
    %v7984 = vadd.f32 0.0, %v7983
    %v7985 = vpop.f32.mrb[0].mxu0
    %v7986 = vadd.f32 0.0, %v7985
    %7987 = vmatprep.mubr.bf16.mxu0 0
    %7988 = vmatmul.mubr.bf16.gmra.mrb[0].mxu0 %v7937
    %v7989 = vpop.f32.mrb[0].mxu0
    %v7990 = vadd.f32 0.0, %v7989
    %v7991 = vpop.f32.mrb[0].mxu0
    %v7992 = vadd.f32 0.0, %v7991
    %v7993 = vpop.f32.mrb[0].mxu0
    %v7994 = vadd.f32 0.0, %v7993
    %v7995 = vpop.f32.mrb[0].mxu0
    %v7996 = vadd.f32 0.0, %v7995
    %7997 = vmatprep.mubr.bf16.mxu0 0
    %7998 = vmatmul.mubr.bf16.gmra.mrb[0].mxu0 %v7940
    %v7999 = vpop.f32.mrb[0].mxu0
    %v8000 = vadd.f32 0.0, %v7999
    %v8001 = vpop.f32.mrb[0].mxu0
    %v8002 = vadd.f32 0.0, %v8001
    %v8003 = vpop.f32.mrb[0].mxu0
    %v8004 = vadd.f32 0.0, %v8003
    %v8005 = vpop.f32.mrb[0].mxu0
    %v8006 = vadd.f32 0.0, %v8005
    %8007 = vmatprep.mubr.bf16.mxu0 0
    %8008 = vmatmul.mubr.bf16.gmra.mrb[0].mxu0 %v7943
    %v8009 = vpop.f32.mrb[0].mxu0
    %v8010 = vadd.f32 0.0, %v8009
    %v8011 = vpop.f32.mrb[0].mxu0
    %v8012 = vadd.f32 0.0, %v8011
    %v8013 = vpop.f32.mrb[0].mxu0
    %v8014 = vadd.f32 0.0, %v8013
    %v8015 = vpop.f32.mrb[0].mxu0
    %v8016 = vadd.f32 0.0, %v8015
    %8017 = vdwg.mxu0
    %v8018 = vpack.c.bf16 %v7984, %v7980
    %v8019 = vpack.c.bf16 %v7986, %v7982
    %v8020 = vpack.c.bf16 %v7994, %v7990
    %v8021 = vpack.c.bf16 %v7996, %v7992
    %v8022 = vpack.c.bf16 %v8004, %v8000
    %v8023 = vpack.c.bf16 %v8006, %v8002
    %v8024 = vpack.c.bf16 %v8014, %v8010
    %v8025 = vpack.c.bf16 %v8016, %v8012
    %s8026 = scalar_lea.vmem %s57, 224
    %v8027 = vld [vmem:[%s8026] sm:$0xf]
    %v8028 = vld [vmem:[%s8026 + $0x4] sm:$0xf]
    %v8029 = vld [vmem:[%s8026 + $0x8] sm:$0xf]
    %v8030 = vld [vmem:[%s8026 + $0xc] sm:$0xf]
    %v8031 = vld [vmem:[%s8026 + $0x10] sm:$0xf]
    %v8032 = vld [vmem:[%s8026 + $0x14] sm:$0xf]
    %v8033 = vld [vmem:[%s8026 + $0x18] sm:$0xf]
    %v8034 = vld [vmem:[%s8026 + $0x1c] sm:$0xf]
    %v8035 = vld [vmem:[%s8026 + $0x20] sm:$0xf]
    %v8036 = vld [vmem:[%s8026 + $0x24] sm:$0xf]
    %v8037 = vld [vmem:[%s8026 + $0x28] sm:$0xf]
    %v8038 = vld [vmem:[%s8026 + $0x2c] sm:$0xf]
    %v8039 = vld [vmem:[%s8026 + $0x30] sm:$0xf]
    %v8040 = vld [vmem:[%s8026 + $0x34] sm:$0xf]
    %v8041 = vld [vmem:[%s8026 + $0x38] sm:$0xf]
    %v8042 = vld [vmem:[%s8026 + $0x3c] sm:$0xf]
    %v8043 = vld [vmem:[%s8026 + $0x40] sm:$0xf]
    %v8044 = vld [vmem:[%s8026 + $0x44] sm:$0xf]
    %v8045 = vld [vmem:[%s8026 + $0x48] sm:$0xf]
    %v8046 = vld [vmem:[%s8026 + $0x4c] sm:$0xf]
    %v8047 = vld [vmem:[%s8026 + $0x50] sm:$0xf]
    %v8048 = vld [vmem:[%s8026 + $0x54] sm:$0xf]
    %v8049 = vld [vmem:[%s8026 + $0x58] sm:$0xf]
    %v8050 = vld [vmem:[%s8026 + $0x5c] sm:$0xf]
    %v8051 = vld [vmem:[%s8026 + $0x60] sm:$0xf]
    %v8052 = vld [vmem:[%s8026 + $0x64] sm:$0xf]
    %v8053 = vld [vmem:[%s8026 + $0x68] sm:$0xf]
    %v8054 = vld [vmem:[%s8026 + $0x6c] sm:$0xf]
    %v8083 = vunpack.c.l.b16 %v8027
    %v8084 = vunpack.c.l.b16 %v8028
    %v8085 = vunpack.c.l.b16 %v8029
    %v8086 = vunpack.c.l.b16 %v8030
    %v8087 = vunpack.c.l.b16 %v8031
    %v8088 = vunpack.c.l.b16 %v8032
    %v8089 = vunpack.c.l.b16 %v8033
    %v8090 = vunpack.c.l.b16 %v8034
    %v8091 = vunpack.c.l.b16 %v8035
    %v8092 = vunpack.c.l.b16 %v8036
    %v8093 = vunpack.c.l.b16 %v8037
    %v8094 = vunpack.c.l.b16 %v8038
    %v8095 = vunpack.c.l.b16 %v8039
    %v8096 = vunpack.c.l.b16 %v8040
    %v8097 = vunpack.c.l.b16 %v8041
    %v8098 = vunpack.c.l.b16 %v8042
    %v8099 = vunpack.c.l.b16 %v8043
    %v8100 = vunpack.c.l.b16 %v8044
    %v8101 = vunpack.c.l.b16 %v8045
    %v8102 = vunpack.c.l.b16 %v8046
    %v8103 = vunpack.c.l.b16 %v8047
    %v8104 = vunpack.c.l.b16 %v8048
    %v8105 = vunpack.c.l.b16 %v8049
    %v8106 = vunpack.c.l.b16 %v8050
    %v8107 = vunpack.c.l.b16 %v8051
    %v8108 = vunpack.c.l.b16 %v8052
    %v8109 = vunpack.c.l.b16 %v8053
    %v8110 = vunpack.c.l.b16 %v8054
    %v8111 = vpack.c.b16 %v8084, %v8083
    %v8112 = vpack.c.b16 %v8086, %v8085
    %v8113 = vpack.c.b16 %v8088, %v8087
    %v8114 = vpack.c.b16 %v8090, %v8089
    %v8115 = vpack.c.b16 %v8092, %v8091
    %v8116 = vpack.c.b16 %v8094, %v8093
    %v8117 = vpack.c.b16 %v8096, %v8095
    %v8118 = vpack.c.b16 %v8098, %v8097
    %v8119 = vpack.c.b16 %v8100, %v8099
    %v8120 = vpack.c.b16 %v8102, %v8101
    %v8121 = vpack.c.b16 %v8104, %v8103
    %v8122 = vpack.c.b16 %v8106, %v8105
    %v8123 = vpack.c.b16 %v8108, %v8107
    %v8124 = vpack.c.b16 %v8110, %v8109
    %v8140 = vsel %vm1520, %v8019, 0
    %v8143 = vsel %vm1520, %v8021, 0
    %v8146 = vsel %vm1520, %v8023, 0
    %v8149 = vsel %vm1520, %v8025, 0
    %8151 = vmatprep.subr.bf16.mxu0 0
    %8152 = vmatpush1.bf16.msra.mxu0 %v8111
    %8153 = vmatprep.subr.bf16.mxu0 0
    %8154 = vmatpush1.bf16.msra.mxu0 %v8112
    %8155 = vmatprep.subr.bf16.mxu0 0
    %8156 = vmatpush1.bf16.msra.mxu0 %v8113
    %8157 = vmatprep.subr.bf16.mxu0 0
    %8158 = vmatpush1.bf16.msra.mxu0 %v8114
    %8159 = vmatprep.subr.bf16.mxu0 0
    %8160 = vmatpush1.bf16.msra.mxu0 %v8115
    %8161 = vmatprep.subr.bf16.mxu0 0
    %8162 = vmatpush1.bf16.msra.mxu0 %v8116
    %8163 = vmatprep.subr.bf16.mxu0 0
    %8164 = vmatpush1.bf16.msra.mxu0 %v8117
    %8165 = vmatprep.subr.bf16.mxu0 0
    %8166 = vmatpush1.bf16.msra.mxu0 %v8118
    %8167 = vmatprep.subr.bf16.mxu0 0
    %8168 = vmatpush1.bf16.msra.mxu0 %v8119
    %8169 = vmatprep.subr.bf16.mxu0 0
    %8170 = vmatpush1.bf16.msra.mxu0 %v8120
    %8171 = vmatprep.subr.bf16.mxu0 0
    %8172 = vmatpush1.bf16.msra.mxu0 %v8121
    %8173 = vmatprep.subr.bf16.mxu0 0
    %8174 = vmatpush1.bf16.msra.mxu0 %v8122
    %8175 = vmatprep.subr.bf16.mxu0 0
    %8176 = vmatpush1.bf16.msra.mxu0 %v8123
    %8177 = vmatprep.subr.bf16.mxu0 0
    %8178 = vmatpush1.bf16.msra.mxu0 %v8124
    %8179 = vmatprep.subr.bf16.mxu0 0
    %8180 = vmatpush1.bf16.msra.mxu0 0
    %8181 = vmatprep.subr.bf16.mxu0 0
    %8182 = vmatpush1.bf16.msra.mxu0 0
    %8183 = vmatprep.mubr.bf16.mxu0 %v8140
    %8184 = vmatmul.mubr.bf16.gmra.mrb[0].mxu0 %v8018
    %v8185 = vpop.f32.mrb[0].mxu0
    %v8186 = vadd.f32 0.0, %v8185
    %v8187 = vpop.f32.mrb[0].mxu0
    %v8188 = vpop.f32.mrb[0].mxu0
    %v8189 = vadd.f32 0.0, %v8188
    %v8190 = vpop.f32.mrb[0].mxu0
    %8191 = vmatprep.mubr.bf16.mxu0 %v8143
    %8192 = vmatmul.mubr.bf16.gmra.mrb[0].mxu0 %v8020
    %v8193 = vpop.f32.mrb[0].mxu0
    %v8194 = vadd.f32 0.0, %v8193
    %v8195 = vpop.f32.mrb[0].mxu0
    %v8196 = vpop.f32.mrb[0].mxu0
    %v8197 = vadd.f32 0.0, %v8196
    %v8198 = vpop.f32.mrb[0].mxu0
    %8199 = vmatprep.mubr.bf16.mxu0 %v8146
    %8200 = vmatmul.mubr.bf16.gmra.mrb[0].mxu0 %v8022
    %v8201 = vpop.f32.mrb[0].mxu0
    %v8202 = vadd.f32 0.0, %v8201
    %v8203 = vpop.f32.mrb[0].mxu0
    %v8204 = vpop.f32.mrb[0].mxu0
    %v8205 = vadd.f32 0.0, %v8204
    %v8206 = vpop.f32.mrb[0].mxu0
    %8207 = vmatprep.mubr.bf16.mxu0 %v8149
    %8208 = vmatmul.mubr.bf16.gmra.mrb[0].mxu0 %v8024
    %v8209 = vpop.f32.mrb[0].mxu0
    %v8210 = vadd.f32 0.0, %v8209
    %v8211 = vpop.f32.mrb[0].mxu0
    %v8212 = vpop.f32.mrb[0].mxu0
    %v8213 = vadd.f32 0.0, %v8212
    %v8214 = vpop.f32.mrb[0].mxu0
    %8215 = vdwg.mxu0
    %v8216 = vadd.f32 %v7874, %v8186
    %v8217 = vadd.f32 %v7877, %v8189
    %v8218 = vadd.f32 %v7882, %v8194
    %v8219 = vadd.f32 %v7885, %v8197
    %v8220 = vadd.f32 %v7890, %v8202
    %v8221 = vadd.f32 %v7893, %v8205
    %v8222 = vadd.f32 %v7898, %v8210
    %v8223 = vadd.f32 %v7901, %v8213
    %s8224 = scalar_lea.vmem %s55, 96
    %v8225 = vld [vmem:[%s8224] sm:$0xf]
    %v8226 = vld [vmem:[%s8224 + $0x4] sm:$0xf]
    %v8227 = vld [vmem:[%s8224 + $0x8] sm:$0xf]
    %v8228 = vld [vmem:[%s8224 + $0xc] sm:$0xf]
    %v8229 = vld [vmem:[%s8224 + $0x10] sm:$0xf]
    %v8230 = vld [vmem:[%s8224 + $0x14] sm:$0xf]
    %v8231 = vld [vmem:[%s8224 + $0x18] sm:$0xf]
    %v8232 = vld [vmem:[%s8224 + $0x1c] sm:$0x3]
    %v8241 = vunpack.c.l.b16 %v8225
    %v8242 = vunpack.c.l.b16 %v8226
    %v8243 = vunpack.c.l.b16 %v8227
    %v8244 = vunpack.c.l.b16 %v8228
    %v8245 = vunpack.c.l.b16 %v8229
    %v8246 = vunpack.c.l.b16 %v8230
    %v8247 = vunpack.c.l.b16 %v8231
    %v8248 = vunpack.c.l.b16 %v8232
    %v8249 = vpack.c.b16 %v8242, %v8241
    %v8250 = vpack.c.b16 %v8244, %v8243
    %v8251 = vpack.c.b16 %v8246, %v8245
    %v8252 = vpack.c.b16 %v8248, %v8247
    %v8254 = vsel %vm1222, %v8249, 0
    %v8257 = vsel %vm1222, %v8250, 0
    %v8260 = vsel %vm1222, %v8251, 0
    %v8263 = vsel %vm1222, %v8252, 0
    %8265 = vmatprep.subr.bf16.mxu0 %v7320
    %8266 = vmatpush1.bf16.msra.mxu0 %v7317
    %8267 = vmatprep.subr.bf16.mxu0 0
    %8268 = vmatpush1.bf16.msra.mxu0 0
    %8269 = vmatprep.subr.bf16.mxu0 0
    %8270 = vmatpush1.bf16.msra.mxu0 0
    %8271 = vmatprep.subr.bf16.mxu0 0
    %8272 = vmatpush1.bf16.msra.mxu0 0
    %8273 = vmatprep.subr.bf16.mxu0 0
    %8274 = vmatpush1.bf16.msra.mxu0 0
    %8275 = vmatprep.subr.bf16.mxu0 0
    %8276 = vmatpush1.bf16.msra.mxu0 0
    %8277 = vmatprep.subr.bf16.mxu0 0
    %8278 = vmatpush1.bf16.msra.mxu0 0
    %8279 = vmatprep.subr.bf16.mxu0 0
    %8280 = vmatpush1.bf16.msra.mxu0 0
    %8281 = vmatprep.subr.bf16.mxu0 0
    %8282 = vmatpush1.bf16.msra.mxu0 0
    %8283 = vmatprep.subr.bf16.mxu0 0
    %8284 = vmatpush1.bf16.msra.mxu0 0
    %8285 = vmatprep.subr.bf16.mxu0 0
    %8286 = vmatpush1.bf16.msra.mxu0 0
    %8287 = vmatprep.subr.bf16.mxu0 0
    %8288 = vmatpush1.bf16.msra.mxu0 0
    %8289 = vmatprep.subr.bf16.mxu0 0
    %8290 = vmatpush1.bf16.msra.mxu0 0
    %8291 = vmatprep.subr.bf16.mxu0 0
    %8292 = vmatpush1.bf16.msra.mxu0 0
    %8293 = vmatprep.subr.bf16.mxu0 0
    %8294 = vmatpush1.bf16.msra.mxu0 0
    %8295 = vmatprep.subr.bf16.mxu0 0
    %8296 = vmatpush1.bf16.msra.mxu0 0
    %8297 = vmatprep.mubr.bf16.mxu0 0
    %8298 = vmatmul.mubr.bf16.gmra.mrb[0].mxu0 %v8254
    %v8299 = vpop.f32.mrb[0].mxu0
    %v8300 = vadd.f32 0.0, %v8299
    %v8301 = vpop.f32.mrb[0].mxu0
    %v8302 = vadd.f32 0.0, %v8301
    %v8303 = vpop.f32.mrb[0].mxu0
    %v8304 = vadd.f32 0.0, %v8303
    %v8305 = vpop.f32.mrb[0].mxu0
    %v8306 = vadd.f32 0.0, %v8305
    %8307 = vmatprep.mubr.bf16.mxu0 0
    %8308 = vmatmul.mubr.bf16.gmra.mrb[0].mxu0 %v8257
    %v8309 = vpop.f32.mrb[0].mxu0
    %v8310 = vadd.f32 0.0, %v8309
    %v8311 = vpop.f32.mrb[0].mxu0
    %v8312 = vadd.f32 0.0, %v8311
    %v8313 = vpop.f32.mrb[0].mxu0
    %v8314 = vadd.f32 0.0, %v8313
    %v8315 = vpop.f32.mrb[0].mxu0
    %v8316 = vadd.f32 0.0, %v8315
    %8317 = vmatprep.mubr.bf16.mxu0 0
    %8318 = vmatmul.mubr.bf16.gmra.mrb[0].mxu0 %v8260
    %v8319 = vpop.f32.mrb[0].mxu0
    %v8320 = vadd.f32 0.0, %v8319
    %v8321 = vpop.f32.mrb[0].mxu0
    %v8322 = vadd.f32 0.0, %v8321
    %v8323 = vpop.f32.mrb[0].mxu0
    %v8324 = vadd.f32 0.0, %v8323
    %v8325 = vpop.f32.mrb[0].mxu0
    %v8326 = vadd.f32 0.0, %v8325
    %8327 = vmatprep.mubr.bf16.mxu0 0
    %8328 = vmatmul.mubr.bf16.gmra.mrb[0].mxu0 %v8263
    %v8329 = vpop.f32.mrb[0].mxu0
    %v8330 = vadd.f32 0.0, %v8329
    %v8331 = vpop.f32.mrb[0].mxu0
    %v8332 = vadd.f32 0.0, %v8331
    %v8333 = vpop.f32.mrb[0].mxu0
    %v8334 = vadd.f32 0.0, %v8333
    %v8335 = vpop.f32.mrb[0].mxu0
    %v8336 = vadd.f32 0.0, %v8335
    %8337 = vdwg.mxu0
    %v8338 = vpack.c.bf16 %v8304, %v8300
    %v8339 = vpack.c.bf16 %v8306, %v8302
    %v8340 = vpack.c.bf16 %v8314, %v8310
    %v8341 = vpack.c.bf16 %v8316, %v8312
    %v8342 = vpack.c.bf16 %v8324, %v8320
    %v8343 = vpack.c.bf16 %v8326, %v8322
    %v8344 = vpack.c.bf16 %v8334, %v8330
    %v8345 = vpack.c.bf16 %v8336, %v8332
    %s8346 = scalar_lea.vmem %s57, 336
    %v8347 = vld [vmem:[%s8346] sm:$0xf]
    %v8348 = vld [vmem:[%s8346 + $0x4] sm:$0xf]
    %v8349 = vld [vmem:[%s8346 + $0x8] sm:$0xf]
    %v8350 = vld [vmem:[%s8346 + $0xc] sm:$0xf]
    %v8351 = vld [vmem:[%s8346 + $0x10] sm:$0xf]
    %v8352 = vld [vmem:[%s8346 + $0x14] sm:$0xf]
    %v8353 = vld [vmem:[%s8346 + $0x18] sm:$0xf]
    %v8354 = vld [vmem:[%s8346 + $0x1c] sm:$0xf]
    %v8355 = vld [vmem:[%s8346 + $0x20] sm:$0xf]
    %v8356 = vld [vmem:[%s8346 + $0x24] sm:$0xf]
    %v8357 = vld [vmem:[%s8346 + $0x28] sm:$0xf]
    %v8358 = vld [vmem:[%s8346 + $0x2c] sm:$0xf]
    %v8359 = vld [vmem:[%s8346 + $0x30] sm:$0xf]
    %v8360 = vld [vmem:[%s8346 + $0x34] sm:$0xf]
    %v8361 = vld [vmem:[%s8346 + $0x38] sm:$0xf]
    %v8362 = vld [vmem:[%s8346 + $0x3c] sm:$0xf]
    %v8363 = vld [vmem:[%s8346 + $0x40] sm:$0xf]
    %v8364 = vld [vmem:[%s8346 + $0x44] sm:$0xf]
    %v8365 = vld [vmem:[%s8346 + $0x48] sm:$0xf]
    %v8366 = vld [vmem:[%s8346 + $0x4c] sm:$0xf]
    %v8367 = vld [vmem:[%s8346 + $0x50] sm:$0xf]
    %v8368 = vld [vmem:[%s8346 + $0x54] sm:$0xf]
    %v8369 = vld [vmem:[%s8346 + $0x58] sm:$0xf]
    %v8370 = vld [vmem:[%s8346 + $0x5c] sm:$0xf]
    %v8371 = vld [vmem:[%s8346 + $0x60] sm:$0xf]
    %v8372 = vld [vmem:[%s8346 + $0x64] sm:$0xf]
    %v8373 = vld [vmem:[%s8346 + $0x68] sm:$0xf]
    %v8374 = vld [vmem:[%s8346 + $0x6c] sm:$0xf]
    %v8403 = vunpack.c.l.b16 %v8347
    %v8404 = vunpack.c.l.b16 %v8348
    %v8405 = vunpack.c.l.b16 %v8349
    %v8406 = vunpack.c.l.b16 %v8350
    %v8407 = vunpack.c.l.b16 %v8351
    %v8408 = vunpack.c.l.b16 %v8352
    %v8409 = vunpack.c.l.b16 %v8353
    %v8410 = vunpack.c.l.b16 %v8354
    %v8411 = vunpack.c.l.b16 %v8355
    %v8412 = vunpack.c.l.b16 %v8356
    %v8413 = vunpack.c.l.b16 %v8357
    %v8414 = vunpack.c.l.b16 %v8358
    %v8415 = vunpack.c.l.b16 %v8359
    %v8416 = vunpack.c.l.b16 %v8360
    %v8417 = vunpack.c.l.b16 %v8361
    %v8418 = vunpack.c.l.b16 %v8362
    %v8419 = vunpack.c.l.b16 %v8363
    %v8420 = vunpack.c.l.b16 %v8364
    %v8421 = vunpack.c.l.b16 %v8365
    %v8422 = vunpack.c.l.b16 %v8366
    %v8423 = vunpack.c.l.b16 %v8367
    %v8424 = vunpack.c.l.b16 %v8368
    %v8425 = vunpack.c.l.b16 %v8369
    %v8426 = vunpack.c.l.b16 %v8370
    %v8427 = vunpack.c.l.b16 %v8371
    %v8428 = vunpack.c.l.b16 %v8372
    %v8429 = vunpack.c.l.b16 %v8373
    %v8430 = vunpack.c.l.b16 %v8374
    %v8431 = vpack.c.b16 %v8404, %v8403
    %v8432 = vpack.c.b16 %v8406, %v8405
    %v8433 = vpack.c.b16 %v8408, %v8407
    %v8434 = vpack.c.b16 %v8410, %v8409
    %v8435 = vpack.c.b16 %v8412, %v8411
    %v8436 = vpack.c.b16 %v8414, %v8413
    %v8437 = vpack.c.b16 %v8416, %v8415
    %v8438 = vpack.c.b16 %v8418, %v8417
    %v8439 = vpack.c.b16 %v8420, %v8419
    %v8440 = vpack.c.b16 %v8422, %v8421
    %v8441 = vpack.c.b16 %v8424, %v8423
    %v8442 = vpack.c.b16 %v8426, %v8425
    %v8443 = vpack.c.b16 %v8428, %v8427
    %v8444 = vpack.c.b16 %v8430, %v8429
    %v8460 = vsel %vm1520, %v8339, 0
    %v8463 = vsel %vm1520, %v8341, 0
    %v8466 = vsel %vm1520, %v8343, 0
    %v8469 = vsel %vm1520, %v8345, 0
    %8471 = vmatprep.subr.bf16.mxu0 0
    %8472 = vmatpush1.bf16.msra.mxu0 %v8431
    %8473 = vmatprep.subr.bf16.mxu0 0
    %8474 = vmatpush1.bf16.msra.mxu0 %v8432
    %8475 = vmatprep.subr.bf16.mxu0 0
    %8476 = vmatpush1.bf16.msra.mxu0 %v8433
    %8477 = vmatprep.subr.bf16.mxu0 0
    %8478 = vmatpush1.bf16.msra.mxu0 %v8434
    %8479 = vmatprep.subr.bf16.mxu0 0
    %8480 = vmatpush1.bf16.msra.mxu0 %v8435
    %8481 = vmatprep.subr.bf16.mxu0 0
    %8482 = vmatpush1.bf16.msra.mxu0 %v8436
    %8483 = vmatprep.subr.bf16.mxu0 0
    %8484 = vmatpush1.bf16.msra.mxu0 %v8437
    %8485 = vmatprep.subr.bf16.mxu0 0
    %8486 = vmatpush1.bf16.msra.mxu0 %v8438
    %8487 = vmatprep.subr.bf16.mxu0 0
    %8488 = vmatpush1.bf16.msra.mxu0 %v8439
    %8489 = vmatprep.subr.bf16.mxu0 0
    %8490 = vmatpush1.bf16.msra.mxu0 %v8440
    %8491 = vmatprep.subr.bf16.mxu0 0
    %8492 = vmatpush1.bf16.msra.mxu0 %v8441
    %8493 = vmatprep.subr.bf16.mxu0 0
    %8494 = vmatpush1.bf16.msra.mxu0 %v8442
    %8495 = vmatprep.subr.bf16.mxu0 0
    %8496 = vmatpush1.bf16.msra.mxu0 %v8443
    %8497 = vmatprep.subr.bf16.mxu0 0
    %8498 = vmatpush1.bf16.msra.mxu0 %v8444
    %8499 = vmatprep.subr.bf16.mxu0 0
    %8500 = vmatpush1.bf16.msra.mxu0 0
    %8501 = vmatprep.subr.bf16.mxu0 0
    %8502 = vmatpush1.bf16.msra.mxu0 0
    %8503 = vmatprep.mubr.bf16.mxu0 %v8460
    %8504 = vmatmul.mubr.bf16.gmra.mrb[0].mxu0 %v8338
    %v8505 = vpop.f32.mrb[0].mxu0
    %v8506 = vadd.f32 0.0, %v8505
    %v8507 = vpop.f32.mrb[0].mxu0
    %v8508 = vpop.f32.mrb[0].mxu0
    %v8509 = vadd.f32 0.0, %v8508
    %v8510 = vpop.f32.mrb[0].mxu0
    %8511 = vmatprep.mubr.bf16.mxu0 %v8463
    %8512 = vmatmul.mubr.bf16.gmra.mrb[0].mxu0 %v8340
    %v8513 = vpop.f32.mrb[0].mxu0
    %v8514 = vadd.f32 0.0, %v8513
    %v8515 = vpop.f32.mrb[0].mxu0
    %v8516 = vpop.f32.mrb[0].mxu0
    %v8517 = vadd.f32 0.0, %v8516
    %v8518 = vpop.f32.mrb[0].mxu0
    %8519 = vmatprep.mubr.bf16.mxu0 %v8466
    %8520 = vmatmul.mubr.bf16.gmra.mrb[0].mxu0 %v8342
    %v8521 = vpop.f32.mrb[0].mxu0
    %v8522 = vadd.f32 0.0, %v8521
    %v8523 = vpop.f32.mrb[0].mxu0
    %v8524 = vpop.f32.mrb[0].mxu0
    %v8525 = vadd.f32 0.0, %v8524
    %v8526 = vpop.f32.mrb[0].mxu0
    %8527 = vmatprep.mubr.bf16.mxu0 %v8469
    %8528 = vmatmul.mubr.bf16.gmra.mrb[0].mxu0 %v8344
    %v8529 = vpop.f32.mrb[0].mxu0
    %v8530 = vadd.f32 0.0, %v8529
    %v8531 = vpop.f32.mrb[0].mxu0
    %v8532 = vpop.f32.mrb[0].mxu0
    %v8533 = vadd.f32 0.0, %v8532
    %v8534 = vpop.f32.mrb[0].mxu0
    %8535 = vdwg.mxu0
    %v8536 = vadd.f32 %v8216, %v8506
    %v8537 = vadd.f32 %v8217, %v8509
    %v8538 = vadd.f32 %v8218, %v8514
    %v8539 = vadd.f32 %v8219, %v8517
    %v8540 = vadd.f32 %v8220, %v8522
    %v8541 = vadd.f32 %v8221, %v8525
    %v8542 = vadd.f32 %v8222, %v8530
    %v8543 = vadd.f32 %v8223, %v8533
    %s8544 = scalar_lea.vmem %s55, 128
    %v8545 = vld [vmem:[%s8544] sm:$0xf]
    %v8546 = vld [vmem:[%s8544 + $0x4] sm:$0xf]
    %v8547 = vld [vmem:[%s8544 + $0x8] sm:$0xf]
    %v8548 = vld [vmem:[%s8544 + $0xc] sm:$0xf]
    %v8549 = vld [vmem:[%s8544 + $0x10] sm:$0xf]
    %v8550 = vld [vmem:[%s8544 + $0x14] sm:$0xf]
    %v8551 = vld [vmem:[%s8544 + $0x18] sm:$0xf]
    %v8552 = vld [vmem:[%s8544 + $0x1c] sm:$0x3]
    %v8561 = vunpack.c.l.b16 %v8545
    %v8562 = vunpack.c.l.b16 %v8546
    %v8563 = vunpack.c.l.b16 %v8547
    %v8564 = vunpack.c.l.b16 %v8548
    %v8565 = vunpack.c.l.b16 %v8549
    %v8566 = vunpack.c.l.b16 %v8550
    %v8567 = vunpack.c.l.b16 %v8551
    %v8568 = vunpack.c.l.b16 %v8552
    %v8569 = vpack.c.b16 %v8562, %v8561
    %v8570 = vpack.c.b16 %v8564, %v8563
    %v8571 = vpack.c.b16 %v8566, %v8565
    %v8572 = vpack.c.b16 %v8568, %v8567
    %v8574 = vsel %vm1222, %v8569, 0
    %v8577 = vsel %vm1222, %v8570, 0
    %v8580 = vsel %vm1222, %v8571, 0
    %v8583 = vsel %vm1222, %v8572, 0
    %8585 = vmatprep.subr.bf16.mxu0 %v7320
    %8586 = vmatpush1.bf16.msra.mxu0 %v7317
    %8587 = vmatprep.subr.bf16.mxu0 0
    %8588 = vmatpush1.bf16.msra.mxu0 0
    %8589 = vmatprep.subr.bf16.mxu0 0
    %8590 = vmatpush1.bf16.msra.mxu0 0
    %8591 = vmatprep.subr.bf16.mxu0 0
    %8592 = vmatpush1.bf16.msra.mxu0 0
    %8593 = vmatprep.subr.bf16.mxu0 0
    %8594 = vmatpush1.bf16.msra.mxu0 0
    %8595 = vmatprep.subr.bf16.mxu0 0
    %8596 = vmatpush1.bf16.msra.mxu0 0
    %8597 = vmatprep.subr.bf16.mxu0 0
    %8598 = vmatpush1.bf16.msra.mxu0 0
    %8599 = vmatprep.subr.bf16.mxu0 0
    %8600 = vmatpush1.bf16.msra.mxu0 0
    %8601 = vmatprep.subr.bf16.mxu0 0
    %8602 = vmatpush1.bf16.msra.mxu0 0
    %8603 = vmatprep.subr.bf16.mxu0 0
    %8604 = vmatpush1.bf16.msra.mxu0 0
    %8605 = vmatprep.subr.bf16.mxu0 0
    %8606 = vmatpush1.bf16.msra.mxu0 0
    %8607 = vmatprep.subr.bf16.mxu0 0
    %8608 = vmatpush1.bf16.msra.mxu0 0
    %8609 = vmatprep.subr.bf16.mxu0 0
    %8610 = vmatpush1.bf16.msra.mxu0 0
    %8611 = vmatprep.subr.bf16.mxu0 0
    %8612 = vmatpush1.bf16.msra.mxu0 0
    %8613 = vmatprep.subr.bf16.mxu0 0
    %8614 = vmatpush1.bf16.msra.mxu0 0
    %8615 = vmatprep.subr.bf16.mxu0 0
    %8616 = vmatpush1.bf16.msra.mxu0 0
    %8617 = vmatprep.mubr.bf16.mxu0 0
    %8618 = vmatmul.mubr.bf16.gmra.mrb[0].mxu0 %v8574
    %v8619 = vpop.f32.mrb[0].mxu0
    %v8620 = vadd.f32 0.0, %v8619
    %v8621 = vpop.f32.mrb[0].mxu0
    %v8622 = vadd.f32 0.0, %v8621
    %v8623 = vpop.f32.mrb[0].mxu0
    %v8624 = vadd.f32 0.0, %v8623
    %v8625 = vpop.f32.mrb[0].mxu0
    %v8626 = vadd.f32 0.0, %v8625
    %8627 = vmatprep.mubr.bf16.mxu0 0
    %8628 = vmatmul.mubr.bf16.gmra.mrb[0].mxu0 %v8577
    %v8629 = vpop.f32.mrb[0].mxu0
    %v8630 = vadd.f32 0.0, %v8629
    %v8631 = vpop.f32.mrb[0].mxu0
    %v8632 = vadd.f32 0.0, %v8631
    %v8633 = vpop.f32.mrb[0].mxu0
    %v8634 = vadd.f32 0.0, %v8633
    %v8635 = vpop.f32.mrb[0].mxu0
    %v8636 = vadd.f32 0.0, %v8635
    %8637 = vmatprep.mubr.bf16.mxu0 0
    %8638 = vmatmul.mubr.bf16.gmra.mrb[0].mxu0 %v8580
    %v8639 = vpop.f32.mrb[0].mxu0
    %v8640 = vadd.f32 0.0, %v8639
    %v8641 = vpop.f32.mrb[0].mxu0
    %v8642 = vadd.f32 0.0, %v8641
    %v8643 = vpop.f32.mrb[0].mxu0
    %v8644 = vadd.f32 0.0, %v8643
    %v8645 = vpop.f32.mrb[0].mxu0
    %v8646 = vadd.f32 0.0, %v8645
    %8647 = vmatprep.mubr.bf16.mxu0 0
    %8648 = vmatmul.mubr.bf16.gmra.mrb[0].mxu0 %v8583
    %v8649 = vpop.f32.mrb[0].mxu0
    %v8650 = vadd.f32 0.0, %v8649
    %v8651 = vpop.f32.mrb[0].mxu0
    %v8652 = vadd.f32 0.0, %v8651
    %v8653 = vpop.f32.mrb[0].mxu0
    %v8654 = vadd.f32 0.0, %v8653
    %v8655 = vpop.f32.mrb[0].mxu0
    %v8656 = vadd.f32 0.0, %v8655
    %8657 = vdwg.mxu0
    %v8658 = vpack.c.bf16 %v8624, %v8620
    %v8659 = vpack.c.bf16 %v8626, %v8622
    %v8660 = vpack.c.bf16 %v8634, %v8630
    %v8661 = vpack.c.bf16 %v8636, %v8632
    %v8662 = vpack.c.bf16 %v8644, %v8640
    %v8663 = vpack.c.bf16 %v8646, %v8642
    %v8664 = vpack.c.bf16 %v8654, %v8650
    %v8665 = vpack.c.bf16 %v8656, %v8652
    %s8666 = scalar_lea.vmem %s57, 448
    %v8667 = vld [vmem:[%s8666] sm:$0xf]
    %v8668 = vld [vmem:[%s8666 + $0x4] sm:$0xf]
    %v8669 = vld [vmem:[%s8666 + $0x8] sm:$0xf]
    %v8670 = vld [vmem:[%s8666 + $0xc] sm:$0xf]
    %v8671 = vld [vmem:[%s8666 + $0x10] sm:$0xf]
    %v8672 = vld [vmem:[%s8666 + $0x14] sm:$0xf]
    %v8673 = vld [vmem:[%s8666 + $0x18] sm:$0xf]
    %v8674 = vld [vmem:[%s8666 + $0x1c] sm:$0xf]
    %v8675 = vld [vmem:[%s8666 + $0x20] sm:$0xf]
    %v8676 = vld [vmem:[%s8666 + $0x24] sm:$0xf]
    %v8677 = vld [vmem:[%s8666 + $0x28] sm:$0xf]
    %v8678 = vld [vmem:[%s8666 + $0x2c] sm:$0xf]
    %v8679 = vld [vmem:[%s8666 + $0x30] sm:$0xf]
    %v8680 = vld [vmem:[%s8666 + $0x34] sm:$0xf]
    %v8681 = vld [vmem:[%s8666 + $0x38] sm:$0xf]
    %v8682 = vld [vmem:[%s8666 + $0x3c] sm:$0xf]
    %v8683 = vld [vmem:[%s8666 + $0x40] sm:$0xf]
    %v8684 = vld [vmem:[%s8666 + $0x44] sm:$0xf]
    %v8685 = vld [vmem:[%s8666 + $0x48] sm:$0xf]
    %v8686 = vld [vmem:[%s8666 + $0x4c] sm:$0xf]
    %v8687 = vld [vmem:[%s8666 + $0x50] sm:$0xf]
    %v8688 = vld [vmem:[%s8666 + $0x54] sm:$0xf]
    %v8689 = vld [vmem:[%s8666 + $0x58] sm:$0xf]
    %v8690 = vld [vmem:[%s8666 + $0x5c] sm:$0xf]
    %v8691 = vld [vmem:[%s8666 + $0x60] sm:$0xf]
    %v8692 = vld [vmem:[%s8666 + $0x64] sm:$0xf]
    %v8693 = vld [vmem:[%s8666 + $0x68] sm:$0xf]
    %v8694 = vld [vmem:[%s8666 + $0x6c] sm:$0xf]
    %v8723 = vunpack.c.l.b16 %v8667
    %v8724 = vunpack.c.l.b16 %v8668
    %v8725 = vunpack.c.l.b16 %v8669
    %v8726 = vunpack.c.l.b16 %v8670
    %v8727 = vunpack.c.l.b16 %v8671
    %v8728 = vunpack.c.l.b16 %v8672
    %v8729 = vunpack.c.l.b16 %v8673
    %v8730 = vunpack.c.l.b16 %v8674
    %v8731 = vunpack.c.l.b16 %v8675
    %v8732 = vunpack.c.l.b16 %v8676
    %v8733 = vunpack.c.l.b16 %v8677
    %v8734 = vunpack.c.l.b16 %v8678
    %v8735 = vunpack.c.l.b16 %v8679
    %v8736 = vunpack.c.l.b16 %v8680
    %v8737 = vunpack.c.l.b16 %v8681
    %v8738 = vunpack.c.l.b16 %v8682
    %v8739 = vunpack.c.l.b16 %v8683
    %v8740 = vunpack.c.l.b16 %v8684
    %v8741 = vunpack.c.l.b16 %v8685
    %v8742 = vunpack.c.l.b16 %v8686
    %v8743 = vunpack.c.l.b16 %v8687
    %v8744 = vunpack.c.l.b16 %v8688
    %v8745 = vunpack.c.l.b16 %v8689
    %v8746 = vunpack.c.l.b16 %v8690
    %v8747 = vunpack.c.l.b16 %v8691
    %v8748 = vunpack.c.l.b16 %v8692
    %v8749 = vunpack.c.l.b16 %v8693
    %v8750 = vunpack.c.l.b16 %v8694
    %v8751 = vpack.c.b16 %v8724, %v8723
    %v8752 = vpack.c.b16 %v8726, %v8725
    %v8753 = vpack.c.b16 %v8728, %v8727
    %v8754 = vpack.c.b16 %v8730, %v8729
    %v8755 = vpack.c.b16 %v8732, %v8731
    %v8756 = vpack.c.b16 %v8734, %v8733
    %v8757 = vpack.c.b16 %v8736, %v8735
    %v8758 = vpack.c.b16 %v8738, %v8737
    %v8759 = vpack.c.b16 %v8740, %v8739
    %v8760 = vpack.c.b16 %v8742, %v8741
    %v8761 = vpack.c.b16 %v8744, %v8743
    %v8762 = vpack.c.b16 %v8746, %v8745
    %v8763 = vpack.c.b16 %v8748, %v8747
    %v8764 = vpack.c.b16 %v8750, %v8749
    %v8780 = vsel %vm1520, %v8659, 0
    %v8783 = vsel %vm1520, %v8661, 0
    %v8786 = vsel %vm1520, %v8663, 0
    %v8789 = vsel %vm1520, %v8665, 0
    %8791 = vmatprep.subr.bf16.mxu0 0
    %8792 = vmatpush1.bf16.msra.mxu0 %v8751
    %8793 = vmatprep.subr.bf16.mxu0 0
    %8794 = vmatpush1.bf16.msra.mxu0 %v8752
    %8795 = vmatprep.subr.bf16.mxu0 0
    %8796 = vmatpush1.bf16.msra.mxu0 %v8753
    %8797 = vmatprep.subr.bf16.mxu0 0
    %8798 = vmatpush1.bf16.msra.mxu0 %v8754
    %8799 = vmatprep.subr.bf16.mxu0 0
    %8800 = vmatpush1.bf16.msra.mxu0 %v8755
    %8801 = vmatprep.subr.bf16.mxu0 0
    %8802 = vmatpush1.bf16.msra.mxu0 %v8756
    %8803 = vmatprep.subr.bf16.mxu0 0
    %8804 = vmatpush1.bf16.msra.mxu0 %v8757
    %8805 = vmatprep.subr.bf16.mxu0 0
    %8806 = vmatpush1.bf16.msra.mxu0 %v8758
    %8807 = vmatprep.subr.bf16.mxu0 0
    %8808 = vmatpush1.bf16.msra.mxu0 %v8759
    %8809 = vmatprep.subr.bf16.mxu0 0
    %8810 = vmatpush1.bf16.msra.mxu0 %v8760
    %8811 = vmatprep.subr.bf16.mxu0 0
    %8812 = vmatpush1.bf16.msra.mxu0 %v8761
    %8813 = vmatprep.subr.bf16.mxu0 0
    %8814 = vmatpush1.bf16.msra.mxu0 %v8762
    %8815 = vmatprep.subr.bf16.mxu0 0
    %8816 = vmatpush1.bf16.msra.mxu0 %v8763
    %8817 = vmatprep.subr.bf16.mxu0 0
    %8818 = vmatpush1.bf16.msra.mxu0 %v8764
    %8819 = vmatprep.subr.bf16.mxu0 0
    %8820 = vmatpush1.bf16.msra.mxu0 0
    %8821 = vmatprep.subr.bf16.mxu0 0
    %8822 = vmatpush1.bf16.msra.mxu0 0
    %8823 = vmatprep.mubr.bf16.mxu0 %v8780
    %8824 = vmatmul.mubr.bf16.gmra.mrb[0].mxu0 %v8658
    %v8825 = vpop.f32.mrb[0].mxu0
    %v8826 = vadd.f32 0.0, %v8825
    %v8827 = vpop.f32.mrb[0].mxu0
    %v8828 = vpop.f32.mrb[0].mxu0
    %v8829 = vadd.f32 0.0, %v8828
    %v8830 = vpop.f32.mrb[0].mxu0
    %8831 = vmatprep.mubr.bf16.mxu0 %v8783
    %8832 = vmatmul.mubr.bf16.gmra.mrb[0].mxu0 %v8660
    %v8833 = vpop.f32.mrb[0].mxu0
    %v8834 = vadd.f32 0.0, %v8833
    %v8835 = vpop.f32.mrb[0].mxu0
    %v8836 = vpop.f32.mrb[0].mxu0
    %v8837 = vadd.f32 0.0, %v8836
    %v8838 = vpop.f32.mrb[0].mxu0
    %8839 = vmatprep.mubr.bf16.mxu0 %v8786
    %8840 = vmatmul.mubr.bf16.gmra.mrb[0].mxu0 %v8662
    %v8841 = vpop.f32.mrb[0].mxu0
    %v8842 = vadd.f32 0.0, %v8841
    %v8843 = vpop.f32.mrb[0].mxu0
    %v8844 = vpop.f32.mrb[0].mxu0
    %v8845 = vadd.f32 0.0, %v8844
    %v8846 = vpop.f32.mrb[0].mxu0
    %8847 = vmatprep.mubr.bf16.mxu0 %v8789
    %8848 = vmatmul.mubr.bf16.gmra.mrb[0].mxu0 %v8664
    %v8849 = vpop.f32.mrb[0].mxu0
    %v8850 = vadd.f32 0.0, %v8849
    %v8851 = vpop.f32.mrb[0].mxu0
    %v8852 = vpop.f32.mrb[0].mxu0
    %v8853 = vadd.f32 0.0, %v8852
    %v8854 = vpop.f32.mrb[0].mxu0
    %8855 = vdwg.mxu0
    %v8856 = vadd.f32 %v8536, %v8826
    %v8857 = vadd.f32 %v8537, %v8829
    %v8858 = vadd.f32 %v8538, %v8834
    %v8859 = vadd.f32 %v8539, %v8837
    %v8860 = vadd.f32 %v8540, %v8842
    %v8861 = vadd.f32 %v8541, %v8845
    %v8862 = vadd.f32 %v8542, %v8850
    %v8863 = vadd.f32 %v8543, %v8853
    %s8864 = scalar_lea.vmem %s55, 160
    %v8865 = vld [vmem:[%s8864] sm:$0xf]
    %v8866 = vld [vmem:[%s8864 + $0x4] sm:$0xf]
    %v8867 = vld [vmem:[%s8864 + $0x8] sm:$0xf]
    %v8868 = vld [vmem:[%s8864 + $0xc] sm:$0xf]
    %v8869 = vld [vmem:[%s8864 + $0x10] sm:$0xf]
    %v8870 = vld [vmem:[%s8864 + $0x14] sm:$0xf]
    %v8871 = vld [vmem:[%s8864 + $0x18] sm:$0xf]
    %v8872 = vld [vmem:[%s8864 + $0x1c] sm:$0x3]
    %v8881 = vunpack.c.l.b16 %v8865
    %v8882 = vunpack.c.l.b16 %v8866
    %v8883 = vunpack.c.l.b16 %v8867
    %v8884 = vunpack.c.l.b16 %v8868
    %v8885 = vunpack.c.l.b16 %v8869
    %v8886 = vunpack.c.l.b16 %v8870
    %v8887 = vunpack.c.l.b16 %v8871
    %v8888 = vunpack.c.l.b16 %v8872
    %v8889 = vpack.c.b16 %v8882, %v8881
    %v8890 = vpack.c.b16 %v8884, %v8883
    %v8891 = vpack.c.b16 %v8886, %v8885
    %v8892 = vpack.c.b16 %v8888, %v8887
    %v8894 = vsel %vm1222, %v8889, 0
    %v8897 = vsel %vm1222, %v8890, 0
    %v8900 = vsel %vm1222, %v8891, 0
    %v8903 = vsel %vm1222, %v8892, 0
    %8905 = vmatprep.subr.bf16.mxu0 %v7320
    %8906 = vmatpush1.bf16.msra.mxu0 %v7317
    %8907 = vmatprep.subr.bf16.mxu0 0
    %8908 = vmatpush1.bf16.msra.mxu0 0
    %8909 = vmatprep.subr.bf16.mxu0 0
    %8910 = vmatpush1.bf16.msra.mxu0 0
    %8911 = vmatprep.subr.bf16.mxu0 0
    %8912 = vmatpush1.bf16.msra.mxu0 0
    %8913 = vmatprep.subr.bf16.mxu0 0
    %8914 = vmatpush1.bf16.msra.mxu0 0
    %8915 = vmatprep.subr.bf16.mxu0 0
    %8916 = vmatpush1.bf16.msra.mxu0 0
    %8917 = vmatprep.subr.bf16.mxu0 0
    %8918 = vmatpush1.bf16.msra.mxu0 0
    %8919 = vmatprep.subr.bf16.mxu0 0
    %8920 = vmatpush1.bf16.msra.mxu0 0
    %8921 = vmatprep.subr.bf16.mxu0 0
    %8922 = vmatpush1.bf16.msra.mxu0 0
    %8923 = vmatprep.subr.bf16.mxu0 0
    %8924 = vmatpush1.bf16.msra.mxu0 0
    %8925 = vmatprep.subr.bf16.mxu0 0
    %8926 = vmatpush1.bf16.msra.mxu0 0
    %8927 = vmatprep.subr.bf16.mxu0 0
    %8928 = vmatpush1.bf16.msra.mxu0 0
    %8929 = vmatprep.subr.bf16.mxu0 0
    %8930 = vmatpush1.bf16.msra.mxu0 0
    %8931 = vmatprep.subr.bf16.mxu0 0
    %8932 = vmatpush1.bf16.msra.mxu0 0
    %8933 = vmatprep.subr.bf16.mxu0 0
    %8934 = vmatpush1.bf16.msra.mxu0 0
    %8935 = vmatprep.subr.bf16.mxu0 0
    %8936 = vmatpush1.bf16.msra.mxu0 0
    %8937 = vmatprep.mubr.bf16.mxu0 0
    %8938 = vmatmul.mubr.bf16.gmra.mrb[0].mxu0 %v8894
    %v8939 = vpop.f32.mrb[0].mxu0
    %v8940 = vadd.f32 0.0, %v8939
    %v8941 = vpop.f32.mrb[0].mxu0
    %v8942 = vadd.f32 0.0, %v8941
    %v8943 = vpop.f32.mrb[0].mxu0
    %v8944 = vadd.f32 0.0, %v8943
    %v8945 = vpop.f32.mrb[0].mxu0
    %v8946 = vadd.f32 0.0, %v8945
    %8947 = vmatprep.mubr.bf16.mxu0 0
    %8948 = vmatmul.mubr.bf16.gmra.mrb[0].mxu0 %v8897
    %v8949 = vpop.f32.mrb[0].mxu0
    %v8950 = vadd.f32 0.0, %v8949
    %v8951 = vpop.f32.mrb[0].mxu0
    %v8952 = vadd.f32 0.0, %v8951
    %v8953 = vpop.f32.mrb[0].mxu0
    %v8954 = vadd.f32 0.0, %v8953
    %v8955 = vpop.f32.mrb[0].mxu0
    %v8956 = vadd.f32 0.0, %v8955
    %8957 = vmatprep.mubr.bf16.mxu0 0
    %8958 = vmatmul.mubr.bf16.gmra.mrb[0].mxu0 %v8900
    %v8959 = vpop.f32.mrb[0].mxu0
    %v8960 = vadd.f32 0.0, %v8959
    %v8961 = vpop.f32.mrb[0].mxu0
    %v8962 = vadd.f32 0.0, %v8961
    %v8963 = vpop.f32.mrb[0].mxu0
    %v8964 = vadd.f32 0.0, %v8963
    %v8965 = vpop.f32.mrb[0].mxu0
    %v8966 = vadd.f32 0.0, %v8965
    %8967 = vmatprep.mubr.bf16.mxu0 0
    %8968 = vmatmul.mubr.bf16.gmra.mrb[0].mxu0 %v8903
    %v8969 = vpop.f32.mrb[0].mxu0
    %v8970 = vadd.f32 0.0, %v8969
    %v8971 = vpop.f32.mrb[0].mxu0
    %v8972 = vadd.f32 0.0, %v8971
    %v8973 = vpop.f32.mrb[0].mxu0
    %v8974 = vadd.f32 0.0, %v8973
    %v8975 = vpop.f32.mrb[0].mxu0
    %v8976 = vadd.f32 0.0, %v8975
    %8977 = vdwg.mxu0
    %v8978 = vpack.c.bf16 %v8944, %v8940
    %v8979 = vpack.c.bf16 %v8946, %v8942
    %v8980 = vpack.c.bf16 %v8954, %v8950
    %v8981 = vpack.c.bf16 %v8956, %v8952
    %v8982 = vpack.c.bf16 %v8964, %v8960
    %v8983 = vpack.c.bf16 %v8966, %v8962
    %v8984 = vpack.c.bf16 %v8974, %v8970
    %v8985 = vpack.c.bf16 %v8976, %v8972
    %s8986 = scalar_lea.vmem %s57, 560
    %v8987 = vld [vmem:[%s8986] sm:$0xf]
    %v8988 = vld [vmem:[%s8986 + $0x4] sm:$0xf]
    %v8989 = vld [vmem:[%s8986 + $0x8] sm:$0xf]
    %v8990 = vld [vmem:[%s8986 + $0xc] sm:$0xf]
    %v8991 = vld [vmem:[%s8986 + $0x10] sm:$0xf]
    %v8992 = vld [vmem:[%s8986 + $0x14] sm:$0xf]
    %v8993 = vld [vmem:[%s8986 + $0x18] sm:$0xf]
    %v8994 = vld [vmem:[%s8986 + $0x1c] sm:$0xf]
    %v8995 = vld [vmem:[%s8986 + $0x20] sm:$0xf]
    %v8996 = vld [vmem:[%s8986 + $0x24] sm:$0xf]
    %v8997 = vld [vmem:[%s8986 + $0x28] sm:$0xf]
    %v8998 = vld [vmem:[%s8986 + $0x2c] sm:$0xf]
    %v8999 = vld [vmem:[%s8986 + $0x30] sm:$0xf]
    %v9000 = vld [vmem:[%s8986 + $0x34] sm:$0xf]
    %v9001 = vld [vmem:[%s8986 + $0x38] sm:$0xf]
    %v9002 = vld [vmem:[%s8986 + $0x3c] sm:$0xf]
    %v9003 = vld [vmem:[%s8986 + $0x40] sm:$0xf]
    %v9004 = vld [vmem:[%s8986 + $0x44] sm:$0xf]
    %v9005 = vld [vmem:[%s8986 + $0x48] sm:$0xf]
    %v9006 = vld [vmem:[%s8986 + $0x4c] sm:$0xf]
    %v9007 = vld [vmem:[%s8986 + $0x50] sm:$0xf]
    %v9008 = vld [vmem:[%s8986 + $0x54] sm:$0xf]
    %v9009 = vld [vmem:[%s8986 + $0x58] sm:$0xf]
    %v9010 = vld [vmem:[%s8986 + $0x5c] sm:$0xf]
    %v9011 = vld [vmem:[%s8986 + $0x60] sm:$0xf]
    %v9012 = vld [vmem:[%s8986 + $0x64] sm:$0xf]
    %v9013 = vld [vmem:[%s8986 + $0x68] sm:$0xf]
    %v9014 = vld [vmem:[%s8986 + $0x6c] sm:$0xf]
    %v9043 = vunpack.c.l.b16 %v8987
    %v9044 = vunpack.c.l.b16 %v8988
    %v9045 = vunpack.c.l.b16 %v8989
    %v9046 = vunpack.c.l.b16 %v8990
    %v9047 = vunpack.c.l.b16 %v8991
    %v9048 = vunpack.c.l.b16 %v8992
    %v9049 = vunpack.c.l.b16 %v8993
    %v9050 = vunpack.c.l.b16 %v8994
    %v9051 = vunpack.c.l.b16 %v8995
    %v9052 = vunpack.c.l.b16 %v8996
    %v9053 = vunpack.c.l.b16 %v8997
    %v9054 = vunpack.c.l.b16 %v8998
    %v9055 = vunpack.c.l.b16 %v8999
    %v9056 = vunpack.c.l.b16 %v9000
    %v9057 = vunpack.c.l.b16 %v9001
    %v9058 = vunpack.c.l.b16 %v9002
    %v9059 = vunpack.c.l.b16 %v9003
    %v9060 = vunpack.c.l.b16 %v9004
    %v9061 = vunpack.c.l.b16 %v9005
    %v9062 = vunpack.c.l.b16 %v9006
    %v9063 = vunpack.c.l.b16 %v9007
    %v9064 = vunpack.c.l.b16 %v9008
    %v9065 = vunpack.c.l.b16 %v9009
    %v9066 = vunpack.c.l.b16 %v9010
    %v9067 = vunpack.c.l.b16 %v9011
    %v9068 = vunpack.c.l.b16 %v9012
    %v9069 = vunpack.c.l.b16 %v9013
    %v9070 = vunpack.c.l.b16 %v9014
    %v9071 = vpack.c.b16 %v9044, %v9043
    %v9072 = vpack.c.b16 %v9046, %v9045
    %v9073 = vpack.c.b16 %v9048, %v9047
    %v9074 = vpack.c.b16 %v9050, %v9049
    %v9075 = vpack.c.b16 %v9052, %v9051
    %v9076 = vpack.c.b16 %v9054, %v9053
    %v9077 = vpack.c.b16 %v9056, %v9055
    %v9078 = vpack.c.b16 %v9058, %v9057
    %v9079 = vpack.c.b16 %v9060, %v9059
    %v9080 = vpack.c.b16 %v9062, %v9061
    %v9081 = vpack.c.b16 %v9064, %v9063
    %v9082 = vpack.c.b16 %v9066, %v9065
    %v9083 = vpack.c.b16 %v9068, %v9067
    %v9084 = vpack.c.b16 %v9070, %v9069
    %v9100 = vsel %vm1520, %v8979, 0
    %v9103 = vsel %vm1520, %v8981, 0
    %v9106 = vsel %vm1520, %v8983, 0
    %v9109 = vsel %vm1520, %v8985, 0
    %9111 = vmatprep.subr.bf16.mxu0 0
    %9112 = vmatpush1.bf16.msra.mxu0 %v9071
    %9113 = vmatprep.subr.bf16.mxu0 0
    %9114 = vmatpush1.bf16.msra.mxu0 %v9072
    %9115 = vmatprep.subr.bf16.mxu0 0
    %9116 = vmatpush1.bf16.msra.mxu0 %v9073
    %9117 = vmatprep.subr.bf16.mxu0 0
    %9118 = vmatpush1.bf16.msra.mxu0 %v9074
    %9119 = vmatprep.subr.bf16.mxu0 0
    %9120 = vmatpush1.bf16.msra.mxu0 %v9075
    %9121 = vmatprep.subr.bf16.mxu0 0
    %9122 = vmatpush1.bf16.msra.mxu0 %v9076
    %9123 = vmatprep.subr.bf16.mxu0 0
    %9124 = vmatpush1.bf16.msra.mxu0 %v9077
    %9125 = vmatprep.subr.bf16.mxu0 0
    %9126 = vmatpush1.bf16.msra.mxu0 %v9078
    %9127 = vmatprep.subr.bf16.mxu0 0
    %9128 = vmatpush1.bf16.msra.mxu0 %v9079
    %9129 = vmatprep.subr.bf16.mxu0 0
    %9130 = vmatpush1.bf16.msra.mxu0 %v9080
    %9131 = vmatprep.subr.bf16.mxu0 0
    %9132 = vmatpush1.bf16.msra.mxu0 %v9081
    %9133 = vmatprep.subr.bf16.mxu0 0
    %9134 = vmatpush1.bf16.msra.mxu0 %v9082
    %9135 = vmatprep.subr.bf16.mxu0 0
    %9136 = vmatpush1.bf16.msra.mxu0 %v9083
    %9137 = vmatprep.subr.bf16.mxu0 0
    %9138 = vmatpush1.bf16.msra.mxu0 %v9084
    %9139 = vmatprep.subr.bf16.mxu0 0
    %9140 = vmatpush1.bf16.msra.mxu0 0
    %9141 = vmatprep.subr.bf16.mxu0 0
    %9142 = vmatpush1.bf16.msra.mxu0 0
    %9143 = vmatprep.mubr.bf16.mxu0 %v9100
    %9144 = vmatmul.mubr.bf16.gmra.mrb[0].mxu0 %v8978
    %v9145 = vpop.f32.mrb[0].mxu0
    %v9146 = vadd.f32 0.0, %v9145
    %v9147 = vpop.f32.mrb[0].mxu0
    %v9148 = vpop.f32.mrb[0].mxu0
    %v9149 = vadd.f32 0.0, %v9148
    %v9150 = vpop.f32.mrb[0].mxu0
    %9151 = vmatprep.mubr.bf16.mxu0 %v9103
    %9152 = vmatmul.mubr.bf16.gmra.mrb[0].mxu0 %v8980
    %v9153 = vpop.f32.mrb[0].mxu0
    %v9154 = vadd.f32 0.0, %v9153
    %v9155 = vpop.f32.mrb[0].mxu0
    %v9156 = vpop.f32.mrb[0].mxu0
    %v9157 = vadd.f32 0.0, %v9156
    %v9158 = vpop.f32.mrb[0].mxu0
    %9159 = vmatprep.mubr.bf16.mxu0 %v9106
    %9160 = vmatmul.mubr.bf16.gmra.mrb[0].mxu0 %v8982
    %v9161 = vpop.f32.mrb[0].mxu0
    %v9162 = vadd.f32 0.0, %v9161
    %v9163 = vpop.f32.mrb[0].mxu0
    %v9164 = vpop.f32.mrb[0].mxu0
    %v9165 = vadd.f32 0.0, %v9164
    %v9166 = vpop.f32.mrb[0].mxu0
    %9167 = vmatprep.mubr.bf16.mxu0 %v9109
    %9168 = vmatmul.mubr.bf16.gmra.mrb[0].mxu0 %v8984
    %v9169 = vpop.f32.mrb[0].mxu0
    %v9170 = vadd.f32 0.0, %v9169
    %v9171 = vpop.f32.mrb[0].mxu0
    %v9172 = vpop.f32.mrb[0].mxu0
    %v9173 = vadd.f32 0.0, %v9172
    %v9174 = vpop.f32.mrb[0].mxu0
    %9175 = vdwg.mxu0
    %v9176 = vadd.f32 %v8856, %v9146
    %v9177 = vadd.f32 %v8857, %v9149
    %v9178 = vadd.f32 %v8858, %v9154
    %v9179 = vadd.f32 %v8859, %v9157
    %v9180 = vadd.f32 %v8860, %v9162
    %v9181 = vadd.f32 %v8861, %v9165
    %v9182 = vadd.f32 %v8862, %v9170
    %v9183 = vadd.f32 %v8863, %v9173
    %s9184 = scalar_lea.vmem %s55, 192
    %v9185 = vld [vmem:[%s9184] sm:$0xf]
    %v9186 = vld [vmem:[%s9184 + $0x4] sm:$0xf]
    %v9187 = vld [vmem:[%s9184 + $0x8] sm:$0xf]
    %v9188 = vld [vmem:[%s9184 + $0xc] sm:$0xf]
    %v9189 = vld [vmem:[%s9184 + $0x10] sm:$0xf]
    %v9190 = vld [vmem:[%s9184 + $0x14] sm:$0xf]
    %v9191 = vld [vmem:[%s9184 + $0x18] sm:$0xf]
    %v9192 = vld [vmem:[%s9184 + $0x1c] sm:$0x3]
    %v9201 = vunpack.c.l.b16 %v9185
    %v9202 = vunpack.c.l.b16 %v9186
    %v9203 = vunpack.c.l.b16 %v9187
    %v9204 = vunpack.c.l.b16 %v9188
    %v9205 = vunpack.c.l.b16 %v9189
    %v9206 = vunpack.c.l.b16 %v9190
    %v9207 = vunpack.c.l.b16 %v9191
    %v9208 = vunpack.c.l.b16 %v9192
    %v9209 = vpack.c.b16 %v9202, %v9201
    %v9210 = vpack.c.b16 %v9204, %v9203
    %v9211 = vpack.c.b16 %v9206, %v9205
    %v9212 = vpack.c.b16 %v9208, %v9207
    %v9214 = vsel %vm1222, %v9209, 0
    %v9217 = vsel %vm1222, %v9210, 0
    %v9220 = vsel %vm1222, %v9211, 0
    %v9223 = vsel %vm1222, %v9212, 0
    %9225 = vmatprep.subr.bf16.mxu0 %v7320
    %9226 = vmatpush1.bf16.msra.mxu0 %v7317
    %9227 = vmatprep.subr.bf16.mxu0 0
    %9228 = vmatpush1.bf16.msra.mxu0 0
    %9229 = vmatprep.subr.bf16.mxu0 0
    %9230 = vmatpush1.bf16.msra.mxu0 0
    %9231 = vmatprep.subr.bf16.mxu0 0
    %9232 = vmatpush1.bf16.msra.mxu0 0
    %9233 = vmatprep.subr.bf16.mxu0 0
    %9234 = vmatpush1.bf16.msra.mxu0 0
    %9235 = vmatprep.subr.bf16.mxu0 0
    %9236 = vmatpush1.bf16.msra.mxu0 0
    %9237 = vmatprep.subr.bf16.mxu0 0
    %9238 = vmatpush1.bf16.msra.mxu0 0
    %9239 = vmatprep.subr.bf16.mxu0 0
    %9240 = vmatpush1.bf16.msra.mxu0 0
    %9241 = vmatprep.subr.bf16.mxu0 0
    %9242 = vmatpush1.bf16.msra.mxu0 0
    %9243 = vmatprep.subr.bf16.mxu0 0
    %9244 = vmatpush1.bf16.msra.mxu0 0
    %9245 = vmatprep.subr.bf16.mxu0 0
    %9246 = vmatpush1.bf16.msra.mxu0 0
    %9247 = vmatprep.subr.bf16.mxu0 0
    %9248 = vmatpush1.bf16.msra.mxu0 0
    %9249 = vmatprep.subr.bf16.mxu0 0
    %9250 = vmatpush1.bf16.msra.mxu0 0
    %9251 = vmatprep.subr.bf16.mxu0 0
    %9252 = vmatpush1.bf16.msra.mxu0 0
    %9253 = vmatprep.subr.bf16.mxu0 0
    %9254 = vmatpush1.bf16.msra.mxu0 0
    %9255 = vmatprep.subr.bf16.mxu0 0
    %9256 = vmatpush1.bf16.msra.mxu0 0
    %9257 = vmatprep.mubr.bf16.mxu0 0
    %9258 = vmatmul.mubr.bf16.gmra.mrb[0].mxu0 %v9214
    %v9259 = vpop.f32.mrb[0].mxu0
    %v9260 = vadd.f32 0.0, %v9259
    %v9261 = vpop.f32.mrb[0].mxu0
    %v9262 = vadd.f32 0.0, %v9261
    %v9263 = vpop.f32.mrb[0].mxu0
    %v9264 = vadd.f32 0.0, %v9263
    %v9265 = vpop.f32.mrb[0].mxu0
    %v9266 = vadd.f32 0.0, %v9265
    %9267 = vmatprep.mubr.bf16.mxu0 0
    %9268 = vmatmul.mubr.bf16.gmra.mrb[0].mxu0 %v9217
    %v9269 = vpop.f32.mrb[0].mxu0
    %v9270 = vadd.f32 0.0, %v9269
    %v9271 = vpop.f32.mrb[0].mxu0
    %v9272 = vadd.f32 0.0, %v9271
    %v9273 = vpop.f32.mrb[0].mxu0
    %v9274 = vadd.f32 0.0, %v9273
    %v9275 = vpop.f32.mrb[0].mxu0
    %v9276 = vadd.f32 0.0, %v9275
    %9277 = vmatprep.mubr.bf16.mxu0 0
    %9278 = vmatmul.mubr.bf16.gmra.mrb[0].mxu0 %v9220
    %v9279 = vpop.f32.mrb[0].mxu0
    %v9280 = vadd.f32 0.0, %v9279
    %v9281 = vpop.f32.mrb[0].mxu0
    %v9282 = vadd.f32 0.0, %v9281
    %v9283 = vpop.f32.mrb[0].mxu0
    %v9284 = vadd.f32 0.0, %v9283
    %v9285 = vpop.f32.mrb[0].mxu0
    %v9286 = vadd.f32 0.0, %v9285
    %9287 = vmatprep.mubr.bf16.mxu0 0
    %9288 = vmatmul.mubr.bf16.gmra.mrb[0].mxu0 %v9223
    %v9289 = vpop.f32.mrb[0].mxu0
    %v9290 = vadd.f32 0.0, %v9289
    %v9291 = vpop.f32.mrb[0].mxu0
    %v9292 = vadd.f32 0.0, %v9291
    %v9293 = vpop.f32.mrb[0].mxu0
    %v9294 = vadd.f32 0.0, %v9293
    %v9295 = vpop.f32.mrb[0].mxu0
    %v9296 = vadd.f32 0.0, %v9295
    %9297 = vdwg.mxu0
    %v9298 = vpack.c.bf16 %v9264, %v9260
    %v9299 = vpack.c.bf16 %v9266, %v9262
    %v9300 = vpack.c.bf16 %v9274, %v9270
    %v9301 = vpack.c.bf16 %v9276, %v9272
    %v9302 = vpack.c.bf16 %v9284, %v9280
    %v9303 = vpack.c.bf16 %v9286, %v9282
    %v9304 = vpack.c.bf16 %v9294, %v9290
    %v9305 = vpack.c.bf16 %v9296, %v9292
    %s9306 = scalar_lea.vmem %s57, 672
    %v9307 = vld [vmem:[%s9306] sm:$0xf]
    %v9308 = vld [vmem:[%s9306 + $0x4] sm:$0xf]
    %v9309 = vld [vmem:[%s9306 + $0x8] sm:$0xf]
    %v9310 = vld [vmem:[%s9306 + $0xc] sm:$0xf]
    %v9311 = vld [vmem:[%s9306 + $0x10] sm:$0xf]
    %v9312 = vld [vmem:[%s9306 + $0x14] sm:$0xf]
    %v9313 = vld [vmem:[%s9306 + $0x18] sm:$0xf]
    %v9314 = vld [vmem:[%s9306 + $0x1c] sm:$0xf]
    %v9315 = vld [vmem:[%s9306 + $0x20] sm:$0xf]
    %v9316 = vld [vmem:[%s9306 + $0x24] sm:$0xf]
    %v9317 = vld [vmem:[%s9306 + $0x28] sm:$0xf]
    %v9318 = vld [vmem:[%s9306 + $0x2c] sm:$0xf]
    %v9319 = vld [vmem:[%s9306 + $0x30] sm:$0xf]
    %v9320 = vld [vmem:[%s9306 + $0x34] sm:$0xf]
    %v9321 = vld [vmem:[%s9306 + $0x38] sm:$0xf]
    %v9322 = vld [vmem:[%s9306 + $0x3c] sm:$0xf]
    %v9323 = vld [vmem:[%s9306 + $0x40] sm:$0xf]
    %v9324 = vld [vmem:[%s9306 + $0x44] sm:$0xf]
    %v9325 = vld [vmem:[%s9306 + $0x48] sm:$0xf]
    %v9326 = vld [vmem:[%s9306 + $0x4c] sm:$0xf]
    %v9327 = vld [vmem:[%s9306 + $0x50] sm:$0xf]
    %v9328 = vld [vmem:[%s9306 + $0x54] sm:$0xf]
    %v9329 = vld [vmem:[%s9306 + $0x58] sm:$0xf]
    %v9330 = vld [vmem:[%s9306 + $0x5c] sm:$0xf]
    %v9331 = vld [vmem:[%s9306 + $0x60] sm:$0xf]
    %v9332 = vld [vmem:[%s9306 + $0x64] sm:$0xf]
    %v9333 = vld [vmem:[%s9306 + $0x68] sm:$0xf]
    %v9334 = vld [vmem:[%s9306 + $0x6c] sm:$0xf]
    %v9363 = vunpack.c.l.b16 %v9307
    %v9364 = vunpack.c.l.b16 %v9308
    %v9365 = vunpack.c.l.b16 %v9309
    %v9366 = vunpack.c.l.b16 %v9310
    %v9367 = vunpack.c.l.b16 %v9311
    %v9368 = vunpack.c.l.b16 %v9312
    %v9369 = vunpack.c.l.b16 %v9313
    %v9370 = vunpack.c.l.b16 %v9314
    %v9371 = vunpack.c.l.b16 %v9315
    %v9372 = vunpack.c.l.b16 %v9316
    %v9373 = vunpack.c.l.b16 %v9317
    %v9374 = vunpack.c.l.b16 %v9318
    %v9375 = vunpack.c.l.b16 %v9319
    %v9376 = vunpack.c.l.b16 %v9320
    %v9377 = vunpack.c.l.b16 %v9321
    %v9378 = vunpack.c.l.b16 %v9322
    %v9379 = vunpack.c.l.b16 %v9323
    %v9380 = vunpack.c.l.b16 %v9324
    %v9381 = vunpack.c.l.b16 %v9325
    %v9382 = vunpack.c.l.b16 %v9326
    %v9383 = vunpack.c.l.b16 %v9327
    %v9384 = vunpack.c.l.b16 %v9328
    %v9385 = vunpack.c.l.b16 %v9329
    %v9386 = vunpack.c.l.b16 %v9330
    %v9387 = vunpack.c.l.b16 %v9331
    %v9388 = vunpack.c.l.b16 %v9332
    %v9389 = vunpack.c.l.b16 %v9333
    %v9390 = vunpack.c.l.b16 %v9334
    %v9391 = vpack.c.b16 %v9364, %v9363
    %v9392 = vpack.c.b16 %v9366, %v9365
    %v9393 = vpack.c.b16 %v9368, %v9367
    %v9394 = vpack.c.b16 %v9370, %v9369
    %v9395 = vpack.c.b16 %v9372, %v9371
    %v9396 = vpack.c.b16 %v9374, %v9373
    %v9397 = vpack.c.b16 %v9376, %v9375
    %v9398 = vpack.c.b16 %v9378, %v9377
    %v9399 = vpack.c.b16 %v9380, %v9379
    %v9400 = vpack.c.b16 %v9382, %v9381
    %v9401 = vpack.c.b16 %v9384, %v9383
    %v9402 = vpack.c.b16 %v9386, %v9385
    %v9403 = vpack.c.b16 %v9388, %v9387
    %v9404 = vpack.c.b16 %v9390, %v9389
    %v9420 = vsel %vm1520, %v9299, 0
    %v9423 = vsel %vm1520, %v9301, 0
    %v9426 = vsel %vm1520, %v9303, 0
    %v9429 = vsel %vm1520, %v9305, 0
    %9431 = vmatprep.subr.bf16.mxu0 0
    %9432 = vmatpush1.bf16.msra.mxu0 %v9391
    %9433 = vmatprep.subr.bf16.mxu0 0
    %9434 = vmatpush1.bf16.msra.mxu0 %v9392
    %9435 = vmatprep.subr.bf16.mxu0 0
    %9436 = vmatpush1.bf16.msra.mxu0 %v9393
    %9437 = vmatprep.subr.bf16.mxu0 0
    %9438 = vmatpush1.bf16.msra.mxu0 %v9394
    %9439 = vmatprep.subr.bf16.mxu0 0
    %9440 = vmatpush1.bf16.msra.mxu0 %v9395
    %9441 = vmatprep.subr.bf16.mxu0 0
    %9442 = vmatpush1.bf16.msra.mxu0 %v9396
    %9443 = vmatprep.subr.bf16.mxu0 0
    %9444 = vmatpush1.bf16.msra.mxu0 %v9397
    %9445 = vmatprep.subr.bf16.mxu0 0
    %9446 = vmatpush1.bf16.msra.mxu0 %v9398
    %9447 = vmatprep.subr.bf16.mxu0 0
    %9448 = vmatpush1.bf16.msra.mxu0 %v9399
    %9449 = vmatprep.subr.bf16.mxu0 0
    %9450 = vmatpush1.bf16.msra.mxu0 %v9400
    %9451 = vmatprep.subr.bf16.mxu0 0
    %9452 = vmatpush1.bf16.msra.mxu0 %v9401
    %9453 = vmatprep.subr.bf16.mxu0 0
    %9454 = vmatpush1.bf16.msra.mxu0 %v9402
    %9455 = vmatprep.subr.bf16.mxu0 0
    %9456 = vmatpush1.bf16.msra.mxu0 %v9403
    %9457 = vmatprep.subr.bf16.mxu0 0
    %9458 = vmatpush1.bf16.msra.mxu0 %v9404
    %9459 = vmatprep.subr.bf16.mxu0 0
    %9460 = vmatpush1.bf16.msra.mxu0 0
    %9461 = vmatprep.subr.bf16.mxu0 0
    %9462 = vmatpush1.bf16.msra.mxu0 0
    %9463 = vmatprep.mubr.bf16.mxu0 %v9420
    %9464 = vmatmul.mubr.bf16.gmra.mrb[0].mxu0 %v9298
    %v9465 = vpop.f32.mrb[0].mxu0
    %v9466 = vadd.f32 0.0, %v9465
    %v9467 = vpop.f32.mrb[0].mxu0
    %v9468 = vpop.f32.mrb[0].mxu0
    %v9469 = vadd.f32 0.0, %v9468
    %v9470 = vpop.f32.mrb[0].mxu0
    %9471 = vmatprep.mubr.bf16.mxu0 %v9423
    %9472 = vmatmul.mubr.bf16.gmra.mrb[0].mxu0 %v9300
    %v9473 = vpop.f32.mrb[0].mxu0
    %v9474 = vadd.f32 0.0, %v9473
    %v9475 = vpop.f32.mrb[0].mxu0
    %v9476 = vpop.f32.mrb[0].mxu0
    %v9477 = vadd.f32 0.0, %v9476
    %v9478 = vpop.f32.mrb[0].mxu0
    %9479 = vmatprep.mubr.bf16.mxu0 %v9426
    %9480 = vmatmul.mubr.bf16.gmra.mrb[0].mxu0 %v9302
    %v9481 = vpop.f32.mrb[0].mxu0
    %v9482 = vadd.f32 0.0, %v9481
    %v9483 = vpop.f32.mrb[0].mxu0
    %v9484 = vpop.f32.mrb[0].mxu0
    %v9485 = vadd.f32 0.0, %v9484
    %v9486 = vpop.f32.mrb[0].mxu0
    %9487 = vmatprep.mubr.bf16.mxu0 %v9429
    %9488 = vmatmul.mubr.bf16.gmra.mrb[0].mxu0 %v9304
    %v9489 = vpop.f32.mrb[0].mxu0
    %v9490 = vadd.f32 0.0, %v9489
    %v9491 = vpop.f32.mrb[0].mxu0
    %v9492 = vpop.f32.mrb[0].mxu0
    %v9493 = vadd.f32 0.0, %v9492
    %v9494 = vpop.f32.mrb[0].mxu0
    %9495 = vdwg.mxu0
    %v9496 = vadd.f32 %v9176, %v9466
    %v9497 = vadd.f32 %v9177, %v9469
    %v9498 = vadd.f32 %v9178, %v9474
    %v9499 = vadd.f32 %v9179, %v9477
    %v9500 = vadd.f32 %v9180, %v9482
    %v9501 = vadd.f32 %v9181, %v9485
    %v9502 = vadd.f32 %v9182, %v9490
    %v9503 = vadd.f32 %v9183, %v9493
    %s9504 = scalar_lea.vmem %s55, 224
    %v9505 = vld [vmem:[%s9504] sm:$0xf]
    %v9506 = vld [vmem:[%s9504 + $0x4] sm:$0xf]
    %v9507 = vld [vmem:[%s9504 + $0x8] sm:$0xf]
    %v9508 = vld [vmem:[%s9504 + $0xc] sm:$0xf]
    %v9509 = vld [vmem:[%s9504 + $0x10] sm:$0xf]
    %v9510 = vld [vmem:[%s9504 + $0x14] sm:$0xf]
    %v9511 = vld [vmem:[%s9504 + $0x18] sm:$0xf]
    %v9512 = vld [vmem:[%s9504 + $0x1c] sm:$0x3]
    %v9521 = vunpack.c.l.b16 %v9505
    %v9522 = vunpack.c.l.b16 %v9506
    %v9523 = vunpack.c.l.b16 %v9507
    %v9524 = vunpack.c.l.b16 %v9508
    %v9525 = vunpack.c.l.b16 %v9509
    %v9526 = vunpack.c.l.b16 %v9510
    %v9527 = vunpack.c.l.b16 %v9511
    %v9528 = vunpack.c.l.b16 %v9512
    %v9529 = vpack.c.b16 %v9522, %v9521
    %v9530 = vpack.c.b16 %v9524, %v9523
    %v9531 = vpack.c.b16 %v9526, %v9525
    %v9532 = vpack.c.b16 %v9528, %v9527
    %v9534 = vsel %vm1222, %v9529, 0
    %v9537 = vsel %vm1222, %v9530, 0
    %v9540 = vsel %vm1222, %v9531, 0
    %v9543 = vsel %vm1222, %v9532, 0
    %9545 = vmatprep.subr.bf16.mxu0 %v7320
    %9546 = vmatpush1.bf16.msra.mxu0 %v7317
    %9547 = vmatprep.subr.bf16.mxu0 0
    %9548 = vmatpush1.bf16.msra.mxu0 0
    %9549 = vmatprep.subr.bf16.mxu0 0
    %9550 = vmatpush1.bf16.msra.mxu0 0
    %9551 = vmatprep.subr.bf16.mxu0 0
    %9552 = vmatpush1.bf16.msra.mxu0 0
    %9553 = vmatprep.subr.bf16.mxu0 0
    %9554 = vmatpush1.bf16.msra.mxu0 0
    %9555 = vmatprep.subr.bf16.mxu0 0
    %9556 = vmatpush1.bf16.msra.mxu0 0
    %9557 = vmatprep.subr.bf16.mxu0 0
    %9558 = vmatpush1.bf16.msra.mxu0 0
    %9559 = vmatprep.subr.bf16.mxu0 0
    %9560 = vmatpush1.bf16.msra.mxu0 0
    %9561 = vmatprep.subr.bf16.mxu0 0
    %9562 = vmatpush1.bf16.msra.mxu0 0
    %9563 = vmatprep.subr.bf16.mxu0 0
    %9564 = vmatpush1.bf16.msra.mxu0 0
    %9565 = vmatprep.subr.bf16.mxu0 0
    %9566 = vmatpush1.bf16.msra.mxu0 0
    %9567 = vmatprep.subr.bf16.mxu0 0
    %9568 = vmatpush1.bf16.msra.mxu0 0
    %9569 = vmatprep.subr.bf16.mxu0 0
    %9570 = vmatpush1.bf16.msra.mxu0 0
    %9571 = vmatprep.subr.bf16.mxu0 0
    %9572 = vmatpush1.bf16.msra.mxu0 0
    %9573 = vmatprep.subr.bf16.mxu0 0
    %9574 = vmatpush1.bf16.msra.mxu0 0
    %9575 = vmatprep.subr.bf16.mxu0 0
    %9576 = vmatpush1.bf16.msra.mxu0 0
    %9577 = vmatprep.mubr.bf16.mxu0 0
    %9578 = vmatmul.mubr.bf16.gmra.mrb[0].mxu0 %v9534
    %v9579 = vpop.f32.mrb[0].mxu0
    %v9580 = vadd.f32 0.0, %v9579
    %v9581 = vpop.f32.mrb[0].mxu0
    %v9582 = vadd.f32 0.0, %v9581
    %v9583 = vpop.f32.mrb[0].mxu0
    %v9584 = vadd.f32 0.0, %v9583
    %v9585 = vpop.f32.mrb[0].mxu0
    %v9586 = vadd.f32 0.0, %v9585
    %9587 = vmatprep.mubr.bf16.mxu0 0
    %9588 = vmatmul.mubr.bf16.gmra.mrb[0].mxu0 %v9537
    %v9589 = vpop.f32.mrb[0].mxu0
    %v9590 = vadd.f32 0.0, %v9589
    %v9591 = vpop.f32.mrb[0].mxu0
    %v9592 = vadd.f32 0.0, %v9591
    %v9593 = vpop.f32.mrb[0].mxu0
    %v9594 = vadd.f32 0.0, %v9593
    %v9595 = vpop.f32.mrb[0].mxu0
    %v9596 = vadd.f32 0.0, %v9595
    %9597 = vmatprep.mubr.bf16.mxu0 0
    %9598 = vmatmul.mubr.bf16.gmra.mrb[0].mxu0 %v9540
    %v9599 = vpop.f32.mrb[0].mxu0
    %v9600 = vadd.f32 0.0, %v9599
    %v9601 = vpop.f32.mrb[0].mxu0
    %v9602 = vadd.f32 0.0, %v9601
    %v9603 = vpop.f32.mrb[0].mxu0
    %v9604 = vadd.f32 0.0, %v9603
    %v9605 = vpop.f32.mrb[0].mxu0
    %v9606 = vadd.f32 0.0, %v9605
    %9607 = vmatprep.mubr.bf16.mxu0 0
    %9608 = vmatmul.mubr.bf16.gmra.mrb[0].mxu0 %v9543
    %v9609 = vpop.f32.mrb[0].mxu0
    %v9610 = vadd.f32 0.0, %v9609
    %v9611 = vpop.f32.mrb[0].mxu0
    %v9612 = vadd.f32 0.0, %v9611
    %v9613 = vpop.f32.mrb[0].mxu0
    %v9614 = vadd.f32 0.0, %v9613
    %v9615 = vpop.f32.mrb[0].mxu0
    %v9616 = vadd.f32 0.0, %v9615
    %9617 = vdwg.mxu0
    %v9618 = vpack.c.bf16 %v9584, %v9580
    %v9619 = vpack.c.bf16 %v9586, %v9582
    %v9620 = vpack.c.bf16 %v9594, %v9590
    %v9621 = vpack.c.bf16 %v9596, %v9592
    %v9622 = vpack.c.bf16 %v9604, %v9600
    %v9623 = vpack.c.bf16 %v9606, %v9602
    %v9624 = vpack.c.bf16 %v9614, %v9610
    %v9625 = vpack.c.bf16 %v9616, %v9612
    %s9626 = scalar_lea.vmem %s57, 784
    %v9627 = vld [vmem:[%s9626] sm:$0xf]
    %v9628 = vld [vmem:[%s9626 + $0x4] sm:$0xf]
    %v9629 = vld [vmem:[%s9626 + $0x8] sm:$0xf]
    %v9630 = vld [vmem:[%s9626 + $0xc] sm:$0xf]
    %v9631 = vld [vmem:[%s9626 + $0x10] sm:$0xf]
    %v9632 = vld [vmem:[%s9626 + $0x14] sm:$0xf]
    %v9633 = vld [vmem:[%s9626 + $0x18] sm:$0xf]
    %v9634 = vld [vmem:[%s9626 + $0x1c] sm:$0xf]
    %v9635 = vld [vmem:[%s9626 + $0x20] sm:$0xf]
    %v9636 = vld [vmem:[%s9626 + $0x24] sm:$0xf]
    %v9637 = vld [vmem:[%s9626 + $0x28] sm:$0xf]
    %v9638 = vld [vmem:[%s9626 + $0x2c] sm:$0xf]
    %v9639 = vld [vmem:[%s9626 + $0x30] sm:$0xf]
    %v9640 = vld [vmem:[%s9626 + $0x34] sm:$0xf]
    %v9641 = vld [vmem:[%s9626 + $0x38] sm:$0xf]
    %v9642 = vld [vmem:[%s9626 + $0x3c] sm:$0xf]
    %v9643 = vld [vmem:[%s9626 + $0x40] sm:$0xf]
    %v9644 = vld [vmem:[%s9626 + $0x44] sm:$0xf]
    %v9645 = vld [vmem:[%s9626 + $0x48] sm:$0xf]
    %v9646 = vld [vmem:[%s9626 + $0x4c] sm:$0xf]
    %v9647 = vld [vmem:[%s9626 + $0x50] sm:$0xf]
    %v9648 = vld [vmem:[%s9626 + $0x54] sm:$0xf]
    %v9649 = vld [vmem:[%s9626 + $0x58] sm:$0xf]
    %v9650 = vld [vmem:[%s9626 + $0x5c] sm:$0xf]
    %v9651 = vld [vmem:[%s9626 + $0x60] sm:$0xf]
    %v9652 = vld [vmem:[%s9626 + $0x64] sm:$0xf]
    %v9653 = vld [vmem:[%s9626 + $0x68] sm:$0xf]
    %v9654 = vld [vmem:[%s9626 + $0x6c] sm:$0xf]
    %v9683 = vunpack.c.l.b16 %v9627
    %v9684 = vunpack.c.l.b16 %v9628
    %v9685 = vunpack.c.l.b16 %v9629
    %v9686 = vunpack.c.l.b16 %v9630
    %v9687 = vunpack.c.l.b16 %v9631
    %v9688 = vunpack.c.l.b16 %v9632
    %v9689 = vunpack.c.l.b16 %v9633
    %v9690 = vunpack.c.l.b16 %v9634
    %v9691 = vunpack.c.l.b16 %v9635
    %v9692 = vunpack.c.l.b16 %v9636
    %v9693 = vunpack.c.l.b16 %v9637
    %v9694 = vunpack.c.l.b16 %v9638
    %v9695 = vunpack.c.l.b16 %v9639
    %v9696 = vunpack.c.l.b16 %v9640
    %v9697 = vunpack.c.l.b16 %v9641
    %v9698 = vunpack.c.l.b16 %v9642
    %v9699 = vunpack.c.l.b16 %v9643
    %v9700 = vunpack.c.l.b16 %v9644
    %v9701 = vunpack.c.l.b16 %v9645
    %v9702 = vunpack.c.l.b16 %v9646
    %v9703 = vunpack.c.l.b16 %v9647
    %v9704 = vunpack.c.l.b16 %v9648
    %v9705 = vunpack.c.l.b16 %v9649
    %v9706 = vunpack.c.l.b16 %v9650
    %v9707 = vunpack.c.l.b16 %v9651
    %v9708 = vunpack.c.l.b16 %v9652
    %v9709 = vunpack.c.l.b16 %v9653
    %v9710 = vunpack.c.l.b16 %v9654
    %v9711 = vpack.c.b16 %v9684, %v9683
    %v9712 = vpack.c.b16 %v9686, %v9685
    %v9713 = vpack.c.b16 %v9688, %v9687
    %v9714 = vpack.c.b16 %v9690, %v9689
    %v9715 = vpack.c.b16 %v9692, %v9691
    %v9716 = vpack.c.b16 %v9694, %v9693
    %v9717 = vpack.c.b16 %v9696, %v9695
    %v9718 = vpack.c.b16 %v9698, %v9697
    %v9719 = vpack.c.b16 %v9700, %v9699
    %v9720 = vpack.c.b16 %v9702, %v9701
    %v9721 = vpack.c.b16 %v9704, %v9703
    %v9722 = vpack.c.b16 %v9706, %v9705
    %v9723 = vpack.c.b16 %v9708, %v9707
    %v9724 = vpack.c.b16 %v9710, %v9709
    %v9740 = vsel %vm1520, %v9619, 0
    %v9743 = vsel %vm1520, %v9621, 0
    %v9746 = vsel %vm1520, %v9623, 0
    %v9749 = vsel %vm1520, %v9625, 0
    %9751 = vmatprep.subr.bf16.mxu0 0
    %9752 = vmatpush1.bf16.msra.mxu0 %v9711
    %9753 = vmatprep.subr.bf16.mxu0 0
    %9754 = vmatpush1.bf16.msra.mxu0 %v9712
    %9755 = vmatprep.subr.bf16.mxu0 0
    %9756 = vmatpush1.bf16.msra.mxu0 %v9713
    %9757 = vmatprep.subr.bf16.mxu0 0
    %9758 = vmatpush1.bf16.msra.mxu0 %v9714
    %9759 = vmatprep.subr.bf16.mxu0 0
    %9760 = vmatpush1.bf16.msra.mxu0 %v9715
    %9761 = vmatprep.subr.bf16.mxu0 0
    %9762 = vmatpush1.bf16.msra.mxu0 %v9716
    %9763 = vmatprep.subr.bf16.mxu0 0
    %9764 = vmatpush1.bf16.msra.mxu0 %v9717
    %9765 = vmatprep.subr.bf16.mxu0 0
    %9766 = vmatpush1.bf16.msra.mxu0 %v9718
    %9767 = vmatprep.subr.bf16.mxu0 0
    %9768 = vmatpush1.bf16.msra.mxu0 %v9719
    %9769 = vmatprep.subr.bf16.mxu0 0
    %9770 = vmatpush1.bf16.msra.mxu0 %v9720
    %9771 = vmatprep.subr.bf16.mxu0 0
    %9772 = vmatpush1.bf16.msra.mxu0 %v9721
    %9773 = vmatprep.subr.bf16.mxu0 0
    %9774 = vmatpush1.bf16.msra.mxu0 %v9722
    %9775 = vmatprep.subr.bf16.mxu0 0
    %9776 = vmatpush1.bf16.msra.mxu0 %v9723
    %9777 = vmatprep.subr.bf16.mxu0 0
    %9778 = vmatpush1.bf16.msra.mxu0 %v9724
    %9779 = vmatprep.subr.bf16.mxu0 0
    %9780 = vmatpush1.bf16.msra.mxu0 0
    %9781 = vmatprep.subr.bf16.mxu0 0
    %9782 = vmatpush1.bf16.msra.mxu0 0
    %9783 = vmatprep.mubr.bf16.mxu0 %v9740
    %9784 = vmatmul.mubr.bf16.gmra.mrb[0].mxu0 %v9618
    %v9785 = vpop.f32.mrb[0].mxu0
    %v9786 = vadd.f32 0.0, %v9785
    %v9787 = vpop.f32.mrb[0].mxu0
    %v9788 = vpop.f32.mrb[0].mxu0
    %v9789 = vadd.f32 0.0, %v9788
    %v9790 = vpop.f32.mrb[0].mxu0
    %9791 = vmatprep.mubr.bf16.mxu0 %v9743
    %9792 = vmatmul.mubr.bf16.gmra.mrb[0].mxu0 %v9620
    %v9793 = vpop.f32.mrb[0].mxu0
    %v9794 = vadd.f32 0.0, %v9793
    %v9795 = vpop.f32.mrb[0].mxu0
    %v9796 = vpop.f32.mrb[0].mxu0
    %v9797 = vadd.f32 0.0, %v9796
    %v9798 = vpop.f32.mrb[0].mxu0
    %9799 = vmatprep.mubr.bf16.mxu0 %v9746
    %9800 = vmatmul.mubr.bf16.gmra.mrb[0].mxu0 %v9622
    %v9801 = vpop.f32.mrb[0].mxu0
    %v9802 = vadd.f32 0.0, %v9801
    %v9803 = vpop.f32.mrb[0].mxu0
    %v9804 = vpop.f32.mrb[0].mxu0
    %v9805 = vadd.f32 0.0, %v9804
    %v9806 = vpop.f32.mrb[0].mxu0
    %9807 = vmatprep.mubr.bf16.mxu0 %v9749
    %9808 = vmatmul.mubr.bf16.gmra.mrb[0].mxu0 %v9624
    %v9809 = vpop.f32.mrb[0].mxu0
    %v9810 = vadd.f32 0.0, %v9809
    %v9811 = vpop.f32.mrb[0].mxu0
    %v9812 = vpop.f32.mrb[0].mxu0
    %v9813 = vadd.f32 0.0, %v9812
    %v9814 = vpop.f32.mrb[0].mxu0
    %9815 = vdwg.mxu0
    %v9816 = vadd.f32 %v9496, %v9786
    %v9817 = vadd.f32 %v9497, %v9789
    %v9818 = vadd.f32 %v9498, %v9794
    %v9819 = vadd.f32 %v9499, %v9797
    %v9820 = vadd.f32 %v9500, %v9802
    %v9821 = vadd.f32 %v9501, %v9805
    %v9822 = vadd.f32 %v9502, %v9810
    %v9823 = vadd.f32 %v9503, %v9813
    %v9824 = vld [vmem:[%s59] sm:$0x1]
    %v9826 = vlaneseq
    %v9827 = vshrl.u32 %v9826, 7
    %v9828 = vsub.s32 0, %v9827
    %v9829 = vrot.slane %v9824, %v9828
    %v9831 = vadd.f32 %v9816, %v9829
    %v9832 = vadd.f32 %v9817, %v9829
    %v9833 = vadd.f32 %v9818, %v9829
    %v9834 = vadd.f32 %v9819, %v9829
    %v9835 = vadd.f32 %v9820, %v9829
    %v9836 = vadd.f32 %v9821, %v9829
    %v9837 = vadd.f32 %v9822, %v9829
    %v9838 = vadd.f32 %v9823, %v9829
    %v9839 = vsub.f32 0.0, %v9831
    %v9840 = vsub.f32 0.0, %v9832
    %v9841 = vsub.f32 0.0, %v9833
    %v9842 = vsub.f32 0.0, %v9834
    %v9843 = vsub.f32 0.0, %v9835
    %v9844 = vsub.f32 0.0, %v9836
    %v9845 = vsub.f32 0.0, %v9837
    %v9846 = vsub.f32 0.0, %v9838
    %v9847 = vmul.f32 %v9839, 1.442695
    %v9848 = vpow.pop %v9847
    %v9849 = vmul.f32 %v9840, 1.442695
    %v9850 = vpow.pop %v9849
    %v9851 = vmul.f32 %v9841, 1.442695
    %v9852 = vpow.pop %v9851
    %v9853 = vmul.f32 %v9842, 1.442695
    %v9854 = vpow.pop %v9853
    %v9855 = vmul.f32 %v9843, 1.442695
    %v9856 = vpow.pop %v9855
    %v9857 = vmul.f32 %v9844, 1.442695
    %v9858 = vpow.pop %v9857
    %v9859 = vmul.f32 %v9845, 1.442695
    %v9860 = vpow.pop %v9859
    %v9861 = vmul.f32 %v9846, 1.442695
    %v9862 = vpow.pop %v9861
    %v9863 = vadd.f32 %v9848, 1.0
    %v9864 = vadd.f32 %v9850, 1.0
    %v9865 = vadd.f32 %v9852, 1.0
    %v9866 = vadd.f32 %v9854, 1.0
    %v9867 = vadd.f32 %v9856, 1.0
    %v9868 = vadd.f32 %v9858, 1.0
    %v9869 = vadd.f32 %v9860, 1.0
    %v9870 = vadd.f32 %v9862, 1.0
    %v9871 = vrcp.pop %v9863
    %v9872 = vmul.f32 1.0, %v9871
    %v9873 = vrcp.pop %v9864
    %v9874 = vmul.f32 1.0, %v9873
    %v9875 = vrcp.pop %v9865
    %v9876 = vmul.f32 1.0, %v9875
    %v9877 = vrcp.pop %v9866
    %v9878 = vmul.f32 1.0, %v9877
    %v9879 = vrcp.pop %v9867
    %v9880 = vmul.f32 1.0, %v9879
    %v9881 = vrcp.pop %v9868
    %v9882 = vmul.f32 1.0, %v9881
    %v9883 = vrcp.pop %v9869
    %v9884 = vmul.f32 1.0, %v9883
    %v9885 = vrcp.pop %v9870
    %v9886 = vmul.f32 1.0, %v9885
    %9887 = vst.msk [vmem:[%s61] sm:$0xff] %vm283, %v9872
    %9888 = vst.msk [vmem:[%s61 + $0x8] sm:$0xff] %vm283, %v9874
    %9889 = vst.msk [vmem:[%s61 + $0x10] sm:$0xff] %vm283, %v9876
    %9890 = vst.msk [vmem:[%s61 + $0x18] sm:$0xff] %vm283, %v9878
    %9891 = vst.msk [vmem:[%s61 + $0x20] sm:$0xff] %vm283, %v9880
    %9892 = vst.msk [vmem:[%s61 + $0x28] sm:$0xff] %vm283, %v9882
    %9893 = vst.msk [vmem:[%s61 + $0x30] sm:$0xff] %vm283, %v9884
    %vm9894 = vcmask 240640
    %9895 = vst.msk [vmem:[%s61 + $0x38] sm:$0xf] %vm9894, %v9886
    // Predicated region
    $region122: #{cvae_forward.1} parent=1 // pred_check
      _
    $region123: #{cvae_forward.1} parent=1 // pred_check_branch
      %9897 = sbr.rel (0) target = $region125
    $region124: #{cvae_forward.1} parent=1 // pred_region
      _
    $region125: #{cvae_forward.1} parent=1 // pred_fallthru
      _
    // Predicated region
    $region126: #{cvae_forward.1} parent=1 // pred_check
      _
    $region127: #{cvae_forward.1} parent=1 // pred_check_branch
      %9899 = sbr.rel (0) target = $region129
    $region128: #{cvae_forward.1} parent=1 // pred_region
      %s9901 = ssub.s32 32, 32
      %9902 = vsyncadd [#allocation3], %s9901
      %s9904 = sshll.u32 [#allocation2], 4
      %s9905 = int_to_ptr.vmem [resolvable:$true] %s9904
      %9907 = dma.vmem_to_hbm [thread:$0]  %s9905, 32, %s63, [#allocation3]
    $region129: #{cvae_forward.1} parent=1 // pred_fallthru
      _
    // Predicated region
    $region130: #{cvae_forward.1} parent=1 // pred_check
      _
    $region131: #{cvae_forward.1} parent=1 // pred_check_branch
      %9909 = sbr.rel (0) target = $region133
    $region132: #{cvae_forward.1} parent=1 // pred_region
      %s9911 = ssub.s32 32, 32
      %9912 = vsyncadd [#allocation5], %s9911
      %s9914 = sshll.u32 [#allocation4], 4
      %s9915 = int_to_ptr.vmem [resolvable:$true] %s9914
      %9917 = dma.vmem_to_hbm [thread:$0]  %s9915, 32, %s65, [#allocation5]
    $region133: #{cvae_forward.1} parent=1 // pred_fallthru
      _
    // Predicated region
    $region134: #{cvae_forward.1} parent=1 // pred_check
      _
    $region135: #{cvae_forward.1} parent=1 // pred_check_branch
      %9919 = sbr.rel (0) target = $region137
    $region136: #{cvae_forward.1} parent=1 // pred_region
      _
    $region137: #{cvae_forward.1} parent=1 // pred_fallthru
      _
    // Predicated region
    $region138: #{cvae_forward.1} parent=1 // pred_check
      _
    $region139: #{cvae_forward.1} parent=1 // pred_check_branch
      %9921 = sbr.rel (0) target = $region141
    $region140: #{cvae_forward.1} parent=1 // pred_region
      %9922 = dma.done [#allocation3], 32
    $region141: #{cvae_forward.1} parent=1 // pred_fallthru
      _
    // Predicated region
    $region142: #{cvae_forward.1} parent=1 // pred_check
      _
    $region143: #{cvae_forward.1} parent=1 // pred_check_branch
      %9924 = sbr.rel (0) target = $region145
    $region144: #{cvae_forward.1} parent=1 // pred_region
      %9925 = dma.done [#allocation5], 32
    $region145: #{cvae_forward.1} parent=1 // pred_fallthru
      _
    %9926 = vsyncpa [#allocation3], 1
    %9927 = vsyncpa [#allocation5], 1

</llo_original>
